<compile_context>
chip_gen: v6e
topology: v6e:2x2x1
jax: 0.10.0
libtpu: 0.0.40
codegen_flags: <defaults>
</compile_context>

<pallas_src>
import functools
import math

import jax
import jax.numpy as jnp
from jax.experimental import pallas as pl
from jax.experimental.pallas import tpu as pltpu


def _log_softmax(x):
    m = jnp.max(x, axis=-1, keepdims=True)
    s = x - m
    return s - jnp.log(jnp.sum(jnp.exp(s), axis=-1, keepdims=True))


def gru_decoder_kernel(
    # activations
    emb_ref, encp_ref, enc_ref, hid_ref, mask_ref, srcm_ref, ctxw_ref,
    # attention params (hidden-side projection [D,A] f32, score vector [1,A] f32)
    w_ah_ref, v_ref,
    # fused GRU params (PyTorch gate order r|z|n concatenated along the out axis)
    w_i_ref, b_i_ref, w_h_ref, b_h_ref,
    # adaptive-log-softmax head + 2 tails: per-input-split weights, pre-transposed
    # [in,out] bf16 (three partial dots summed instead of concat([h,ctx,emb]))
    wh_h_ref, wh_c_ref, wh_e_ref,
    wt0a_h_ref, wt0a_c_ref, wt0a_e_ref, wt0b_ref,
    wt1a_h_ref, wt1a_c_ref, wt1a_e_ref, wt1b_ref,
    # outputs
    vocab_ref, attn_ref, ctx_out_ref, hid_out_ref,
    # scratch (persist across the L grid axis)
    hp_sc, m_sc, l_sc, ctx_sc, s_sc,
    *, dec_dim, cutoff0, energy_bf16, return_log_probs):
    f32 = jnp.float32
    bf16 = jnp.bfloat16
    D = dec_dim

    l = pl.program_id(0)
    n_l = pl.num_programs(0)

    # ------------- init (first L tile): hidden projection + running stats -------------
    @pl.when(l == 0)
    def _init():
        # f32 activations & weights (decode batch is tiny; bf16 cast is pure VPU overhead)
        hp_sc[...] = jnp.dot(hid_ref[...], w_ah_ref[...], preferred_element_type=f32)
        m_sc[...] = jnp.full_like(m_sc, -jnp.inf)
        l_sc[...] = jnp.zeros_like(l_sc)
        ctx_sc[...] = jnp.zeros_like(ctx_sc)

    # ------------- additive attention: this L tile -------------
    encp = encp_ref[...]                      # [B, tL, A] bf16 (enc@W_ae + b_a, precomputed)
    hp = hp_sc[...]                           # [B, A] f32
    if energy_bf16:
        # bf16 tanh path (EUP has bf16 throughput on v6e/v7x); scores accumulate in f32.
        # Set energy_bf16=False on v5e (no bf16 EUP/VPU path).
        energy = jnp.tanh(encp + hp[:, None, :].astype(bf16))
        scores = jnp.sum(energy.astype(f32) * v_ref[...][None, :, :], axis=-1)
    else:
        energy = jnp.tanh(encp.astype(f32) + hp[:, None, :])
        scores = jnp.sum(energy * v_ref[...][None, :, :], axis=-1)
    mask = mask_ref[...]                      # [B, tL]
    scores = jnp.where(mask > 0.0, scores, -1e10)

    # ------------- online softmax + context accumulation (flash-style) -------------
    m_old = m_sc[...]
    m_new = jnp.maximum(m_old, jnp.max(scores, axis=-1, keepdims=True))
    alpha = jnp.exp(m_old - m_new)
    p = jnp.exp(scores - m_new)                                  # [B, tL]
    l_sc[...] = alpha * l_sc[...] + jnp.sum(p, axis=-1, keepdims=True)
    # context: VPU multiply + sublane reduce over this tile (avoids q=1 bmm on the MXU)
    ctx_tile = jnp.sum(p[:, :, None] * enc_ref[...].astype(f32), axis=1)  # [B, E]
    ctx_sc[...] = alpha * ctx_sc[...] + ctx_tile
    m_sc[...] = m_new

    # stash raw masked scores; attention weights are finalized once at the last tile
    tl = scores.shape[-1]
    off = pl.multiple_of(l * tl, tl)
    s_sc[:, pl.ds(off, tl)] = scores

    # ------------- finalize (last L tile): GRU + gating + adaptive softmax -------------
    @pl.when(l == n_l - 1)
    def _finalize():
        x = emb_ref[...]                      # [B, M] f32
        h = hid_ref[...]                      # [B, D] f32
        sm = srcm_ref[...]                    # [B, 1]
        ctx_old = ctxw_ref[...]               # [B, E]

        # Exact divide: denominator is only [B,1]; the approx reciprocal bought
        # nothing and broke the attn-sums-to-1 tolerance.
        inv_l = 1.0 / l_sc[...]
        attn_ref[...] = jnp.exp(s_sc[...] - m_sc[...]) * inv_l
        ctx_new = ctx_sc[...] * inv_l

        # single-step GRU, gates fused into two wide dots (f32 activations/weights)
        gi = jnp.dot(x, w_i_ref[...], preferred_element_type=f32) + b_i_ref[...]
        gh = jnp.dot(h, w_h_ref[...], preferred_element_type=f32) + b_h_ref[...]
        r = jax.nn.sigmoid(gi[:, 0:D] + gh[:, 0:D])
        z = jax.nn.sigmoid(gi[:, D:2 * D] + gh[:, D:2 * D])
        n = jnp.tanh(gi[:, 2 * D:3 * D] + r * gh[:, 2 * D:3 * D])
        h_new = (1.0 - z) * n + z * h

        # src_mask gating
        h_new = sm * h_new + (1.0 - sm) * h
        ctx_new = sm * ctx_new + (1.0 - sm) * ctx_old
        hid_out_ref[...] = h_new
        ctx_out_ref[...] = ctx_new

        # AdaptiveLogSoftmaxWithLoss.log_prob over [h_new | ctx_new | emb]:
        # three partial dots summed (no input-lane concat); weights bf16, f32 acc.
        h_b = h_new.astype(bf16)
        c_b = ctx_new.astype(bf16)
        x_b = x.astype(bf16)

        def proj3(wh_, wc_, we_):
            return (jnp.dot(h_b, wh_[...], preferred_element_type=f32)
                    + jnp.dot(c_b, wc_[...], preferred_element_type=f32)
                    + jnp.dot(x_b, we_[...], preferred_element_type=f32))

        head = proj3(wh_h_ref, wh_c_ref, wh_e_ref)               # [B, c0+2]
        z0 = proj3(wt0a_h_ref, wt0a_c_ref, wt0a_e_ref)           # [B, p0]
        z1 = proj3(wt1a_h_ref, wt1a_c_ref, wt1a_e_ref)           # [B, p1]
        t0 = jnp.dot(z0.astype(bf16), wt0b_ref[...], preferred_element_type=f32)
        t1 = jnp.dot(z1.astype(bf16), wt1b_ref[...], preferred_element_type=f32)

        head_lp = _log_softmax(head)
        lp0 = _log_softmax(t0) + head_lp[:, cutoff0:cutoff0 + 1]
        lp1 = _log_softmax(t1) + head_lp[:, cutoff0 + 1:cutoff0 + 2]
        full_lp = jnp.concatenate([head_lp[:, 0:cutoff0], lp0, lp1], axis=1)

        if return_log_probs:
            vocab_ref[...] = full_lp          # skips the B*V exp epilogue on the EUP
        else:
            vocab_ref[...] = jnp.exp(full_lp)


def init_params(key, *, emb_dim, enc_dim, dec_dim, attn_dim, output_dim):
    """Raw parameters in PyTorch layout ([out_features, in_features])."""
    c0 = round(output_dim / 12)
    c1 = 3 * c0
    in_feat = dec_dim + enc_dim + emb_dim
    head_size = c0 + 2                      # shortlist + 2 tail-cluster logits
    p0 = in_feat // 4                       # div_value**1
    p1 = in_feat // 16                      # div_value**2
    D, E, M, A = dec_dim, enc_dim, emb_dim, attn_dim
    shapes = {
        'w_ae': (A, E), 'w_ah': (A, D), 'b_a': (1, A), 'v': (1, A),
        'w_ir': (D, M), 'w_iz': (D, M), 'w_in': (D, M),
        'w_hr': (D, D), 'w_hz': (D, D), 'w_hn': (D, D),
        'b_ir': (1, D), 'b_iz': (1, D), 'b_in': (1, D),
        'b_hr': (1, D), 'b_hz': (1, D), 'b_hn': (1, D),
        'wh_h': (head_size, D), 'wh_c': (head_size, E), 'wh_e': (head_size, M),
        'wt0a_h': (p0, D), 'wt0a_c': (p0, E), 'wt0a_e': (p0, M), 'wt0b': (c1 - c0, p0),
        'wt1a_h': (p1, D), 'wt1a_c': (p1, E), 'wt1a_e': (p1, M),
        'wt1b': (output_dim - c1, p1),
    }
    keys = jax.random.split(key, len(shapes))
    params = {name: 0.1 * jax.random.normal(k, shp, jnp.float32)
              for (name, shp), k in zip(shapes.items(), keys)}
    return params, (c0, c1)


def pack_params(raw):
    """One-time host-side packing: transpose to [in,out], fuse GRU gates.
    GRU / attention weights stay f32 (tiny, f32 activations at decode batch);
    the big adaptive-softmax weights are cast to bf16 (dominant HBM traffic)."""
    tf = lambda w: jnp.asarray(w.T, jnp.float32)
    tb = lambda w: jnp.asarray(w.T, jnp.bfloat16)
    return {
        # attention (b_a is folded into enc_proj in precompute_encoder)
        'w_ae_t': tf(raw['w_ae']),                                       # [E, A]
        'w_ah_t': tf(raw['w_ah']),                                       # [D, A]
        'b_a': raw['b_a'], 'v': raw['v'],                                # [1, A] f32
        # GRU: gate order r | z | n along output axis
        'w_i': jnp.concatenate([tf(raw['w_ir']), tf(raw['w_iz']), tf(raw['w_in'])], axis=1),
        'w_h': jnp.concatenate([tf(raw['w_hr']), tf(raw['w_hz']), tf(raw['w_hn'])], axis=1),
        'b_i': jnp.concatenate([raw['b_ir'], raw['b_iz'], raw['b_in']], axis=1),
        'b_h': jnp.concatenate([raw['b_hr'], raw['b_hz'], raw['b_hn']], axis=1),
        # adaptive softmax: kept split per input (h / ctx / emb) -> 3 partial dots
        'wh_h': tb(raw['wh_h']), 'wh_c': tb(raw['wh_c']), 'wh_e': tb(raw['wh_e']),
        'wt0a_h': tb(raw['wt0a_h']), 'wt0a_c': tb(raw['wt0a_c']), 'wt0a_e': tb(raw['wt0a_e']),
        'wt0b': tb(raw['wt0b']),
        'wt1a_h': tb(raw['wt1a_h']), 'wt1a_c': tb(raw['wt1a_c']), 'wt1a_e': tb(raw['wt1a_e']),
        'wt1b': tb(raw['wt1b']),
    }


def precompute_encoder(packed, enc_outputs):
    """Step-invariant work, done ONCE per sequence (not per decode token):
      * enc @ W_ae attention projection with the attention bias b_a folded in,
        stored bf16 (halves the biggest per-step stream)
      * bf16 copy of enc_outputs for the context accumulation."""
    enc_proj = (jnp.einsum('ble,ea->bla', enc_outputs, packed['w_ae_t'],
                           preferred_element_type=jnp.float32)
                + packed['b_a'][None, :, :]).astype(jnp.bfloat16)
    enc_bf16 = enc_outputs.astype(jnp.bfloat16)
    return enc_proj, enc_bf16


def _resident(shape):
    nd = len(shape)
    def im(l):
        return (0,) * nd
    return pl.BlockSpec(tuple(int(s) for s in shape), im)


def gru_decoder_forward(packed, cutoffs, input_embs, enc_proj, enc_bf16, hidden,
                        mask_others, src_mask, context_weight,
                        *, tile_l=128, energy_bf16=True, return_log_probs=False):
    c0, c1 = cutoffs
    B, L, A = enc_proj.shape
    E = enc_bf16.shape[2]
    D = hidden.shape[1]
    M = input_embs.shape[1]
    p0 = packed['wt0a_h'].shape[1]
    p1 = packed['wt1a_h'].shape[1]
    V = c1 + packed['wt1b'].shape[1]
    head = c0 + 2

    tile_l = min(tile_l, L)
    # (8,128) constraint: mask tile is the lane dim, so partial tiles must be 128-aligned
    assert L % tile_l == 0 and (tile_l == L or tile_l % 128 == 0), \
        "tot_elem must be a multiple of tile_l (and tile_l a multiple of 128 when tiled)"
    n_l = L // tile_l

    operands_and_specs = [
        (input_embs,     _resident((B, M))),
        (enc_proj,       pl.BlockSpec((B, tile_l, A), lambda l: (0, l, 0))),
        (enc_bf16,       pl.BlockSpec((B, tile_l, E), lambda l: (0, l, 0))),
        (hidden,         _resident((B, D))),
        (mask_others,    pl.BlockSpec((B, tile_l), lambda l: (0, l))),
        (src_mask,       _resident((B, 1))),
        (context_weight, _resident((B, E))),
        (packed['w_ah_t'], _resident((D, A))),
        (packed['v'],      _resident((1, A))),
        (packed['w_i'],    _resident((M, 3 * D))),
        (packed['b_i'],    _resident((1, 3 * D))),
        (packed['w_h'],    _resident((D, 3 * D))),
        (packed['b_h'],    _resident((1, 3 * D))),
        (packed['wh_h'],   _resident((D, head))),
        (packed['wh_c'],   _resident((E, head))),
        (packed['wh_e'],   _resident((M, head))),
        (packed['wt0a_h'], _resident((D, p0))),
        (packed['wt0a_c'], _resident((E, p0))),
        (packed['wt0a_e'], _resident((M, p0))),
        (packed['wt0b'],   _resident((p0, c1 - c0))),
        (packed['wt1a_h'], _resident((D, p1))),
        (packed['wt1a_c'], _resident((E, p1))),
        (packed['wt1a_e'], _resident((M, p1))),
        (packed['wt1b'],   _resident((p1, V - c1))),
    ]
    operands = [o for o, _ in operands_and_specs]
    in_specs = [s for _, s in operands_and_specs]

    out_shapes = (
        jax.ShapeDtypeStruct((B, V), jnp.float32),   # vocab_dist
        jax.ShapeDtypeStruct((B, L), jnp.float32),   # attn_dist
        jax.ShapeDtypeStruct((B, E), jnp.float32),   # context_weight_new
        jax.ShapeDtypeStruct((B, D), jnp.float32),   # hidden_new
    )
    out_specs = (
        _resident((B, V)),
        _resident((B, L)),
        _resident((B, E)),
        _resident((B, D)),
    )
    scratch_shapes = [
        pltpu.VMEM((B, A), jnp.float32),   # hidden projection (computed once at l==0)
        pltpu.VMEM((B, 1), jnp.float32),   # running max
        pltpu.VMEM((B, 1), jnp.float32),   # running sum-exp
        pltpu.VMEM((B, E), jnp.float32),   # running (unnormalized) context
        pltpu.VMEM((B, L), jnp.float32),   # raw masked scores (for the attn output)
    ]

    # Advisory cost estimate for the surrounding XLA schedule.
    flops = 2 * B * (D * A + L * A + L * E + (M + D) * 3 * D
                     + (D + E + M) * (head + p0 + p1)
                     + p0 * (c1 - c0) + p1 * (V - c1))
    transcendentals = B * (L * A + 2 * L + 3 * D + 2 * V)
    bytes_accessed = (sum(int(x.size) * x.dtype.itemsize for x in operands)
                      + sum(4 * int(math.prod(s.shape)) for s in out_shapes))

    kernel = functools.partial(gru_decoder_kernel, dec_dim=D, cutoff0=c0,
                               energy_bf16=energy_bf16,
                               return_log_probs=return_log_probs)
    return pl.pallas_call(
        kernel,
        grid_spec=pltpu.PrefetchScalarGridSpec(
            num_scalar_prefetch=0,
            grid=(n_l,),
            in_specs=in_specs,
            out_specs=out_specs,
            scratch_shapes=scratch_shapes),
        out_shape=out_shapes,
        # in-place state update: hidden -> hidden_new, context_weight -> context_new
        input_output_aliases={3: 3, 6: 2},
        compiler_params=pltpu.CompilerParams(
            # L axis is a reduction (online softmax) -> "arbitrary".
            dimension_semantics=("arbitrary",),
            # Head/tail weights are fully resident (see TODO on N tiling); raise the
            # scoped VMEM limit. On v6e use ~100MiB at production sizes; on v7x tile N.
            vmem_limit_bytes=64 * 1024 * 1024),
        cost_estimate=pl.CostEstimate(flops=flops, transcendentals=transcendentals,
                                      bytes_accessed=bytes_accessed),
    )(*operands)


if __name__ == "__main__":
    B, L = 8, 256
    EMB, ENC, DEC, ATTN = 64, 64, 64, 64
    V = 384
    TILE_L = 128

    key = jax.random.PRNGKey(0)
    k_par, k_emb, k_enc, k_hid, k_ctx, k_m1, k_m2 = jax.random.split(key, 7)

    raw_params, cutoffs = init_params(
        k_par, emb_dim=EMB, enc_dim=ENC, dec_dim=DEC, attn_dim=ATTN, output_dim=V)
    packed = pack_params(raw_params)

    input_embs = jax.random.normal(k_emb, (B, EMB), jnp.float32)
    enc_outputs = jax.random.normal(k_enc, (B, L, ENC), jnp.float32)
    hidden = jax.random.normal(k_hid, (B, DEC), jnp.float32)
    context_weight = jax.random.normal(k_ctx, (B, ENC), jnp.float32)
    mask_others = (jax.random.uniform(k_m1, (B, L)) > 0.2).astype(jnp.float32)
    mask_others = mask_others.at[:, 0].set(1.0)            # at least one valid elem
    src_mask = (jax.random.uniform(k_m2, (B, 1)) > 0.3).astype(jnp.float32)

    # Once-per-sequence precompute (hoisted out of the per-token decode step).
    enc_proj, enc_bf16 = precompute_encoder(packed, enc_outputs)

    outs = gru_decoder_forward(packed, cutoffs, input_embs, enc_proj, enc_bf16,
                               hidden, mask_others, src_mask, context_weight,
                               tile_l=TILE_L, energy_bf16=True, return_log_probs=False)
    vocab_dist, attn_dist, ctx_new, hid_new = jax.block_until_ready(outs)

    assert vocab_dist.shape == (B, V)
    assert attn_dist.shape == (B, L)
    assert ctx_new.shape == (B, ENC)
    assert hid_new.shape == (B, DEC)
    # vocab_dist = exp(log_prob) -> rows sum to ~1; attn rows sum to ~1 (exact divide)
    assert jnp.allclose(jnp.sum(vocab_dist, axis=1), 1.0, atol=1e-3)
    assert jnp.allclose(jnp.sum(attn_dist, axis=1), 1.0, atol=1e-3)
    assert bool(jnp.all(jnp.isfinite(vocab_dist)))
    assert bool(jnp.all(jnp.isfinite(hid_new))) and bool(jnp.all(jnp.isfinite(ctx_new)))

    print("KERNEL_OK")
</pallas_src>

<mosaic_0001>
module attributes {stable_mosaic.version = 11 : i64} {
  func.func @gru_decoder_kernel(%arg0: i32, %arg1: memref<8x64xf32, #tpu.memory_space<vmem>>, %arg2: memref<8x128x64xbf16, #tpu.memory_space<vmem>>, %arg3: memref<8x128x64xbf16, #tpu.memory_space<vmem>>, %arg4: memref<8x64xf32, #tpu.memory_space<vmem>>, %arg5: memref<8x128xf32, #tpu.memory_space<vmem>>, %arg6: memref<8x1xf32, #tpu.memory_space<vmem>>, %arg7: memref<8x64xf32, #tpu.memory_space<vmem>>, %arg8: memref<64x64xf32, #tpu.memory_space<vmem>>, %arg9: memref<1x64xf32, #tpu.memory_space<vmem>>, %arg10: memref<64x192xf32, #tpu.memory_space<vmem>>, %arg11: memref<1x192xf32, #tpu.memory_space<vmem>>, %arg12: memref<64x192xf32, #tpu.memory_space<vmem>>, %arg13: memref<1x192xf32, #tpu.memory_space<vmem>>, %arg14: memref<64x34xbf16, #tpu.memory_space<vmem>>, %arg15: memref<64x34xbf16, #tpu.memory_space<vmem>>, %arg16: memref<64x34xbf16, #tpu.memory_space<vmem>>, %arg17: memref<64x48xbf16, #tpu.memory_space<vmem>>, %arg18: memref<64x48xbf16, #tpu.memory_space<vmem>>, %arg19: memref<64x48xbf16, #tpu.memory_space<vmem>>, %arg20: memref<48x64xbf16, #tpu.memory_space<vmem>>, %arg21: memref<64x12xbf16, #tpu.memory_space<vmem>>, %arg22: memref<64x12xbf16, #tpu.memory_space<vmem>>, %arg23: memref<64x12xbf16, #tpu.memory_space<vmem>>, %arg24: memref<12x288xbf16, #tpu.memory_space<vmem>>, %arg25: memref<8x384xf32, #tpu.memory_space<vmem>>, %arg26: memref<8x256xf32, #tpu.memory_space<vmem>>, %arg27: memref<8x64xf32, #tpu.memory_space<vmem>>, %arg28: memref<8x64xf32, #tpu.memory_space<vmem>>, %arg29: memref<8x64xf32, #tpu.memory_space<vmem>>, %arg30: memref<8x1xf32, #tpu.memory_space<vmem>>, %arg31: memref<8x1xf32, #tpu.memory_space<vmem>>, %arg32: memref<8x64xf32, #tpu.memory_space<vmem>>, %arg33: memref<8x256xf32, #tpu.memory_space<vmem>>) attributes {dimension_semantics = [#tpu.dimension_semantics<arbitrary>], iteration_bounds = array<i64: 2>, scalar_prefetch = 0 : i64, scratch_operands = 5 : i64, tpu.core_type = #tpu.core_type<tc>, window_params = [{pipeline_mode = #tpu.pipeline_mode<synchronous>, transform_indices = @transform_0, window_bounds = array<i64: 8, 64>}, {transform_indices = @transform_1, window_bounds = array<i64: 8, 128, 64>}, {transform_indices = @transform_2, window_bounds = array<i64: 8, 128, 64>}, {pipeline_mode = #tpu.pipeline_mode<synchronous>, transform_indices = @transform_3, window_bounds = array<i64: 8, 64>}, {transform_indices = @transform_4, window_bounds = array<i64: 8, 128>}, {pipeline_mode = #tpu.pipeline_mode<synchronous>, transform_indices = @transform_5, window_bounds = array<i64: 8, 1>}, {pipeline_mode = #tpu.pipeline_mode<synchronous>, transform_indices = @transform_6, window_bounds = array<i64: 8, 64>}, {pipeline_mode = #tpu.pipeline_mode<synchronous>, transform_indices = @transform_7, window_bounds = array<i64: 64, 64>}, {pipeline_mode = #tpu.pipeline_mode<synchronous>, transform_indices = @transform_8, window_bounds = array<i64: 1, 64>}, {pipeline_mode = #tpu.pipeline_mode<synchronous>, transform_indices = @transform_9, window_bounds = array<i64: 64, 192>}, {pipeline_mode = #tpu.pipeline_mode<synchronous>, transform_indices = @transform_10, window_bounds = array<i64: 1, 192>}, {pipeline_mode = #tpu.pipeline_mode<synchronous>, transform_indices = @transform_11, window_bounds = array<i64: 64, 192>}, {pipeline_mode = #tpu.pipeline_mode<synchronous>, transform_indices = @transform_12, window_bounds = array<i64: 1, 192>}, {pipeline_mode = #tpu.pipeline_mode<synchronous>, transform_indices = @transform_13, window_bounds = array<i64: 64, 34>}, {pipeline_mode = #tpu.pipeline_mode<synchronous>, transform_indices = @transform_14, window_bounds = array<i64: 64, 34>}, {pipeline_mode = #tpu.pipeline_mode<synchronous>, transform_indices = @transform_15, window_bounds = array<i64: 64, 34>}, {pipeline_mode = #tpu.pipeline_mode<synchronous>, transform_indices = @transform_16, window_bounds = array<i64: 64, 48>}, {pipeline_mode = #tpu.pipeline_mode<synchronous>, transform_indices = @transform_17, window_bounds = array<i64: 64, 48>}, {pipeline_mode = #tpu.pipeline_mode<synchronous>, transform_indices = @transform_18, window_bounds = array<i64: 64, 48>}, {pipeline_mode = #tpu.pipeline_mode<synchronous>, transform_indices = @transform_19, window_bounds = array<i64: 48, 64>}, {pipeline_mode = #tpu.pipeline_mode<synchronous>, transform_indices = @transform_20, window_bounds = array<i64: 64, 12>}, {pipeline_mode = #tpu.pipeline_mode<synchronous>, transform_indices = @transform_21, window_bounds = array<i64: 64, 12>}, {pipeline_mode = #tpu.pipeline_mode<synchronous>, transform_indices = @transform_22, window_bounds = array<i64: 64, 12>}, {pipeline_mode = #tpu.pipeline_mode<synchronous>, transform_indices = @transform_23, window_bounds = array<i64: 12, 288>}, {pipeline_mode = #tpu.pipeline_mode<synchronous>, transform_indices = @transform_24, window_bounds = array<i64: 8, 384>}, {pipeline_mode = #tpu.pipeline_mode<synchronous>, transform_indices = @transform_25, window_bounds = array<i64: 8, 256>}, {pipeline_mode = #tpu.pipeline_mode<synchronous>, transform_indices = @transform_26, window_bounds = array<i64: 8, 64>}, {pipeline_mode = #tpu.pipeline_mode<synchronous>, transform_indices = @transform_27, window_bounds = array<i64: 8, 64>}]} {
    %c0_i32 = arith.constant 0 : i32
    %0 = arith.cmpi eq, %arg0, %c0_i32 : i32
    %1 = arith.extui %0 : i1 to i32
    %c0_i32_0 = arith.constant 0 : i32
    %2 = arith.cmpi ne, %1, %c0_i32_0 : i32
    scf.if %2 {
      %c0_31 = arith.constant 0 : index
      %c0_32 = arith.constant 0 : index
      %55 = vector.load %arg4[%c0_31, %c0_32] : memref<8x64xf32, #tpu.memory_space<vmem>>, vector<8x64xf32>
      %c0_33 = arith.constant 0 : index
      %c0_34 = arith.constant 0 : index
      %56 = vector.load %arg8[%c0_33, %c0_34] : memref<64x64xf32, #tpu.memory_space<vmem>>, vector<64x64xf32>
      %cst_35 = arith.constant dense<0.000000e+00> : vector<8x64xf32>
      %57 = tpu.matmul %55, %56, %cst_35 {dimension_numbers = #tpu.dot_dimension_numbers<[1], [0], [0], [1], [0, 0, 1, 1], [], []>} : vector<8x64xf32>, vector<64x64xf32>, vector<8x64xf32> -> vector<8x64xf32>
      %c0_36 = arith.constant 0 : index
      %c0_37 = arith.constant 0 : index
      %58 = vector.load %arg29[%c0_36, %c0_37] : memref<8x64xf32, #tpu.memory_space<vmem>>, vector<8x64xf32>
      tpu.vector_store %arg29[%c0_36, %c0_37], %57 {strides = array<i32>} : memref<8x64xf32, #tpu.memory_space<vmem>>, vector<8x64xf32>,
      %cst_38 = arith.constant 0xFF800000 : f32
      %59 = vector.broadcast %cst_38 : f32 to vector<8x1xf32>
      %c0_39 = arith.constant 0 : index
      %c0_40 = arith.constant 0 : index
      %60 = vector.load %arg30[%c0_39, %c0_40] : memref<8x1xf32, #tpu.memory_space<vmem>>, vector<8x1xf32>
      tpu.vector_store %arg30[%c0_39, %c0_40], %59 {strides = array<i32>} : memref<8x1xf32, #tpu.memory_space<vmem>>, vector<8x1xf32>,
      %cst_41 = arith.constant 0.000000e+00 : f32
      %61 = vector.broadcast %cst_41 : f32 to vector<8x1xf32>
      %c0_42 = arith.constant 0 : index
      %c0_43 = arith.constant 0 : index
      %62 = vector.load %arg31[%c0_42, %c0_43] : memref<8x1xf32, #tpu.memory_space<vmem>>, vector<8x1xf32>
      tpu.vector_store %arg31[%c0_42, %c0_43], %61 {strides = array<i32>} : memref<8x1xf32, #tpu.memory_space<vmem>>, vector<8x1xf32>,
      %cst_44 = arith.constant 0.000000e+00 : f32
      %63 = vector.broadcast %cst_44 : f32 to vector<8x64xf32>
      %c0_45 = arith.constant 0 : index
      %c0_46 = arith.constant 0 : index
      %64 = vector.load %arg32[%c0_45, %c0_46] : memref<8x64xf32, #tpu.memory_space<vmem>>, vector<8x64xf32>
      tpu.vector_store %arg32[%c0_45, %c0_46], %63 {strides = array<i32>} : memref<8x64xf32, #tpu.memory_space<vmem>>, vector<8x64xf32>,
    } else {
    }
    %c0 = arith.constant 0 : index
    %c0_1 = arith.constant 0 : index
    %c0_2 = arith.constant 0 : index
    %3 = vector.load %arg2[%c0, %c0_1, %c0_2] : memref<8x128x64xbf16, #tpu.memory_space<vmem>>, vector<8x128x64xbf16>
    %c0_3 = arith.constant 0 : index
    %c0_4 = arith.constant 0 : index
    %4 = vector.load %arg29[%c0_3, %c0_4] : memref<8x64xf32, #tpu.memory_space<vmem>>, vector<8x64xf32>
    %5 = vector.shape_cast %4 : vector<8x64xf32> to vector<8x1x64xf32>
    %6 = arith.truncf %5 : vector<8x1x64xf32> to vector<8x1x64xbf16>
    %7 = vector.broadcast %6 : vector<8x1x64xbf16> to vector<8x128x64xbf16>
    %8 = arith.addf %3, %7 : vector<8x128x64xbf16>
    %9 = math.tanh %8 : vector<8x128x64xbf16>
    %10 = arith.extf %9 : vector<8x128x64xbf16> to vector<8x128x64xf32>
    %c0_5 = arith.constant 0 : index
    %c0_6 = arith.constant 0 : index
    %11 = vector.load %arg9[%c0_5, %c0_6] : memref<1x64xf32, #tpu.memory_space<vmem>>, vector<1x64xf32>
    %12 = vector.shape_cast %11 : vector<1x64xf32> to vector<1x1x64xf32>
    %13 = vector.broadcast %12 : vector<1x1x64xf32> to vector<8x128x64xf32>
    %14 = arith.mulf %10, %13 : vector<8x128x64xf32>
    %cst = arith.constant dense<0.000000e+00> : vector<8x128xf32>
    %15 = vector.multi_reduction <add>, %14, %cst [2] : vector<8x128x64xf32> to vector<8x128xf32>
    %c0_7 = arith.constant 0 : index
    %c0_8 = arith.constant 0 : index
    %16 = vector.load %arg5[%c0_7, %c0_8] : memref<8x128xf32, #tpu.memory_space<vmem>>, vector<8x128xf32>
    %cst_9 = arith.constant 0.000000e+00 : f32
    %17 = vector.broadcast %cst_9 : f32 to vector<8x128xf32>
    %18 = arith.cmpf ogt, %16, %17 : vector<8x128xf32>
    %cst_10 = arith.constant -1.000000e+10 : f32
    %19 = vector.broadcast %cst_10 : f32 to vector<8x128xf32>
    %20 = arith.select %18, %15, %19 : vector<8x128xi1>, vector<8x128xf32>
    %c0_11 = arith.constant 0 : index
    %c0_12 = arith.constant 0 : index
    %21 = vector.load %arg30[%c0_11, %c0_12] : memref<8x1xf32, #tpu.memory_space<vmem>>, vector<8x1xf32>
    %cst_13 = arith.constant dense<0xFF800000> : vector<8xf32>
    %22 = vector.multi_reduction <maximumf>, %20, %cst_13 [1] : vector<8x128xf32> to vector<8xf32>
    %23 = vector.shape_cast %22 : vector<8xf32> to vector<8x1xf32>
    %24 = arith.maximumf %21, %23 : vector<8x1xf32>
    %25 = arith.subf %21, %24 : vector<8x1xf32>
    %26 = math.exp %25 : vector<8x1xf32>
    %27 = vector.broadcast %24 : vector<8x1xf32> to vector<8x128xf32>
    %28 = arith.subf %20, %27 : vector<8x128xf32>
    %29 = math.exp %28 : vector<8x128xf32>
    %c0_14 = arith.constant 0 : index
    %c0_15 = arith.constant 0 : index
    %30 = vector.load %arg31[%c0_14, %c0_15] : memref<8x1xf32, #tpu.memory_space<vmem>>, vector<8x1xf32>
    %31 = arith.mulf %26, %30 : vector<8x1xf32>
    %cst_16 = arith.constant dense<0.000000e+00> : vector<8xf32>
    %32 = vector.multi_reduction <add>, %29, %cst_16 [1] : vector<8x128xf32> to vector<8xf32>
    %33 = vector.shape_cast %32 : vector<8xf32> to vector<8x1xf32>
    %34 = arith.addf %31, %33 : vector<8x1xf32>
    %c0_17 = arith.constant 0 : index
    %c0_18 = arith.constant 0 : index
    %35 = vector.load %arg31[%c0_17, %c0_18] : memref<8x1xf32, #tpu.memory_space<vmem>>, vector<8x1xf32>
    tpu.vector_store %arg31[%c0_17, %c0_18], %34 {strides = array<i32>} : memref<8x1xf32, #tpu.memory_space<vmem>>, vector<8x1xf32>,
    %36 = vector.shape_cast %29 : vector<8x128xf32> to vector<8x128x1xf32>
    %c0_19 = arith.constant 0 : index
    %c0_20 = arith.constant 0 : index
    %c0_21 = arith.constant 0 : index
    %37 = vector.load %arg3[%c0_19, %c0_20, %c0_21] : memref<8x128x64xbf16, #tpu.memory_space<vmem>>, vector<8x128x64xbf16>
    %38 = arith.extf %37 : vector<8x128x64xbf16> to vector<8x128x64xf32>
    %39 = vector.broadcast %36 : vector<8x128x1xf32> to vector<8x128x64xf32>
    %40 = arith.mulf %39, %38 : vector<8x128x64xf32>
    %cst_22 = arith.constant dense<0.000000e+00> : vector<8x64xf32>
    %41 = vector.multi_reduction <add>, %40, %cst_22 [1] : vector<8x128x64xf32> to vector<8x64xf32>
    %c0_23 = arith.constant 0 : index
    %c0_24 = arith.constant 0 : index
    %42 = vector.load %arg32[%c0_23, %c0_24] : memref<8x64xf32, #tpu.memory_space<vmem>>, vector<8x64xf32>
    %43 = vector.broadcast %26 : vector<8x1xf32> to vector<8x64xf32>
    %44 = arith.mulf %43, %42 : vector<8x64xf32>
    %45 = arith.addf %44, %41 : vector<8x64xf32>
    %c0_25 = arith.constant 0 : index
    %c0_26 = arith.constant 0 : index
    %46 = vector.load %arg32[%c0_25, %c0_26] : memref<8x64xf32, #tpu.memory_space<vmem>>, vector<8x64xf32>
    tpu.vector_store %arg32[%c0_25, %c0_26], %45 {strides = array<i32>} : memref<8x64xf32, #tpu.memory_space<vmem>>, vector<8x64xf32>,
    %c0_27 = arith.constant 0 : index
    %c0_28 = arith.constant 0 : index
    %47 = vector.load %arg30[%c0_27, %c0_28] : memref<8x1xf32, #tpu.memory_space<vmem>>, vector<8x1xf32>
    tpu.vector_store %arg30[%c0_27, %c0_28], %24 {strides = array<i32>} : memref<8x1xf32, #tpu.memory_space<vmem>>, vector<8x1xf32>,
    %c128_i32 = arith.constant 128 : i32
    %48 = arith.muli %arg0, %c128_i32 : i32
    %49 = tpu.assume_multiple %48, 128 : i32
    %c0_29 = arith.constant 0 : index
    %50 = arith.index_cast %49 : i32 to index
    %51 = vector.load %arg33[%c0_29, %50] : memref<8x256xf32, #tpu.memory_space<vmem>>, vector<8x128xf32>
    tpu.vector_store %arg33[%c0_29, %50], %20 {strides = array<i32>} : memref<8x256xf32, #tpu.memory_space<vmem>>, vector<8x128xf32>,
    %c1_i32 = arith.constant 1 : i32
    %52 = arith.cmpi eq, %arg0, %c1_i32 : i32
    %53 = arith.extui %52 : i1 to i32
    %c0_i32_30 = arith.constant 0 : i32
    %54 = arith.cmpi ne, %53, %c0_i32_30 : i32
    scf.if %54 {
      %c0_31 = arith.constant 0 : index
      %c0_32 = arith.constant 0 : index
      %55 = vector.load %arg1[%c0_31, %c0_32] : memref<8x64xf32, #tpu.memory_space<vmem>>, vector<8x64xf32>
      %c0_33 = arith.constant 0 : index
      %c0_34 = arith.constant 0 : index
      %56 = vector.load %arg4[%c0_33, %c0_34] : memref<8x64xf32, #tpu.memory_space<vmem>>, vector<8x64xf32>
      %c0_35 = arith.constant 0 : index
      %c0_36 = arith.constant 0 : index
      %57 = vector.load %arg6[%c0_35, %c0_36] : memref<8x1xf32, #tpu.memory_space<vmem>>, vector<8x1xf32>
      %c0_37 = arith.constant 0 : index
      %c0_38 = arith.constant 0 : index
      %58 = vector.load %arg7[%c0_37, %c0_38] : memref<8x64xf32, #tpu.memory_space<vmem>>, vector<8x64xf32>
      %c0_39 = arith.constant 0 : index
      %c0_40 = arith.constant 0 : index
      %59 = vector.load %arg31[%c0_39, %c0_40] : memref<8x1xf32, #tpu.memory_space<vmem>>, vector<8x1xf32>
      %cst_41 = arith.constant 1.000000e+00 : f32
      %60 = vector.broadcast %cst_41 : f32 to vector<8x1xf32>
      %61 = arith.divf %60, %59 : vector<8x1xf32>
      %c0_42 = arith.constant 0 : index
      %c0_43 = arith.constant 0 : index
      %62 = vector.load %arg33[%c0_42, %c0_43] : memref<8x256xf32, #tpu.memory_space<vmem>>, vector<8x256xf32>
      %c0_44 = arith.constant 0 : index
      %c0_45 = arith.constant 0 : index
      %63 = vector.load %arg30[%c0_44, %c0_45] : memref<8x1xf32, #tpu.memory_space<vmem>>, vector<8x1xf32>
      %64 = vector.broadcast %63 : vector<8x1xf32> to vector<8x256xf32>
      %65 = arith.subf %62, %64 : vector<8x256xf32>
      %66 = math.exp %65 : vector<8x256xf32>
      %67 = vector.broadcast %61 : vector<8x1xf32> to vector<8x256xf32>
      %68 = arith.mulf %66, %67 : vector<8x256xf32>
      %c0_46 = arith.constant 0 : index
      %c0_47 = arith.constant 0 : index
      %69 = vector.load %arg26[%c0_46, %c0_47] : memref<8x256xf32, #tpu.memory_space<vmem>>, vector<8x256xf32>
      tpu.vector_store %arg26[%c0_46, %c0_47], %68 {strides = array<i32>} : memref<8x256xf32, #tpu.memory_space<vmem>>, vector<8x256xf32>,
      %c0_48 = arith.constant 0 : index
      %c0_49 = arith.constant 0 : index
      %70 = vector.load %arg32[%c0_48, %c0_49] : memref<8x64xf32, #tpu.memory_space<vmem>>, vector<8x64xf32>
      %71 = vector.broadcast %61 : vector<8x1xf32> to vector<8x64xf32>
      %72 = arith.mulf %70, %71 : vector<8x64xf32>
      %c0_50 = arith.constant 0 : index
      %c0_51 = arith.constant 0 : index
      %73 = vector.load %arg10[%c0_50, %c0_51] : memref<64x192xf32, #tpu.memory_space<vmem>>, vector<64x192xf32>
      %cst_52 = arith.constant dense<0.000000e+00> : vector<8x192xf32>
      %74 = tpu.matmul %55, %73, %cst_52 {dimension_numbers = #tpu.dot_dimension_numbers<[1], [0], [0], [1], [0, 0, 1, 1], [], []>} : vector<8x64xf32>, vector<64x192xf32>, vector<8x192xf32> -> vector<8x192xf32>
      %c0_53 = arith.constant 0 : index
      %c0_54 = arith.constant 0 : index
      %75 = vector.load %arg11[%c0_53, %c0_54] : memref<1x192xf32, #tpu.memory_space<vmem>>, vector<1x192xf32>
      %76 = vector.broadcast %75 : vector<1x192xf32> to vector<8x192xf32>
      %77 = arith.addf %74, %76 : vector<8x192xf32>
      %c0_55 = arith.constant 0 : index
      %c0_56 = arith.constant 0 : index
      %78 = vector.load %arg12[%c0_55, %c0_56] : memref<64x192xf32, #tpu.memory_space<vmem>>, vector<64x192xf32>
      %cst_57 = arith.constant dense<0.000000e+00> : vector<8x192xf32>
      %79 = tpu.matmul %56, %78, %cst_57 {dimension_numbers = #tpu.dot_dimension_numbers<[1], [0], [0], [1], [0, 0, 1, 1], [], []>} : vector<8x64xf32>, vector<64x192xf32>, vector<8x192xf32> -> vector<8x192xf32>
      %c0_58 = arith.constant 0 : index
      %c0_59 = arith.constant 0 : index
      %80 = vector.load %arg13[%c0_58, %c0_59] : memref<1x192xf32, #tpu.memory_space<vmem>>, vector<1x192xf32>
      %81 = vector.broadcast %80 : vector<1x192xf32> to vector<8x192xf32>
      %82 = arith.addf %79, %81 : vector<8x192xf32>
      %83 = vector.extract_strided_slice %77 {offsets = [0, 0], sizes = [8, 64], strides = [1, 1]} : vector<8x192xf32> to vector<8x64xf32>
      %84 = vector.extract_strided_slice %82 {offsets = [0, 0], sizes = [8, 64], strides = [1, 1]} : vector<8x192xf32> to vector<8x64xf32>
      %85 = arith.addf %83, %84 : vector<8x64xf32>
      %86 = arith.negf %85 : vector<8x64xf32>
      %87 = math.exp %86 : vector<8x64xf32>
      %cst_60 = arith.constant 1.000000e+00 : f32
      %88 = vector.broadcast %cst_60 : f32 to vector<8x64xf32>
      %89 = arith.addf %88, %87 : vector<8x64xf32>
      %90 = arith.divf %88, %89 : vector<8x64xf32>
      %91 = vector.extract_strided_slice %77 {offsets = [0, 64], sizes = [8, 64], strides = [1, 1]} : vector<8x192xf32> to vector<8x64xf32>
      %92 = vector.extract_strided_slice %82 {offsets = [0, 64], sizes = [8, 64], strides = [1, 1]} : vector<8x192xf32> to vector<8x64xf32>
      %93 = arith.addf %91, %92 : vector<8x64xf32>
      %94 = arith.negf %93 : vector<8x64xf32>
      %95 = math.exp %94 : vector<8x64xf32>
      %cst_61 = arith.constant 1.000000e+00 : f32
      %96 = vector.broadcast %cst_61 : f32 to vector<8x64xf32>
      %97 = arith.addf %96, %95 : vector<8x64xf32>
      %98 = arith.divf %96, %97 : vector<8x64xf32>
      %99 = vector.extract_strided_slice %77 {offsets = [0, 128], sizes = [8, 64], strides = [1, 1]} : vector<8x192xf32> to vector<8x64xf32>
      %100 = vector.extract_strided_slice %82 {offsets = [0, 128], sizes = [8, 64], strides = [1, 1]} : vector<8x192xf32> to vector<8x64xf32>
      %101 = arith.mulf %90, %100 : vector<8x64xf32>
      %102 = arith.addf %99, %101 : vector<8x64xf32>
      %103 = math.tanh %102 : vector<8x64xf32>
      %cst_62 = arith.constant 1.000000e+00 : f32
      %104 = vector.broadcast %cst_62 : f32 to vector<8x64xf32>
      %105 = arith.subf %104, %98 : vector<8x64xf32>
      %106 = arith.mulf %105, %103 : vector<8x64xf32>
      %107 = arith.mulf %98, %56 : vector<8x64xf32>
      %108 = arith.addf %106, %107 : vector<8x64xf32>
      %109 = vector.broadcast %57 : vector<8x1xf32> to vector<8x64xf32>
      %110 = arith.mulf %109, %108 : vector<8x64xf32>
      %cst_63 = arith.constant 1.000000e+00 : f32
      %111 = vector.broadcast %cst_63 : f32 to vector<8x1xf32>
      %112 = arith.subf %111, %57 : vector<8x1xf32>
      %113 = vector.broadcast %112 : vector<8x1xf32> to vector<8x64xf32>
      %114 = arith.mulf %113, %56 : vector<8x64xf32>
      %115 = arith.addf %110, %114 : vector<8x64xf32>
      %116 = vector.broadcast %57 : vector<8x1xf32> to vector<8x64xf32>
      %117 = arith.mulf %116, %72 : vector<8x64xf32>
      %cst_64 = arith.constant 1.000000e+00 : f32
      %118 = vector.broadcast %cst_64 : f32 to vector<8x1xf32>
      %119 = arith.subf %118, %57 : vector<8x1xf32>
      %120 = vector.broadcast %119 : vector<8x1xf32> to vector<8x64xf32>
      %121 = arith.mulf %120, %58 : vector<8x64xf32>
      %122 = arith.addf %117, %121 : vector<8x64xf32>
      %c0_65 = arith.constant 0 : index
      %c0_66 = arith.constant 0 : index
      %123 = vector.load %arg28[%c0_65, %c0_66] : memref<8x64xf32, #tpu.memory_space<vmem>>, vector<8x64xf32>
      tpu.vector_store %arg28[%c0_65, %c0_66], %115 {strides = array<i32>} : memref<8x64xf32, #tpu.memory_space<vmem>>, vector<8x64xf32>,
      %c0_67 = arith.constant 0 : index
      %c0_68 = arith.constant 0 : index
      %124 = vector.load %arg27[%c0_67, %c0_68] : memref<8x64xf32, #tpu.memory_space<vmem>>, vector<8x64xf32>
      tpu.vector_store %arg27[%c0_67, %c0_68], %122 {strides = array<i32>} : memref<8x64xf32, #tpu.memory_space<vmem>>, vector<8x64xf32>,
      %125 = arith.truncf %115 : vector<8x64xf32> to vector<8x64xbf16>
      %126 = arith.truncf %122 : vector<8x64xf32> to vector<8x64xbf16>
      %127 = arith.truncf %55 : vector<8x64xf32> to vector<8x64xbf16>
      %c0_69 = arith.constant 0 : index
      %c0_70 = arith.constant 0 : index
      %128 = vector.load %arg14[%c0_69, %c0_70] : memref<64x34xbf16, #tpu.memory_space<vmem>>, vector<64x34xbf16>
      %cst_71 = arith.constant dense<0.000000e+00> : vector<8x34xf32>
      %129 = tpu.matmul %125, %128, %cst_71 {dimension_numbers = #tpu.dot_dimension_numbers<[1], [0], [0], [1], [0, 0, 1, 1], [], []>} : vector<8x64xbf16>, vector<64x34xbf16>, vector<8x34xf32> -> vector<8x34xf32>
      %c0_72 = arith.constant 0 : index
      %c0_73 = arith.constant 0 : index
      %130 = vector.load %arg15[%c0_72, %c0_73] : memref<64x34xbf16, #tpu.memory_space<vmem>>, vector<64x34xbf16>
      %cst_74 = arith.constant dense<0.000000e+00> : vector<8x34xf32>
      %131 = tpu.matmul %126, %130, %cst_74 {dimension_numbers = #tpu.dot_dimension_numbers<[1], [0], [0], [1], [0, 0, 1, 1], [], []>} : vector<8x64xbf16>, vector<64x34xbf16>, vector<8x34xf32> -> vector<8x34xf32>
      %132 = arith.addf %129, %131 : vector<8x34xf32>
      %c0_75 = arith.constant 0 : index
      %c0_76 = arith.constant 0 : index
      %133 = vector.load %arg16[%c0_75, %c0_76] : memref<64x34xbf16, #tpu.memory_space<vmem>>, vector<64x34xbf16>
      %cst_77 = arith.constant dense<0.000000e+00> : vector<8x34xf32>
      %134 = tpu.matmul %127, %133, %cst_77 {dimension_numbers = #tpu.dot_dimension_numbers<[1], [0], [0], [1], [0, 0, 1, 1], [], []>} : vector<8x64xbf16>, vector<64x34xbf16>, vector<8x34xf32> -> vector<8x34xf32>
      %135 = arith.addf %132, %134 : vector<8x34xf32>
      %c0_78 = arith.constant 0 : index
      %c0_79 = arith.constant 0 : index
      %136 = vector.load %arg17[%c0_78, %c0_79] : memref<64x48xbf16, #tpu.memory_space<vmem>>, vector<64x48xbf16>
      %cst_80 = arith.constant dense<0.000000e+00> : vector<8x48xf32>
      %137 = tpu.matmul %125, %136, %cst_80 {dimension_numbers = #tpu.dot_dimension_numbers<[1], [0], [0], [1], [0, 0, 1, 1], [], []>} : vector<8x64xbf16>, vector<64x48xbf16>, vector<8x48xf32> -> vector<8x48xf32>
      %c0_81 = arith.constant 0 : index
      %c0_82 = arith.constant 0 : index
      %138 = vector.load %arg18[%c0_81, %c0_82] : memref<64x48xbf16, #tpu.memory_space<vmem>>, vector<64x48xbf16>
      %cst_83 = arith.constant dense<0.000000e+00> : vector<8x48xf32>
      %139 = tpu.matmul %126, %138, %cst_83 {dimension_numbers = #tpu.dot_dimension_numbers<[1], [0], [0], [1], [0, 0, 1, 1], [], []>} : vector<8x64xbf16>, vector<64x48xbf16>, vector<8x48xf32> -> vector<8x48xf32>
      %140 = arith.addf %137, %139 : vector<8x48xf32>
      %c0_84 = arith.constant 0 : index
      %c0_85 = arith.constant 0 : index
      %141 = vector.load %arg19[%c0_84, %c0_85] : memref<64x48xbf16, #tpu.memory_space<vmem>>, vector<64x48xbf16>
      %cst_86 = arith.constant dense<0.000000e+00> : vector<8x48xf32>
      %142 = tpu.matmul %127, %141, %cst_86 {dimension_numbers = #tpu.dot_dimension_numbers<[1], [0], [0], [1], [0, 0, 1, 1], [], []>} : vector<8x64xbf16>, vector<64x48xbf16>, vector<8x48xf32> -> vector<8x48xf32>
      %143 = arith.addf %140, %142 : vector<8x48xf32>
      %c0_87 = arith.constant 0 : index
      %c0_88 = arith.constant 0 : index
      %144 = vector.load %arg21[%c0_87, %c0_88] : memref<64x12xbf16, #tpu.memory_space<vmem>>, vector<64x12xbf16>
      %cst_89 = arith.constant dense<0.000000e+00> : vector<8x12xf32>
      %145 = tpu.matmul %125, %144, %cst_89 {dimension_numbers = #tpu.dot_dimension_numbers<[1], [0], [0], [1], [0, 0, 1, 1], [], []>} : vector<8x64xbf16>, vector<64x12xbf16>, vector<8x12xf32> -> vector<8x12xf32>
      %c0_90 = arith.constant 0 : index
      %c0_91 = arith.constant 0 : index
      %146 = vector.load %arg22[%c0_90, %c0_91] : memref<64x12xbf16, #tpu.memory_space<vmem>>, vector<64x12xbf16>
      %cst_92 = arith.constant dense<0.000000e+00> : vector<8x12xf32>
      %147 = tpu.matmul %126, %146, %cst_92 {dimension_numbers = #tpu.dot_dimension_numbers<[1], [0], [0], [1], [0, 0, 1, 1], [], []>} : vector<8x64xbf16>, vector<64x12xbf16>, vector<8x12xf32> -> vector<8x12xf32>
      %148 = arith.addf %145, %147 : vector<8x12xf32>
      %c0_93 = arith.constant 0 : index
      %c0_94 = arith.constant 0 : index
      %149 = vector.load %arg23[%c0_93, %c0_94] : memref<64x12xbf16, #tpu.memory_space<vmem>>, vector<64x12xbf16>
      %cst_95 = arith.constant dense<0.000000e+00> : vector<8x12xf32>
      %150 = tpu.matmul %127, %149, %cst_95 {dimension_numbers = #tpu.dot_dimension_numbers<[1], [0], [0], [1], [0, 0, 1, 1], [], []>} : vector<8x64xbf16>, vector<64x12xbf16>, vector<8x12xf32> -> vector<8x12xf32>
      %151 = arith.addf %148, %150 : vector<8x12xf32>
      %152 = arith.truncf %143 : vector<8x48xf32> to vector<8x48xbf16>
      %c0_96 = arith.constant 0 : index
      %c0_97 = arith.constant 0 : index
      %153 = vector.load %arg20[%c0_96, %c0_97] : memref<48x64xbf16, #tpu.memory_space<vmem>>, vector<48x64xbf16>
      %cst_98 = arith.constant dense<0.000000e+00> : vector<8x64xf32>
      %154 = tpu.matmul %152, %153, %cst_98 {dimension_numbers = #tpu.dot_dimension_numbers<[1], [0], [0], [1], [0, 0, 1, 1], [], []>} : vector<8x48xbf16>, vector<48x64xbf16>, vector<8x64xf32> -> vector<8x64xf32>
      %155 = arith.truncf %151 : vector<8x12xf32> to vector<8x12xbf16>
      %c0_99 = arith.constant 0 : index
      %c0_100 = arith.constant 0 : index
      %156 = vector.load %arg24[%c0_99, %c0_100] : memref<12x288xbf16, #tpu.memory_space<vmem>>, vector<12x288xbf16>
      %cst_101 = arith.constant dense<0.000000e+00> : vector<8x288xf32>
      %157 = tpu.matmul %155, %156, %cst_101 {dimension_numbers = #tpu.dot_dimension_numbers<[1], [0], [0], [1], [0, 0, 1, 1], [], []>} : vector<8x12xbf16>, vector<12x288xbf16>, vector<8x288xf32> -> vector<8x288xf32>
      %cst_102 = arith.constant dense<0xFF800000> : vector<8xf32>
      %158 = vector.multi_reduction <maximumf>, %135, %cst_102 [1] : vector<8x34xf32> to vector<8xf32>
      %159 = vector.shape_cast %158 : vector<8xf32> to vector<8x1xf32>
      %160 = vector.broadcast %159 : vector<8x1xf32> to vector<8x34xf32>
      %161 = arith.subf %135, %160 : vector<8x34xf32>
      %162 = math.exp %161 : vector<8x34xf32>
      %cst_103 = arith.constant dense<0.000000e+00> : vector<8xf32>
      %163 = vector.multi_reduction <add>, %162, %cst_103 [1] : vector<8x34xf32> to vector<8xf32>
      %164 = vector.shape_cast %163 : vector<8xf32> to vector<8x1xf32>
      %165 = math.log %164 : vector<8x1xf32>
      %166 = vector.broadcast %165 : vector<8x1xf32> to vector<8x34xf32>
      %167 = arith.subf %161, %166 : vector<8x34xf32>
      %cst_104 = arith.constant dense<0xFF800000> : vector<8xf32>
      %168 = vector.multi_reduction <maximumf>, %154, %cst_104 [1] : vector<8x64xf32> to vector<8xf32>
      %169 = vector.shape_cast %168 : vector<8xf32> to vector<8x1xf32>
      %170 = vector.broadcast %169 : vector<8x1xf32> to vector<8x64xf32>
      %171 = arith.subf %154, %170 : vector<8x64xf32>
      %172 = math.exp %171 : vector<8x64xf32>
      %cst_105 = arith.constant dense<0.000000e+00> : vector<8xf32>
      %173 = vector.multi_reduction <add>, %172, %cst_105 [1] : vector<8x64xf32> to vector<8xf32>
      %174 = vector.shape_cast %173 : vector<8xf32> to vector<8x1xf32>
      %175 = math.log %174 : vector<8x1xf32>
      %176 = vector.broadcast %175 : vector<8x1xf32> to vector<8x64xf32>
      %177 = arith.subf %171, %176 : vector<8x64xf32>
      %178 = vector.extract_strided_slice %167 {offsets = [0, 32], sizes = [8, 1], strides = [1, 1]} : vector<8x34xf32> to vector<8x1xf32>
      %179 = vector.broadcast %178 : vector<8x1xf32> to vector<8x64xf32>
      %180 = arith.addf %177, %179 : vector<8x64xf32>
      %cst_106 = arith.constant dense<0xFF800000> : vector<8xf32>
      %181 = vector.multi_reduction <maximumf>, %157, %cst_106 [1] : vector<8x288xf32> to vector<8xf32>
      %182 = vector.shape_cast %181 : vector<8xf32> to vector<8x1xf32>
      %183 = vector.broadcast %182 : vector<8x1xf32> to vector<8x288xf32>
      %184 = arith.subf %157, %183 : vector<8x288xf32>
      %185 = math.exp %184 : vector<8x288xf32>
      %cst_107 = arith.constant dense<0.000000e+00> : vector<8xf32>
      %186 = vector.multi_reduction <add>, %185, %cst_107 [1] : vector<8x288xf32> to vector<8xf32>
      %187 = vector.shape_cast %186 : vector<8xf32> to vector<8x1xf32>
      %188 = math.log %187 : vector<8x1xf32>
      %189 = vector.broadcast %188 : vector<8x1xf32> to vector<8x288xf32>
      %190 = arith.subf %184, %189 : vector<8x288xf32>
      %191 = vector.extract_strided_slice %167 {offsets = [0, 33], sizes = [8, 1], strides = [1, 1]} : vector<8x34xf32> to vector<8x1xf32>
      %192 = vector.broadcast %191 : vector<8x1xf32> to vector<8x288xf32>
      %193 = arith.addf %190, %192 : vector<8x288xf32>
      %194 = vector.extract_strided_slice %167 {offsets = [0, 0], sizes = [8, 32], strides = [1, 1]} : vector<8x34xf32> to vector<8x32xf32>
      %195 = tpu.concatenate %194, %180, %193 in 1 : vector<8x32xf32>, vector<8x64xf32>, vector<8x288xf32> -> vector<8x384xf32>
      %196 = math.exp %195 : vector<8x384xf32>
      %c0_108 = arith.constant 0 : index
      %c0_109 = arith.constant 0 : index
      %197 = vector.load %arg25[%c0_108, %c0_109] : memref<8x384xf32, #tpu.memory_space<vmem>>, vector<8x384xf32>
      tpu.vector_store %arg25[%c0_108, %c0_109], %196 {strides = array<i32>} : memref<8x384xf32, #tpu.memory_space<vmem>>, vector<8x384xf32>,
    } else {
    }
    return
  }
  func.func @transform_0(%arg0: i32) -> (i32, i32) {
    %c0_i32 = arith.constant 0 : i32
    %c0_i32_0 = arith.constant 0 : i32
    %c0_i32_1 = arith.constant 0 : i32
    return %c0_i32, %c0_i32_0 : i32, i32
  }
  func.func @transform_1(%arg0: i32) -> (i32, i32, i32) {
    %c0_i32 = arith.constant 0 : i32
    %c0_i32_0 = arith.constant 0 : i32
    %c0_i32_1 = arith.constant 0 : i32
    return %c0_i32, %arg0, %c0_i32_0 : i32, i32, i32
  }
  func.func @transform_2(%arg0: i32) -> (i32, i32, i32) {
    %c0_i32 = arith.constant 0 : i32
    %c0_i32_0 = arith.constant 0 : i32
    %c0_i32_1 = arith.constant 0 : i32
    return %c0_i32, %arg0, %c0_i32_0 : i32, i32, i32
  }
  func.func @transform_3(%arg0: i32) -> (i32, i32) {
    %c0_i32 = arith.constant 0 : i32
    %c0_i32_0 = arith.constant 0 : i32
    %c0_i32_1 = arith.constant 0 : i32
    return %c0_i32, %c0_i32_0 : i32, i32
  }
  func.func @transform_4(%arg0: i32) -> (i32, i32) {
    %c0_i32 = arith.constant 0 : i32
    %c0_i32_0 = arith.constant 0 : i32
    return %c0_i32, %arg0 : i32, i32
  }
  func.func @transform_5(%arg0: i32) -> (i32, i32) {
    %c0_i32 = arith.constant 0 : i32
    %c0_i32_0 = arith.constant 0 : i32
    %c0_i32_1 = arith.constant 0 : i32
    return %c0_i32, %c0_i32_0 : i32, i32
  }
  func.func @transform_6(%arg0: i32) -> (i32, i32) {
    %c0_i32 = arith.constant 0 : i32
    %c0_i32_0 = arith.constant 0 : i32
    %c0_i32_1 = arith.constant 0 : i32
    return %c0_i32, %c0_i32_0 : i32, i32
  }
  func.func @transform_7(%arg0: i32) -> (i32, i32) {
    %c0_i32 = arith.constant 0 : i32
    %c0_i32_0 = arith.constant 0 : i32
    %c0_i32_1 = arith.constant 0 : i32
    return %c0_i32, %c0_i32_0 : i32, i32
  }
  func.func @transform_8(%arg0: i32) -> (i32, i32) {
    %c0_i32 = arith.constant 0 : i32
    %c0_i32_0 = arith.constant 0 : i32
    %c0_i32_1 = arith.constant 0 : i32
    return %c0_i32, %c0_i32_0 : i32, i32
  }
  func.func @transform_9(%arg0: i32) -> (i32, i32) {
    %c0_i32 = arith.constant 0 : i32
    %c0_i32_0 = arith.constant 0 : i32
    %c0_i32_1 = arith.constant 0 : i32
    return %c0_i32, %c0_i32_0 : i32, i32
  }
  func.func @transform_10(%arg0: i32) -> (i32, i32) {
    %c0_i32 = arith.constant 0 : i32
    %c0_i32_0 = arith.constant 0 : i32
    %c0_i32_1 = arith.constant 0 : i32
    return %c0_i32, %c0_i32_0 : i32, i32
  }
  func.func @transform_11(%arg0: i32) -> (i32, i32) {
    %c0_i32 = arith.constant 0 : i32
    %c0_i32_0 = arith.constant 0 : i32
    %c0_i32_1 = arith.constant 0 : i32
    return %c0_i32, %c0_i32_0 : i32, i32
  }
  func.func @transform_12(%arg0: i32) -> (i32, i32) {
    %c0_i32 = arith.constant 0 : i32
    %c0_i32_0 = arith.constant 0 : i32
    %c0_i32_1 = arith.constant 0 : i32
    return %c0_i32, %c0_i32_0 : i32, i32
  }
  func.func @transform_13(%arg0: i32) -> (i32, i32) {
    %c0_i32 = arith.constant 0 : i32
    %c0_i32_0 = arith.constant 0 : i32
    %c0_i32_1 = arith.constant 0 : i32
    return %c0_i32, %c0_i32_0 : i32, i32
  }
  func.func @transform_14(%arg0: i32) -> (i32, i32) {
    %c0_i32 = arith.constant 0 : i32
    %c0_i32_0 = arith.constant 0 : i32
    %c0_i32_1 = arith.constant 0 : i32
    return %c0_i32, %c0_i32_0 : i32, i32
  }
  func.func @transform_15(%arg0: i32) -> (i32, i32) {
    %c0_i32 = arith.constant 0 : i32
    %c0_i32_0 = arith.constant 0 : i32
    %c0_i32_1 = arith.constant 0 : i32
    return %c0_i32, %c0_i32_0 : i32, i32
  }
  func.func @transform_16(%arg0: i32) -> (i32, i32) {
    %c0_i32 = arith.constant 0 : i32
    %c0_i32_0 = arith.constant 0 : i32
    %c0_i32_1 = arith.constant 0 : i32
    return %c0_i32, %c0_i32_0 : i32, i32
  }
  func.func @transform_17(%arg0: i32) -> (i32, i32) {
    %c0_i32 = arith.constant 0 : i32
    %c0_i32_0 = arith.constant 0 : i32
    %c0_i32_1 = arith.constant 0 : i32
    return %c0_i32, %c0_i32_0 : i32, i32
  }
  func.func @transform_18(%arg0: i32) -> (i32, i32) {
    %c0_i32 = arith.constant 0 : i32
    %c0_i32_0 = arith.constant 0 : i32
    %c0_i32_1 = arith.constant 0 : i32
    return %c0_i32, %c0_i32_0 : i32, i32
  }
  func.func @transform_19(%arg0: i32) -> (i32, i32) {
    %c0_i32 = arith.constant 0 : i32
    %c0_i32_0 = arith.constant 0 : i32
    %c0_i32_1 = arith.constant 0 : i32
    return %c0_i32, %c0_i32_0 : i32, i32
  }
  func.func @transform_20(%arg0: i32) -> (i32, i32) {
    %c0_i32 = arith.constant 0 : i32
    %c0_i32_0 = arith.constant 0 : i32
    %c0_i32_1 = arith.constant 0 : i32
    return %c0_i32, %c0_i32_0 : i32, i32
  }
  func.func @transform_21(%arg0: i32) -> (i32, i32) {
    %c0_i32 = arith.constant 0 : i32
    %c0_i32_0 = arith.constant 0 : i32
    %c0_i32_1 = arith.constant 0 : i32
    return %c0_i32, %c0_i32_0 : i32, i32
  }
  func.func @transform_22(%arg0: i32) -> (i32, i32) {
    %c0_i32 = arith.constant 0 : i32
    %c0_i32_0 = arith.constant 0 : i32
    %c0_i32_1 = arith.constant 0 : i32
    return %c0_i32, %c0_i32_0 : i32, i32
  }
  func.func @transform_23(%arg0: i32) -> (i32, i32) {
    %c0_i32 = arith.constant 0 : i32
    %c0_i32_0 = arith.constant 0 : i32
    %c0_i32_1 = arith.constant 0 : i32
    return %c0_i32, %c0_i32_0 : i32, i32
  }
  func.func @transform_24(%arg0: i32) -> (i32, i32) {
    %c0_i32 = arith.constant 0 : i32
    %c0_i32_0 = arith.constant 0 : i32
    %c0_i32_1 = arith.constant 0 : i32
    return %c0_i32, %c0_i32_0 : i32, i32
  }
  func.func @transform_25(%arg0: i32) -> (i32, i32) {
    %c0_i32 = arith.constant 0 : i32
    %c0_i32_0 = arith.constant 0 : i32
    %c0_i32_1 = arith.constant 0 : i32
    return %c0_i32, %c0_i32_0 : i32, i32
  }
  func.func @transform_26(%arg0: i32) -> (i32, i32) {
    %c0_i32 = arith.constant 0 : i32
    %c0_i32_0 = arith.constant 0 : i32
    %c0_i32_1 = arith.constant 0 : i32
    return %c0_i32, %c0_i32_0 : i32, i32
  }
  func.func @transform_27(%arg0: i32) -> (i32, i32) {
    %c0_i32 = arith.constant 0 : i32
    %c0_i32_0 = arith.constant 0 : i32
    %c0_i32_1 = arith.constant 0 : i32
    return %c0_i32, %c0_i32_0 : i32, i32
  }
}

</mosaic_0001>

<llo_original>
// kernel: tpu_custom_call.1
$region0: #{tpu_custom_call.1}
  #allocation0 [shape = 'u32[]', space=smem, size = 0x4, offset = 0x4, fixed_abs, tag = 'smem constant byte address 0x4 - core index']
  #allocation1 [shape = 'u32[144,128]{1,0:T(1,128)}', space=vmem, size = 0x12000, scoped, tag = 'internal scratch']
  #allocation2 [shape = 'f32[8,64]{1,0:T(8,128)}', space=vmem, size = 0x1000, scoped, tag = 'scratch operand']
  #allocation3 [shape = 'f32[8,1]{1,0:T(8,128)}', space=vmem, size = 0x1000, scoped, tag = 'scratch operand']
  #allocation4 [shape = 'f32[8,1]{1,0:T(8,128)}', space=vmem, size = 0x1000, scoped, tag = 'scratch operand']
  #allocation5 [shape = 'f32[8,64]{1,0:T(8,128)}', space=vmem, size = 0x1000, scoped, tag = 'scratch operand']
  #allocation6 [shape = 'f32[8,256]{1,0:T(8,128)}', space=vmem, size = 0x2000, scoped, tag = 'scratch operand']
  %s0 = inlined_call_operand.vmem [shape: f32[8,64], index: 0, kind: input, shape index: {}]
  %s1 = inlined_call_operand.vmem [shape: bf16[8,256,64], index: 1, kind: input, shape index: {}]
  %s2 = inlined_call_operand.vmem [shape: bf16[8,256,64], index: 2, kind: input, shape index: {}]
  %s3 = inlined_call_operand.hbm [shape: f32[8,64], index: 3, kind: input, shape index: {}, may-alias: {3,27}]
  %s4 = inlined_call_operand.vmem [shape: f32[8,256], index: 4, kind: input, shape index: {}]
  %s5 = inlined_call_operand.vmem [shape: f32[8,1], index: 5, kind: input, shape index: {}]
  %s6 = inlined_call_operand.hbm [shape: f32[8,64], index: 6, kind: input, shape index: {}, may-alias: {6,26}]
  %s7 = inlined_call_operand.vmem [shape: f32[64,64], index: 7, kind: input, shape index: {}]
  %s8 = inlined_call_operand.vmem [shape: f32[1,64], index: 8, kind: input, shape index: {}]
  %s9 = inlined_call_operand.vmem [shape: f32[64,192], index: 9, kind: input, shape index: {}]
  %s10 = inlined_call_operand.vmem [shape: f32[1,192], index: 10, kind: input, shape index: {}]
  %s11 = inlined_call_operand.vmem [shape: f32[64,192], index: 11, kind: input, shape index: {}]
  %s12 = inlined_call_operand.vmem [shape: f32[1,192], index: 12, kind: input, shape index: {}]
  %s13 = inlined_call_operand.vmem [shape: bf16[64,34], index: 13, kind: input, shape index: {}]
  %s14 = inlined_call_operand.vmem [shape: bf16[64,34], index: 14, kind: input, shape index: {}]
  %s15 = inlined_call_operand.vmem [shape: bf16[64,34], index: 15, kind: input, shape index: {}]
  %s16 = inlined_call_operand.vmem [shape: bf16[64,48], index: 16, kind: input, shape index: {}]
  %s17 = inlined_call_operand.vmem [shape: bf16[64,48], index: 17, kind: input, shape index: {}]
  %s18 = inlined_call_operand.vmem [shape: bf16[64,48], index: 18, kind: input, shape index: {}]
  %s19 = inlined_call_operand.vmem [shape: bf16[48,64], index: 19, kind: input, shape index: {}]
  %s20 = inlined_call_operand.vmem [shape: bf16[64,12], index: 20, kind: input, shape index: {}]
  %s21 = inlined_call_operand.vmem [shape: bf16[64,12], index: 21, kind: input, shape index: {}]
  %s22 = inlined_call_operand.vmem [shape: bf16[64,12], index: 22, kind: input, shape index: {}]
  %s23 = inlined_call_operand.vmem [shape: bf16[12,288], index: 23, kind: input, shape index: {}]
  %s24 = inlined_call_operand.hbm [shape: f32[8,384], index: 24, kind: output, shape index: {0}]
  %s25 = inlined_call_operand.hbm [shape: f32[8,256], index: 25, kind: output, shape index: {1}]
  %s26 = inlined_call_operand.hbm [shape: f32[8,64], index: 26, kind: output, shape index: {2}, may-alias: {6,26}]
  %s27 = inlined_call_operand.hbm [shape: f32[8,64], index: 27, kind: output, shape index: {3}, may-alias: {3,27}]
  %28 = xla_tuple %s24, %s25, %s26, %s27
  %s29 = sld [smem:[#allocation0]]
  $region251: #{tpu_custom_call.1} parent=0
    _
  %s31 = ssub.s32 1, %s29
  %s32 = scalar_select 0, %s31, %s29
  $region1: #{tpu_custom_call.1} parent=0
    #allocation7 [shape = 'u8[524288]{0}', space=vmem, size = 0x80000, scoped, tag = 'input window, operand 1']
    #allocation8 [shape = 'u8[524288]{0}', space=vmem, size = 0x80000, scoped, tag = 'input window, operand 2']
    #allocation9 [shape = 'u8[4096]{0}', space=vmem, size = 0x1000, scoped, tag = 'input window, operand 3, single buffered']
    #allocation10 [shape = 's32[2]{0}', space=sflag, size = 0x8, scoped, tag = 'scoped memory for tpu_custom_call.1']
    #allocation11 [shape = 's32[2]{0}', space=sflag, size = 0x8, scoped, tag = 'scoped memory for tpu_custom_call.1']
    #allocation12 [shape = 'u8[4096]{0}', space=vmem, size = 0x1000, scoped, tag = 'input window, operand 6, single buffered']
    #allocation13 [shape = 's32[1]{0}', space=sflag, size = 0x4, scoped, tag = 'scoped memory for tpu_custom_call.1']
    #allocation14 [shape = 'u8[12288]{0}', space=vmem, size = 0x3000, scoped, tag = 'output window, operand 0, single buffered']
    #allocation15 [shape = 'u8[8192]{0}', space=vmem, size = 0x2000, scoped, tag = 'output window, operand 1, single buffered']
    #allocation16 [shape = 's32[1]{0}', space=sflag, size = 0x4, scoped, tag = 'scoped memory for tpu_custom_call.1']
    #allocation17 [shape = 'u8[4096]{0}', space=vmem, size = 0x1000, scoped, tag = 'output window, operand 2, single buffered']
    #allocation18 [shape = 'u8[4096]{0}', space=vmem, size = 0x1000, scoped, tag = 'output window, operand 3, single buffered']
    #allocation19 [shape = 's32[1]{0}', space=sflag, size = 0x4, scoped, tag = 'scoped memory for tpu_custom_call.1']
    %33 = vsyncpa [#allocation10], 0
    %34 = vsyncpa [#allocation13], 0
    %35 = vsyncpa [#allocation11], 0
    %36 = vsyncpa [#allocation16], 0
    %37 = vsyncpa [#allocation19], 0
    loop: start=0, step=1, limit=4
    $region2: #{tpu_custom_call.1} parent=1 // loop_pre_header
      _
    $region3: #{tpu_custom_call.1} parent=1 // loop_header
      %s39 = sphi 0, %s43
      %p40 = scmp.ge.s32.totalorder %s39, 4
      %s47 = sphi 0, %s47
      %s49 = sphi 0, %s47
      %s50 = sphi 0, %s49
      %s64 = sphi 0, %s50
      %s70 = sphi 0, %s72
      %s73 = sphi 0, %s70
      %s74 = sphi 0, %s73
      %s90 = sphi 0, %s74
      %s96 = sphi 0, %s98
      %s99 = sphi 0, %s96
      %s100 = sphi 0, %s99
      %s116 = sphi 0, %s100
      %s120 = sphi 0, %s120
      %s122 = sphi 0, %s120
      %s123 = sphi 0, %s122
      %s137 = sphi 0, %s123
      %s143 = sphi 0, %s145
      %s146 = sphi 0, %s143
      %s147 = sphi 0, %s146
      %s163 = sphi 0, %s147
      %s167 = sphi 0, %s167
      %s169 = sphi 0, %s167
      %s170 = sphi 0, %s169
      %s184 = sphi 0, %s170
      %s188 = sphi 0, %s188
      %s190 = sphi 0, %s188
      %s191 = sphi 0, %s190
      %s205 = sphi 0, %s191
      %s209 = sphi 0, %s209
      %s211 = sphi 0, %s209
      %s212 = sphi 0, %s211
      %s226 = sphi 0, %s212
      %s230 = sphi 0, %s230
      %s232 = sphi 0, %s230
      %s233 = sphi 0, %s232
      %s247 = sphi 0, %s233
      %s251 = sphi 0, %s251
      %s253 = sphi 0, %s251
      %s254 = sphi 0, %s253
      %s268 = sphi 0, %s254
      %s272 = sphi 0, %s272
      %s274 = sphi 0, %s272
      %s275 = sphi 0, %s274
      %s289 = sphi 0, %s275
      %s293 = sphi 0, %s293
      %s295 = sphi 0, %s293
      %s296 = sphi 0, %s295
      %s310 = sphi 0, %s296
      %s314 = sphi 0, %s314
      %s316 = sphi 0, %s314
      %s317 = sphi 0, %s316
      %s331 = sphi 0, %s317
      %s335 = sphi 0, %s335
      %s337 = sphi 0, %s335
      %s338 = sphi 0, %s337
      %s352 = sphi 0, %s338
      %s356 = sphi 0, %s356
      %s358 = sphi 0, %s356
      %s359 = sphi 0, %s358
      %s373 = sphi 0, %s359
      %s377 = sphi 0, %s377
      %s379 = sphi 0, %s377
      %s380 = sphi 0, %s379
      %s394 = sphi 0, %s380
      %s398 = sphi 0, %s398
      %s400 = sphi 0, %s398
      %s401 = sphi 0, %s400
      %s415 = sphi 0, %s401
      %s419 = sphi 0, %s419
      %s421 = sphi 0, %s419
      %s422 = sphi 0, %s421
      %s436 = sphi 0, %s422
      %s440 = sphi 0, %s440
      %s442 = sphi 0, %s440
      %s443 = sphi 0, %s442
      %s457 = sphi 0, %s443
      %s461 = sphi 0, %s461
      %s463 = sphi 0, %s461
      %s464 = sphi 0, %s463
      %s478 = sphi 0, %s464
      %s482 = sphi 0, %s482
      %s484 = sphi 0, %s482
      %s485 = sphi 0, %s484
      %s499 = sphi 0, %s485
      %s503 = sphi 0, %s503
      %s505 = sphi 0, %s503
      %s506 = sphi 0, %s505
      %s520 = sphi 0, %s506
      %s524 = sphi 0, %s524
      %s526 = sphi 0, %s524
      %s527 = sphi 0, %s526
      %s541 = sphi 0, %s527
      %s545 = sphi 0, %s545
      %s547 = sphi 0, %s545
      %s548 = sphi 0, %s547
      %s562 = sphi 0, %s548
      %s566 = sphi 0, %s566
      %s568 = sphi 0, %s566
      %s569 = sphi 0, %s568
      %s583 = sphi 0, %s569
      %s587 = sphi 0, %s587
      %s589 = sphi 0, %s587
      %s590 = sphi 0, %s589
      %s604 = sphi 0, %s590
      %s608 = sphi 0, %s608
      %s610 = sphi 0, %s608
      %s611 = sphi 0, %s610
      %s625 = sphi 0, %s611
      %s629 = sphi 0, %s629
      %s631 = sphi 0, %s629
      %s632 = sphi 0, %s631
      %s646 = sphi 0, %s632
    $region4: #{tpu_custom_call.1} parent=1 // loop_header_branch
      %42 = sbr.rel (%p40) target = $region8
    $region5: #{tpu_custom_call.1} parent=1 // loop_body
      %s44 = ssub.s32 %s39, 1
      %s45 = ssub.s32 %s39, 2
      %s46 = sadd.s32 %s39, 1
      %s48 = sadd.s32 %s47, 1
      %p51 = scmp.eq.s32.totalorder %s39, 1
      %p52 = scmp.ne.s32.totalorder %s47, %s49
      %p53 = scmp.eq.s32.totalorder %s39, 0
      %p54 = por %p52, %p53
      %p55 = scmp.ne.s32.totalorder %s47, %s49
      %p56 = scmp.eq.s32.totalorder %s44, 1
      %p57 = por %p55, %p56
      %p58 = scmp.ne.s32.totalorder %s49, %s50
      %p59 = scmp.eq.s32.totalorder %s44, 0
      %p60 = por %p58, %p59
      %p61 = scmp.ne.s32.totalorder %s49, %s50
      %p62 = scmp.eq.s32.totalorder %s45, 1
      %p63 = por %p61, %p62
      %p65 = scmp.ne.s32.totalorder %s50, %s64
      %p66 = scmp.eq.s32.totalorder %s45, 0
      %p67 = por %p65, %p66
      %s68 = ssub.s32 %s39, %s46
      %p69 = scmp.eq.s32.totalorder %s68, 0
      %s71 = sadd.s32 %s70, 1
      %s72 = scalar_select %p69, %s70, %s71
      %p75 = pneg %p69
      %p76 = scmp.eq.s32.totalorder %s39, 1
      %p77 = por %p75, %p76
      %p78 = scmp.ne.s32.totalorder %s70, %s73
      %p79 = scmp.eq.s32.totalorder %s39, 0
      %p80 = por %p78, %p79
      %p81 = scmp.ne.s32.totalorder %s70, %s73
      %p82 = scmp.eq.s32.totalorder %s44, 1
      %p83 = por %p81, %p82
      %p84 = scmp.ne.s32.totalorder %s73, %s74
      %p85 = scmp.eq.s32.totalorder %s44, 0
      %p86 = por %p84, %p85
      %p87 = scmp.ne.s32.totalorder %s73, %s74
      %p88 = scmp.eq.s32.totalorder %s45, 1
      %p89 = por %p87, %p88
      %p91 = scmp.ne.s32.totalorder %s74, %s90
      %p92 = scmp.eq.s32.totalorder %s45, 0
      %p93 = por %p91, %p92
      %s94 = ssub.s32 %s39, %s46
      %p95 = scmp.eq.s32.totalorder %s94, 0
      %s97 = sadd.s32 %s96, 1
      %s98 = scalar_select %p95, %s96, %s97
      %p101 = pneg %p95
      %p102 = scmp.eq.s32.totalorder %s39, 1
      %p103 = por %p101, %p102
      %p104 = scmp.ne.s32.totalorder %s96, %s99
      %p105 = scmp.eq.s32.totalorder %s39, 0
      %p106 = por %p104, %p105
      %p107 = scmp.ne.s32.totalorder %s96, %s99
      %p108 = scmp.eq.s32.totalorder %s44, 1
      %p109 = por %p107, %p108
      %p110 = scmp.ne.s32.totalorder %s99, %s100
      %p111 = scmp.eq.s32.totalorder %s44, 0
      %p112 = por %p110, %p111
      %p113 = scmp.ne.s32.totalorder %s99, %s100
      %p114 = scmp.eq.s32.totalorder %s45, 1
      %p115 = por %p113, %p114
      %p117 = scmp.ne.s32.totalorder %s100, %s116
      %p118 = scmp.eq.s32.totalorder %s45, 0
      %p119 = por %p117, %p118
      %s121 = sadd.s32 %s120, 1
      %p124 = scmp.eq.s32.totalorder %s39, 1
      %p125 = scmp.ne.s32.totalorder %s120, %s122
      %p126 = scmp.eq.s32.totalorder %s39, 0
      %p127 = por %p125, %p126
      %p128 = scmp.ne.s32.totalorder %s120, %s122
      %p129 = scmp.eq.s32.totalorder %s44, 1
      %p130 = por %p128, %p129
      %p131 = scmp.ne.s32.totalorder %s122, %s123
      %p132 = scmp.eq.s32.totalorder %s44, 0
      %p133 = por %p131, %p132
      %p134 = scmp.ne.s32.totalorder %s122, %s123
      %p135 = scmp.eq.s32.totalorder %s45, 1
      %p136 = por %p134, %p135
      %p138 = scmp.ne.s32.totalorder %s123, %s137
      %p139 = scmp.eq.s32.totalorder %s45, 0
      %p140 = por %p138, %p139
      %s141 = ssub.s32 %s39, %s46
      %p142 = scmp.eq.s32.totalorder %s141, 0
      %s144 = sadd.s32 %s143, 1
      %s145 = scalar_select %p142, %s143, %s144
      %p148 = pneg %p142
      %p149 = scmp.eq.s32.totalorder %s39, 1
      %p150 = por %p148, %p149
      %p151 = scmp.ne.s32.totalorder %s143, %s146
      %p152 = scmp.eq.s32.totalorder %s39, 0
      %p153 = por %p151, %p152
      %p154 = scmp.ne.s32.totalorder %s143, %s146
      %p155 = scmp.eq.s32.totalorder %s44, 1
      %p156 = por %p154, %p155
      %p157 = scmp.ne.s32.totalorder %s146, %s147
      %p158 = scmp.eq.s32.totalorder %s44, 0
      %p159 = por %p157, %p158
      %p160 = scmp.ne.s32.totalorder %s146, %s147
      %p161 = scmp.eq.s32.totalorder %s45, 1
      %p162 = por %p160, %p161
      %p164 = scmp.ne.s32.totalorder %s147, %s163
      %p165 = scmp.eq.s32.totalorder %s45, 0
      %p166 = por %p164, %p165
      %s168 = sadd.s32 %s167, 1
      %p171 = scmp.eq.s32.totalorder %s39, 1
      %p172 = scmp.ne.s32.totalorder %s167, %s169
      %p173 = scmp.eq.s32.totalorder %s39, 0
      %p174 = por %p172, %p173
      %p175 = scmp.ne.s32.totalorder %s167, %s169
      %p176 = scmp.eq.s32.totalorder %s44, 1
      %p177 = por %p175, %p176
      %p178 = scmp.ne.s32.totalorder %s169, %s170
      %p179 = scmp.eq.s32.totalorder %s44, 0
      %p180 = por %p178, %p179
      %p181 = scmp.ne.s32.totalorder %s169, %s170
      %p182 = scmp.eq.s32.totalorder %s45, 1
      %p183 = por %p181, %p182
      %p185 = scmp.ne.s32.totalorder %s170, %s184
      %p186 = scmp.eq.s32.totalorder %s45, 0
      %p187 = por %p185, %p186
      %s189 = sadd.s32 %s188, 1
      %p192 = scmp.eq.s32.totalorder %s39, 1
      %p193 = scmp.ne.s32.totalorder %s188, %s190
      %p194 = scmp.eq.s32.totalorder %s39, 0
      %p195 = por %p193, %p194
      %p196 = scmp.ne.s32.totalorder %s188, %s190
      %p197 = scmp.eq.s32.totalorder %s44, 1
      %p198 = por %p196, %p197
      %p199 = scmp.ne.s32.totalorder %s190, %s191
      %p200 = scmp.eq.s32.totalorder %s44, 0
      %p201 = por %p199, %p200
      %p202 = scmp.ne.s32.totalorder %s190, %s191
      %p203 = scmp.eq.s32.totalorder %s45, 1
      %p204 = por %p202, %p203
      %p206 = scmp.ne.s32.totalorder %s191, %s205
      %p207 = scmp.eq.s32.totalorder %s45, 0
      %p208 = por %p206, %p207
      %s210 = sadd.s32 %s209, 1
      %p213 = scmp.eq.s32.totalorder %s39, 1
      %p214 = scmp.ne.s32.totalorder %s209, %s211
      %p215 = scmp.eq.s32.totalorder %s39, 0
      %p216 = por %p214, %p215
      %p217 = scmp.ne.s32.totalorder %s209, %s211
      %p218 = scmp.eq.s32.totalorder %s44, 1
      %p219 = por %p217, %p218
      %p220 = scmp.ne.s32.totalorder %s211, %s212
      %p221 = scmp.eq.s32.totalorder %s44, 0
      %p222 = por %p220, %p221
      %p223 = scmp.ne.s32.totalorder %s211, %s212
      %p224 = scmp.eq.s32.totalorder %s45, 1
      %p225 = por %p223, %p224
      %p227 = scmp.ne.s32.totalorder %s212, %s226
      %p228 = scmp.eq.s32.totalorder %s45, 0
      %p229 = por %p227, %p228
      %s231 = sadd.s32 %s230, 1
      %p234 = scmp.eq.s32.totalorder %s39, 1
      %p235 = scmp.ne.s32.totalorder %s230, %s232
      %p236 = scmp.eq.s32.totalorder %s39, 0
      %p237 = por %p235, %p236
      %p238 = scmp.ne.s32.totalorder %s230, %s232
      %p239 = scmp.eq.s32.totalorder %s44, 1
      %p240 = por %p238, %p239
      %p241 = scmp.ne.s32.totalorder %s232, %s233
      %p242 = scmp.eq.s32.totalorder %s44, 0
      %p243 = por %p241, %p242
      %p244 = scmp.ne.s32.totalorder %s232, %s233
      %p245 = scmp.eq.s32.totalorder %s45, 1
      %p246 = por %p244, %p245
      %p248 = scmp.ne.s32.totalorder %s233, %s247
      %p249 = scmp.eq.s32.totalorder %s45, 0
      %p250 = por %p248, %p249
      %s252 = sadd.s32 %s251, 1
      %p255 = scmp.eq.s32.totalorder %s39, 1
      %p256 = scmp.ne.s32.totalorder %s251, %s253
      %p257 = scmp.eq.s32.totalorder %s39, 0
      %p258 = por %p256, %p257
      %p259 = scmp.ne.s32.totalorder %s251, %s253
      %p260 = scmp.eq.s32.totalorder %s44, 1
      %p261 = por %p259, %p260
      %p262 = scmp.ne.s32.totalorder %s253, %s254
      %p263 = scmp.eq.s32.totalorder %s44, 0
      %p264 = por %p262, %p263
      %p265 = scmp.ne.s32.totalorder %s253, %s254
      %p266 = scmp.eq.s32.totalorder %s45, 1
      %p267 = por %p265, %p266
      %p269 = scmp.ne.s32.totalorder %s254, %s268
      %p270 = scmp.eq.s32.totalorder %s45, 0
      %p271 = por %p269, %p270
      %s273 = sadd.s32 %s272, 1
      %p276 = scmp.eq.s32.totalorder %s39, 1
      %p277 = scmp.ne.s32.totalorder %s272, %s274
      %p278 = scmp.eq.s32.totalorder %s39, 0
      %p279 = por %p277, %p278
      %p280 = scmp.ne.s32.totalorder %s272, %s274
      %p281 = scmp.eq.s32.totalorder %s44, 1
      %p282 = por %p280, %p281
      %p283 = scmp.ne.s32.totalorder %s274, %s275
      %p284 = scmp.eq.s32.totalorder %s44, 0
      %p285 = por %p283, %p284
      %p286 = scmp.ne.s32.totalorder %s274, %s275
      %p287 = scmp.eq.s32.totalorder %s45, 1
      %p288 = por %p286, %p287
      %p290 = scmp.ne.s32.totalorder %s275, %s289
      %p291 = scmp.eq.s32.totalorder %s45, 0
      %p292 = por %p290, %p291
      %s294 = sadd.s32 %s293, 1
      %p297 = scmp.eq.s32.totalorder %s39, 1
      %p298 = scmp.ne.s32.totalorder %s293, %s295
      %p299 = scmp.eq.s32.totalorder %s39, 0
      %p300 = por %p298, %p299
      %p301 = scmp.ne.s32.totalorder %s293, %s295
      %p302 = scmp.eq.s32.totalorder %s44, 1
      %p303 = por %p301, %p302
      %p304 = scmp.ne.s32.totalorder %s295, %s296
      %p305 = scmp.eq.s32.totalorder %s44, 0
      %p306 = por %p304, %p305
      %p307 = scmp.ne.s32.totalorder %s295, %s296
      %p308 = scmp.eq.s32.totalorder %s45, 1
      %p309 = por %p307, %p308
      %p311 = scmp.ne.s32.totalorder %s296, %s310
      %p312 = scmp.eq.s32.totalorder %s45, 0
      %p313 = por %p311, %p312
      %s315 = sadd.s32 %s314, 1
      %p318 = scmp.eq.s32.totalorder %s39, 1
      %p319 = scmp.ne.s32.totalorder %s314, %s316
      %p320 = scmp.eq.s32.totalorder %s39, 0
      %p321 = por %p319, %p320
      %p322 = scmp.ne.s32.totalorder %s314, %s316
      %p323 = scmp.eq.s32.totalorder %s44, 1
      %p324 = por %p322, %p323
      %p325 = scmp.ne.s32.totalorder %s316, %s317
      %p326 = scmp.eq.s32.totalorder %s44, 0
      %p327 = por %p325, %p326
      %p328 = scmp.ne.s32.totalorder %s316, %s317
      %p329 = scmp.eq.s32.totalorder %s45, 1
      %p330 = por %p328, %p329
      %p332 = scmp.ne.s32.totalorder %s317, %s331
      %p333 = scmp.eq.s32.totalorder %s45, 0
      %p334 = por %p332, %p333
      %s336 = sadd.s32 %s335, 1
      %p339 = scmp.eq.s32.totalorder %s39, 1
      %p340 = scmp.ne.s32.totalorder %s335, %s337
      %p341 = scmp.eq.s32.totalorder %s39, 0
      %p342 = por %p340, %p341
      %p343 = scmp.ne.s32.totalorder %s335, %s337
      %p344 = scmp.eq.s32.totalorder %s44, 1
      %p345 = por %p343, %p344
      %p346 = scmp.ne.s32.totalorder %s337, %s338
      %p347 = scmp.eq.s32.totalorder %s44, 0
      %p348 = por %p346, %p347
      %p349 = scmp.ne.s32.totalorder %s337, %s338
      %p350 = scmp.eq.s32.totalorder %s45, 1
      %p351 = por %p349, %p350
      %p353 = scmp.ne.s32.totalorder %s338, %s352
      %p354 = scmp.eq.s32.totalorder %s45, 0
      %p355 = por %p353, %p354
      %s357 = sadd.s32 %s356, 1
      %p360 = scmp.eq.s32.totalorder %s39, 1
      %p361 = scmp.ne.s32.totalorder %s356, %s358
      %p362 = scmp.eq.s32.totalorder %s39, 0
      %p363 = por %p361, %p362
      %p364 = scmp.ne.s32.totalorder %s356, %s358
      %p365 = scmp.eq.s32.totalorder %s44, 1
      %p366 = por %p364, %p365
      %p367 = scmp.ne.s32.totalorder %s358, %s359
      %p368 = scmp.eq.s32.totalorder %s44, 0
      %p369 = por %p367, %p368
      %p370 = scmp.ne.s32.totalorder %s358, %s359
      %p371 = scmp.eq.s32.totalorder %s45, 1
      %p372 = por %p370, %p371
      %p374 = scmp.ne.s32.totalorder %s359, %s373
      %p375 = scmp.eq.s32.totalorder %s45, 0
      %p376 = por %p374, %p375
      %s378 = sadd.s32 %s377, 1
      %p381 = scmp.eq.s32.totalorder %s39, 1
      %p382 = scmp.ne.s32.totalorder %s377, %s379
      %p383 = scmp.eq.s32.totalorder %s39, 0
      %p384 = por %p382, %p383
      %p385 = scmp.ne.s32.totalorder %s377, %s379
      %p386 = scmp.eq.s32.totalorder %s44, 1
      %p387 = por %p385, %p386
      %p388 = scmp.ne.s32.totalorder %s379, %s380
      %p389 = scmp.eq.s32.totalorder %s44, 0
      %p390 = por %p388, %p389
      %p391 = scmp.ne.s32.totalorder %s379, %s380
      %p392 = scmp.eq.s32.totalorder %s45, 1
      %p393 = por %p391, %p392
      %p395 = scmp.ne.s32.totalorder %s380, %s394
      %p396 = scmp.eq.s32.totalorder %s45, 0
      %p397 = por %p395, %p396
      %s399 = sadd.s32 %s398, 1
      %p402 = scmp.eq.s32.totalorder %s39, 1
      %p403 = scmp.ne.s32.totalorder %s398, %s400
      %p404 = scmp.eq.s32.totalorder %s39, 0
      %p405 = por %p403, %p404
      %p406 = scmp.ne.s32.totalorder %s398, %s400
      %p407 = scmp.eq.s32.totalorder %s44, 1
      %p408 = por %p406, %p407
      %p409 = scmp.ne.s32.totalorder %s400, %s401
      %p410 = scmp.eq.s32.totalorder %s44, 0
      %p411 = por %p409, %p410
      %p412 = scmp.ne.s32.totalorder %s400, %s401
      %p413 = scmp.eq.s32.totalorder %s45, 1
      %p414 = por %p412, %p413
      %p416 = scmp.ne.s32.totalorder %s401, %s415
      %p417 = scmp.eq.s32.totalorder %s45, 0
      %p418 = por %p416, %p417
      %s420 = sadd.s32 %s419, 1
      %p423 = scmp.eq.s32.totalorder %s39, 1
      %p424 = scmp.ne.s32.totalorder %s419, %s421
      %p425 = scmp.eq.s32.totalorder %s39, 0
      %p426 = por %p424, %p425
      %p427 = scmp.ne.s32.totalorder %s419, %s421
      %p428 = scmp.eq.s32.totalorder %s44, 1
      %p429 = por %p427, %p428
      %p430 = scmp.ne.s32.totalorder %s421, %s422
      %p431 = scmp.eq.s32.totalorder %s44, 0
      %p432 = por %p430, %p431
      %p433 = scmp.ne.s32.totalorder %s421, %s422
      %p434 = scmp.eq.s32.totalorder %s45, 1
      %p435 = por %p433, %p434
      %p437 = scmp.ne.s32.totalorder %s422, %s436
      %p438 = scmp.eq.s32.totalorder %s45, 0
      %p439 = por %p437, %p438
      %s441 = sadd.s32 %s440, 1
      %p444 = scmp.eq.s32.totalorder %s39, 1
      %p445 = scmp.ne.s32.totalorder %s440, %s442
      %p446 = scmp.eq.s32.totalorder %s39, 0
      %p447 = por %p445, %p446
      %p448 = scmp.ne.s32.totalorder %s440, %s442
      %p449 = scmp.eq.s32.totalorder %s44, 1
      %p450 = por %p448, %p449
      %p451 = scmp.ne.s32.totalorder %s442, %s443
      %p452 = scmp.eq.s32.totalorder %s44, 0
      %p453 = por %p451, %p452
      %p454 = scmp.ne.s32.totalorder %s442, %s443
      %p455 = scmp.eq.s32.totalorder %s45, 1
      %p456 = por %p454, %p455
      %p458 = scmp.ne.s32.totalorder %s443, %s457
      %p459 = scmp.eq.s32.totalorder %s45, 0
      %p460 = por %p458, %p459
      %s462 = sadd.s32 %s461, 1
      %p465 = scmp.eq.s32.totalorder %s39, 1
      %p466 = scmp.ne.s32.totalorder %s461, %s463
      %p467 = scmp.eq.s32.totalorder %s39, 0
      %p468 = por %p466, %p467
      %p469 = scmp.ne.s32.totalorder %s461, %s463
      %p470 = scmp.eq.s32.totalorder %s44, 1
      %p471 = por %p469, %p470
      %p472 = scmp.ne.s32.totalorder %s463, %s464
      %p473 = scmp.eq.s32.totalorder %s44, 0
      %p474 = por %p472, %p473
      %p475 = scmp.ne.s32.totalorder %s463, %s464
      %p476 = scmp.eq.s32.totalorder %s45, 1
      %p477 = por %p475, %p476
      %p479 = scmp.ne.s32.totalorder %s464, %s478
      %p480 = scmp.eq.s32.totalorder %s45, 0
      %p481 = por %p479, %p480
      %s483 = sadd.s32 %s482, 1
      %p486 = scmp.eq.s32.totalorder %s39, 1
      %p487 = scmp.ne.s32.totalorder %s482, %s484
      %p488 = scmp.eq.s32.totalorder %s39, 0
      %p489 = por %p487, %p488
      %p490 = scmp.ne.s32.totalorder %s482, %s484
      %p491 = scmp.eq.s32.totalorder %s44, 1
      %p492 = por %p490, %p491
      %p493 = scmp.ne.s32.totalorder %s484, %s485
      %p494 = scmp.eq.s32.totalorder %s44, 0
      %p495 = por %p493, %p494
      %p496 = scmp.ne.s32.totalorder %s484, %s485
      %p497 = scmp.eq.s32.totalorder %s45, 1
      %p498 = por %p496, %p497
      %p500 = scmp.ne.s32.totalorder %s485, %s499
      %p501 = scmp.eq.s32.totalorder %s45, 0
      %p502 = por %p500, %p501
      %s504 = sadd.s32 %s503, 1
      %p507 = scmp.eq.s32.totalorder %s39, 1
      %p508 = scmp.ne.s32.totalorder %s503, %s505
      %p509 = scmp.eq.s32.totalorder %s39, 0
      %p510 = por %p508, %p509
      %p511 = scmp.ne.s32.totalorder %s503, %s505
      %p512 = scmp.eq.s32.totalorder %s44, 1
      %p513 = por %p511, %p512
      %p514 = scmp.ne.s32.totalorder %s505, %s506
      %p515 = scmp.eq.s32.totalorder %s44, 0
      %p516 = por %p514, %p515
      %p517 = scmp.ne.s32.totalorder %s505, %s506
      %p518 = scmp.eq.s32.totalorder %s45, 1
      %p519 = por %p517, %p518
      %p521 = scmp.ne.s32.totalorder %s506, %s520
      %p522 = scmp.eq.s32.totalorder %s45, 0
      %p523 = por %p521, %p522
      %s525 = sadd.s32 %s524, 1
      %p528 = scmp.eq.s32.totalorder %s39, 1
      %p529 = scmp.ne.s32.totalorder %s524, %s526
      %p530 = scmp.eq.s32.totalorder %s39, 0
      %p531 = por %p529, %p530
      %p532 = scmp.ne.s32.totalorder %s524, %s526
      %p533 = scmp.eq.s32.totalorder %s44, 1
      %p534 = por %p532, %p533
      %p535 = scmp.ne.s32.totalorder %s526, %s527
      %p536 = scmp.eq.s32.totalorder %s44, 0
      %p537 = por %p535, %p536
      %p538 = scmp.ne.s32.totalorder %s526, %s527
      %p539 = scmp.eq.s32.totalorder %s45, 1
      %p540 = por %p538, %p539
      %p542 = scmp.ne.s32.totalorder %s527, %s541
      %p543 = scmp.eq.s32.totalorder %s45, 0
      %p544 = por %p542, %p543
      %s546 = sadd.s32 %s545, 1
      %p549 = scmp.eq.s32.totalorder %s39, 1
      %p550 = scmp.ne.s32.totalorder %s545, %s547
      %p551 = scmp.eq.s32.totalorder %s39, 0
      %p552 = por %p550, %p551
      %p553 = scmp.ne.s32.totalorder %s545, %s547
      %p554 = scmp.eq.s32.totalorder %s44, 1
      %p555 = por %p553, %p554
      %p556 = scmp.ne.s32.totalorder %s547, %s548
      %p557 = scmp.eq.s32.totalorder %s44, 0
      %p558 = por %p556, %p557
      %p559 = scmp.ne.s32.totalorder %s547, %s548
      %p560 = scmp.eq.s32.totalorder %s45, 1
      %p561 = por %p559, %p560
      %p563 = scmp.ne.s32.totalorder %s548, %s562
      %p564 = scmp.eq.s32.totalorder %s45, 0
      %p565 = por %p563, %p564
      %s567 = sadd.s32 %s566, 1
      %p570 = scmp.eq.s32.totalorder %s39, 1
      %p571 = scmp.ne.s32.totalorder %s566, %s568
      %p572 = scmp.eq.s32.totalorder %s39, 0
      %p573 = por %p571, %p572
      %p574 = scmp.ne.s32.totalorder %s566, %s568
      %p575 = scmp.eq.s32.totalorder %s44, 1
      %p576 = por %p574, %p575
      %p577 = scmp.ne.s32.totalorder %s568, %s569
      %p578 = scmp.eq.s32.totalorder %s44, 0
      %p579 = por %p577, %p578
      %p580 = scmp.ne.s32.totalorder %s568, %s569
      %p581 = scmp.eq.s32.totalorder %s45, 1
      %p582 = por %p580, %p581
      %p584 = scmp.ne.s32.totalorder %s569, %s583
      %p585 = scmp.eq.s32.totalorder %s45, 0
      %p586 = por %p584, %p585
      %s588 = sadd.s32 %s587, 1
      %p591 = scmp.eq.s32.totalorder %s39, 1
      %p592 = scmp.ne.s32.totalorder %s587, %s589
      %p593 = scmp.eq.s32.totalorder %s39, 0
      %p594 = por %p592, %p593
      %p595 = scmp.ne.s32.totalorder %s587, %s589
      %p596 = scmp.eq.s32.totalorder %s44, 1
      %p597 = por %p595, %p596
      %p598 = scmp.ne.s32.totalorder %s589, %s590
      %p599 = scmp.eq.s32.totalorder %s44, 0
      %p600 = por %p598, %p599
      %p601 = scmp.ne.s32.totalorder %s589, %s590
      %p602 = scmp.eq.s32.totalorder %s45, 1
      %p603 = por %p601, %p602
      %p605 = scmp.ne.s32.totalorder %s590, %s604
      %p606 = scmp.eq.s32.totalorder %s45, 0
      %p607 = por %p605, %p606
      %s609 = sadd.s32 %s608, 1
      %p612 = scmp.eq.s32.totalorder %s39, 1
      %p613 = scmp.ne.s32.totalorder %s608, %s610
      %p614 = scmp.eq.s32.totalorder %s39, 0
      %p615 = por %p613, %p614
      %p616 = scmp.ne.s32.totalorder %s608, %s610
      %p617 = scmp.eq.s32.totalorder %s44, 1
      %p618 = por %p616, %p617
      %p619 = scmp.ne.s32.totalorder %s610, %s611
      %p620 = scmp.eq.s32.totalorder %s44, 0
      %p621 = por %p619, %p620
      %p622 = scmp.ne.s32.totalorder %s610, %s611
      %p623 = scmp.eq.s32.totalorder %s45, 1
      %p624 = por %p622, %p623
      %p626 = scmp.ne.s32.totalorder %s611, %s625
      %p627 = scmp.eq.s32.totalorder %s45, 0
      %p628 = por %p626, %p627
      %s630 = sadd.s32 %s629, 1
      %p633 = scmp.eq.s32.totalorder %s39, 1
      %p634 = scmp.ne.s32.totalorder %s629, %s631
      %p635 = scmp.eq.s32.totalorder %s39, 0
      %p636 = por %p634, %p635
      %p637 = scmp.ne.s32.totalorder %s629, %s631
      %p638 = scmp.eq.s32.totalorder %s44, 1
      %p639 = por %p637, %p638
      %p640 = scmp.ne.s32.totalorder %s631, %s632
      %p641 = scmp.eq.s32.totalorder %s44, 0
      %p642 = por %p640, %p641
      %p643 = scmp.ne.s32.totalorder %s631, %s632
      %p644 = scmp.eq.s32.totalorder %s45, 1
      %p645 = por %p643, %p644
      %p647 = scmp.ne.s32.totalorder %s632, %s646
      %p648 = scmp.eq.s32.totalorder %s45, 0
      %p649 = por %p647, %p648
      %p650 = scmp.le.s32.totalorder 1, %s39
      %p651 = scmp.lt.s32.totalorder %s39, 3
      %p652 = pnand %p650, %p651
      %p653 = pneg %p652
      // Predicated region
      $region9: #{tpu_custom_call.1} parent=5 // pred_check
        _
      $region10: #{tpu_custom_call.1} parent=5 // pred_check_branch
        %655 = sbr.rel (%p652) target = $region12
      $region11: #{tpu_custom_call.1} parent=5 // pred_region
        %s656 = ssub.s32 %s39, 1
        // Predicated region
        $region13: #{tpu_custom_call.1} parent=11 // pred_check
          %p657 = pneg %p60
        $region14: #{tpu_custom_call.1} parent=11 // pred_check_branch
          %659 = sbr.rel (%p657) target = $region16
        $region15: #{tpu_custom_call.1} parent=11 // pred_region
          _
        $region16: #{tpu_custom_call.1} parent=11 // pred_fallthru
          _
        // Predicated region
        $region17: #{tpu_custom_call.1} parent=11 // pred_check
          %p660 = pneg %p133
        $region18: #{tpu_custom_call.1} parent=11 // pred_check_branch
          %662 = sbr.rel (%p660) target = $region20
        $region19: #{tpu_custom_call.1} parent=11 // pred_region
          %s664 = ssub.s32 128, 128
          %665 = vsyncadd [#allocation10], %s664
          %s667 = sshll.u32 [#allocation9], 4
          %s668 = int_to_ptr.vmem [resolvable:$true] %s667
          %670 = dma.hbm_to_vmem [thread:$0]  %s3, 128, %s668, [#allocation10]
        $region20: #{tpu_custom_call.1} parent=11 // pred_fallthru
          _
        // Predicated region
        $region21: #{tpu_custom_call.1} parent=11 // pred_check
          %p671 = pneg %p180
        $region22: #{tpu_custom_call.1} parent=11 // pred_check_branch
          %673 = sbr.rel (%p671) target = $region24
        $region23: #{tpu_custom_call.1} parent=11 // pred_region
          _
        $region24: #{tpu_custom_call.1} parent=11 // pred_fallthru
          _
        // Predicated region
        $region25: #{tpu_custom_call.1} parent=11 // pred_check
          %p674 = pneg %p201
        $region26: #{tpu_custom_call.1} parent=11 // pred_check_branch
          %676 = sbr.rel (%p674) target = $region28
        $region27: #{tpu_custom_call.1} parent=11 // pred_region
          %s678 = ssub.s32 128, 128
          %679 = vsyncadd [#allocation13], %s678
          %s681 = sshll.u32 [#allocation12], 4
          %s682 = int_to_ptr.vmem [resolvable:$true] %s681
          %684 = dma.hbm_to_vmem [thread:$0]  %s6, 128, %s682, [#allocation13]
        $region28: #{tpu_custom_call.1} parent=11 // pred_fallthru
          _
        // Predicated region
        $region29: #{tpu_custom_call.1} parent=11 // pred_check
          %p685 = pneg %p222
        $region30: #{tpu_custom_call.1} parent=11 // pred_check_branch
          %687 = sbr.rel (%p685) target = $region32
        $region31: #{tpu_custom_call.1} parent=11 // pred_region
          _
        $region32: #{tpu_custom_call.1} parent=11 // pred_fallthru
          _
        // Predicated region
        $region33: #{tpu_custom_call.1} parent=11 // pred_check
          %p688 = pneg %p243
        $region34: #{tpu_custom_call.1} parent=11 // pred_check_branch
          %690 = sbr.rel (%p688) target = $region36
        $region35: #{tpu_custom_call.1} parent=11 // pred_region
          _
        $region36: #{tpu_custom_call.1} parent=11 // pred_fallthru
          _
        // Predicated region
        $region37: #{tpu_custom_call.1} parent=11 // pred_check
          %p691 = pneg %p264
        $region38: #{tpu_custom_call.1} parent=11 // pred_check_branch
          %693 = sbr.rel (%p691) target = $region40
        $region39: #{tpu_custom_call.1} parent=11 // pred_region
          _
        $region40: #{tpu_custom_call.1} parent=11 // pred_fallthru
          _
        // Predicated region
        $region41: #{tpu_custom_call.1} parent=11 // pred_check
          %p694 = pneg %p285
        $region42: #{tpu_custom_call.1} parent=11 // pred_check_branch
          %696 = sbr.rel (%p694) target = $region44
        $region43: #{tpu_custom_call.1} parent=11 // pred_region
          _
        $region44: #{tpu_custom_call.1} parent=11 // pred_fallthru
          _
        // Predicated region
        $region45: #{tpu_custom_call.1} parent=11 // pred_check
          %p697 = pneg %p306
        $region46: #{tpu_custom_call.1} parent=11 // pred_check_branch
          %699 = sbr.rel (%p697) target = $region48
        $region47: #{tpu_custom_call.1} parent=11 // pred_region
          _
        $region48: #{tpu_custom_call.1} parent=11 // pred_fallthru
          _
        // Predicated region
        $region49: #{tpu_custom_call.1} parent=11 // pred_check
          %p700 = pneg %p327
        $region50: #{tpu_custom_call.1} parent=11 // pred_check_branch
          %702 = sbr.rel (%p700) target = $region52
        $region51: #{tpu_custom_call.1} parent=11 // pred_region
          _
        $region52: #{tpu_custom_call.1} parent=11 // pred_fallthru
          _
        // Predicated region
        $region53: #{tpu_custom_call.1} parent=11 // pred_check
          %p703 = pneg %p348
        $region54: #{tpu_custom_call.1} parent=11 // pred_check_branch
          %705 = sbr.rel (%p703) target = $region56
        $region55: #{tpu_custom_call.1} parent=11 // pred_region
          _
        $region56: #{tpu_custom_call.1} parent=11 // pred_fallthru
          _
        // Predicated region
        $region57: #{tpu_custom_call.1} parent=11 // pred_check
          %p706 = pneg %p369
        $region58: #{tpu_custom_call.1} parent=11 // pred_check_branch
          %708 = sbr.rel (%p706) target = $region60
        $region59: #{tpu_custom_call.1} parent=11 // pred_region
          _
        $region60: #{tpu_custom_call.1} parent=11 // pred_fallthru
          _
        // Predicated region
        $region61: #{tpu_custom_call.1} parent=11 // pred_check
          %p709 = pneg %p390
        $region62: #{tpu_custom_call.1} parent=11 // pred_check_branch
          %711 = sbr.rel (%p709) target = $region64
        $region63: #{tpu_custom_call.1} parent=11 // pred_region
          _
        $region64: #{tpu_custom_call.1} parent=11 // pred_fallthru
          _
        // Predicated region
        $region65: #{tpu_custom_call.1} parent=11 // pred_check
          %p712 = pneg %p411
        $region66: #{tpu_custom_call.1} parent=11 // pred_check_branch
          %714 = sbr.rel (%p712) target = $region68
        $region67: #{tpu_custom_call.1} parent=11 // pred_region
          _
        $region68: #{tpu_custom_call.1} parent=11 // pred_fallthru
          _
        // Predicated region
        $region69: #{tpu_custom_call.1} parent=11 // pred_check
          %p715 = pneg %p432
        $region70: #{tpu_custom_call.1} parent=11 // pred_check_branch
          %717 = sbr.rel (%p715) target = $region72
        $region71: #{tpu_custom_call.1} parent=11 // pred_region
          _
        $region72: #{tpu_custom_call.1} parent=11 // pred_fallthru
          _
        // Predicated region
        $region73: #{tpu_custom_call.1} parent=11 // pred_check
          %p718 = pneg %p453
        $region74: #{tpu_custom_call.1} parent=11 // pred_check_branch
          %720 = sbr.rel (%p718) target = $region76
        $region75: #{tpu_custom_call.1} parent=11 // pred_region
          _
        $region76: #{tpu_custom_call.1} parent=11 // pred_fallthru
          _
        // Predicated region
        $region77: #{tpu_custom_call.1} parent=11 // pred_check
          %p721 = pneg %p474
        $region78: #{tpu_custom_call.1} parent=11 // pred_check_branch
          %723 = sbr.rel (%p721) target = $region80
        $region79: #{tpu_custom_call.1} parent=11 // pred_region
          _
        $region80: #{tpu_custom_call.1} parent=11 // pred_fallthru
          _
        // Predicated region
        $region81: #{tpu_custom_call.1} parent=11 // pred_check
          %p724 = pneg %p495
        $region82: #{tpu_custom_call.1} parent=11 // pred_check_branch
          %726 = sbr.rel (%p724) target = $region84
        $region83: #{tpu_custom_call.1} parent=11 // pred_region
          _
        $region84: #{tpu_custom_call.1} parent=11 // pred_fallthru
          _
        // Predicated region
        $region85: #{tpu_custom_call.1} parent=11 // pred_check
          %p727 = pneg %p516
        $region86: #{tpu_custom_call.1} parent=11 // pred_check_branch
          %729 = sbr.rel (%p727) target = $region88
        $region87: #{tpu_custom_call.1} parent=11 // pred_region
          _
        $region88: #{tpu_custom_call.1} parent=11 // pred_fallthru
          _
        // Predicated region
        $region89: #{tpu_custom_call.1} parent=11 // pred_check
          %p730 = pneg %p537
        $region90: #{tpu_custom_call.1} parent=11 // pred_check_branch
          %732 = sbr.rel (%p730) target = $region92
        $region91: #{tpu_custom_call.1} parent=11 // pred_region
          _
        $region92: #{tpu_custom_call.1} parent=11 // pred_fallthru
          _
        // Predicated region
        $region93: #{tpu_custom_call.1} parent=11 // pred_check
          %p733 = pneg %p558
        $region94: #{tpu_custom_call.1} parent=11 // pred_check_branch
          %735 = sbr.rel (%p733) target = $region96
        $region95: #{tpu_custom_call.1} parent=11 // pred_region
          _
        $region96: #{tpu_custom_call.1} parent=11 // pred_fallthru
          _
      $region12: #{tpu_custom_call.1} parent=5 // pred_fallthru
        _
      %p736 = scmp.lt.s32.totalorder %s39, 2
      // Predicated region
      $region97: #{tpu_custom_call.1} parent=5 // pred_check
        %p737 = pneg %p736
      $region98: #{tpu_custom_call.1} parent=5 // pred_check_branch
        %739 = sbr.rel (%p737) target = $region100
      $region99: #{tpu_custom_call.1} parent=5 // pred_region
        // Predicated region
        $region101: #{tpu_custom_call.1} parent=99 // pred_check
          %p740 = pneg %p80
        $region102: #{tpu_custom_call.1} parent=99 // pred_check_branch
          %742 = sbr.rel (%p740) target = $region104
        $region103: #{tpu_custom_call.1} parent=99 // pred_region
          %s743 = sand.u32 %s70, 1
          %s744 = sand.u32 %s70, 1
          %s745 = smul.addr %s744, 512
          %s746 = scalar_lea.vmem [#allocation7], %s745
          %s747 = smul.u32 16, %s39
          %s748 = smul.addr %s747, 4
          %s749 = scalar_lea.vmem %s1, %s748
          // Predicated region
          $region105: #{tpu_custom_call.1} parent=103 // pred_check
            _
          $region106: #{tpu_custom_call.1} parent=103 // pred_check_branch
            %751 = sbr.rel (0) target = $region108
          $region107: #{tpu_custom_call.1} parent=103 // pred_region
            // Predicated region
            $region109: #{tpu_custom_call.1} parent=107 // pred_check
              _
            $region110: #{tpu_custom_call.1} parent=107 // pred_check_branch
              %753 = sbr.rel target = $region112
            $region111: #{tpu_custom_call.1} parent=107 // pred_region
              // Predicated region
              $region124: #{tpu_custom_call.1} parent=111 // pred_check
                _
              $region125: #{tpu_custom_call.1} parent=111 // pred_check_branch
                %1023 = sbr.rel (0) target = $region127
              $region126: #{tpu_custom_call.1} parent=111 // pred_region
                loop: start=0, step=1, limit=1
                $region128: #{tpu_custom_call.1} parent=126 // loop_pre_header
                  _
                $region129: #{tpu_custom_call.1} parent=126 // loop_header
                  %s1025 = sphi 0, %s1029
                  %p1026 = scmp.ge.s32.totalorder %s1025, 1
                  %s1030 = sphi %s749, %s749
                  %s1031 = sphi %s746, %s746
                $region130: #{tpu_custom_call.1} parent=126 // loop_header_branch
                  %1028 = sbr.rel (%p1026) target = $region134
                $region131: #{tpu_custom_call.1} parent=126 // loop_body
                  _
                $region132: #{tpu_custom_call.1} parent=126 // loop_footer
                  %s1029 = sadd.s32 1, %s1025
                $region133: #{tpu_custom_call.1} parent=126 // loop_footer_branch
                  %1024 = sbr.rel target = $region129
                $region134: #{tpu_custom_call.1} parent=126 // loop_exit
                  _
                %s1033 = ssub.s32 16, 1
                loop: start=0, step=1, limit=1
                $region135: #{tpu_custom_call.1} parent=126 // loop_pre_header
                  _
                $region136: #{tpu_custom_call.1} parent=126 // loop_header
                  %s1035 = sphi 0, %s1039
                  %p1036 = scmp.ge.s32.totalorder %s1035, 1
                  %s1040 = sphi %s749, %s749
                  %s1041 = sphi %s746, %s746
                $region137: #{tpu_custom_call.1} parent=126 // loop_header_branch
                  %1038 = sbr.rel (%p1036) target = $region141
                $region138: #{tpu_custom_call.1} parent=126 // loop_body
                  %v1042 = vld [vmem:[%s1040] sm:%s1033]
                  %1043 = vst [vmem:[%s1041] sm:%s1033] %v1042
                  %v1044 = vld [vmem:[%s1040 + $0x4] sm:%s1033]
                  %1045 = vst [vmem:[%s1041 + $0x4] sm:%s1033] %v1044
                  %v1046 = vld [vmem:[%s1040 + $0x8] sm:%s1033]
                  %1047 = vst [vmem:[%s1041 + $0x8] sm:%s1033] %v1046
                  %v1048 = vld [vmem:[%s1040 + $0xc] sm:%s1033]
                  %1049 = vst [vmem:[%s1041 + $0xc] sm:%s1033] %v1048
                  %v1050 = vld [vmem:[%s1040 + $0x10] sm:%s1033]
                  %1051 = vst [vmem:[%s1041 + $0x10] sm:%s1033] %v1050
                  %v1052 = vld [vmem:[%s1040 + $0x14] sm:%s1033]
                  %1053 = vst [vmem:[%s1041 + $0x14] sm:%s1033] %v1052
                  %v1054 = vld [vmem:[%s1040 + $0x18] sm:%s1033]
                  %1055 = vst [vmem:[%s1041 + $0x18] sm:%s1033] %v1054
                  %v1056 = vld [vmem:[%s1040 + $0x1c] sm:%s1033]
                  %1057 = vst [vmem:[%s1041 + $0x1c] sm:%s1033] %v1056
                  %v1058 = vld [vmem:[%s1040 + $0x20] sm:%s1033]
                  %1059 = vst [vmem:[%s1041 + $0x20] sm:%s1033] %v1058
                  %v1060 = vld [vmem:[%s1040 + $0x24] sm:%s1033]
                  %1061 = vst [vmem:[%s1041 + $0x24] sm:%s1033] %v1060
                  %v1062 = vld [vmem:[%s1040 + $0x28] sm:%s1033]
                  %1063 = vst [vmem:[%s1041 + $0x28] sm:%s1033] %v1062
                  %v1064 = vld [vmem:[%s1040 + $0x2c] sm:%s1033]
                  %1065 = vst [vmem:[%s1041 + $0x2c] sm:%s1033] %v1064
                  %v1066 = vld [vmem:[%s1040 + $0x30] sm:%s1033]
                  %1067 = vst [vmem:[%s1041 + $0x30] sm:%s1033] %v1066
                  %v1068 = vld [vmem:[%s1040 + $0x34] sm:%s1033]
                  %1069 = vst [vmem:[%s1041 + $0x34] sm:%s1033] %v1068
                  %v1070 = vld [vmem:[%s1040 + $0x38] sm:%s1033]
                  %1071 = vst [vmem:[%s1041 + $0x38] sm:%s1033] %v1070
                  %v1072 = vld [vmem:[%s1040 + $0x3c] sm:%s1033]
                  %1073 = vst [vmem:[%s1041 + $0x3c] sm:%s1033] %v1072
                  %v1074 = vld [vmem:[%s1040 + $0x80] sm:%s1033]
                  %1075 = vst [vmem:[%s1041 + $0x40] sm:%s1033] %v1074
                  %v1076 = vld [vmem:[%s1040 + $0x84] sm:%s1033]
                  %1077 = vst [vmem:[%s1041 + $0x44] sm:%s1033] %v1076
                  %v1078 = vld [vmem:[%s1040 + $0x88] sm:%s1033]
                  %1079 = vst [vmem:[%s1041 + $0x48] sm:%s1033] %v1078
                  %v1080 = vld [vmem:[%s1040 + $0x8c] sm:%s1033]
                  %1081 = vst [vmem:[%s1041 + $0x4c] sm:%s1033] %v1080
                  %v1082 = vld [vmem:[%s1040 + $0x90] sm:%s1033]
                  %1083 = vst [vmem:[%s1041 + $0x50] sm:%s1033] %v1082
                  %v1084 = vld [vmem:[%s1040 + $0x94] sm:%s1033]
                  %1085 = vst [vmem:[%s1041 + $0x54] sm:%s1033] %v1084
                  %v1086 = vld [vmem:[%s1040 + $0x98] sm:%s1033]
                  %1087 = vst [vmem:[%s1041 + $0x58] sm:%s1033] %v1086
                  %v1088 = vld [vmem:[%s1040 + $0x9c] sm:%s1033]
                  %1089 = vst [vmem:[%s1041 + $0x5c] sm:%s1033] %v1088
                  %v1090 = vld [vmem:[%s1040 + $0xa0] sm:%s1033]
                  %1091 = vst [vmem:[%s1041 + $0x60] sm:%s1033] %v1090
                  %v1092 = vld [vmem:[%s1040 + $0xa4] sm:%s1033]
                  %1093 = vst [vmem:[%s1041 + $0x64] sm:%s1033] %v1092
                  %v1094 = vld [vmem:[%s1040 + $0xa8] sm:%s1033]
                  %1095 = vst [vmem:[%s1041 + $0x68] sm:%s1033] %v1094
                  %v1096 = vld [vmem:[%s1040 + $0xac] sm:%s1033]
                  %1097 = vst [vmem:[%s1041 + $0x6c] sm:%s1033] %v1096
                  %v1098 = vld [vmem:[%s1040 + $0xb0] sm:%s1033]
                  %1099 = vst [vmem:[%s1041 + $0x70] sm:%s1033] %v1098
                  %v1100 = vld [vmem:[%s1040 + $0xb4] sm:%s1033]
                  %1101 = vst [vmem:[%s1041 + $0x74] sm:%s1033] %v1100
                  %v1102 = vld [vmem:[%s1040 + $0xb8] sm:%s1033]
                  %1103 = vst [vmem:[%s1041 + $0x78] sm:%s1033] %v1102
                  %v1104 = vld [vmem:[%s1040 + $0xbc] sm:%s1033]
                  %1105 = vst [vmem:[%s1041 + $0x7c] sm:%s1033] %v1104
                  %v1106 = vld [vmem:[%s1040 + $0x100] sm:%s1033]
                  %1107 = vst [vmem:[%s1041 + $0x80] sm:%s1033] %v1106
                  %v1108 = vld [vmem:[%s1040 + $0x104] sm:%s1033]
                  %1109 = vst [vmem:[%s1041 + $0x84] sm:%s1033] %v1108
                  %v1110 = vld [vmem:[%s1040 + $0x108] sm:%s1033]
                  %1111 = vst [vmem:[%s1041 + $0x88] sm:%s1033] %v1110
                  %v1112 = vld [vmem:[%s1040 + $0x10c] sm:%s1033]
                  %1113 = vst [vmem:[%s1041 + $0x8c] sm:%s1033] %v1112
                  %v1114 = vld [vmem:[%s1040 + $0x110] sm:%s1033]
                  %1115 = vst [vmem:[%s1041 + $0x90] sm:%s1033] %v1114
                  %v1116 = vld [vmem:[%s1040 + $0x114] sm:%s1033]
                  %1117 = vst [vmem:[%s1041 + $0x94] sm:%s1033] %v1116
                  %v1118 = vld [vmem:[%s1040 + $0x118] sm:%s1033]
                  %1119 = vst [vmem:[%s1041 + $0x98] sm:%s1033] %v1118
                  %v1120 = vld [vmem:[%s1040 + $0x11c] sm:%s1033]
                  %1121 = vst [vmem:[%s1041 + $0x9c] sm:%s1033] %v1120
                  %v1122 = vld [vmem:[%s1040 + $0x120] sm:%s1033]
                  %1123 = vst [vmem:[%s1041 + $0xa0] sm:%s1033] %v1122
                  %v1124 = vld [vmem:[%s1040 + $0x124] sm:%s1033]
                  %1125 = vst [vmem:[%s1041 + $0xa4] sm:%s1033] %v1124
                  %v1126 = vld [vmem:[%s1040 + $0x128] sm:%s1033]
                  %1127 = vst [vmem:[%s1041 + $0xa8] sm:%s1033] %v1126
                  %v1128 = vld [vmem:[%s1040 + $0x12c] sm:%s1033]
                  %1129 = vst [vmem:[%s1041 + $0xac] sm:%s1033] %v1128
                  %v1130 = vld [vmem:[%s1040 + $0x130] sm:%s1033]
                  %1131 = vst [vmem:[%s1041 + $0xb0] sm:%s1033] %v1130
                  %v1132 = vld [vmem:[%s1040 + $0x134] sm:%s1033]
                  %1133 = vst [vmem:[%s1041 + $0xb4] sm:%s1033] %v1132
                  %v1134 = vld [vmem:[%s1040 + $0x138] sm:%s1033]
                  %1135 = vst [vmem:[%s1041 + $0xb8] sm:%s1033] %v1134
                  %v1136 = vld [vmem:[%s1040 + $0x13c] sm:%s1033]
                  %1137 = vst [vmem:[%s1041 + $0xbc] sm:%s1033] %v1136
                  %v1138 = vld [vmem:[%s1040 + $0x180] sm:%s1033]
                  %1139 = vst [vmem:[%s1041 + $0xc0] sm:%s1033] %v1138
                  %v1140 = vld [vmem:[%s1040 + $0x184] sm:%s1033]
                  %1141 = vst [vmem:[%s1041 + $0xc4] sm:%s1033] %v1140
                  %v1142 = vld [vmem:[%s1040 + $0x188] sm:%s1033]
                  %1143 = vst [vmem:[%s1041 + $0xc8] sm:%s1033] %v1142
                  %v1144 = vld [vmem:[%s1040 + $0x18c] sm:%s1033]
                  %1145 = vst [vmem:[%s1041 + $0xcc] sm:%s1033] %v1144
                  %v1146 = vld [vmem:[%s1040 + $0x190] sm:%s1033]
                  %1147 = vst [vmem:[%s1041 + $0xd0] sm:%s1033] %v1146
                  %v1148 = vld [vmem:[%s1040 + $0x194] sm:%s1033]
                  %1149 = vst [vmem:[%s1041 + $0xd4] sm:%s1033] %v1148
                  %v1150 = vld [vmem:[%s1040 + $0x198] sm:%s1033]
                  %1151 = vst [vmem:[%s1041 + $0xd8] sm:%s1033] %v1150
                  %v1152 = vld [vmem:[%s1040 + $0x19c] sm:%s1033]
                  %1153 = vst [vmem:[%s1041 + $0xdc] sm:%s1033] %v1152
                  %v1154 = vld [vmem:[%s1040 + $0x1a0] sm:%s1033]
                  %1155 = vst [vmem:[%s1041 + $0xe0] sm:%s1033] %v1154
                  %v1156 = vld [vmem:[%s1040 + $0x1a4] sm:%s1033]
                  %1157 = vst [vmem:[%s1041 + $0xe4] sm:%s1033] %v1156
                  %v1158 = vld [vmem:[%s1040 + $0x1a8] sm:%s1033]
                  %1159 = vst [vmem:[%s1041 + $0xe8] sm:%s1033] %v1158
                  %v1160 = vld [vmem:[%s1040 + $0x1ac] sm:%s1033]
                  %1161 = vst [vmem:[%s1041 + $0xec] sm:%s1033] %v1160
                  %v1162 = vld [vmem:[%s1040 + $0x1b0] sm:%s1033]
                  %1163 = vst [vmem:[%s1041 + $0xf0] sm:%s1033] %v1162
                  %v1164 = vld [vmem:[%s1040 + $0x1b4] sm:%s1033]
                  %1165 = vst [vmem:[%s1041 + $0xf4] sm:%s1033] %v1164
                  %v1166 = vld [vmem:[%s1040 + $0x1b8] sm:%s1033]
                  %1167 = vst [vmem:[%s1041 + $0xf8] sm:%s1033] %v1166
                  %v1168 = vld [vmem:[%s1040 + $0x1bc] sm:%s1033]
                  %1169 = vst [vmem:[%s1041 + $0xfc] sm:%s1033] %v1168
                  %v1170 = vld [vmem:[%s1040 + $0x200] sm:%s1033]
                  %1171 = vst [vmem:[%s1041 + $0x100] sm:%s1033] %v1170
                  %v1172 = vld [vmem:[%s1040 + $0x204] sm:%s1033]
                  %1173 = vst [vmem:[%s1041 + $0x104] sm:%s1033] %v1172
                  %v1174 = vld [vmem:[%s1040 + $0x208] sm:%s1033]
                  %1175 = vst [vmem:[%s1041 + $0x108] sm:%s1033] %v1174
                  %v1176 = vld [vmem:[%s1040 + $0x20c] sm:%s1033]
                  %1177 = vst [vmem:[%s1041 + $0x10c] sm:%s1033] %v1176
                  %v1178 = vld [vmem:[%s1040 + $0x210] sm:%s1033]
                  %1179 = vst [vmem:[%s1041 + $0x110] sm:%s1033] %v1178
                  %v1180 = vld [vmem:[%s1040 + $0x214] sm:%s1033]
                  %1181 = vst [vmem:[%s1041 + $0x114] sm:%s1033] %v1180
                  %v1182 = vld [vmem:[%s1040 + $0x218] sm:%s1033]
                  %1183 = vst [vmem:[%s1041 + $0x118] sm:%s1033] %v1182
                  %v1184 = vld [vmem:[%s1040 + $0x21c] sm:%s1033]
                  %1185 = vst [vmem:[%s1041 + $0x11c] sm:%s1033] %v1184
                  %v1186 = vld [vmem:[%s1040 + $0x220] sm:%s1033]
                  %1187 = vst [vmem:[%s1041 + $0x120] sm:%s1033] %v1186
                  %v1188 = vld [vmem:[%s1040 + $0x224] sm:%s1033]
                  %1189 = vst [vmem:[%s1041 + $0x124] sm:%s1033] %v1188
                  %v1190 = vld [vmem:[%s1040 + $0x228] sm:%s1033]
                  %1191 = vst [vmem:[%s1041 + $0x128] sm:%s1033] %v1190
                  %v1192 = vld [vmem:[%s1040 + $0x22c] sm:%s1033]
                  %1193 = vst [vmem:[%s1041 + $0x12c] sm:%s1033] %v1192
                  %v1194 = vld [vmem:[%s1040 + $0x230] sm:%s1033]
                  %1195 = vst [vmem:[%s1041 + $0x130] sm:%s1033] %v1194
                  %v1196 = vld [vmem:[%s1040 + $0x234] sm:%s1033]
                  %1197 = vst [vmem:[%s1041 + $0x134] sm:%s1033] %v1196
                  %v1198 = vld [vmem:[%s1040 + $0x238] sm:%s1033]
                  %1199 = vst [vmem:[%s1041 + $0x138] sm:%s1033] %v1198
                  %v1200 = vld [vmem:[%s1040 + $0x23c] sm:%s1033]
                  %1201 = vst [vmem:[%s1041 + $0x13c] sm:%s1033] %v1200
                  %v1202 = vld [vmem:[%s1040 + $0x280] sm:%s1033]
                  %1203 = vst [vmem:[%s1041 + $0x140] sm:%s1033] %v1202
                  %v1204 = vld [vmem:[%s1040 + $0x284] sm:%s1033]
                  %1205 = vst [vmem:[%s1041 + $0x144] sm:%s1033] %v1204
                  %v1206 = vld [vmem:[%s1040 + $0x288] sm:%s1033]
                  %1207 = vst [vmem:[%s1041 + $0x148] sm:%s1033] %v1206
                  %v1208 = vld [vmem:[%s1040 + $0x28c] sm:%s1033]
                  %1209 = vst [vmem:[%s1041 + $0x14c] sm:%s1033] %v1208
                  %v1210 = vld [vmem:[%s1040 + $0x290] sm:%s1033]
                  %1211 = vst [vmem:[%s1041 + $0x150] sm:%s1033] %v1210
                  %v1212 = vld [vmem:[%s1040 + $0x294] sm:%s1033]
                  %1213 = vst [vmem:[%s1041 + $0x154] sm:%s1033] %v1212
                  %v1214 = vld [vmem:[%s1040 + $0x298] sm:%s1033]
                  %1215 = vst [vmem:[%s1041 + $0x158] sm:%s1033] %v1214
                  %v1216 = vld [vmem:[%s1040 + $0x29c] sm:%s1033]
                  %1217 = vst [vmem:[%s1041 + $0x15c] sm:%s1033] %v1216
                  %v1218 = vld [vmem:[%s1040 + $0x2a0] sm:%s1033]
                  %1219 = vst [vmem:[%s1041 + $0x160] sm:%s1033] %v1218
                  %v1220 = vld [vmem:[%s1040 + $0x2a4] sm:%s1033]
                  %1221 = vst [vmem:[%s1041 + $0x164] sm:%s1033] %v1220
                  %v1222 = vld [vmem:[%s1040 + $0x2a8] sm:%s1033]
                  %1223 = vst [vmem:[%s1041 + $0x168] sm:%s1033] %v1222
                  %v1224 = vld [vmem:[%s1040 + $0x2ac] sm:%s1033]
                  %1225 = vst [vmem:[%s1041 + $0x16c] sm:%s1033] %v1224
                  %v1226 = vld [vmem:[%s1040 + $0x2b0] sm:%s1033]
                  %1227 = vst [vmem:[%s1041 + $0x170] sm:%s1033] %v1226
                  %v1228 = vld [vmem:[%s1040 + $0x2b4] sm:%s1033]
                  %1229 = vst [vmem:[%s1041 + $0x174] sm:%s1033] %v1228
                  %v1230 = vld [vmem:[%s1040 + $0x2b8] sm:%s1033]
                  %1231 = vst [vmem:[%s1041 + $0x178] sm:%s1033] %v1230
                  %v1232 = vld [vmem:[%s1040 + $0x2bc] sm:%s1033]
                  %1233 = vst [vmem:[%s1041 + $0x17c] sm:%s1033] %v1232
                  %v1234 = vld [vmem:[%s1040 + $0x300] sm:%s1033]
                  %1235 = vst [vmem:[%s1041 + $0x180] sm:%s1033] %v1234
                  %v1236 = vld [vmem:[%s1040 + $0x304] sm:%s1033]
                  %1237 = vst [vmem:[%s1041 + $0x184] sm:%s1033] %v1236
                  %v1238 = vld [vmem:[%s1040 + $0x308] sm:%s1033]
                  %1239 = vst [vmem:[%s1041 + $0x188] sm:%s1033] %v1238
                  %v1240 = vld [vmem:[%s1040 + $0x30c] sm:%s1033]
                  %1241 = vst [vmem:[%s1041 + $0x18c] sm:%s1033] %v1240
                  %v1242 = vld [vmem:[%s1040 + $0x310] sm:%s1033]
                  %1243 = vst [vmem:[%s1041 + $0x190] sm:%s1033] %v1242
                  %v1244 = vld [vmem:[%s1040 + $0x314] sm:%s1033]
                  %1245 = vst [vmem:[%s1041 + $0x194] sm:%s1033] %v1244
                  %v1246 = vld [vmem:[%s1040 + $0x318] sm:%s1033]
                  %1247 = vst [vmem:[%s1041 + $0x198] sm:%s1033] %v1246
                  %v1248 = vld [vmem:[%s1040 + $0x31c] sm:%s1033]
                  %1249 = vst [vmem:[%s1041 + $0x19c] sm:%s1033] %v1248
                  %v1250 = vld [vmem:[%s1040 + $0x320] sm:%s1033]
                  %1251 = vst [vmem:[%s1041 + $0x1a0] sm:%s1033] %v1250
                  %v1252 = vld [vmem:[%s1040 + $0x324] sm:%s1033]
                  %1253 = vst [vmem:[%s1041 + $0x1a4] sm:%s1033] %v1252
                  %v1254 = vld [vmem:[%s1040 + $0x328] sm:%s1033]
                  %1255 = vst [vmem:[%s1041 + $0x1a8] sm:%s1033] %v1254
                  %v1256 = vld [vmem:[%s1040 + $0x32c] sm:%s1033]
                  %1257 = vst [vmem:[%s1041 + $0x1ac] sm:%s1033] %v1256
                  %v1258 = vld [vmem:[%s1040 + $0x330] sm:%s1033]
                  %1259 = vst [vmem:[%s1041 + $0x1b0] sm:%s1033] %v1258
                  %v1260 = vld [vmem:[%s1040 + $0x334] sm:%s1033]
                  %1261 = vst [vmem:[%s1041 + $0x1b4] sm:%s1033] %v1260
                  %v1262 = vld [vmem:[%s1040 + $0x338] sm:%s1033]
                  %1263 = vst [vmem:[%s1041 + $0x1b8] sm:%s1033] %v1262
                  %v1264 = vld [vmem:[%s1040 + $0x33c] sm:%s1033]
                  %1265 = vst [vmem:[%s1041 + $0x1bc] sm:%s1033] %v1264
                  %v1266 = vld [vmem:[%s1040 + $0x380] sm:%s1033]
                  %1267 = vst [vmem:[%s1041 + $0x1c0] sm:%s1033] %v1266
                  %v1268 = vld [vmem:[%s1040 + $0x384] sm:%s1033]
                  %1269 = vst [vmem:[%s1041 + $0x1c4] sm:%s1033] %v1268
                  %v1270 = vld [vmem:[%s1040 + $0x388] sm:%s1033]
                  %1271 = vst [vmem:[%s1041 + $0x1c8] sm:%s1033] %v1270
                  %v1272 = vld [vmem:[%s1040 + $0x38c] sm:%s1033]
                  %1273 = vst [vmem:[%s1041 + $0x1cc] sm:%s1033] %v1272
                  %v1274 = vld [vmem:[%s1040 + $0x390] sm:%s1033]
                  %1275 = vst [vmem:[%s1041 + $0x1d0] sm:%s1033] %v1274
                  %v1276 = vld [vmem:[%s1040 + $0x394] sm:%s1033]
                  %1277 = vst [vmem:[%s1041 + $0x1d4] sm:%s1033] %v1276
                  %v1278 = vld [vmem:[%s1040 + $0x398] sm:%s1033]
                  %1279 = vst [vmem:[%s1041 + $0x1d8] sm:%s1033] %v1278
                  %v1280 = vld [vmem:[%s1040 + $0x39c] sm:%s1033]
                  %1281 = vst [vmem:[%s1041 + $0x1dc] sm:%s1033] %v1280
                  %v1282 = vld [vmem:[%s1040 + $0x3a0] sm:%s1033]
                  %1283 = vst [vmem:[%s1041 + $0x1e0] sm:%s1033] %v1282
                  %v1284 = vld [vmem:[%s1040 + $0x3a4] sm:%s1033]
                  %1285 = vst [vmem:[%s1041 + $0x1e4] sm:%s1033] %v1284
                  %v1286 = vld [vmem:[%s1040 + $0x3a8] sm:%s1033]
                  %1287 = vst [vmem:[%s1041 + $0x1e8] sm:%s1033] %v1286
                  %v1288 = vld [vmem:[%s1040 + $0x3ac] sm:%s1033]
                  %1289 = vst [vmem:[%s1041 + $0x1ec] sm:%s1033] %v1288
                  %v1290 = vld [vmem:[%s1040 + $0x3b0] sm:%s1033]
                  %1291 = vst [vmem:[%s1041 + $0x1f0] sm:%s1033] %v1290
                  %v1292 = vld [vmem:[%s1040 + $0x3b4] sm:%s1033]
                  %1293 = vst [vmem:[%s1041 + $0x1f4] sm:%s1033] %v1292
                  %v1294 = vld [vmem:[%s1040 + $0x3b8] sm:%s1033]
                  %1295 = vst [vmem:[%s1041 + $0x1f8] sm:%s1033] %v1294
                  %v1296 = vld [vmem:[%s1040 + $0x3bc] sm:%s1033]
                  %1297 = vst [vmem:[%s1041 + $0x1fc] sm:%s1033] %v1296
                $region139: #{tpu_custom_call.1} parent=126 // loop_footer
                  %s1039 = sadd.s32 1, %s1035
                $region140: #{tpu_custom_call.1} parent=126 // loop_footer_branch
                  %1034 = sbr.rel target = $region136
                $region141: #{tpu_custom_call.1} parent=126 // loop_exit
                  _
              $region127: #{tpu_custom_call.1} parent=111 // pred_fallthru
                _
            $region112: #{tpu_custom_call.1} parent=107 // pred_fallthru
              _
            // Predicated region
            $region113: #{tpu_custom_call.1} parent=107 // pred_check
              _
            $region114: #{tpu_custom_call.1} parent=107 // pred_check_branch
              %755 = sbr.rel (0) target = $region116
            $region115: #{tpu_custom_call.1} parent=107 // pred_region
              %s757 = ssub.s32 16, 1
              loop: start=0, step=1, limit=1
              $region117: #{tpu_custom_call.1} parent=115 // loop_pre_header
                _
              $region118: #{tpu_custom_call.1} parent=115 // loop_header
                %s759 = sphi 0, %s763
                %p760 = scmp.ge.s32.totalorder %s759, 1
                %s764 = sphi %s749, %s749
                %s765 = sphi %s746, %s746
              $region119: #{tpu_custom_call.1} parent=115 // loop_header_branch
                %762 = sbr.rel (%p760) target = $region123
              $region120: #{tpu_custom_call.1} parent=115 // loop_body
                %v766 = vld [vmem:[%s764] sm:%s757]
                %767 = vst [vmem:[%s765] sm:%s757] %v766
                %v768 = vld [vmem:[%s764 + $0x4] sm:%s757]
                %769 = vst [vmem:[%s765 + $0x4] sm:%s757] %v768
                %v770 = vld [vmem:[%s764 + $0x8] sm:%s757]
                %771 = vst [vmem:[%s765 + $0x8] sm:%s757] %v770
                %v772 = vld [vmem:[%s764 + $0xc] sm:%s757]
                %773 = vst [vmem:[%s765 + $0xc] sm:%s757] %v772
                %v774 = vld [vmem:[%s764 + $0x10] sm:%s757]
                %775 = vst [vmem:[%s765 + $0x10] sm:%s757] %v774
                %v776 = vld [vmem:[%s764 + $0x14] sm:%s757]
                %777 = vst [vmem:[%s765 + $0x14] sm:%s757] %v776
                %v778 = vld [vmem:[%s764 + $0x18] sm:%s757]
                %779 = vst [vmem:[%s765 + $0x18] sm:%s757] %v778
                %v780 = vld [vmem:[%s764 + $0x1c] sm:%s757]
                %781 = vst [vmem:[%s765 + $0x1c] sm:%s757] %v780
                %v782 = vld [vmem:[%s764 + $0x20] sm:%s757]
                %783 = vst [vmem:[%s765 + $0x20] sm:%s757] %v782
                %v784 = vld [vmem:[%s764 + $0x24] sm:%s757]
                %785 = vst [vmem:[%s765 + $0x24] sm:%s757] %v784
                %v786 = vld [vmem:[%s764 + $0x28] sm:%s757]
                %787 = vst [vmem:[%s765 + $0x28] sm:%s757] %v786
                %v788 = vld [vmem:[%s764 + $0x2c] sm:%s757]
                %789 = vst [vmem:[%s765 + $0x2c] sm:%s757] %v788
                %v790 = vld [vmem:[%s764 + $0x30] sm:%s757]
                %791 = vst [vmem:[%s765 + $0x30] sm:%s757] %v790
                %v792 = vld [vmem:[%s764 + $0x34] sm:%s757]
                %793 = vst [vmem:[%s765 + $0x34] sm:%s757] %v792
                %v794 = vld [vmem:[%s764 + $0x38] sm:%s757]
                %795 = vst [vmem:[%s765 + $0x38] sm:%s757] %v794
                %v796 = vld [vmem:[%s764 + $0x3c] sm:%s757]
                %797 = vst [vmem:[%s765 + $0x3c] sm:%s757] %v796
                %v798 = vld [vmem:[%s764 + $0x80] sm:%s757]
                %799 = vst [vmem:[%s765 + $0x40] sm:%s757] %v798
                %v800 = vld [vmem:[%s764 + $0x84] sm:%s757]
                %801 = vst [vmem:[%s765 + $0x44] sm:%s757] %v800
                %v802 = vld [vmem:[%s764 + $0x88] sm:%s757]
                %803 = vst [vmem:[%s765 + $0x48] sm:%s757] %v802
                %v804 = vld [vmem:[%s764 + $0x8c] sm:%s757]
                %805 = vst [vmem:[%s765 + $0x4c] sm:%s757] %v804
                %v806 = vld [vmem:[%s764 + $0x90] sm:%s757]
                %807 = vst [vmem:[%s765 + $0x50] sm:%s757] %v806
                %v808 = vld [vmem:[%s764 + $0x94] sm:%s757]
                %809 = vst [vmem:[%s765 + $0x54] sm:%s757] %v808
                %v810 = vld [vmem:[%s764 + $0x98] sm:%s757]
                %811 = vst [vmem:[%s765 + $0x58] sm:%s757] %v810
                %v812 = vld [vmem:[%s764 + $0x9c] sm:%s757]
                %813 = vst [vmem:[%s765 + $0x5c] sm:%s757] %v812
                %v814 = vld [vmem:[%s764 + $0xa0] sm:%s757]
                %815 = vst [vmem:[%s765 + $0x60] sm:%s757] %v814
                %v816 = vld [vmem:[%s764 + $0xa4] sm:%s757]
                %817 = vst [vmem:[%s765 + $0x64] sm:%s757] %v816
                %v818 = vld [vmem:[%s764 + $0xa8] sm:%s757]
                %819 = vst [vmem:[%s765 + $0x68] sm:%s757] %v818
                %v820 = vld [vmem:[%s764 + $0xac] sm:%s757]
                %821 = vst [vmem:[%s765 + $0x6c] sm:%s757] %v820
                %v822 = vld [vmem:[%s764 + $0xb0] sm:%s757]
                %823 = vst [vmem:[%s765 + $0x70] sm:%s757] %v822
                %v824 = vld [vmem:[%s764 + $0xb4] sm:%s757]
                %825 = vst [vmem:[%s765 + $0x74] sm:%s757] %v824
                %v826 = vld [vmem:[%s764 + $0xb8] sm:%s757]
                %827 = vst [vmem:[%s765 + $0x78] sm:%s757] %v826
                %v828 = vld [vmem:[%s764 + $0xbc] sm:%s757]
                %829 = vst [vmem:[%s765 + $0x7c] sm:%s757] %v828
                %v830 = vld [vmem:[%s764 + $0x100] sm:%s757]
                %831 = vst [vmem:[%s765 + $0x80] sm:%s757] %v830
                %v832 = vld [vmem:[%s764 + $0x104] sm:%s757]
                %833 = vst [vmem:[%s765 + $0x84] sm:%s757] %v832
                %v834 = vld [vmem:[%s764 + $0x108] sm:%s757]
                %835 = vst [vmem:[%s765 + $0x88] sm:%s757] %v834
                %v836 = vld [vmem:[%s764 + $0x10c] sm:%s757]
                %837 = vst [vmem:[%s765 + $0x8c] sm:%s757] %v836
                %v838 = vld [vmem:[%s764 + $0x110] sm:%s757]
                %839 = vst [vmem:[%s765 + $0x90] sm:%s757] %v838
                %v840 = vld [vmem:[%s764 + $0x114] sm:%s757]
                %841 = vst [vmem:[%s765 + $0x94] sm:%s757] %v840
                %v842 = vld [vmem:[%s764 + $0x118] sm:%s757]
                %843 = vst [vmem:[%s765 + $0x98] sm:%s757] %v842
                %v844 = vld [vmem:[%s764 + $0x11c] sm:%s757]
                %845 = vst [vmem:[%s765 + $0x9c] sm:%s757] %v844
                %v846 = vld [vmem:[%s764 + $0x120] sm:%s757]
                %847 = vst [vmem:[%s765 + $0xa0] sm:%s757] %v846
                %v848 = vld [vmem:[%s764 + $0x124] sm:%s757]
                %849 = vst [vmem:[%s765 + $0xa4] sm:%s757] %v848
                %v850 = vld [vmem:[%s764 + $0x128] sm:%s757]
                %851 = vst [vmem:[%s765 + $0xa8] sm:%s757] %v850
                %v852 = vld [vmem:[%s764 + $0x12c] sm:%s757]
                %853 = vst [vmem:[%s765 + $0xac] sm:%s757] %v852
                %v854 = vld [vmem:[%s764 + $0x130] sm:%s757]
                %855 = vst [vmem:[%s765 + $0xb0] sm:%s757] %v854
                %v856 = vld [vmem:[%s764 + $0x134] sm:%s757]
                %857 = vst [vmem:[%s765 + $0xb4] sm:%s757] %v856
                %v858 = vld [vmem:[%s764 + $0x138] sm:%s757]
                %859 = vst [vmem:[%s765 + $0xb8] sm:%s757] %v858
                %v860 = vld [vmem:[%s764 + $0x13c] sm:%s757]
                %861 = vst [vmem:[%s765 + $0xbc] sm:%s757] %v860
                %v862 = vld [vmem:[%s764 + $0x180] sm:%s757]
                %863 = vst [vmem:[%s765 + $0xc0] sm:%s757] %v862
                %v864 = vld [vmem:[%s764 + $0x184] sm:%s757]
                %865 = vst [vmem:[%s765 + $0xc4] sm:%s757] %v864
                %v866 = vld [vmem:[%s764 + $0x188] sm:%s757]
                %867 = vst [vmem:[%s765 + $0xc8] sm:%s757] %v866
                %v868 = vld [vmem:[%s764 + $0x18c] sm:%s757]
                %869 = vst [vmem:[%s765 + $0xcc] sm:%s757] %v868
                %v870 = vld [vmem:[%s764 + $0x190] sm:%s757]
                %871 = vst [vmem:[%s765 + $0xd0] sm:%s757] %v870
                %v872 = vld [vmem:[%s764 + $0x194] sm:%s757]
                %873 = vst [vmem:[%s765 + $0xd4] sm:%s757] %v872
                %v874 = vld [vmem:[%s764 + $0x198] sm:%s757]
                %875 = vst [vmem:[%s765 + $0xd8] sm:%s757] %v874
                %v876 = vld [vmem:[%s764 + $0x19c] sm:%s757]
                %877 = vst [vmem:[%s765 + $0xdc] sm:%s757] %v876
                %v878 = vld [vmem:[%s764 + $0x1a0] sm:%s757]
                %879 = vst [vmem:[%s765 + $0xe0] sm:%s757] %v878
                %v880 = vld [vmem:[%s764 + $0x1a4] sm:%s757]
                %881 = vst [vmem:[%s765 + $0xe4] sm:%s757] %v880
                %v882 = vld [vmem:[%s764 + $0x1a8] sm:%s757]
                %883 = vst [vmem:[%s765 + $0xe8] sm:%s757] %v882
                %v884 = vld [vmem:[%s764 + $0x1ac] sm:%s757]
                %885 = vst [vmem:[%s765 + $0xec] sm:%s757] %v884
                %v886 = vld [vmem:[%s764 + $0x1b0] sm:%s757]
                %887 = vst [vmem:[%s765 + $0xf0] sm:%s757] %v886
                %v888 = vld [vmem:[%s764 + $0x1b4] sm:%s757]
                %889 = vst [vmem:[%s765 + $0xf4] sm:%s757] %v888
                %v890 = vld [vmem:[%s764 + $0x1b8] sm:%s757]
                %891 = vst [vmem:[%s765 + $0xf8] sm:%s757] %v890
                %v892 = vld [vmem:[%s764 + $0x1bc] sm:%s757]
                %893 = vst [vmem:[%s765 + $0xfc] sm:%s757] %v892
                %v894 = vld [vmem:[%s764 + $0x200] sm:%s757]
                %895 = vst [vmem:[%s765 + $0x100] sm:%s757] %v894
                %v896 = vld [vmem:[%s764 + $0x204] sm:%s757]
                %897 = vst [vmem:[%s765 + $0x104] sm:%s757] %v896
                %v898 = vld [vmem:[%s764 + $0x208] sm:%s757]
                %899 = vst [vmem:[%s765 + $0x108] sm:%s757] %v898
                %v900 = vld [vmem:[%s764 + $0x20c] sm:%s757]
                %901 = vst [vmem:[%s765 + $0x10c] sm:%s757] %v900
                %v902 = vld [vmem:[%s764 + $0x210] sm:%s757]
                %903 = vst [vmem:[%s765 + $0x110] sm:%s757] %v902
                %v904 = vld [vmem:[%s764 + $0x214] sm:%s757]
                %905 = vst [vmem:[%s765 + $0x114] sm:%s757] %v904
                %v906 = vld [vmem:[%s764 + $0x218] sm:%s757]
                %907 = vst [vmem:[%s765 + $0x118] sm:%s757] %v906
                %v908 = vld [vmem:[%s764 + $0x21c] sm:%s757]
                %909 = vst [vmem:[%s765 + $0x11c] sm:%s757] %v908
                %v910 = vld [vmem:[%s764 + $0x220] sm:%s757]
                %911 = vst [vmem:[%s765 + $0x120] sm:%s757] %v910
                %v912 = vld [vmem:[%s764 + $0x224] sm:%s757]
                %913 = vst [vmem:[%s765 + $0x124] sm:%s757] %v912
                %v914 = vld [vmem:[%s764 + $0x228] sm:%s757]
                %915 = vst [vmem:[%s765 + $0x128] sm:%s757] %v914
                %v916 = vld [vmem:[%s764 + $0x22c] sm:%s757]
                %917 = vst [vmem:[%s765 + $0x12c] sm:%s757] %v916
                %v918 = vld [vmem:[%s764 + $0x230] sm:%s757]
                %919 = vst [vmem:[%s765 + $0x130] sm:%s757] %v918
                %v920 = vld [vmem:[%s764 + $0x234] sm:%s757]
                %921 = vst [vmem:[%s765 + $0x134] sm:%s757] %v920
                %v922 = vld [vmem:[%s764 + $0x238] sm:%s757]
                %923 = vst [vmem:[%s765 + $0x138] sm:%s757] %v922
                %v924 = vld [vmem:[%s764 + $0x23c] sm:%s757]
                %925 = vst [vmem:[%s765 + $0x13c] sm:%s757] %v924
                %v926 = vld [vmem:[%s764 + $0x280] sm:%s757]
                %927 = vst [vmem:[%s765 + $0x140] sm:%s757] %v926
                %v928 = vld [vmem:[%s764 + $0x284] sm:%s757]
                %929 = vst [vmem:[%s765 + $0x144] sm:%s757] %v928
                %v930 = vld [vmem:[%s764 + $0x288] sm:%s757]
                %931 = vst [vmem:[%s765 + $0x148] sm:%s757] %v930
                %v932 = vld [vmem:[%s764 + $0x28c] sm:%s757]
                %933 = vst [vmem:[%s765 + $0x14c] sm:%s757] %v932
                %v934 = vld [vmem:[%s764 + $0x290] sm:%s757]
                %935 = vst [vmem:[%s765 + $0x150] sm:%s757] %v934
                %v936 = vld [vmem:[%s764 + $0x294] sm:%s757]
                %937 = vst [vmem:[%s765 + $0x154] sm:%s757] %v936
                %v938 = vld [vmem:[%s764 + $0x298] sm:%s757]
                %939 = vst [vmem:[%s765 + $0x158] sm:%s757] %v938
                %v940 = vld [vmem:[%s764 + $0x29c] sm:%s757]
                %941 = vst [vmem:[%s765 + $0x15c] sm:%s757] %v940
                %v942 = vld [vmem:[%s764 + $0x2a0] sm:%s757]
                %943 = vst [vmem:[%s765 + $0x160] sm:%s757] %v942
                %v944 = vld [vmem:[%s764 + $0x2a4] sm:%s757]
                %945 = vst [vmem:[%s765 + $0x164] sm:%s757] %v944
                %v946 = vld [vmem:[%s764 + $0x2a8] sm:%s757]
                %947 = vst [vmem:[%s765 + $0x168] sm:%s757] %v946
                %v948 = vld [vmem:[%s764 + $0x2ac] sm:%s757]
                %949 = vst [vmem:[%s765 + $0x16c] sm:%s757] %v948
                %v950 = vld [vmem:[%s764 + $0x2b0] sm:%s757]
                %951 = vst [vmem:[%s765 + $0x170] sm:%s757] %v950
                %v952 = vld [vmem:[%s764 + $0x2b4] sm:%s757]
                %953 = vst [vmem:[%s765 + $0x174] sm:%s757] %v952
                %v954 = vld [vmem:[%s764 + $0x2b8] sm:%s757]
                %955 = vst [vmem:[%s765 + $0x178] sm:%s757] %v954
                %v956 = vld [vmem:[%s764 + $0x2bc] sm:%s757]
                %957 = vst [vmem:[%s765 + $0x17c] sm:%s757] %v956
                %v958 = vld [vmem:[%s764 + $0x300] sm:%s757]
                %959 = vst [vmem:[%s765 + $0x180] sm:%s757] %v958
                %v960 = vld [vmem:[%s764 + $0x304] sm:%s757]
                %961 = vst [vmem:[%s765 + $0x184] sm:%s757] %v960
                %v962 = vld [vmem:[%s764 + $0x308] sm:%s757]
                %963 = vst [vmem:[%s765 + $0x188] sm:%s757] %v962
                %v964 = vld [vmem:[%s764 + $0x30c] sm:%s757]
                %965 = vst [vmem:[%s765 + $0x18c] sm:%s757] %v964
                %v966 = vld [vmem:[%s764 + $0x310] sm:%s757]
                %967 = vst [vmem:[%s765 + $0x190] sm:%s757] %v966
                %v968 = vld [vmem:[%s764 + $0x314] sm:%s757]
                %969 = vst [vmem:[%s765 + $0x194] sm:%s757] %v968
                %v970 = vld [vmem:[%s764 + $0x318] sm:%s757]
                %971 = vst [vmem:[%s765 + $0x198] sm:%s757] %v970
                %v972 = vld [vmem:[%s764 + $0x31c] sm:%s757]
                %973 = vst [vmem:[%s765 + $0x19c] sm:%s757] %v972
                %v974 = vld [vmem:[%s764 + $0x320] sm:%s757]
                %975 = vst [vmem:[%s765 + $0x1a0] sm:%s757] %v974
                %v976 = vld [vmem:[%s764 + $0x324] sm:%s757]
                %977 = vst [vmem:[%s765 + $0x1a4] sm:%s757] %v976
                %v978 = vld [vmem:[%s764 + $0x328] sm:%s757]
                %979 = vst [vmem:[%s765 + $0x1a8] sm:%s757] %v978
                %v980 = vld [vmem:[%s764 + $0x32c] sm:%s757]
                %981 = vst [vmem:[%s765 + $0x1ac] sm:%s757] %v980
                %v982 = vld [vmem:[%s764 + $0x330] sm:%s757]
                %983 = vst [vmem:[%s765 + $0x1b0] sm:%s757] %v982
                %v984 = vld [vmem:[%s764 + $0x334] sm:%s757]
                %985 = vst [vmem:[%s765 + $0x1b4] sm:%s757] %v984
                %v986 = vld [vmem:[%s764 + $0x338] sm:%s757]
                %987 = vst [vmem:[%s765 + $0x1b8] sm:%s757] %v986
                %v988 = vld [vmem:[%s764 + $0x33c] sm:%s757]
                %989 = vst [vmem:[%s765 + $0x1bc] sm:%s757] %v988
                %v990 = vld [vmem:[%s764 + $0x380] sm:%s757]
                %991 = vst [vmem:[%s765 + $0x1c0] sm:%s757] %v990
                %v992 = vld [vmem:[%s764 + $0x384] sm:%s757]
                %993 = vst [vmem:[%s765 + $0x1c4] sm:%s757] %v992
                %v994 = vld [vmem:[%s764 + $0x388] sm:%s757]
                %995 = vst [vmem:[%s765 + $0x1c8] sm:%s757] %v994
                %v996 = vld [vmem:[%s764 + $0x38c] sm:%s757]
                %997 = vst [vmem:[%s765 + $0x1cc] sm:%s757] %v996
                %v998 = vld [vmem:[%s764 + $0x390] sm:%s757]
                %999 = vst [vmem:[%s765 + $0x1d0] sm:%s757] %v998
                %v1000 = vld [vmem:[%s764 + $0x394] sm:%s757]
                %1001 = vst [vmem:[%s765 + $0x1d4] sm:%s757] %v1000
                %v1002 = vld [vmem:[%s764 + $0x398] sm:%s757]
                %1003 = vst [vmem:[%s765 + $0x1d8] sm:%s757] %v1002
                %v1004 = vld [vmem:[%s764 + $0x39c] sm:%s757]
                %1005 = vst [vmem:[%s765 + $0x1dc] sm:%s757] %v1004
                %v1006 = vld [vmem:[%s764 + $0x3a0] sm:%s757]
                %1007 = vst [vmem:[%s765 + $0x1e0] sm:%s757] %v1006
                %v1008 = vld [vmem:[%s764 + $0x3a4] sm:%s757]
                %1009 = vst [vmem:[%s765 + $0x1e4] sm:%s757] %v1008
                %v1010 = vld [vmem:[%s764 + $0x3a8] sm:%s757]
                %1011 = vst [vmem:[%s765 + $0x1e8] sm:%s757] %v1010
                %v1012 = vld [vmem:[%s764 + $0x3ac] sm:%s757]
                %1013 = vst [vmem:[%s765 + $0x1ec] sm:%s757] %v1012
                %v1014 = vld [vmem:[%s764 + $0x3b0] sm:%s757]
                %1015 = vst [vmem:[%s765 + $0x1f0] sm:%s757] %v1014
                %v1016 = vld [vmem:[%s764 + $0x3b4] sm:%s757]
                %1017 = vst [vmem:[%s765 + $0x1f4] sm:%s757] %v1016
                %v1018 = vld [vmem:[%s764 + $0x3b8] sm:%s757]
                %1019 = vst [vmem:[%s765 + $0x1f8] sm:%s757] %v1018
                %v1020 = vld [vmem:[%s764 + $0x3bc] sm:%s757]
                %1021 = vst [vmem:[%s765 + $0x1fc] sm:%s757] %v1020
              $region121: #{tpu_custom_call.1} parent=115 // loop_footer
                %s763 = sadd.s32 1, %s759
              $region122: #{tpu_custom_call.1} parent=115 // loop_footer_branch
                %758 = sbr.rel target = $region118
              $region123: #{tpu_custom_call.1} parent=115 // loop_exit
                _
            $region116: #{tpu_custom_call.1} parent=107 // pred_fallthru
              _
          $region108: #{tpu_custom_call.1} parent=103 // pred_fallthru
            _
          %1298 = vnop
        $region104: #{tpu_custom_call.1} parent=99 // pred_fallthru
          _
        // Predicated region
        $region142: #{tpu_custom_call.1} parent=99 // pred_check
          %p1299 = pneg %p106
        $region143: #{tpu_custom_call.1} parent=99 // pred_check_branch
          %1301 = sbr.rel (%p1299) target = $region145
        $region144: #{tpu_custom_call.1} parent=99 // pred_region
          %s1302 = sand.u32 %s96, 1
          %s1303 = sand.u32 %s96, 1
          %s1304 = smul.addr %s1303, 512
          %s1305 = scalar_lea.vmem [#allocation8], %s1304
          %s1306 = smul.u32 16, %s39
          %s1307 = smul.addr %s1306, 4
          %s1308 = scalar_lea.vmem %s2, %s1307
          // Predicated region
          $region146: #{tpu_custom_call.1} parent=144 // pred_check
            _
          $region147: #{tpu_custom_call.1} parent=144 // pred_check_branch
            %1310 = sbr.rel (0) target = $region149
          $region148: #{tpu_custom_call.1} parent=144 // pred_region
            // Predicated region
            $region150: #{tpu_custom_call.1} parent=148 // pred_check
              _
            $region151: #{tpu_custom_call.1} parent=148 // pred_check_branch
              %1312 = sbr.rel target = $region153
            $region152: #{tpu_custom_call.1} parent=148 // pred_region
              // Predicated region
              $region165: #{tpu_custom_call.1} parent=152 // pred_check
                _
              $region166: #{tpu_custom_call.1} parent=152 // pred_check_branch
                %1582 = sbr.rel (0) target = $region168
              $region167: #{tpu_custom_call.1} parent=152 // pred_region
                loop: start=0, step=1, limit=1
                $region169: #{tpu_custom_call.1} parent=167 // loop_pre_header
                  _
                $region170: #{tpu_custom_call.1} parent=167 // loop_header
                  %s1584 = sphi 0, %s1588
                  %p1585 = scmp.ge.s32.totalorder %s1584, 1
                  %s1589 = sphi %s1308, %s1308
                  %s1590 = sphi %s1305, %s1305
                $region171: #{tpu_custom_call.1} parent=167 // loop_header_branch
                  %1587 = sbr.rel (%p1585) target = $region175
                $region172: #{tpu_custom_call.1} parent=167 // loop_body
                  _
                $region173: #{tpu_custom_call.1} parent=167 // loop_footer
                  %s1588 = sadd.s32 1, %s1584
                $region174: #{tpu_custom_call.1} parent=167 // loop_footer_branch
                  %1583 = sbr.rel target = $region170
                $region175: #{tpu_custom_call.1} parent=167 // loop_exit
                  _
                %s1592 = ssub.s32 16, 1
                loop: start=0, step=1, limit=1
                $region176: #{tpu_custom_call.1} parent=167 // loop_pre_header
                  _
                $region177: #{tpu_custom_call.1} parent=167 // loop_header
                  %s1594 = sphi 0, %s1598
                  %p1595 = scmp.ge.s32.totalorder %s1594, 1
                  %s1599 = sphi %s1308, %s1308
                  %s1600 = sphi %s1305, %s1305
                $region178: #{tpu_custom_call.1} parent=167 // loop_header_branch
                  %1597 = sbr.rel (%p1595) target = $region182
                $region179: #{tpu_custom_call.1} parent=167 // loop_body
                  %v1601 = vld [vmem:[%s1599] sm:%s1592]
                  %1602 = vst [vmem:[%s1600] sm:%s1592] %v1601
                  %v1603 = vld [vmem:[%s1599 + $0x4] sm:%s1592]
                  %1604 = vst [vmem:[%s1600 + $0x4] sm:%s1592] %v1603
                  %v1605 = vld [vmem:[%s1599 + $0x8] sm:%s1592]
                  %1606 = vst [vmem:[%s1600 + $0x8] sm:%s1592] %v1605
                  %v1607 = vld [vmem:[%s1599 + $0xc] sm:%s1592]
                  %1608 = vst [vmem:[%s1600 + $0xc] sm:%s1592] %v1607
                  %v1609 = vld [vmem:[%s1599 + $0x10] sm:%s1592]
                  %1610 = vst [vmem:[%s1600 + $0x10] sm:%s1592] %v1609
                  %v1611 = vld [vmem:[%s1599 + $0x14] sm:%s1592]
                  %1612 = vst [vmem:[%s1600 + $0x14] sm:%s1592] %v1611
                  %v1613 = vld [vmem:[%s1599 + $0x18] sm:%s1592]
                  %1614 = vst [vmem:[%s1600 + $0x18] sm:%s1592] %v1613
                  %v1615 = vld [vmem:[%s1599 + $0x1c] sm:%s1592]
                  %1616 = vst [vmem:[%s1600 + $0x1c] sm:%s1592] %v1615
                  %v1617 = vld [vmem:[%s1599 + $0x20] sm:%s1592]
                  %1618 = vst [vmem:[%s1600 + $0x20] sm:%s1592] %v1617
                  %v1619 = vld [vmem:[%s1599 + $0x24] sm:%s1592]
                  %1620 = vst [vmem:[%s1600 + $0x24] sm:%s1592] %v1619
                  %v1621 = vld [vmem:[%s1599 + $0x28] sm:%s1592]
                  %1622 = vst [vmem:[%s1600 + $0x28] sm:%s1592] %v1621
                  %v1623 = vld [vmem:[%s1599 + $0x2c] sm:%s1592]
                  %1624 = vst [vmem:[%s1600 + $0x2c] sm:%s1592] %v1623
                  %v1625 = vld [vmem:[%s1599 + $0x30] sm:%s1592]
                  %1626 = vst [vmem:[%s1600 + $0x30] sm:%s1592] %v1625
                  %v1627 = vld [vmem:[%s1599 + $0x34] sm:%s1592]
                  %1628 = vst [vmem:[%s1600 + $0x34] sm:%s1592] %v1627
                  %v1629 = vld [vmem:[%s1599 + $0x38] sm:%s1592]
                  %1630 = vst [vmem:[%s1600 + $0x38] sm:%s1592] %v1629
                  %v1631 = vld [vmem:[%s1599 + $0x3c] sm:%s1592]
                  %1632 = vst [vmem:[%s1600 + $0x3c] sm:%s1592] %v1631
                  %v1633 = vld [vmem:[%s1599 + $0x80] sm:%s1592]
                  %1634 = vst [vmem:[%s1600 + $0x40] sm:%s1592] %v1633
                  %v1635 = vld [vmem:[%s1599 + $0x84] sm:%s1592]
                  %1636 = vst [vmem:[%s1600 + $0x44] sm:%s1592] %v1635
                  %v1637 = vld [vmem:[%s1599 + $0x88] sm:%s1592]
                  %1638 = vst [vmem:[%s1600 + $0x48] sm:%s1592] %v1637
                  %v1639 = vld [vmem:[%s1599 + $0x8c] sm:%s1592]
                  %1640 = vst [vmem:[%s1600 + $0x4c] sm:%s1592] %v1639
                  %v1641 = vld [vmem:[%s1599 + $0x90] sm:%s1592]
                  %1642 = vst [vmem:[%s1600 + $0x50] sm:%s1592] %v1641
                  %v1643 = vld [vmem:[%s1599 + $0x94] sm:%s1592]
                  %1644 = vst [vmem:[%s1600 + $0x54] sm:%s1592] %v1643
                  %v1645 = vld [vmem:[%s1599 + $0x98] sm:%s1592]
                  %1646 = vst [vmem:[%s1600 + $0x58] sm:%s1592] %v1645
                  %v1647 = vld [vmem:[%s1599 + $0x9c] sm:%s1592]
                  %1648 = vst [vmem:[%s1600 + $0x5c] sm:%s1592] %v1647
                  %v1649 = vld [vmem:[%s1599 + $0xa0] sm:%s1592]
                  %1650 = vst [vmem:[%s1600 + $0x60] sm:%s1592] %v1649
                  %v1651 = vld [vmem:[%s1599 + $0xa4] sm:%s1592]
                  %1652 = vst [vmem:[%s1600 + $0x64] sm:%s1592] %v1651
                  %v1653 = vld [vmem:[%s1599 + $0xa8] sm:%s1592]
                  %1654 = vst [vmem:[%s1600 + $0x68] sm:%s1592] %v1653
                  %v1655 = vld [vmem:[%s1599 + $0xac] sm:%s1592]
                  %1656 = vst [vmem:[%s1600 + $0x6c] sm:%s1592] %v1655
                  %v1657 = vld [vmem:[%s1599 + $0xb0] sm:%s1592]
                  %1658 = vst [vmem:[%s1600 + $0x70] sm:%s1592] %v1657
                  %v1659 = vld [vmem:[%s1599 + $0xb4] sm:%s1592]
                  %1660 = vst [vmem:[%s1600 + $0x74] sm:%s1592] %v1659
                  %v1661 = vld [vmem:[%s1599 + $0xb8] sm:%s1592]
                  %1662 = vst [vmem:[%s1600 + $0x78] sm:%s1592] %v1661
                  %v1663 = vld [vmem:[%s1599 + $0xbc] sm:%s1592]
                  %1664 = vst [vmem:[%s1600 + $0x7c] sm:%s1592] %v1663
                  %v1665 = vld [vmem:[%s1599 + $0x100] sm:%s1592]
                  %1666 = vst [vmem:[%s1600 + $0x80] sm:%s1592] %v1665
                  %v1667 = vld [vmem:[%s1599 + $0x104] sm:%s1592]
                  %1668 = vst [vmem:[%s1600 + $0x84] sm:%s1592] %v1667
                  %v1669 = vld [vmem:[%s1599 + $0x108] sm:%s1592]
                  %1670 = vst [vmem:[%s1600 + $0x88] sm:%s1592] %v1669
                  %v1671 = vld [vmem:[%s1599 + $0x10c] sm:%s1592]
                  %1672 = vst [vmem:[%s1600 + $0x8c] sm:%s1592] %v1671
                  %v1673 = vld [vmem:[%s1599 + $0x110] sm:%s1592]
                  %1674 = vst [vmem:[%s1600 + $0x90] sm:%s1592] %v1673
                  %v1675 = vld [vmem:[%s1599 + $0x114] sm:%s1592]
                  %1676 = vst [vmem:[%s1600 + $0x94] sm:%s1592] %v1675
                  %v1677 = vld [vmem:[%s1599 + $0x118] sm:%s1592]
                  %1678 = vst [vmem:[%s1600 + $0x98] sm:%s1592] %v1677
                  %v1679 = vld [vmem:[%s1599 + $0x11c] sm:%s1592]
                  %1680 = vst [vmem:[%s1600 + $0x9c] sm:%s1592] %v1679
                  %v1681 = vld [vmem:[%s1599 + $0x120] sm:%s1592]
                  %1682 = vst [vmem:[%s1600 + $0xa0] sm:%s1592] %v1681
                  %v1683 = vld [vmem:[%s1599 + $0x124] sm:%s1592]
                  %1684 = vst [vmem:[%s1600 + $0xa4] sm:%s1592] %v1683
                  %v1685 = vld [vmem:[%s1599 + $0x128] sm:%s1592]
                  %1686 = vst [vmem:[%s1600 + $0xa8] sm:%s1592] %v1685
                  %v1687 = vld [vmem:[%s1599 + $0x12c] sm:%s1592]
                  %1688 = vst [vmem:[%s1600 + $0xac] sm:%s1592] %v1687
                  %v1689 = vld [vmem:[%s1599 + $0x130] sm:%s1592]
                  %1690 = vst [vmem:[%s1600 + $0xb0] sm:%s1592] %v1689
                  %v1691 = vld [vmem:[%s1599 + $0x134] sm:%s1592]
                  %1692 = vst [vmem:[%s1600 + $0xb4] sm:%s1592] %v1691
                  %v1693 = vld [vmem:[%s1599 + $0x138] sm:%s1592]
                  %1694 = vst [vmem:[%s1600 + $0xb8] sm:%s1592] %v1693
                  %v1695 = vld [vmem:[%s1599 + $0x13c] sm:%s1592]
                  %1696 = vst [vmem:[%s1600 + $0xbc] sm:%s1592] %v1695
                  %v1697 = vld [vmem:[%s1599 + $0x180] sm:%s1592]
                  %1698 = vst [vmem:[%s1600 + $0xc0] sm:%s1592] %v1697
                  %v1699 = vld [vmem:[%s1599 + $0x184] sm:%s1592]
                  %1700 = vst [vmem:[%s1600 + $0xc4] sm:%s1592] %v1699
                  %v1701 = vld [vmem:[%s1599 + $0x188] sm:%s1592]
                  %1702 = vst [vmem:[%s1600 + $0xc8] sm:%s1592] %v1701
                  %v1703 = vld [vmem:[%s1599 + $0x18c] sm:%s1592]
                  %1704 = vst [vmem:[%s1600 + $0xcc] sm:%s1592] %v1703
                  %v1705 = vld [vmem:[%s1599 + $0x190] sm:%s1592]
                  %1706 = vst [vmem:[%s1600 + $0xd0] sm:%s1592] %v1705
                  %v1707 = vld [vmem:[%s1599 + $0x194] sm:%s1592]
                  %1708 = vst [vmem:[%s1600 + $0xd4] sm:%s1592] %v1707
                  %v1709 = vld [vmem:[%s1599 + $0x198] sm:%s1592]
                  %1710 = vst [vmem:[%s1600 + $0xd8] sm:%s1592] %v1709
                  %v1711 = vld [vmem:[%s1599 + $0x19c] sm:%s1592]
                  %1712 = vst [vmem:[%s1600 + $0xdc] sm:%s1592] %v1711
                  %v1713 = vld [vmem:[%s1599 + $0x1a0] sm:%s1592]
                  %1714 = vst [vmem:[%s1600 + $0xe0] sm:%s1592] %v1713
                  %v1715 = vld [vmem:[%s1599 + $0x1a4] sm:%s1592]
                  %1716 = vst [vmem:[%s1600 + $0xe4] sm:%s1592] %v1715
                  %v1717 = vld [vmem:[%s1599 + $0x1a8] sm:%s1592]
                  %1718 = vst [vmem:[%s1600 + $0xe8] sm:%s1592] %v1717
                  %v1719 = vld [vmem:[%s1599 + $0x1ac] sm:%s1592]
                  %1720 = vst [vmem:[%s1600 + $0xec] sm:%s1592] %v1719
                  %v1721 = vld [vmem:[%s1599 + $0x1b0] sm:%s1592]
                  %1722 = vst [vmem:[%s1600 + $0xf0] sm:%s1592] %v1721
                  %v1723 = vld [vmem:[%s1599 + $0x1b4] sm:%s1592]
                  %1724 = vst [vmem:[%s1600 + $0xf4] sm:%s1592] %v1723
                  %v1725 = vld [vmem:[%s1599 + $0x1b8] sm:%s1592]
                  %1726 = vst [vmem:[%s1600 + $0xf8] sm:%s1592] %v1725
                  %v1727 = vld [vmem:[%s1599 + $0x1bc] sm:%s1592]
                  %1728 = vst [vmem:[%s1600 + $0xfc] sm:%s1592] %v1727
                  %v1729 = vld [vmem:[%s1599 + $0x200] sm:%s1592]
                  %1730 = vst [vmem:[%s1600 + $0x100] sm:%s1592] %v1729
                  %v1731 = vld [vmem:[%s1599 + $0x204] sm:%s1592]
                  %1732 = vst [vmem:[%s1600 + $0x104] sm:%s1592] %v1731
                  %v1733 = vld [vmem:[%s1599 + $0x208] sm:%s1592]
                  %1734 = vst [vmem:[%s1600 + $0x108] sm:%s1592] %v1733
                  %v1735 = vld [vmem:[%s1599 + $0x20c] sm:%s1592]
                  %1736 = vst [vmem:[%s1600 + $0x10c] sm:%s1592] %v1735
                  %v1737 = vld [vmem:[%s1599 + $0x210] sm:%s1592]
                  %1738 = vst [vmem:[%s1600 + $0x110] sm:%s1592] %v1737
                  %v1739 = vld [vmem:[%s1599 + $0x214] sm:%s1592]
                  %1740 = vst [vmem:[%s1600 + $0x114] sm:%s1592] %v1739
                  %v1741 = vld [vmem:[%s1599 + $0x218] sm:%s1592]
                  %1742 = vst [vmem:[%s1600 + $0x118] sm:%s1592] %v1741
                  %v1743 = vld [vmem:[%s1599 + $0x21c] sm:%s1592]
                  %1744 = vst [vmem:[%s1600 + $0x11c] sm:%s1592] %v1743
                  %v1745 = vld [vmem:[%s1599 + $0x220] sm:%s1592]
                  %1746 = vst [vmem:[%s1600 + $0x120] sm:%s1592] %v1745
                  %v1747 = vld [vmem:[%s1599 + $0x224] sm:%s1592]
                  %1748 = vst [vmem:[%s1600 + $0x124] sm:%s1592] %v1747
                  %v1749 = vld [vmem:[%s1599 + $0x228] sm:%s1592]
                  %1750 = vst [vmem:[%s1600 + $0x128] sm:%s1592] %v1749
                  %v1751 = vld [vmem:[%s1599 + $0x22c] sm:%s1592]
                  %1752 = vst [vmem:[%s1600 + $0x12c] sm:%s1592] %v1751
                  %v1753 = vld [vmem:[%s1599 + $0x230] sm:%s1592]
                  %1754 = vst [vmem:[%s1600 + $0x130] sm:%s1592] %v1753
                  %v1755 = vld [vmem:[%s1599 + $0x234] sm:%s1592]
                  %1756 = vst [vmem:[%s1600 + $0x134] sm:%s1592] %v1755
                  %v1757 = vld [vmem:[%s1599 + $0x238] sm:%s1592]
                  %1758 = vst [vmem:[%s1600 + $0x138] sm:%s1592] %v1757
                  %v1759 = vld [vmem:[%s1599 + $0x23c] sm:%s1592]
                  %1760 = vst [vmem:[%s1600 + $0x13c] sm:%s1592] %v1759
                  %v1761 = vld [vmem:[%s1599 + $0x280] sm:%s1592]
                  %1762 = vst [vmem:[%s1600 + $0x140] sm:%s1592] %v1761
                  %v1763 = vld [vmem:[%s1599 + $0x284] sm:%s1592]
                  %1764 = vst [vmem:[%s1600 + $0x144] sm:%s1592] %v1763
                  %v1765 = vld [vmem:[%s1599 + $0x288] sm:%s1592]
                  %1766 = vst [vmem:[%s1600 + $0x148] sm:%s1592] %v1765
                  %v1767 = vld [vmem:[%s1599 + $0x28c] sm:%s1592]
                  %1768 = vst [vmem:[%s1600 + $0x14c] sm:%s1592] %v1767
                  %v1769 = vld [vmem:[%s1599 + $0x290] sm:%s1592]
                  %1770 = vst [vmem:[%s1600 + $0x150] sm:%s1592] %v1769
                  %v1771 = vld [vmem:[%s1599 + $0x294] sm:%s1592]
                  %1772 = vst [vmem:[%s1600 + $0x154] sm:%s1592] %v1771
                  %v1773 = vld [vmem:[%s1599 + $0x298] sm:%s1592]
                  %1774 = vst [vmem:[%s1600 + $0x158] sm:%s1592] %v1773
                  %v1775 = vld [vmem:[%s1599 + $0x29c] sm:%s1592]
                  %1776 = vst [vmem:[%s1600 + $0x15c] sm:%s1592] %v1775
                  %v1777 = vld [vmem:[%s1599 + $0x2a0] sm:%s1592]
                  %1778 = vst [vmem:[%s1600 + $0x160] sm:%s1592] %v1777
                  %v1779 = vld [vmem:[%s1599 + $0x2a4] sm:%s1592]
                  %1780 = vst [vmem:[%s1600 + $0x164] sm:%s1592] %v1779
                  %v1781 = vld [vmem:[%s1599 + $0x2a8] sm:%s1592]
                  %1782 = vst [vmem:[%s1600 + $0x168] sm:%s1592] %v1781
                  %v1783 = vld [vmem:[%s1599 + $0x2ac] sm:%s1592]
                  %1784 = vst [vmem:[%s1600 + $0x16c] sm:%s1592] %v1783
                  %v1785 = vld [vmem:[%s1599 + $0x2b0] sm:%s1592]
                  %1786 = vst [vmem:[%s1600 + $0x170] sm:%s1592] %v1785
                  %v1787 = vld [vmem:[%s1599 + $0x2b4] sm:%s1592]
                  %1788 = vst [vmem:[%s1600 + $0x174] sm:%s1592] %v1787
                  %v1789 = vld [vmem:[%s1599 + $0x2b8] sm:%s1592]
                  %1790 = vst [vmem:[%s1600 + $0x178] sm:%s1592] %v1789
                  %v1791 = vld [vmem:[%s1599 + $0x2bc] sm:%s1592]
                  %1792 = vst [vmem:[%s1600 + $0x17c] sm:%s1592] %v1791
                  %v1793 = vld [vmem:[%s1599 + $0x300] sm:%s1592]
                  %1794 = vst [vmem:[%s1600 + $0x180] sm:%s1592] %v1793
                  %v1795 = vld [vmem:[%s1599 + $0x304] sm:%s1592]
                  %1796 = vst [vmem:[%s1600 + $0x184] sm:%s1592] %v1795
                  %v1797 = vld [vmem:[%s1599 + $0x308] sm:%s1592]
                  %1798 = vst [vmem:[%s1600 + $0x188] sm:%s1592] %v1797
                  %v1799 = vld [vmem:[%s1599 + $0x30c] sm:%s1592]
                  %1800 = vst [vmem:[%s1600 + $0x18c] sm:%s1592] %v1799
                  %v1801 = vld [vmem:[%s1599 + $0x310] sm:%s1592]
                  %1802 = vst [vmem:[%s1600 + $0x190] sm:%s1592] %v1801
                  %v1803 = vld [vmem:[%s1599 + $0x314] sm:%s1592]
                  %1804 = vst [vmem:[%s1600 + $0x194] sm:%s1592] %v1803
                  %v1805 = vld [vmem:[%s1599 + $0x318] sm:%s1592]
                  %1806 = vst [vmem:[%s1600 + $0x198] sm:%s1592] %v1805
                  %v1807 = vld [vmem:[%s1599 + $0x31c] sm:%s1592]
                  %1808 = vst [vmem:[%s1600 + $0x19c] sm:%s1592] %v1807
                  %v1809 = vld [vmem:[%s1599 + $0x320] sm:%s1592]
                  %1810 = vst [vmem:[%s1600 + $0x1a0] sm:%s1592] %v1809
                  %v1811 = vld [vmem:[%s1599 + $0x324] sm:%s1592]
                  %1812 = vst [vmem:[%s1600 + $0x1a4] sm:%s1592] %v1811
                  %v1813 = vld [vmem:[%s1599 + $0x328] sm:%s1592]
                  %1814 = vst [vmem:[%s1600 + $0x1a8] sm:%s1592] %v1813
                  %v1815 = vld [vmem:[%s1599 + $0x32c] sm:%s1592]
                  %1816 = vst [vmem:[%s1600 + $0x1ac] sm:%s1592] %v1815
                  %v1817 = vld [vmem:[%s1599 + $0x330] sm:%s1592]
                  %1818 = vst [vmem:[%s1600 + $0x1b0] sm:%s1592] %v1817
                  %v1819 = vld [vmem:[%s1599 + $0x334] sm:%s1592]
                  %1820 = vst [vmem:[%s1600 + $0x1b4] sm:%s1592] %v1819
                  %v1821 = vld [vmem:[%s1599 + $0x338] sm:%s1592]
                  %1822 = vst [vmem:[%s1600 + $0x1b8] sm:%s1592] %v1821
                  %v1823 = vld [vmem:[%s1599 + $0x33c] sm:%s1592]
                  %1824 = vst [vmem:[%s1600 + $0x1bc] sm:%s1592] %v1823
                  %v1825 = vld [vmem:[%s1599 + $0x380] sm:%s1592]
                  %1826 = vst [vmem:[%s1600 + $0x1c0] sm:%s1592] %v1825
                  %v1827 = vld [vmem:[%s1599 + $0x384] sm:%s1592]
                  %1828 = vst [vmem:[%s1600 + $0x1c4] sm:%s1592] %v1827
                  %v1829 = vld [vmem:[%s1599 + $0x388] sm:%s1592]
                  %1830 = vst [vmem:[%s1600 + $0x1c8] sm:%s1592] %v1829
                  %v1831 = vld [vmem:[%s1599 + $0x38c] sm:%s1592]
                  %1832 = vst [vmem:[%s1600 + $0x1cc] sm:%s1592] %v1831
                  %v1833 = vld [vmem:[%s1599 + $0x390] sm:%s1592]
                  %1834 = vst [vmem:[%s1600 + $0x1d0] sm:%s1592] %v1833
                  %v1835 = vld [vmem:[%s1599 + $0x394] sm:%s1592]
                  %1836 = vst [vmem:[%s1600 + $0x1d4] sm:%s1592] %v1835
                  %v1837 = vld [vmem:[%s1599 + $0x398] sm:%s1592]
                  %1838 = vst [vmem:[%s1600 + $0x1d8] sm:%s1592] %v1837
                  %v1839 = vld [vmem:[%s1599 + $0x39c] sm:%s1592]
                  %1840 = vst [vmem:[%s1600 + $0x1dc] sm:%s1592] %v1839
                  %v1841 = vld [vmem:[%s1599 + $0x3a0] sm:%s1592]
                  %1842 = vst [vmem:[%s1600 + $0x1e0] sm:%s1592] %v1841
                  %v1843 = vld [vmem:[%s1599 + $0x3a4] sm:%s1592]
                  %1844 = vst [vmem:[%s1600 + $0x1e4] sm:%s1592] %v1843
                  %v1845 = vld [vmem:[%s1599 + $0x3a8] sm:%s1592]
                  %1846 = vst [vmem:[%s1600 + $0x1e8] sm:%s1592] %v1845
                  %v1847 = vld [vmem:[%s1599 + $0x3ac] sm:%s1592]
                  %1848 = vst [vmem:[%s1600 + $0x1ec] sm:%s1592] %v1847
                  %v1849 = vld [vmem:[%s1599 + $0x3b0] sm:%s1592]
                  %1850 = vst [vmem:[%s1600 + $0x1f0] sm:%s1592] %v1849
                  %v1851 = vld [vmem:[%s1599 + $0x3b4] sm:%s1592]
                  %1852 = vst [vmem:[%s1600 + $0x1f4] sm:%s1592] %v1851
                  %v1853 = vld [vmem:[%s1599 + $0x3b8] sm:%s1592]
                  %1854 = vst [vmem:[%s1600 + $0x1f8] sm:%s1592] %v1853
                  %v1855 = vld [vmem:[%s1599 + $0x3bc] sm:%s1592]
                  %1856 = vst [vmem:[%s1600 + $0x1fc] sm:%s1592] %v1855
                $region180: #{tpu_custom_call.1} parent=167 // loop_footer
                  %s1598 = sadd.s32 1, %s1594
                $region181: #{tpu_custom_call.1} parent=167 // loop_footer_branch
                  %1593 = sbr.rel target = $region177
                $region182: #{tpu_custom_call.1} parent=167 // loop_exit
                  _
              $region168: #{tpu_custom_call.1} parent=152 // pred_fallthru
                _
            $region153: #{tpu_custom_call.1} parent=148 // pred_fallthru
              _
            // Predicated region
            $region154: #{tpu_custom_call.1} parent=148 // pred_check
              _
            $region155: #{tpu_custom_call.1} parent=148 // pred_check_branch
              %1314 = sbr.rel (0) target = $region157
            $region156: #{tpu_custom_call.1} parent=148 // pred_region
              %s1316 = ssub.s32 16, 1
              loop: start=0, step=1, limit=1
              $region158: #{tpu_custom_call.1} parent=156 // loop_pre_header
                _
              $region159: #{tpu_custom_call.1} parent=156 // loop_header
                %s1318 = sphi 0, %s1322
                %p1319 = scmp.ge.s32.totalorder %s1318, 1
                %s1323 = sphi %s1308, %s1308
                %s1324 = sphi %s1305, %s1305
              $region160: #{tpu_custom_call.1} parent=156 // loop_header_branch
                %1321 = sbr.rel (%p1319) target = $region164
              $region161: #{tpu_custom_call.1} parent=156 // loop_body
                %v1325 = vld [vmem:[%s1323] sm:%s1316]
                %1326 = vst [vmem:[%s1324] sm:%s1316] %v1325
                %v1327 = vld [vmem:[%s1323 + $0x4] sm:%s1316]
                %1328 = vst [vmem:[%s1324 + $0x4] sm:%s1316] %v1327
                %v1329 = vld [vmem:[%s1323 + $0x8] sm:%s1316]
                %1330 = vst [vmem:[%s1324 + $0x8] sm:%s1316] %v1329
                %v1331 = vld [vmem:[%s1323 + $0xc] sm:%s1316]
                %1332 = vst [vmem:[%s1324 + $0xc] sm:%s1316] %v1331
                %v1333 = vld [vmem:[%s1323 + $0x10] sm:%s1316]
                %1334 = vst [vmem:[%s1324 + $0x10] sm:%s1316] %v1333
                %v1335 = vld [vmem:[%s1323 + $0x14] sm:%s1316]
                %1336 = vst [vmem:[%s1324 + $0x14] sm:%s1316] %v1335
                %v1337 = vld [vmem:[%s1323 + $0x18] sm:%s1316]
                %1338 = vst [vmem:[%s1324 + $0x18] sm:%s1316] %v1337
                %v1339 = vld [vmem:[%s1323 + $0x1c] sm:%s1316]
                %1340 = vst [vmem:[%s1324 + $0x1c] sm:%s1316] %v1339
                %v1341 = vld [vmem:[%s1323 + $0x20] sm:%s1316]
                %1342 = vst [vmem:[%s1324 + $0x20] sm:%s1316] %v1341
                %v1343 = vld [vmem:[%s1323 + $0x24] sm:%s1316]
                %1344 = vst [vmem:[%s1324 + $0x24] sm:%s1316] %v1343
                %v1345 = vld [vmem:[%s1323 + $0x28] sm:%s1316]
                %1346 = vst [vmem:[%s1324 + $0x28] sm:%s1316] %v1345
                %v1347 = vld [vmem:[%s1323 + $0x2c] sm:%s1316]
                %1348 = vst [vmem:[%s1324 + $0x2c] sm:%s1316] %v1347
                %v1349 = vld [vmem:[%s1323 + $0x30] sm:%s1316]
                %1350 = vst [vmem:[%s1324 + $0x30] sm:%s1316] %v1349
                %v1351 = vld [vmem:[%s1323 + $0x34] sm:%s1316]
                %1352 = vst [vmem:[%s1324 + $0x34] sm:%s1316] %v1351
                %v1353 = vld [vmem:[%s1323 + $0x38] sm:%s1316]
                %1354 = vst [vmem:[%s1324 + $0x38] sm:%s1316] %v1353
                %v1355 = vld [vmem:[%s1323 + $0x3c] sm:%s1316]
                %1356 = vst [vmem:[%s1324 + $0x3c] sm:%s1316] %v1355
                %v1357 = vld [vmem:[%s1323 + $0x80] sm:%s1316]
                %1358 = vst [vmem:[%s1324 + $0x40] sm:%s1316] %v1357
                %v1359 = vld [vmem:[%s1323 + $0x84] sm:%s1316]
                %1360 = vst [vmem:[%s1324 + $0x44] sm:%s1316] %v1359
                %v1361 = vld [vmem:[%s1323 + $0x88] sm:%s1316]
                %1362 = vst [vmem:[%s1324 + $0x48] sm:%s1316] %v1361
                %v1363 = vld [vmem:[%s1323 + $0x8c] sm:%s1316]
                %1364 = vst [vmem:[%s1324 + $0x4c] sm:%s1316] %v1363
                %v1365 = vld [vmem:[%s1323 + $0x90] sm:%s1316]
                %1366 = vst [vmem:[%s1324 + $0x50] sm:%s1316] %v1365
                %v1367 = vld [vmem:[%s1323 + $0x94] sm:%s1316]
                %1368 = vst [vmem:[%s1324 + $0x54] sm:%s1316] %v1367
                %v1369 = vld [vmem:[%s1323 + $0x98] sm:%s1316]
                %1370 = vst [vmem:[%s1324 + $0x58] sm:%s1316] %v1369
                %v1371 = vld [vmem:[%s1323 + $0x9c] sm:%s1316]
                %1372 = vst [vmem:[%s1324 + $0x5c] sm:%s1316] %v1371
                %v1373 = vld [vmem:[%s1323 + $0xa0] sm:%s1316]
                %1374 = vst [vmem:[%s1324 + $0x60] sm:%s1316] %v1373
                %v1375 = vld [vmem:[%s1323 + $0xa4] sm:%s1316]
                %1376 = vst [vmem:[%s1324 + $0x64] sm:%s1316] %v1375
                %v1377 = vld [vmem:[%s1323 + $0xa8] sm:%s1316]
                %1378 = vst [vmem:[%s1324 + $0x68] sm:%s1316] %v1377
                %v1379 = vld [vmem:[%s1323 + $0xac] sm:%s1316]
                %1380 = vst [vmem:[%s1324 + $0x6c] sm:%s1316] %v1379
                %v1381 = vld [vmem:[%s1323 + $0xb0] sm:%s1316]
                %1382 = vst [vmem:[%s1324 + $0x70] sm:%s1316] %v1381
                %v1383 = vld [vmem:[%s1323 + $0xb4] sm:%s1316]
                %1384 = vst [vmem:[%s1324 + $0x74] sm:%s1316] %v1383
                %v1385 = vld [vmem:[%s1323 + $0xb8] sm:%s1316]
                %1386 = vst [vmem:[%s1324 + $0x78] sm:%s1316] %v1385
                %v1387 = vld [vmem:[%s1323 + $0xbc] sm:%s1316]
                %1388 = vst [vmem:[%s1324 + $0x7c] sm:%s1316] %v1387
                %v1389 = vld [vmem:[%s1323 + $0x100] sm:%s1316]
                %1390 = vst [vmem:[%s1324 + $0x80] sm:%s1316] %v1389
                %v1391 = vld [vmem:[%s1323 + $0x104] sm:%s1316]
                %1392 = vst [vmem:[%s1324 + $0x84] sm:%s1316] %v1391
                %v1393 = vld [vmem:[%s1323 + $0x108] sm:%s1316]
                %1394 = vst [vmem:[%s1324 + $0x88] sm:%s1316] %v1393
                %v1395 = vld [vmem:[%s1323 + $0x10c] sm:%s1316]
                %1396 = vst [vmem:[%s1324 + $0x8c] sm:%s1316] %v1395
                %v1397 = vld [vmem:[%s1323 + $0x110] sm:%s1316]
                %1398 = vst [vmem:[%s1324 + $0x90] sm:%s1316] %v1397
                %v1399 = vld [vmem:[%s1323 + $0x114] sm:%s1316]
                %1400 = vst [vmem:[%s1324 + $0x94] sm:%s1316] %v1399
                %v1401 = vld [vmem:[%s1323 + $0x118] sm:%s1316]
                %1402 = vst [vmem:[%s1324 + $0x98] sm:%s1316] %v1401
                %v1403 = vld [vmem:[%s1323 + $0x11c] sm:%s1316]
                %1404 = vst [vmem:[%s1324 + $0x9c] sm:%s1316] %v1403
                %v1405 = vld [vmem:[%s1323 + $0x120] sm:%s1316]
                %1406 = vst [vmem:[%s1324 + $0xa0] sm:%s1316] %v1405
                %v1407 = vld [vmem:[%s1323 + $0x124] sm:%s1316]
                %1408 = vst [vmem:[%s1324 + $0xa4] sm:%s1316] %v1407
                %v1409 = vld [vmem:[%s1323 + $0x128] sm:%s1316]
                %1410 = vst [vmem:[%s1324 + $0xa8] sm:%s1316] %v1409
                %v1411 = vld [vmem:[%s1323 + $0x12c] sm:%s1316]
                %1412 = vst [vmem:[%s1324 + $0xac] sm:%s1316] %v1411
                %v1413 = vld [vmem:[%s1323 + $0x130] sm:%s1316]
                %1414 = vst [vmem:[%s1324 + $0xb0] sm:%s1316] %v1413
                %v1415 = vld [vmem:[%s1323 + $0x134] sm:%s1316]
                %1416 = vst [vmem:[%s1324 + $0xb4] sm:%s1316] %v1415
                %v1417 = vld [vmem:[%s1323 + $0x138] sm:%s1316]
                %1418 = vst [vmem:[%s1324 + $0xb8] sm:%s1316] %v1417
                %v1419 = vld [vmem:[%s1323 + $0x13c] sm:%s1316]
                %1420 = vst [vmem:[%s1324 + $0xbc] sm:%s1316] %v1419
                %v1421 = vld [vmem:[%s1323 + $0x180] sm:%s1316]
                %1422 = vst [vmem:[%s1324 + $0xc0] sm:%s1316] %v1421
                %v1423 = vld [vmem:[%s1323 + $0x184] sm:%s1316]
                %1424 = vst [vmem:[%s1324 + $0xc4] sm:%s1316] %v1423
                %v1425 = vld [vmem:[%s1323 + $0x188] sm:%s1316]
                %1426 = vst [vmem:[%s1324 + $0xc8] sm:%s1316] %v1425
                %v1427 = vld [vmem:[%s1323 + $0x18c] sm:%s1316]
                %1428 = vst [vmem:[%s1324 + $0xcc] sm:%s1316] %v1427
                %v1429 = vld [vmem:[%s1323 + $0x190] sm:%s1316]
                %1430 = vst [vmem:[%s1324 + $0xd0] sm:%s1316] %v1429
                %v1431 = vld [vmem:[%s1323 + $0x194] sm:%s1316]
                %1432 = vst [vmem:[%s1324 + $0xd4] sm:%s1316] %v1431
                %v1433 = vld [vmem:[%s1323 + $0x198] sm:%s1316]
                %1434 = vst [vmem:[%s1324 + $0xd8] sm:%s1316] %v1433
                %v1435 = vld [vmem:[%s1323 + $0x19c] sm:%s1316]
                %1436 = vst [vmem:[%s1324 + $0xdc] sm:%s1316] %v1435
                %v1437 = vld [vmem:[%s1323 + $0x1a0] sm:%s1316]
                %1438 = vst [vmem:[%s1324 + $0xe0] sm:%s1316] %v1437
                %v1439 = vld [vmem:[%s1323 + $0x1a4] sm:%s1316]
                %1440 = vst [vmem:[%s1324 + $0xe4] sm:%s1316] %v1439
                %v1441 = vld [vmem:[%s1323 + $0x1a8] sm:%s1316]
                %1442 = vst [vmem:[%s1324 + $0xe8] sm:%s1316] %v1441
                %v1443 = vld [vmem:[%s1323 + $0x1ac] sm:%s1316]
                %1444 = vst [vmem:[%s1324 + $0xec] sm:%s1316] %v1443
                %v1445 = vld [vmem:[%s1323 + $0x1b0] sm:%s1316]
                %1446 = vst [vmem:[%s1324 + $0xf0] sm:%s1316] %v1445
                %v1447 = vld [vmem:[%s1323 + $0x1b4] sm:%s1316]
                %1448 = vst [vmem:[%s1324 + $0xf4] sm:%s1316] %v1447
                %v1449 = vld [vmem:[%s1323 + $0x1b8] sm:%s1316]
                %1450 = vst [vmem:[%s1324 + $0xf8] sm:%s1316] %v1449
                %v1451 = vld [vmem:[%s1323 + $0x1bc] sm:%s1316]
                %1452 = vst [vmem:[%s1324 + $0xfc] sm:%s1316] %v1451
                %v1453 = vld [vmem:[%s1323 + $0x200] sm:%s1316]
                %1454 = vst [vmem:[%s1324 + $0x100] sm:%s1316] %v1453
                %v1455 = vld [vmem:[%s1323 + $0x204] sm:%s1316]
                %1456 = vst [vmem:[%s1324 + $0x104] sm:%s1316] %v1455
                %v1457 = vld [vmem:[%s1323 + $0x208] sm:%s1316]
                %1458 = vst [vmem:[%s1324 + $0x108] sm:%s1316] %v1457
                %v1459 = vld [vmem:[%s1323 + $0x20c] sm:%s1316]
                %1460 = vst [vmem:[%s1324 + $0x10c] sm:%s1316] %v1459
                %v1461 = vld [vmem:[%s1323 + $0x210] sm:%s1316]
                %1462 = vst [vmem:[%s1324 + $0x110] sm:%s1316] %v1461
                %v1463 = vld [vmem:[%s1323 + $0x214] sm:%s1316]
                %1464 = vst [vmem:[%s1324 + $0x114] sm:%s1316] %v1463
                %v1465 = vld [vmem:[%s1323 + $0x218] sm:%s1316]
                %1466 = vst [vmem:[%s1324 + $0x118] sm:%s1316] %v1465
                %v1467 = vld [vmem:[%s1323 + $0x21c] sm:%s1316]
                %1468 = vst [vmem:[%s1324 + $0x11c] sm:%s1316] %v1467
                %v1469 = vld [vmem:[%s1323 + $0x220] sm:%s1316]
                %1470 = vst [vmem:[%s1324 + $0x120] sm:%s1316] %v1469
                %v1471 = vld [vmem:[%s1323 + $0x224] sm:%s1316]
                %1472 = vst [vmem:[%s1324 + $0x124] sm:%s1316] %v1471
                %v1473 = vld [vmem:[%s1323 + $0x228] sm:%s1316]
                %1474 = vst [vmem:[%s1324 + $0x128] sm:%s1316] %v1473
                %v1475 = vld [vmem:[%s1323 + $0x22c] sm:%s1316]
                %1476 = vst [vmem:[%s1324 + $0x12c] sm:%s1316] %v1475
                %v1477 = vld [vmem:[%s1323 + $0x230] sm:%s1316]
                %1478 = vst [vmem:[%s1324 + $0x130] sm:%s1316] %v1477
                %v1479 = vld [vmem:[%s1323 + $0x234] sm:%s1316]
                %1480 = vst [vmem:[%s1324 + $0x134] sm:%s1316] %v1479
                %v1481 = vld [vmem:[%s1323 + $0x238] sm:%s1316]
                %1482 = vst [vmem:[%s1324 + $0x138] sm:%s1316] %v1481
                %v1483 = vld [vmem:[%s1323 + $0x23c] sm:%s1316]
                %1484 = vst [vmem:[%s1324 + $0x13c] sm:%s1316] %v1483
                %v1485 = vld [vmem:[%s1323 + $0x280] sm:%s1316]
                %1486 = vst [vmem:[%s1324 + $0x140] sm:%s1316] %v1485
                %v1487 = vld [vmem:[%s1323 + $0x284] sm:%s1316]
                %1488 = vst [vmem:[%s1324 + $0x144] sm:%s1316] %v1487
                %v1489 = vld [vmem:[%s1323 + $0x288] sm:%s1316]
                %1490 = vst [vmem:[%s1324 + $0x148] sm:%s1316] %v1489
                %v1491 = vld [vmem:[%s1323 + $0x28c] sm:%s1316]
                %1492 = vst [vmem:[%s1324 + $0x14c] sm:%s1316] %v1491
                %v1493 = vld [vmem:[%s1323 + $0x290] sm:%s1316]
                %1494 = vst [vmem:[%s1324 + $0x150] sm:%s1316] %v1493
                %v1495 = vld [vmem:[%s1323 + $0x294] sm:%s1316]
                %1496 = vst [vmem:[%s1324 + $0x154] sm:%s1316] %v1495
                %v1497 = vld [vmem:[%s1323 + $0x298] sm:%s1316]
                %1498 = vst [vmem:[%s1324 + $0x158] sm:%s1316] %v1497
                %v1499 = vld [vmem:[%s1323 + $0x29c] sm:%s1316]
                %1500 = vst [vmem:[%s1324 + $0x15c] sm:%s1316] %v1499
                %v1501 = vld [vmem:[%s1323 + $0x2a0] sm:%s1316]
                %1502 = vst [vmem:[%s1324 + $0x160] sm:%s1316] %v1501
                %v1503 = vld [vmem:[%s1323 + $0x2a4] sm:%s1316]
                %1504 = vst [vmem:[%s1324 + $0x164] sm:%s1316] %v1503
                %v1505 = vld [vmem:[%s1323 + $0x2a8] sm:%s1316]
                %1506 = vst [vmem:[%s1324 + $0x168] sm:%s1316] %v1505
                %v1507 = vld [vmem:[%s1323 + $0x2ac] sm:%s1316]
                %1508 = vst [vmem:[%s1324 + $0x16c] sm:%s1316] %v1507
                %v1509 = vld [vmem:[%s1323 + $0x2b0] sm:%s1316]
                %1510 = vst [vmem:[%s1324 + $0x170] sm:%s1316] %v1509
                %v1511 = vld [vmem:[%s1323 + $0x2b4] sm:%s1316]
                %1512 = vst [vmem:[%s1324 + $0x174] sm:%s1316] %v1511
                %v1513 = vld [vmem:[%s1323 + $0x2b8] sm:%s1316]
                %1514 = vst [vmem:[%s1324 + $0x178] sm:%s1316] %v1513
                %v1515 = vld [vmem:[%s1323 + $0x2bc] sm:%s1316]
                %1516 = vst [vmem:[%s1324 + $0x17c] sm:%s1316] %v1515
                %v1517 = vld [vmem:[%s1323 + $0x300] sm:%s1316]
                %1518 = vst [vmem:[%s1324 + $0x180] sm:%s1316] %v1517
                %v1519 = vld [vmem:[%s1323 + $0x304] sm:%s1316]
                %1520 = vst [vmem:[%s1324 + $0x184] sm:%s1316] %v1519
                %v1521 = vld [vmem:[%s1323 + $0x308] sm:%s1316]
                %1522 = vst [vmem:[%s1324 + $0x188] sm:%s1316] %v1521
                %v1523 = vld [vmem:[%s1323 + $0x30c] sm:%s1316]
                %1524 = vst [vmem:[%s1324 + $0x18c] sm:%s1316] %v1523
                %v1525 = vld [vmem:[%s1323 + $0x310] sm:%s1316]
                %1526 = vst [vmem:[%s1324 + $0x190] sm:%s1316] %v1525
                %v1527 = vld [vmem:[%s1323 + $0x314] sm:%s1316]
                %1528 = vst [vmem:[%s1324 + $0x194] sm:%s1316] %v1527
                %v1529 = vld [vmem:[%s1323 + $0x318] sm:%s1316]
                %1530 = vst [vmem:[%s1324 + $0x198] sm:%s1316] %v1529
                %v1531 = vld [vmem:[%s1323 + $0x31c] sm:%s1316]
                %1532 = vst [vmem:[%s1324 + $0x19c] sm:%s1316] %v1531
                %v1533 = vld [vmem:[%s1323 + $0x320] sm:%s1316]
                %1534 = vst [vmem:[%s1324 + $0x1a0] sm:%s1316] %v1533
                %v1535 = vld [vmem:[%s1323 + $0x324] sm:%s1316]
                %1536 = vst [vmem:[%s1324 + $0x1a4] sm:%s1316] %v1535
                %v1537 = vld [vmem:[%s1323 + $0x328] sm:%s1316]
                %1538 = vst [vmem:[%s1324 + $0x1a8] sm:%s1316] %v1537
                %v1539 = vld [vmem:[%s1323 + $0x32c] sm:%s1316]
                %1540 = vst [vmem:[%s1324 + $0x1ac] sm:%s1316] %v1539
                %v1541 = vld [vmem:[%s1323 + $0x330] sm:%s1316]
                %1542 = vst [vmem:[%s1324 + $0x1b0] sm:%s1316] %v1541
                %v1543 = vld [vmem:[%s1323 + $0x334] sm:%s1316]
                %1544 = vst [vmem:[%s1324 + $0x1b4] sm:%s1316] %v1543
                %v1545 = vld [vmem:[%s1323 + $0x338] sm:%s1316]
                %1546 = vst [vmem:[%s1324 + $0x1b8] sm:%s1316] %v1545
                %v1547 = vld [vmem:[%s1323 + $0x33c] sm:%s1316]
                %1548 = vst [vmem:[%s1324 + $0x1bc] sm:%s1316] %v1547
                %v1549 = vld [vmem:[%s1323 + $0x380] sm:%s1316]
                %1550 = vst [vmem:[%s1324 + $0x1c0] sm:%s1316] %v1549
                %v1551 = vld [vmem:[%s1323 + $0x384] sm:%s1316]
                %1552 = vst [vmem:[%s1324 + $0x1c4] sm:%s1316] %v1551
                %v1553 = vld [vmem:[%s1323 + $0x388] sm:%s1316]
                %1554 = vst [vmem:[%s1324 + $0x1c8] sm:%s1316] %v1553
                %v1555 = vld [vmem:[%s1323 + $0x38c] sm:%s1316]
                %1556 = vst [vmem:[%s1324 + $0x1cc] sm:%s1316] %v1555
                %v1557 = vld [vmem:[%s1323 + $0x390] sm:%s1316]
                %1558 = vst [vmem:[%s1324 + $0x1d0] sm:%s1316] %v1557
                %v1559 = vld [vmem:[%s1323 + $0x394] sm:%s1316]
                %1560 = vst [vmem:[%s1324 + $0x1d4] sm:%s1316] %v1559
                %v1561 = vld [vmem:[%s1323 + $0x398] sm:%s1316]
                %1562 = vst [vmem:[%s1324 + $0x1d8] sm:%s1316] %v1561
                %v1563 = vld [vmem:[%s1323 + $0x39c] sm:%s1316]
                %1564 = vst [vmem:[%s1324 + $0x1dc] sm:%s1316] %v1563
                %v1565 = vld [vmem:[%s1323 + $0x3a0] sm:%s1316]
                %1566 = vst [vmem:[%s1324 + $0x1e0] sm:%s1316] %v1565
                %v1567 = vld [vmem:[%s1323 + $0x3a4] sm:%s1316]
                %1568 = vst [vmem:[%s1324 + $0x1e4] sm:%s1316] %v1567
                %v1569 = vld [vmem:[%s1323 + $0x3a8] sm:%s1316]
                %1570 = vst [vmem:[%s1324 + $0x1e8] sm:%s1316] %v1569
                %v1571 = vld [vmem:[%s1323 + $0x3ac] sm:%s1316]
                %1572 = vst [vmem:[%s1324 + $0x1ec] sm:%s1316] %v1571
                %v1573 = vld [vmem:[%s1323 + $0x3b0] sm:%s1316]
                %1574 = vst [vmem:[%s1324 + $0x1f0] sm:%s1316] %v1573
                %v1575 = vld [vmem:[%s1323 + $0x3b4] sm:%s1316]
                %1576 = vst [vmem:[%s1324 + $0x1f4] sm:%s1316] %v1575
                %v1577 = vld [vmem:[%s1323 + $0x3b8] sm:%s1316]
                %1578 = vst [vmem:[%s1324 + $0x1f8] sm:%s1316] %v1577
                %v1579 = vld [vmem:[%s1323 + $0x3bc] sm:%s1316]
                %1580 = vst [vmem:[%s1324 + $0x1fc] sm:%s1316] %v1579
              $region162: #{tpu_custom_call.1} parent=156 // loop_footer
                %s1322 = sadd.s32 1, %s1318
              $region163: #{tpu_custom_call.1} parent=156 // loop_footer_branch
                %1317 = sbr.rel target = $region159
              $region164: #{tpu_custom_call.1} parent=156 // loop_exit
                _
            $region157: #{tpu_custom_call.1} parent=148 // pred_fallthru
              _
          $region149: #{tpu_custom_call.1} parent=144 // pred_fallthru
            _
          %1857 = vnop
        $region145: #{tpu_custom_call.1} parent=99 // pred_fallthru
          _
        // Predicated region
        $region183: #{tpu_custom_call.1} parent=99 // pred_check
          %p1858 = pneg %p153
        $region184: #{tpu_custom_call.1} parent=99 // pred_check_branch
          %1860 = sbr.rel (%p1858) target = $region186
        $region185: #{tpu_custom_call.1} parent=99 // pred_region
          %p1861 = scmp.lt.s32.totalorder %s39, 1
          %s1862 = scalar_select %p1861, %s39, 1
          %s1863 = smul.addr %s1862, 8
          %s1864 = scalar_lea.vmem %s4, %s1863
        $region186: #{tpu_custom_call.1} parent=99 // pred_fallthru
          _
      $region100: #{tpu_custom_call.1} parent=5 // pred_fallthru
        _
      %p1865 = scmp.le.s32.totalorder 1, %s39
      %p1866 = scmp.lt.s32.totalorder %s39, 3
      %p1867 = pnand %p1865, %p1866
      %p1868 = pneg %p1867
      // Predicated region
      $region187: #{tpu_custom_call.1} parent=5 // pred_check
        _
      $region188: #{tpu_custom_call.1} parent=5 // pred_check_branch
        %1870 = sbr.rel (%p1867) target = $region190
      $region189: #{tpu_custom_call.1} parent=5 // pred_region
        %s1871 = ssub.s32 %s39, 1
        %s1872 = sand.u32 %s73, 1
        %s1873 = sand.u32 %s73, 1
        %s1874 = smul.addr %s1873, 512
        %s1875 = scalar_lea.vmem [#allocation7], %s1874
        // Predicated region
        $region191: #{tpu_custom_call.1} parent=189 // pred_check
          %p1876 = pneg %p86
        $region192: #{tpu_custom_call.1} parent=189 // pred_check_branch
          %1878 = sbr.rel (%p1876) target = $region194
        $region193: #{tpu_custom_call.1} parent=189 // pred_region
          _
        $region194: #{tpu_custom_call.1} parent=189 // pred_fallthru
          _
        %s1879 = sand.u32 %s99, 1
        %s1880 = sand.u32 %s99, 1
        %s1881 = smul.addr %s1880, 512
        %s1882 = scalar_lea.vmem [#allocation8], %s1881
        // Predicated region
        $region195: #{tpu_custom_call.1} parent=189 // pred_check
          %p1883 = pneg %p112
        $region196: #{tpu_custom_call.1} parent=189 // pred_check_branch
          %1885 = sbr.rel (%p1883) target = $region198
        $region197: #{tpu_custom_call.1} parent=189 // pred_region
          _
        $region198: #{tpu_custom_call.1} parent=189 // pred_fallthru
          _
        // Predicated region
        $region199: #{tpu_custom_call.1} parent=189 // pred_check
          %p1886 = pneg %p133
        $region200: #{tpu_custom_call.1} parent=189 // pred_check_branch
          %1888 = sbr.rel (%p1886) target = $region202
        $region201: #{tpu_custom_call.1} parent=189 // pred_region
          %1889 = dma.done [#allocation10], 128
        $region202: #{tpu_custom_call.1} parent=189 // pred_fallthru
          _
        // Predicated region
        $region203: #{tpu_custom_call.1} parent=189 // pred_check
          %p1890 = pneg %p201
        $region204: #{tpu_custom_call.1} parent=189 // pred_check_branch
          %1892 = sbr.rel (%p1890) target = $region206
        $region205: #{tpu_custom_call.1} parent=189 // pred_region
          %1893 = dma.done [#allocation13], 128
        $region206: #{tpu_custom_call.1} parent=189 // pred_fallthru
          _
        %p1894 = pneg %p60
        %p1895 = pneg %p57
        %s1896 = sand.u32 %s73, 1
        %s1897 = sand.u32 %s73, 1
        %s1898 = smul.addr %s1897, 512
        %s1899 = scalar_lea.vmem [#allocation7], %s1898
        %p1900 = pneg %p86
        %p1901 = pneg %p83
        %s1902 = sand.u32 %s99, 1
        %s1903 = sand.u32 %s99, 1
        %s1904 = smul.addr %s1903, 512
        %s1905 = scalar_lea.vmem [#allocation8], %s1904
        %p1906 = pneg %p112
        %p1907 = pneg %p109
        %p1908 = pneg %p133
        %p1909 = pneg %p130
        %p1910 = scmp.lt.s32.totalorder %s44, 1
        %s1911 = scalar_select %p1910, %s44, 1
        %s1912 = smul.addr %s1911, 8
        %s1913 = scalar_lea.vmem %s4, %s1912
        %p1914 = pneg %p159
        %p1915 = pneg %p156
        %p1916 = pneg %p180
        %p1917 = pneg %p177
        %p1918 = pneg %p201
        %p1919 = pneg %p198
        %p1920 = pneg %p222
        %p1921 = pneg %p219
        %p1922 = pneg %p243
        %p1923 = pneg %p240
        %p1924 = pneg %p264
        %p1925 = pneg %p261
        %p1926 = pneg %p285
        %p1927 = pneg %p282
        %p1928 = pneg %p306
        %p1929 = pneg %p303
        %p1930 = pneg %p327
        %p1931 = pneg %p324
        %p1932 = pneg %p348
        %p1933 = pneg %p345
        %p1934 = pneg %p369
        %p1935 = pneg %p366
        %p1936 = pneg %p390
        %p1937 = pneg %p387
        %p1938 = pneg %p411
        %p1939 = pneg %p408
        %p1940 = pneg %p432
        %p1941 = pneg %p429
        %p1942 = pneg %p453
        %p1943 = pneg %p450
        %p1944 = pneg %p474
        %p1945 = pneg %p471
        %p1946 = pneg %p495
        %p1947 = pneg %p492
        %p1948 = pneg %p516
        %p1949 = pneg %p513
        %p1950 = pneg %p537
        %p1951 = pneg %p534
        %p1952 = pneg %p558
        %p1953 = pneg %p555
        %p1954 = pneg %p579
        %p1955 = pneg %p576
        %p1956 = pneg %p600
        %p1957 = pneg %p597
        %p1958 = pneg %p621
        %p1959 = pneg %p618
        %p1960 = pneg %p642
        %p1961 = pneg %p639
        %s1962 = smul.u32 16, %s44
        %s1963 = smul.u32 16, %s44
        %p1964 = scmp.lt.s32.totalorder %s44, 1
        %s1965 = scalar_select %p1964, %s44, 1
        %s1966 = smul.addr %s1965, 8
        %s1967 = scalar_lea.vmem %s4, %s1966
        %p1969 = scmp.eq.s32.totalorder %s44, 0
        // Predicated region
        $region207: #{tpu_custom_call.1} parent=189 // pred_check
          %p1970 = pneg %p1969
        $region208: #{tpu_custom_call.1} parent=189 // pred_check_branch
          %1972 = sbr.rel (%p1970) target = $region210
        $region209: #{tpu_custom_call.1} parent=189 // pred_region
          %v1973 = vld [vmem:[#allocation9] sm:$0xff]
          %v1974 = vld [vmem:[%s7] sm:$0xff]
          %v1975 = vld [vmem:[%s7 + $0x8] sm:$0xff]
          %v1976 = vld [vmem:[%s7 + $0x10] sm:$0xff]
          %v1977 = vld [vmem:[%s7 + $0x18] sm:$0xff]
          %v1978 = vld [vmem:[%s7 + $0x20] sm:$0xff]
          %v1979 = vld [vmem:[%s7 + $0x28] sm:$0xff]
          %v1980 = vld [vmem:[%s7 + $0x30] sm:$0xff]
          %v1981 = vld [vmem:[%s7 + $0x38] sm:$0xff]
          %vm1982 = vcmask 523264
          %v1984 = vsel %vm1982, %v1973, 0
          %1986 = vmatprep.subr.mxu0 0.0
          %1987 = vmatpush1.msra.mxu0 0.0
          %1988 = vmatprep.subr.mxu0 0.0
          %1989 = vmatpush1.msra.mxu0 0.0
          %1990 = vmatprep.subr.mxu0 0.0
          %1991 = vmatpush1.msra.mxu0 0.0
          %1992 = vmatprep.subr.mxu0 0.0
          %1993 = vmatpush1.msra.mxu0 0.0
          %1994 = vmatprep.subr.mxu0 0.0
          %1995 = vmatpush1.msra.mxu0 0.0
          %1996 = vmatprep.subr.mxu0 0.0
          %1997 = vmatpush1.msra.mxu0 0.0
          %1998 = vmatprep.subr.mxu0 0.0
          %1999 = vmatpush1.msra.mxu0 0.0
          %2000 = vmatprep.subr.mxu0 0.0
          %2001 = vmatpush1.msra.mxu0 0.0
          %2002 = vmatprep.subr.mxu0 0.0
          %2003 = vmatpush1.msra.mxu0 %v1981
          %2004 = vmatprep.subr.mxu0 0.0
          %2005 = vmatpush1.msra.mxu0 %v1980
          %2006 = vmatprep.subr.mxu0 0.0
          %2007 = vmatpush1.msra.mxu0 %v1979
          %2008 = vmatprep.subr.mxu0 0.0
          %2009 = vmatpush1.msra.mxu0 %v1978
          %2010 = vmatprep.subr.mxu0 0.0
          %2011 = vmatpush1.msra.mxu0 %v1977
          %2012 = vmatprep.subr.mxu0 0.0
          %2013 = vmatpush1.msra.mxu0 %v1976
          %2014 = vmatprep.subr.mxu0 0.0
          %2015 = vmatpush1.msra.mxu0 %v1975
          %2016 = vmatprep.subr.mxu0 0.0
          %2017 = vmatpush1.msra.mxu0 %v1974
          %2018 = vmatprep.subr.mxu0 0.0
          %2019 = vmatpush2.msra.mxu0 0.0
          %2020 = vmatprep.subr.mxu0 0.0
          %2021 = vmatpush2.msra.mxu0 0.0
          %2022 = vmatprep.subr.mxu0 0.0
          %2023 = vmatpush2.msra.mxu0 0.0
          %2024 = vmatprep.subr.mxu0 0.0
          %2025 = vmatpush2.msra.mxu0 0.0
          %2026 = vmatprep.subr.mxu0 0.0
          %2027 = vmatpush2.msra.mxu0 0.0
          %2028 = vmatprep.subr.mxu0 0.0
          %2029 = vmatpush2.msra.mxu0 0.0
          %2030 = vmatprep.subr.mxu0 0.0
          %2031 = vmatpush2.msra.mxu0 0.0
          %2032 = vmatprep.subr.mxu0 0.0
          %2033 = vmatpush2.msra.mxu0 0.0
          %2034 = vmatprep.subr.mxu0 0.0
          %2035 = vmatpush2.msra.mxu0 0.0
          %2036 = vmatprep.subr.mxu0 0.0
          %2037 = vmatpush2.msra.mxu0 0.0
          %2038 = vmatprep.subr.mxu0 0.0
          %2039 = vmatpush2.msra.mxu0 0.0
          %2040 = vmatprep.subr.mxu0 0.0
          %2041 = vmatpush2.msra.mxu0 0.0
          %2042 = vmatprep.subr.mxu0 0.0
          %2043 = vmatpush2.msra.mxu0 0.0
          %2044 = vmatprep.subr.mxu0 0.0
          %2045 = vmatpush2.msra.mxu0 0.0
          %2046 = vmatprep.subr.mxu0 0.0
          %2047 = vmatpush2.msra.mxu0 0.0
          %2048 = vmatprep.subr.mxu0 0.0
          %2049 = vmatpush2.msra.mxu0 0.0
          %2050 = vmatprep.mubr.f32.mxu0 0.0
          %2051 = vmatmul.mubr.f32.gmra.mxu0 %v1984
          %v2052 = vpop.f32.mrf.mxu0
          %v2053 = vadd.f32 0.0, %v2052
          %v2054 = vpop.f32.mrf.mxu0
          %2055 = vdwg.mxu0
          %2056 = vst.msk [vmem:[#allocation2] sm:$0xff] %vm1982, %v2053
          %vm2057 = vcmask 7168
          %2058 = vst.msk [vmem:[#allocation3] sm:$0xff] %vm2057, -inf
          %2059 = vst.msk [vmem:[#allocation4] sm:$0xff] %vm2057, 0.0
          %2060 = vst.msk [vmem:[#allocation5] sm:$0xff] %vm1982, 0.0
        $region210: #{tpu_custom_call.1} parent=189 // pred_fallthru
          _
        %v2061 = vld [vmem:[%s1875] sm:$0xf]
        %v2062 = vld [vmem:[%s1875 + $0x4] sm:$0xf]
        %v2063 = vld [vmem:[%s1875 + $0x8] sm:$0xf]
        %v2064 = vld [vmem:[%s1875 + $0xc] sm:$0xf]
        %v2065 = vld [vmem:[%s1875 + $0x10] sm:$0xf]
        %v2066 = vld [vmem:[%s1875 + $0x14] sm:$0xf]
        %v2067 = vld [vmem:[%s1875 + $0x18] sm:$0xf]
        %v2068 = vld [vmem:[%s1875 + $0x1c] sm:$0xf]
        %v2069 = vld [vmem:[%s1875 + $0x20] sm:$0xf]
        %v2070 = vld [vmem:[%s1875 + $0x24] sm:$0xf]
        %v2071 = vld [vmem:[%s1875 + $0x28] sm:$0xf]
        %v2072 = vld [vmem:[%s1875 + $0x2c] sm:$0xf]
        %v2073 = vld [vmem:[%s1875 + $0x30] sm:$0xf]
        %v2074 = vld [vmem:[%s1875 + $0x34] sm:$0xf]
        %v2075 = vld [vmem:[%s1875 + $0x38] sm:$0xf]
        %v2076 = vld [vmem:[%s1875 + $0x3c] sm:$0xf]
        %v2077 = vld [vmem:[%s1875 + $0x40] sm:$0xf]
        %v2078 = vld [vmem:[%s1875 + $0x44] sm:$0xf]
        %v2079 = vld [vmem:[%s1875 + $0x48] sm:$0xf]
        %v2080 = vld [vmem:[%s1875 + $0x4c] sm:$0xf]
        %v2081 = vld [vmem:[%s1875 + $0x50] sm:$0xf]
        %v2082 = vld [vmem:[%s1875 + $0x54] sm:$0xf]
        %v2083 = vld [vmem:[%s1875 + $0x58] sm:$0xf]
        %v2084 = vld [vmem:[%s1875 + $0x5c] sm:$0xf]
        %v2085 = vld [vmem:[%s1875 + $0x60] sm:$0xf]
        %v2086 = vld [vmem:[%s1875 + $0x64] sm:$0xf]
        %v2087 = vld [vmem:[%s1875 + $0x68] sm:$0xf]
        %v2088 = vld [vmem:[%s1875 + $0x6c] sm:$0xf]
        %v2089 = vld [vmem:[%s1875 + $0x70] sm:$0xf]
        %v2090 = vld [vmem:[%s1875 + $0x74] sm:$0xf]
        %v2091 = vld [vmem:[%s1875 + $0x78] sm:$0xf]
        %v2092 = vld [vmem:[%s1875 + $0x7c] sm:$0xf]
        %v2093 = vld [vmem:[%s1875 + $0x80] sm:$0xf]
        %v2094 = vld [vmem:[%s1875 + $0x84] sm:$0xf]
        %v2095 = vld [vmem:[%s1875 + $0x88] sm:$0xf]
        %v2096 = vld [vmem:[%s1875 + $0x8c] sm:$0xf]
        %v2097 = vld [vmem:[%s1875 + $0x90] sm:$0xf]
        %v2098 = vld [vmem:[%s1875 + $0x94] sm:$0xf]
        %v2099 = vld [vmem:[%s1875 + $0x98] sm:$0xf]
        %v2100 = vld [vmem:[%s1875 + $0x9c] sm:$0xf]
        %v2101 = vld [vmem:[%s1875 + $0xa0] sm:$0xf]
        %v2102 = vld [vmem:[%s1875 + $0xa4] sm:$0xf]
        %v2103 = vld [vmem:[%s1875 + $0xa8] sm:$0xf]
        %v2104 = vld [vmem:[%s1875 + $0xac] sm:$0xf]
        %v2105 = vld [vmem:[%s1875 + $0xb0] sm:$0xf]
        %v2106 = vld [vmem:[%s1875 + $0xb4] sm:$0xf]
        %v2107 = vld [vmem:[%s1875 + $0xb8] sm:$0xf]
        %v2108 = vld [vmem:[%s1875 + $0xbc] sm:$0xf]
        %v2109 = vld [vmem:[%s1875 + $0xc0] sm:$0xf]
        %v2110 = vld [vmem:[%s1875 + $0xc4] sm:$0xf]
        %v2111 = vld [vmem:[%s1875 + $0xc8] sm:$0xf]
        %v2112 = vld [vmem:[%s1875 + $0xcc] sm:$0xf]
        %v2113 = vld [vmem:[%s1875 + $0xd0] sm:$0xf]
        %v2114 = vld [vmem:[%s1875 + $0xd4] sm:$0xf]
        %v2115 = vld [vmem:[%s1875 + $0xd8] sm:$0xf]
        %v2116 = vld [vmem:[%s1875 + $0xdc] sm:$0xf]
        %v2117 = vld [vmem:[%s1875 + $0xe0] sm:$0xf]
        %v2118 = vld [vmem:[%s1875 + $0xe4] sm:$0xf]
        %v2119 = vld [vmem:[%s1875 + $0xe8] sm:$0xf]
        %v2120 = vld [vmem:[%s1875 + $0xec] sm:$0xf]
        %v2121 = vld [vmem:[%s1875 + $0xf0] sm:$0xf]
        %v2122 = vld [vmem:[%s1875 + $0xf4] sm:$0xf]
        %v2123 = vld [vmem:[%s1875 + $0xf8] sm:$0xf]
        %v2124 = vld [vmem:[%s1875 + $0xfc] sm:$0xf]
        %v2125 = vld [vmem:[%s1875 + $0x100] sm:$0xf]
        %v2126 = vld [vmem:[%s1875 + $0x104] sm:$0xf]
        %v2127 = vld [vmem:[%s1875 + $0x108] sm:$0xf]
        %v2128 = vld [vmem:[%s1875 + $0x10c] sm:$0xf]
        %v2129 = vld [vmem:[%s1875 + $0x110] sm:$0xf]
        %v2130 = vld [vmem:[%s1875 + $0x114] sm:$0xf]
        %v2131 = vld [vmem:[%s1875 + $0x118] sm:$0xf]
        %v2132 = vld [vmem:[%s1875 + $0x11c] sm:$0xf]
        %v2133 = vld [vmem:[%s1875 + $0x120] sm:$0xf]
        %v2134 = vld [vmem:[%s1875 + $0x124] sm:$0xf]
        %v2135 = vld [vmem:[%s1875 + $0x128] sm:$0xf]
        %v2136 = vld [vmem:[%s1875 + $0x12c] sm:$0xf]
        %v2137 = vld [vmem:[%s1875 + $0x130] sm:$0xf]
        %v2138 = vld [vmem:[%s1875 + $0x134] sm:$0xf]
        %v2139 = vld [vmem:[%s1875 + $0x138] sm:$0xf]
        %v2140 = vld [vmem:[%s1875 + $0x13c] sm:$0xf]
        %v2141 = vld [vmem:[%s1875 + $0x140] sm:$0xf]
        %v2142 = vld [vmem:[%s1875 + $0x144] sm:$0xf]
        %v2143 = vld [vmem:[%s1875 + $0x148] sm:$0xf]
        %v2144 = vld [vmem:[%s1875 + $0x14c] sm:$0xf]
        %v2145 = vld [vmem:[%s1875 + $0x150] sm:$0xf]
        %v2146 = vld [vmem:[%s1875 + $0x154] sm:$0xf]
        %v2147 = vld [vmem:[%s1875 + $0x158] sm:$0xf]
        %v2148 = vld [vmem:[%s1875 + $0x15c] sm:$0xf]
        %v2149 = vld [vmem:[%s1875 + $0x160] sm:$0xf]
        %v2150 = vld [vmem:[%s1875 + $0x164] sm:$0xf]
        %v2151 = vld [vmem:[%s1875 + $0x168] sm:$0xf]
        %v2152 = vld [vmem:[%s1875 + $0x16c] sm:$0xf]
        %v2153 = vld [vmem:[%s1875 + $0x170] sm:$0xf]
        %v2154 = vld [vmem:[%s1875 + $0x174] sm:$0xf]
        %v2155 = vld [vmem:[%s1875 + $0x178] sm:$0xf]
        %v2156 = vld [vmem:[%s1875 + $0x17c] sm:$0xf]
        %v2157 = vld [vmem:[%s1875 + $0x180] sm:$0xf]
        %v2158 = vld [vmem:[%s1875 + $0x184] sm:$0xf]
        %v2159 = vld [vmem:[%s1875 + $0x188] sm:$0xf]
        %v2160 = vld [vmem:[%s1875 + $0x18c] sm:$0xf]
        %v2161 = vld [vmem:[%s1875 + $0x190] sm:$0xf]
        %v2162 = vld [vmem:[%s1875 + $0x194] sm:$0xf]
        %v2163 = vld [vmem:[%s1875 + $0x198] sm:$0xf]
        %v2164 = vld [vmem:[%s1875 + $0x19c] sm:$0xf]
        %v2165 = vld [vmem:[%s1875 + $0x1a0] sm:$0xf]
        %v2166 = vld [vmem:[%s1875 + $0x1a4] sm:$0xf]
        %v2167 = vld [vmem:[%s1875 + $0x1a8] sm:$0xf]
        %v2168 = vld [vmem:[%s1875 + $0x1ac] sm:$0xf]
        %v2169 = vld [vmem:[%s1875 + $0x1b0] sm:$0xf]
        %v2170 = vld [vmem:[%s1875 + $0x1b4] sm:$0xf]
        %v2171 = vld [vmem:[%s1875 + $0x1b8] sm:$0xf]
        %v2172 = vld [vmem:[%s1875 + $0x1bc] sm:$0xf]
        %v2173 = vld [vmem:[%s1875 + $0x1c0] sm:$0xf]
        %v2174 = vld [vmem:[%s1875 + $0x1c4] sm:$0xf]
        %v2175 = vld [vmem:[%s1875 + $0x1c8] sm:$0xf]
        %v2176 = vld [vmem:[%s1875 + $0x1cc] sm:$0xf]
        %v2177 = vld [vmem:[%s1875 + $0x1d0] sm:$0xf]
        %v2178 = vld [vmem:[%s1875 + $0x1d4] sm:$0xf]
        %v2179 = vld [vmem:[%s1875 + $0x1d8] sm:$0xf]
        %v2180 = vld [vmem:[%s1875 + $0x1dc] sm:$0xf]
        %v2181 = vld [vmem:[%s1875 + $0x1e0] sm:$0xf]
        %v2182 = vld [vmem:[%s1875 + $0x1e4] sm:$0xf]
        %v2183 = vld [vmem:[%s1875 + $0x1e8] sm:$0xf]
        %v2184 = vld [vmem:[%s1875 + $0x1ec] sm:$0xf]
        %v2185 = vld [vmem:[%s1875 + $0x1f0] sm:$0xf]
        %v2186 = vld [vmem:[%s1875 + $0x1f4] sm:$0xf]
        %v2187 = vld [vmem:[%s1875 + $0x1f8] sm:$0xf]
        %v2188 = vld [vmem:[%s1875 + $0x1fc] sm:$0xf]
        %v2189 = vld [vmem:[#allocation2] sm:$0xff]
        %v2191 = vcombine.high %v2189, %v2189
        %v2193 = vunpack.c.l.s4 1966171168
        %v2194 = vunpack.c.0.s8 %v2193
        %v2195 = vlaneseq
        %v2196 = vshrl.u32 %v2195, 7
        %v2197 = vsub.s32 %v2194, %v2196
        %v2198 = vrot.slane %v2189, %v2197
        %v2200 = vunpack.c.l.s4 1966171168
        %v2201 = vunpack.c.0.s8 %v2200
        %v2202 = vlaneseq
        %v2203 = vshrl.u32 %v2202, 7
        %v2204 = vsub.s32 %v2201, %v2203
        %v2205 = vrot.slane %v2191, %v2204
        %v2206 = vcombine.high %v2198, %v2198
        %v2207 = vcombine.high %v2205, %v2205
        %v2209 = vunpack.c.l.s4 1966171168
        %v2210 = vunpack.c.0.s8 %v2209
        %v2211 = vlaneseq
        %v2212 = vshrl.u32 %v2211, 7
        %v2213 = vsub.s32 %v2210, %v2212
        %v2214 = vrot.slane %v2198, %v2213
        %v2216 = vunpack.c.l.s4 1966171168
        %v2217 = vunpack.c.0.s8 %v2216
        %v2218 = vlaneseq
        %v2219 = vshrl.u32 %v2218, 7
        %v2220 = vsub.s32 %v2217, %v2219
        %v2221 = vrot.slane %v2205, %v2220
        %v2223 = vunpack.c.l.s4 1966171168
        %v2224 = vunpack.c.0.s8 %v2223
        %v2225 = vlaneseq
        %v2226 = vshrl.u32 %v2225, 7
        %v2227 = vsub.s32 %v2224, %v2226
        %v2228 = vrot.slane %v2206, %v2227
        %v2230 = vunpack.c.l.s4 1966171168
        %v2231 = vunpack.c.0.s8 %v2230
        %v2232 = vlaneseq
        %v2233 = vshrl.u32 %v2232, 7
        %v2234 = vsub.s32 %v2231, %v2233
        %v2235 = vrot.slane %v2207, %v2234
        %v2236 = vcombine.high %v2214, %v2214
        %v2237 = vcombine.high %v2221, %v2221
        %v2238 = vcombine.high %v2228, %v2228
        %v2239 = vcombine.high %v2235, %v2235
        %v2248 = vpack.c.bf16 %v2214, %v2214
        %v2249 = vpack.c.bf16 %v2228, %v2228
        %v2250 = vpack.c.bf16 %v2236, %v2236
        %v2251 = vpack.c.bf16 %v2238, %v2238
        %v2252 = vpack.c.bf16 %v2221, %v2221
        %v2253 = vpack.c.bf16 %v2235, %v2235
        %v2254 = vpack.c.bf16 %v2237, %v2237
        %v2255 = vpack.c.bf16 %v2239, %v2239
        %v2257 = vpack.i.b16 %v2248, %v2248
        %v2259 = vlaneseq
        %v2260 = vshrl.u32 %v2259, 7
        %v2261 = vsub.s32 0, %v2260
        %v2262 = vrot.slane %v2257, %v2261
        %v2264 = vpack.i.b16 %v2249, %v2249
        %v2266 = vlaneseq
        %v2267 = vshrl.u32 %v2266, 7
        %v2268 = vsub.s32 0, %v2267
        %v2269 = vrot.slane %v2264, %v2268
        %v2271 = vpack.i.b16 %v2250, %v2250
        %v2273 = vlaneseq
        %v2274 = vshrl.u32 %v2273, 7
        %v2275 = vsub.s32 0, %v2274
        %v2276 = vrot.slane %v2271, %v2275
        %v2278 = vpack.i.b16 %v2251, %v2251
        %v2280 = vlaneseq
        %v2281 = vshrl.u32 %v2280, 7
        %v2282 = vsub.s32 0, %v2281
        %v2283 = vrot.slane %v2278, %v2282
        %v2285 = vpack.i.b16 %v2252, %v2252
        %v2287 = vlaneseq
        %v2288 = vshrl.u32 %v2287, 7
        %v2289 = vsub.s32 0, %v2288
        %v2290 = vrot.slane %v2285, %v2289
        %v2292 = vpack.i.b16 %v2253, %v2253
        %v2294 = vlaneseq
        %v2295 = vshrl.u32 %v2294, 7
        %v2296 = vsub.s32 0, %v2295
        %v2297 = vrot.slane %v2292, %v2296
        %v2299 = vpack.i.b16 %v2254, %v2254
        %v2301 = vlaneseq
        %v2302 = vshrl.u32 %v2301, 7
        %v2303 = vsub.s32 0, %v2302
        %v2304 = vrot.slane %v2299, %v2303
        %v2306 = vpack.i.b16 %v2255, %v2255
        %v2308 = vlaneseq
        %v2309 = vshrl.u32 %v2308, 7
        %v2310 = vsub.s32 0, %v2309
        %v2311 = vrot.slane %v2306, %v2310
        %v2320 = vunpack.c.l.b16 %v2262
        %v2321 = vunpack.c.l.b16 %v2269
        %v2322 = vunpack.c.l.b16 %v2276
        %v2323 = vunpack.c.l.b16 %v2283
        %v2324 = vunpack.c.l.b16 %v2290
        %v2325 = vunpack.c.l.b16 %v2297
        %v2326 = vunpack.c.l.b16 %v2304
        %v2327 = vunpack.c.l.b16 %v2311
        %v2328 = vpack.c.b16 %v2320, %v2320
        %v2329 = vpack.c.b16 %v2321, %v2321
        %v2330 = vpack.c.b16 %v2322, %v2322
        %v2331 = vpack.c.b16 %v2323, %v2323
        %v2332 = vpack.c.b16 %v2324, %v2324
        %v2333 = vpack.c.b16 %v2325, %v2325
        %v2334 = vpack.c.b16 %v2326, %v2326
        %v2335 = vpack.c.b16 %v2327, %v2327
        %v2344 = vadd.bf16 %v2061, %v2328
        %v2345 = vadd.bf16 %v2062, %v2328
        %v2346 = vadd.bf16 %v2063, %v2328
        %v2347 = vadd.bf16 %v2064, %v2328
        %v2348 = vadd.bf16 %v2065, %v2328
        %v2349 = vadd.bf16 %v2066, %v2328
        %v2350 = vadd.bf16 %v2067, %v2328
        %v2351 = vadd.bf16 %v2068, %v2328
        %v2352 = vadd.bf16 %v2069, %v2328
        %v2353 = vadd.bf16 %v2070, %v2328
        %v2354 = vadd.bf16 %v2071, %v2328
        %v2355 = vadd.bf16 %v2072, %v2328
        %v2356 = vadd.bf16 %v2073, %v2328
        %v2357 = vadd.bf16 %v2074, %v2328
        %v2358 = vadd.bf16 %v2075, %v2328
        %v2359 = vadd.bf16 %v2076, %v2328
        %v2360 = vadd.bf16 %v2077, %v2329
        %v2361 = vadd.bf16 %v2078, %v2329
        %v2362 = vadd.bf16 %v2079, %v2329
        %v2363 = vadd.bf16 %v2080, %v2329
        %v2364 = vadd.bf16 %v2081, %v2329
        %v2365 = vadd.bf16 %v2082, %v2329
        %v2366 = vadd.bf16 %v2083, %v2329
        %v2367 = vadd.bf16 %v2084, %v2329
        %v2368 = vadd.bf16 %v2085, %v2329
        %v2369 = vadd.bf16 %v2086, %v2329
        %v2370 = vadd.bf16 %v2087, %v2329
        %v2371 = vadd.bf16 %v2088, %v2329
        %v2372 = vadd.bf16 %v2089, %v2329
        %v2373 = vadd.bf16 %v2090, %v2329
        %v2374 = vadd.bf16 %v2091, %v2329
        %v2375 = vadd.bf16 %v2092, %v2329
        %v2376 = vadd.bf16 %v2093, %v2330
        %v2377 = vadd.bf16 %v2094, %v2330
        %v2378 = vadd.bf16 %v2095, %v2330
        %v2379 = vadd.bf16 %v2096, %v2330
        %v2380 = vadd.bf16 %v2097, %v2330
        %v2381 = vadd.bf16 %v2098, %v2330
        %v2382 = vadd.bf16 %v2099, %v2330
        %v2383 = vadd.bf16 %v2100, %v2330
        %v2384 = vadd.bf16 %v2101, %v2330
        %v2385 = vadd.bf16 %v2102, %v2330
        %v2386 = vadd.bf16 %v2103, %v2330
        %v2387 = vadd.bf16 %v2104, %v2330
        %v2388 = vadd.bf16 %v2105, %v2330
        %v2389 = vadd.bf16 %v2106, %v2330
        %v2390 = vadd.bf16 %v2107, %v2330
        %v2391 = vadd.bf16 %v2108, %v2330
        %v2392 = vadd.bf16 %v2109, %v2331
        %v2393 = vadd.bf16 %v2110, %v2331
        %v2394 = vadd.bf16 %v2111, %v2331
        %v2395 = vadd.bf16 %v2112, %v2331
        %v2396 = vadd.bf16 %v2113, %v2331
        %v2397 = vadd.bf16 %v2114, %v2331
        %v2398 = vadd.bf16 %v2115, %v2331
        %v2399 = vadd.bf16 %v2116, %v2331
        %v2400 = vadd.bf16 %v2117, %v2331
        %v2401 = vadd.bf16 %v2118, %v2331
        %v2402 = vadd.bf16 %v2119, %v2331
        %v2403 = vadd.bf16 %v2120, %v2331
        %v2404 = vadd.bf16 %v2121, %v2331
        %v2405 = vadd.bf16 %v2122, %v2331
        %v2406 = vadd.bf16 %v2123, %v2331
        %v2407 = vadd.bf16 %v2124, %v2331
        %v2408 = vadd.bf16 %v2125, %v2332
        %v2409 = vadd.bf16 %v2126, %v2332
        %v2410 = vadd.bf16 %v2127, %v2332
        %v2411 = vadd.bf16 %v2128, %v2332
        %v2412 = vadd.bf16 %v2129, %v2332
        %v2413 = vadd.bf16 %v2130, %v2332
        %v2414 = vadd.bf16 %v2131, %v2332
        %v2415 = vadd.bf16 %v2132, %v2332
        %v2416 = vadd.bf16 %v2133, %v2332
        %v2417 = vadd.bf16 %v2134, %v2332
        %v2418 = vadd.bf16 %v2135, %v2332
        %v2419 = vadd.bf16 %v2136, %v2332
        %v2420 = vadd.bf16 %v2137, %v2332
        %v2421 = vadd.bf16 %v2138, %v2332
        %v2422 = vadd.bf16 %v2139, %v2332
        %v2423 = vadd.bf16 %v2140, %v2332
        %v2424 = vadd.bf16 %v2141, %v2333
        %v2425 = vadd.bf16 %v2142, %v2333
        %v2426 = vadd.bf16 %v2143, %v2333
        %v2427 = vadd.bf16 %v2144, %v2333
        %v2428 = vadd.bf16 %v2145, %v2333
        %v2429 = vadd.bf16 %v2146, %v2333
        %v2430 = vadd.bf16 %v2147, %v2333
        %v2431 = vadd.bf16 %v2148, %v2333
        %v2432 = vadd.bf16 %v2149, %v2333
        %v2433 = vadd.bf16 %v2150, %v2333
        %v2434 = vadd.bf16 %v2151, %v2333
        %v2435 = vadd.bf16 %v2152, %v2333
        %v2436 = vadd.bf16 %v2153, %v2333
        %v2437 = vadd.bf16 %v2154, %v2333
        %v2438 = vadd.bf16 %v2155, %v2333
        %v2439 = vadd.bf16 %v2156, %v2333
        %v2440 = vadd.bf16 %v2157, %v2334
        %v2441 = vadd.bf16 %v2158, %v2334
        %v2442 = vadd.bf16 %v2159, %v2334
        %v2443 = vadd.bf16 %v2160, %v2334
        %v2444 = vadd.bf16 %v2161, %v2334
        %v2445 = vadd.bf16 %v2162, %v2334
        %v2446 = vadd.bf16 %v2163, %v2334
        %v2447 = vadd.bf16 %v2164, %v2334
        %v2448 = vadd.bf16 %v2165, %v2334
        %v2449 = vadd.bf16 %v2166, %v2334
        %v2450 = vadd.bf16 %v2167, %v2334
        %v2451 = vadd.bf16 %v2168, %v2334
        %v2452 = vadd.bf16 %v2169, %v2334
        %v2453 = vadd.bf16 %v2170, %v2334
        %v2454 = vadd.bf16 %v2171, %v2334
        %v2455 = vadd.bf16 %v2172, %v2334
        %v2456 = vadd.bf16 %v2173, %v2335
        %v2457 = vadd.bf16 %v2174, %v2335
        %v2458 = vadd.bf16 %v2175, %v2335
        %v2459 = vadd.bf16 %v2176, %v2335
        %v2460 = vadd.bf16 %v2177, %v2335
        %v2461 = vadd.bf16 %v2178, %v2335
        %v2462 = vadd.bf16 %v2179, %v2335
        %v2463 = vadd.bf16 %v2180, %v2335
        %v2464 = vadd.bf16 %v2181, %v2335
        %v2465 = vadd.bf16 %v2182, %v2335
        %v2466 = vadd.bf16 %v2183, %v2335
        %v2467 = vadd.bf16 %v2184, %v2335
        %v2468 = vadd.bf16 %v2185, %v2335
        %v2469 = vadd.bf16 %v2186, %v2335
        %v2470 = vadd.bf16 %v2187, %v2335
        %v2471 = vadd.bf16 %v2188, %v2335
        %v2472 = vtanh.bf16.pop %v2344
        %v2473 = vtanh.bf16.pop %v2345
        %v2474 = vtanh.bf16.pop %v2346
        %v2475 = vtanh.bf16.pop %v2347
        %v2476 = vtanh.bf16.pop %v2348
        %v2477 = vtanh.bf16.pop %v2349
        %v2478 = vtanh.bf16.pop %v2350
        %v2479 = vtanh.bf16.pop %v2351
        %v2480 = vtanh.bf16.pop %v2352
        %v2481 = vtanh.bf16.pop %v2353
        %v2482 = vtanh.bf16.pop %v2354
        %v2483 = vtanh.bf16.pop %v2355
        %v2484 = vtanh.bf16.pop %v2356
        %v2485 = vtanh.bf16.pop %v2357
        %v2486 = vtanh.bf16.pop %v2358
        %v2487 = vtanh.bf16.pop %v2359
        %v2488 = vtanh.bf16.pop %v2360
        %v2489 = vtanh.bf16.pop %v2361
        %v2490 = vtanh.bf16.pop %v2362
        %v2491 = vtanh.bf16.pop %v2363
        %v2492 = vtanh.bf16.pop %v2364
        %v2493 = vtanh.bf16.pop %v2365
        %v2494 = vtanh.bf16.pop %v2366
        %v2495 = vtanh.bf16.pop %v2367
        %v2496 = vtanh.bf16.pop %v2368
        %v2497 = vtanh.bf16.pop %v2369
        %v2498 = vtanh.bf16.pop %v2370
        %v2499 = vtanh.bf16.pop %v2371
        %v2500 = vtanh.bf16.pop %v2372
        %v2501 = vtanh.bf16.pop %v2373
        %v2502 = vtanh.bf16.pop %v2374
        %v2503 = vtanh.bf16.pop %v2375
        %v2504 = vtanh.bf16.pop %v2376
        %v2505 = vtanh.bf16.pop %v2377
        %v2506 = vtanh.bf16.pop %v2378
        %v2507 = vtanh.bf16.pop %v2379
        %v2508 = vtanh.bf16.pop %v2380
        %v2509 = vtanh.bf16.pop %v2381
        %v2510 = vtanh.bf16.pop %v2382
        %v2511 = vtanh.bf16.pop %v2383
        %v2512 = vtanh.bf16.pop %v2384
        %v2513 = vtanh.bf16.pop %v2385
        %v2514 = vtanh.bf16.pop %v2386
        %v2515 = vtanh.bf16.pop %v2387
        %v2516 = vtanh.bf16.pop %v2388
        %v2517 = vtanh.bf16.pop %v2389
        %v2518 = vtanh.bf16.pop %v2390
        %v2519 = vtanh.bf16.pop %v2391
        %v2520 = vtanh.bf16.pop %v2392
        %v2521 = vtanh.bf16.pop %v2393
        %v2522 = vtanh.bf16.pop %v2394
        %v2523 = vtanh.bf16.pop %v2395
        %v2524 = vtanh.bf16.pop %v2396
        %v2525 = vtanh.bf16.pop %v2397
        %v2526 = vtanh.bf16.pop %v2398
        %v2527 = vtanh.bf16.pop %v2399
        %v2528 = vtanh.bf16.pop %v2400
        %v2529 = vtanh.bf16.pop %v2401
        %v2530 = vtanh.bf16.pop %v2402
        %v2531 = vtanh.bf16.pop %v2403
        %v2532 = vtanh.bf16.pop %v2404
        %v2533 = vtanh.bf16.pop %v2405
        %v2534 = vtanh.bf16.pop %v2406
        %v2535 = vtanh.bf16.pop %v2407
        %v2536 = vtanh.bf16.pop %v2408
        %v2537 = vtanh.bf16.pop %v2409
        %v2538 = vtanh.bf16.pop %v2410
        %v2539 = vtanh.bf16.pop %v2411
        %v2540 = vtanh.bf16.pop %v2412
        %v2541 = vtanh.bf16.pop %v2413
        %v2542 = vtanh.bf16.pop %v2414
        %v2543 = vtanh.bf16.pop %v2415
        %v2544 = vtanh.bf16.pop %v2416
        %v2545 = vtanh.bf16.pop %v2417
        %v2546 = vtanh.bf16.pop %v2418
        %v2547 = vtanh.bf16.pop %v2419
        %v2548 = vtanh.bf16.pop %v2420
        %v2549 = vtanh.bf16.pop %v2421
        %v2550 = vtanh.bf16.pop %v2422
        %v2551 = vtanh.bf16.pop %v2423
        %v2552 = vtanh.bf16.pop %v2424
        %v2553 = vtanh.bf16.pop %v2425
        %v2554 = vtanh.bf16.pop %v2426
        %v2555 = vtanh.bf16.pop %v2427
        %v2556 = vtanh.bf16.pop %v2428
        %v2557 = vtanh.bf16.pop %v2429
        %v2558 = vtanh.bf16.pop %v2430
        %v2559 = vtanh.bf16.pop %v2431
        %v2560 = vtanh.bf16.pop %v2432
        %v2561 = vtanh.bf16.pop %v2433
        %v2562 = vtanh.bf16.pop %v2434
        %v2563 = vtanh.bf16.pop %v2435
        %v2564 = vtanh.bf16.pop %v2436
        %v2565 = vtanh.bf16.pop %v2437
        %v2566 = vtanh.bf16.pop %v2438
        %v2567 = vtanh.bf16.pop %v2439
        %v2568 = vtanh.bf16.pop %v2440
        %v2569 = vtanh.bf16.pop %v2441
        %v2570 = vtanh.bf16.pop %v2442
        %v2571 = vtanh.bf16.pop %v2443
        %v2572 = vtanh.bf16.pop %v2444
        %v2573 = vtanh.bf16.pop %v2445
        %v2574 = vtanh.bf16.pop %v2446
        %v2575 = vtanh.bf16.pop %v2447
        %v2576 = vtanh.bf16.pop %v2448
        %v2577 = vtanh.bf16.pop %v2449
        %v2578 = vtanh.bf16.pop %v2450
        %v2579 = vtanh.bf16.pop %v2451
        %v2580 = vtanh.bf16.pop %v2452
        %v2581 = vtanh.bf16.pop %v2453
        %v2582 = vtanh.bf16.pop %v2454
        %v2583 = vtanh.bf16.pop %v2455
        %v2584 = vtanh.bf16.pop %v2456
        %v2585 = vtanh.bf16.pop %v2457
        %v2586 = vtanh.bf16.pop %v2458
        %v2587 = vtanh.bf16.pop %v2459
        %v2588 = vtanh.bf16.pop %v2460
        %v2589 = vtanh.bf16.pop %v2461
        %v2590 = vtanh.bf16.pop %v2462
        %v2591 = vtanh.bf16.pop %v2463
        %v2592 = vtanh.bf16.pop %v2464
        %v2593 = vtanh.bf16.pop %v2465
        %v2594 = vtanh.bf16.pop %v2466
        %v2595 = vtanh.bf16.pop %v2467
        %v2596 = vtanh.bf16.pop %v2468
        %v2597 = vtanh.bf16.pop %v2469
        %v2598 = vtanh.bf16.pop %v2470
        %v2599 = vtanh.bf16.pop %v2471
        %v2600 = vunpack.c.l.bf16 %v2472
        %v2601 = vunpack.c.l.bf16 %v2473
        %v2602 = vunpack.c.l.bf16 %v2474
        %v2603 = vunpack.c.l.bf16 %v2475
        %v2604 = vunpack.c.l.bf16 %v2476
        %v2605 = vunpack.c.l.bf16 %v2477
        %v2606 = vunpack.c.l.bf16 %v2478
        %v2607 = vunpack.c.l.bf16 %v2479
        %v2608 = vunpack.c.l.bf16 %v2480
        %v2609 = vunpack.c.l.bf16 %v2481
        %v2610 = vunpack.c.l.bf16 %v2482
        %v2611 = vunpack.c.l.bf16 %v2483
        %v2612 = vunpack.c.l.bf16 %v2484
        %v2613 = vunpack.c.l.bf16 %v2485
        %v2614 = vunpack.c.l.bf16 %v2486
        %v2615 = vunpack.c.l.bf16 %v2487
        %v2616 = vunpack.c.l.bf16 %v2488
        %v2617 = vunpack.c.l.bf16 %v2489
        %v2618 = vunpack.c.l.bf16 %v2490
        %v2619 = vunpack.c.l.bf16 %v2491
        %v2620 = vunpack.c.l.bf16 %v2492
        %v2621 = vunpack.c.l.bf16 %v2493
        %v2622 = vunpack.c.l.bf16 %v2494
        %v2623 = vunpack.c.l.bf16 %v2495
        %v2624 = vunpack.c.l.bf16 %v2496
        %v2625 = vunpack.c.l.bf16 %v2497
        %v2626 = vunpack.c.l.bf16 %v2498
        %v2627 = vunpack.c.l.bf16 %v2499
        %v2628 = vunpack.c.l.bf16 %v2500
        %v2629 = vunpack.c.l.bf16 %v2501
        %v2630 = vunpack.c.l.bf16 %v2502
        %v2631 = vunpack.c.l.bf16 %v2503
        %v2632 = vunpack.c.l.bf16 %v2504
        %v2633 = vunpack.c.l.bf16 %v2505
        %v2634 = vunpack.c.l.bf16 %v2506
        %v2635 = vunpack.c.l.bf16 %v2507
        %v2636 = vunpack.c.l.bf16 %v2508
        %v2637 = vunpack.c.l.bf16 %v2509
        %v2638 = vunpack.c.l.bf16 %v2510
        %v2639 = vunpack.c.l.bf16 %v2511
        %v2640 = vunpack.c.l.bf16 %v2512
        %v2641 = vunpack.c.l.bf16 %v2513
        %v2642 = vunpack.c.l.bf16 %v2514
        %v2643 = vunpack.c.l.bf16 %v2515
        %v2644 = vunpack.c.l.bf16 %v2516
        %v2645 = vunpack.c.l.bf16 %v2517
        %v2646 = vunpack.c.l.bf16 %v2518
        %v2647 = vunpack.c.l.bf16 %v2519
        %v2648 = vunpack.c.l.bf16 %v2520
        %v2649 = vunpack.c.l.bf16 %v2521
        %v2650 = vunpack.c.l.bf16 %v2522
        %v2651 = vunpack.c.l.bf16 %v2523
        %v2652 = vunpack.c.l.bf16 %v2524
        %v2653 = vunpack.c.l.bf16 %v2525
        %v2654 = vunpack.c.l.bf16 %v2526
        %v2655 = vunpack.c.l.bf16 %v2527
        %v2656 = vunpack.c.l.bf16 %v2528
        %v2657 = vunpack.c.l.bf16 %v2529
        %v2658 = vunpack.c.l.bf16 %v2530
        %v2659 = vunpack.c.l.bf16 %v2531
        %v2660 = vunpack.c.l.bf16 %v2532
        %v2661 = vunpack.c.l.bf16 %v2533
        %v2662 = vunpack.c.l.bf16 %v2534
        %v2663 = vunpack.c.l.bf16 %v2535
        %v2664 = vunpack.c.l.bf16 %v2536
        %v2665 = vunpack.c.l.bf16 %v2537
        %v2666 = vunpack.c.l.bf16 %v2538
        %v2667 = vunpack.c.l.bf16 %v2539
        %v2668 = vunpack.c.l.bf16 %v2540
        %v2669 = vunpack.c.l.bf16 %v2541
        %v2670 = vunpack.c.l.bf16 %v2542
        %v2671 = vunpack.c.l.bf16 %v2543
        %v2672 = vunpack.c.l.bf16 %v2544
        %v2673 = vunpack.c.l.bf16 %v2545
        %v2674 = vunpack.c.l.bf16 %v2546
        %v2675 = vunpack.c.l.bf16 %v2547
        %v2676 = vunpack.c.l.bf16 %v2548
        %v2677 = vunpack.c.l.bf16 %v2549
        %v2678 = vunpack.c.l.bf16 %v2550
        %v2679 = vunpack.c.l.bf16 %v2551
        %v2680 = vunpack.c.l.bf16 %v2552
        %v2681 = vunpack.c.l.bf16 %v2553
        %v2682 = vunpack.c.l.bf16 %v2554
        %v2683 = vunpack.c.l.bf16 %v2555
        %v2684 = vunpack.c.l.bf16 %v2556
        %v2685 = vunpack.c.l.bf16 %v2557
        %v2686 = vunpack.c.l.bf16 %v2558
        %v2687 = vunpack.c.l.bf16 %v2559
        %v2688 = vunpack.c.l.bf16 %v2560
        %v2689 = vunpack.c.l.bf16 %v2561
        %v2690 = vunpack.c.l.bf16 %v2562
        %v2691 = vunpack.c.l.bf16 %v2563
        %v2692 = vunpack.c.l.bf16 %v2564
        %v2693 = vunpack.c.l.bf16 %v2565
        %v2694 = vunpack.c.l.bf16 %v2566
        %v2695 = vunpack.c.l.bf16 %v2567
        %v2696 = vunpack.c.l.bf16 %v2568
        %v2697 = vunpack.c.l.bf16 %v2569
        %v2698 = vunpack.c.l.bf16 %v2570
        %v2699 = vunpack.c.l.bf16 %v2571
        %v2700 = vunpack.c.l.bf16 %v2572
        %v2701 = vunpack.c.l.bf16 %v2573
        %v2702 = vunpack.c.l.bf16 %v2574
        %v2703 = vunpack.c.l.bf16 %v2575
        %v2704 = vunpack.c.l.bf16 %v2576
        %v2705 = vunpack.c.l.bf16 %v2577
        %v2706 = vunpack.c.l.bf16 %v2578
        %v2707 = vunpack.c.l.bf16 %v2579
        %v2708 = vunpack.c.l.bf16 %v2580
        %v2709 = vunpack.c.l.bf16 %v2581
        %v2710 = vunpack.c.l.bf16 %v2582
        %v2711 = vunpack.c.l.bf16 %v2583
        %v2712 = vunpack.c.l.bf16 %v2584
        %v2713 = vunpack.c.l.bf16 %v2585
        %v2714 = vunpack.c.l.bf16 %v2586
        %v2715 = vunpack.c.l.bf16 %v2587
        %v2716 = vunpack.c.l.bf16 %v2588
        %v2717 = vunpack.c.l.bf16 %v2589
        %v2718 = vunpack.c.l.bf16 %v2590
        %v2719 = vunpack.c.l.bf16 %v2591
        %v2720 = vunpack.c.l.bf16 %v2592
        %v2721 = vunpack.c.l.bf16 %v2593
        %v2722 = vunpack.c.l.bf16 %v2594
        %v2723 = vunpack.c.l.bf16 %v2595
        %v2724 = vunpack.c.l.bf16 %v2596
        %v2725 = vunpack.c.l.bf16 %v2597
        %v2726 = vunpack.c.l.bf16 %v2598
        %v2727 = vunpack.c.l.bf16 %v2599
        %v2728 = vld [vmem:[%s8] sm:$0x1]
        %v2730 = vlaneseq
        %v2731 = vshrl.u32 %v2730, 7
        %v2732 = vsub.s32 0, %v2731
        %v2733 = vrot.slane %v2728, %v2732
        %v2735 = vmul.f32 %v2600, %v2733
        %v2736 = vmul.f32 %v2601, %v2733
        %v2737 = vmul.f32 %v2602, %v2733
        %v2738 = vmul.f32 %v2603, %v2733
        %v2739 = vmul.f32 %v2604, %v2733
        %v2740 = vmul.f32 %v2605, %v2733
        %v2741 = vmul.f32 %v2606, %v2733
        %v2742 = vmul.f32 %v2607, %v2733
        %v2743 = vmul.f32 %v2608, %v2733
        %v2744 = vmul.f32 %v2609, %v2733
        %v2745 = vmul.f32 %v2610, %v2733
        %v2746 = vmul.f32 %v2611, %v2733
        %v2747 = vmul.f32 %v2612, %v2733
        %v2748 = vmul.f32 %v2613, %v2733
        %v2749 = vmul.f32 %v2614, %v2733
        %v2750 = vmul.f32 %v2615, %v2733
        %v2751 = vmul.f32 %v2616, %v2733
        %v2752 = vmul.f32 %v2617, %v2733
        %v2753 = vmul.f32 %v2618, %v2733
        %v2754 = vmul.f32 %v2619, %v2733
        %v2755 = vmul.f32 %v2620, %v2733
        %v2756 = vmul.f32 %v2621, %v2733
        %v2757 = vmul.f32 %v2622, %v2733
        %v2758 = vmul.f32 %v2623, %v2733
        %v2759 = vmul.f32 %v2624, %v2733
        %v2760 = vmul.f32 %v2625, %v2733
        %v2761 = vmul.f32 %v2626, %v2733
        %v2762 = vmul.f32 %v2627, %v2733
        %v2763 = vmul.f32 %v2628, %v2733
        %v2764 = vmul.f32 %v2629, %v2733
        %v2765 = vmul.f32 %v2630, %v2733
        %v2766 = vmul.f32 %v2631, %v2733
        %v2767 = vmul.f32 %v2632, %v2733
        %v2768 = vmul.f32 %v2633, %v2733
        %v2769 = vmul.f32 %v2634, %v2733
        %v2770 = vmul.f32 %v2635, %v2733
        %v2771 = vmul.f32 %v2636, %v2733
        %v2772 = vmul.f32 %v2637, %v2733
        %v2773 = vmul.f32 %v2638, %v2733
        %v2774 = vmul.f32 %v2639, %v2733
        %v2775 = vmul.f32 %v2640, %v2733
        %v2776 = vmul.f32 %v2641, %v2733
        %v2777 = vmul.f32 %v2642, %v2733
        %v2778 = vmul.f32 %v2643, %v2733
        %v2779 = vmul.f32 %v2644, %v2733
        %v2780 = vmul.f32 %v2645, %v2733
        %v2781 = vmul.f32 %v2646, %v2733
        %v2782 = vmul.f32 %v2647, %v2733
        %v2783 = vmul.f32 %v2648, %v2733
        %v2784 = vmul.f32 %v2649, %v2733
        %v2785 = vmul.f32 %v2650, %v2733
        %v2786 = vmul.f32 %v2651, %v2733
        %v2787 = vmul.f32 %v2652, %v2733
        %v2788 = vmul.f32 %v2653, %v2733
        %v2789 = vmul.f32 %v2654, %v2733
        %v2790 = vmul.f32 %v2655, %v2733
        %v2791 = vmul.f32 %v2656, %v2733
        %v2792 = vmul.f32 %v2657, %v2733
        %v2793 = vmul.f32 %v2658, %v2733
        %v2794 = vmul.f32 %v2659, %v2733
        %v2795 = vmul.f32 %v2660, %v2733
        %v2796 = vmul.f32 %v2661, %v2733
        %v2797 = vmul.f32 %v2662, %v2733
        %v2798 = vmul.f32 %v2663, %v2733
        %v2799 = vmul.f32 %v2664, %v2733
        %v2800 = vmul.f32 %v2665, %v2733
        %v2801 = vmul.f32 %v2666, %v2733
        %v2802 = vmul.f32 %v2667, %v2733
        %v2803 = vmul.f32 %v2668, %v2733
        %v2804 = vmul.f32 %v2669, %v2733
        %v2805 = vmul.f32 %v2670, %v2733
        %v2806 = vmul.f32 %v2671, %v2733
        %v2807 = vmul.f32 %v2672, %v2733
        %v2808 = vmul.f32 %v2673, %v2733
        %v2809 = vmul.f32 %v2674, %v2733
        %v2810 = vmul.f32 %v2675, %v2733
        %v2811 = vmul.f32 %v2676, %v2733
        %v2812 = vmul.f32 %v2677, %v2733
        %v2813 = vmul.f32 %v2678, %v2733
        %v2814 = vmul.f32 %v2679, %v2733
        %v2815 = vmul.f32 %v2680, %v2733
        %v2816 = vmul.f32 %v2681, %v2733
        %v2817 = vmul.f32 %v2682, %v2733
        %v2818 = vmul.f32 %v2683, %v2733
        %v2819 = vmul.f32 %v2684, %v2733
        %v2820 = vmul.f32 %v2685, %v2733
        %v2821 = vmul.f32 %v2686, %v2733
        %v2822 = vmul.f32 %v2687, %v2733
        %v2823 = vmul.f32 %v2688, %v2733
        %v2824 = vmul.f32 %v2689, %v2733
        %v2825 = vmul.f32 %v2690, %v2733
        %v2826 = vmul.f32 %v2691, %v2733
        %v2827 = vmul.f32 %v2692, %v2733
        %v2828 = vmul.f32 %v2693, %v2733
        %v2829 = vmul.f32 %v2694, %v2733
        %v2830 = vmul.f32 %v2695, %v2733
        %v2831 = vmul.f32 %v2696, %v2733
        %v2832 = vmul.f32 %v2697, %v2733
        %v2833 = vmul.f32 %v2698, %v2733
        %v2834 = vmul.f32 %v2699, %v2733
        %v2835 = vmul.f32 %v2700, %v2733
        %v2836 = vmul.f32 %v2701, %v2733
        %v2837 = vmul.f32 %v2702, %v2733
        %v2838 = vmul.f32 %v2703, %v2733
        %v2839 = vmul.f32 %v2704, %v2733
        %v2840 = vmul.f32 %v2705, %v2733
        %v2841 = vmul.f32 %v2706, %v2733
        %v2842 = vmul.f32 %v2707, %v2733
        %v2843 = vmul.f32 %v2708, %v2733
        %v2844 = vmul.f32 %v2709, %v2733
        %v2845 = vmul.f32 %v2710, %v2733
        %v2846 = vmul.f32 %v2711, %v2733
        %v2847 = vmul.f32 %v2712, %v2733
        %v2848 = vmul.f32 %v2713, %v2733
        %v2849 = vmul.f32 %v2714, %v2733
        %v2850 = vmul.f32 %v2715, %v2733
        %v2851 = vmul.f32 %v2716, %v2733
        %v2852 = vmul.f32 %v2717, %v2733
        %v2853 = vmul.f32 %v2718, %v2733
        %v2854 = vmul.f32 %v2719, %v2733
        %v2855 = vmul.f32 %v2720, %v2733
        %v2856 = vmul.f32 %v2721, %v2733
        %v2857 = vmul.f32 %v2722, %v2733
        %v2858 = vmul.f32 %v2723, %v2733
        %v2859 = vmul.f32 %v2724, %v2733
        %v2860 = vmul.f32 %v2725, %v2733
        %v2861 = vmul.f32 %v2726, %v2733
        %v2862 = vmul.f32 %v2727, %v2733
        %vm2863 = vcmask 523264
        %v2864 = vsel %vm2863, %v2735, 0.0
        %2865 = vadd.xlane.f32.xlu0 %v2864
        %v2866 = vpop.xlane.xlu0 %2865
        %v2867 = vsel %vm2863, %v2736, 0.0
        %2868 = vadd.xlane.f32.xlu0 %v2867
        %v2869 = vpop.xlane.xlu0 %2868
        %v2870 = vsel %vm2863, %v2737, 0.0
        %2871 = vadd.xlane.f32.xlu0 %v2870
        %v2872 = vpop.xlane.xlu0 %2871
        %v2873 = vsel %vm2863, %v2738, 0.0
        %2874 = vadd.xlane.f32.xlu0 %v2873
        %v2875 = vpop.xlane.xlu0 %2874
        %v2876 = vsel %vm2863, %v2739, 0.0
        %2877 = vadd.xlane.f32.xlu0 %v2876
        %v2878 = vpop.xlane.xlu0 %2877
        %v2879 = vsel %vm2863, %v2740, 0.0
        %2880 = vadd.xlane.f32.xlu0 %v2879
        %v2881 = vpop.xlane.xlu0 %2880
        %v2882 = vsel %vm2863, %v2741, 0.0
        %2883 = vadd.xlane.f32.xlu0 %v2882
        %v2884 = vpop.xlane.xlu0 %2883
        %v2885 = vsel %vm2863, %v2742, 0.0
        %2886 = vadd.xlane.f32.xlu0 %v2885
        %v2887 = vpop.xlane.xlu0 %2886
        %v2888 = vsel %vm2863, %v2743, 0.0
        %2889 = vadd.xlane.f32.xlu0 %v2888
        %v2890 = vpop.xlane.xlu0 %2889
        %v2891 = vsel %vm2863, %v2744, 0.0
        %2892 = vadd.xlane.f32.xlu0 %v2891
        %v2893 = vpop.xlane.xlu0 %2892
        %v2894 = vsel %vm2863, %v2745, 0.0
        %2895 = vadd.xlane.f32.xlu0 %v2894
        %v2896 = vpop.xlane.xlu0 %2895
        %v2897 = vsel %vm2863, %v2746, 0.0
        %2898 = vadd.xlane.f32.xlu0 %v2897
        %v2899 = vpop.xlane.xlu0 %2898
        %v2900 = vsel %vm2863, %v2747, 0.0
        %2901 = vadd.xlane.f32.xlu0 %v2900
        %v2902 = vpop.xlane.xlu0 %2901
        %v2903 = vsel %vm2863, %v2748, 0.0
        %2904 = vadd.xlane.f32.xlu0 %v2903
        %v2905 = vpop.xlane.xlu0 %2904
        %v2906 = vsel %vm2863, %v2749, 0.0
        %2907 = vadd.xlane.f32.xlu0 %v2906
        %v2908 = vpop.xlane.xlu0 %2907
        %v2909 = vsel %vm2863, %v2750, 0.0
        %2910 = vadd.xlane.f32.xlu0 %v2909
        %v2911 = vpop.xlane.xlu0 %2910
        %v2912 = vsel %vm2863, %v2751, 0.0
        %2913 = vadd.xlane.f32.xlu0 %v2912
        %v2914 = vpop.xlane.xlu0 %2913
        %v2915 = vsel %vm2863, %v2752, 0.0
        %2916 = vadd.xlane.f32.xlu0 %v2915
        %v2917 = vpop.xlane.xlu0 %2916
        %v2918 = vsel %vm2863, %v2753, 0.0
        %2919 = vadd.xlane.f32.xlu0 %v2918
        %v2920 = vpop.xlane.xlu0 %2919
        %v2921 = vsel %vm2863, %v2754, 0.0
        %2922 = vadd.xlane.f32.xlu0 %v2921
        %v2923 = vpop.xlane.xlu0 %2922
        %v2924 = vsel %vm2863, %v2755, 0.0
        %2925 = vadd.xlane.f32.xlu0 %v2924
        %v2926 = vpop.xlane.xlu0 %2925
        %v2927 = vsel %vm2863, %v2756, 0.0
        %2928 = vadd.xlane.f32.xlu0 %v2927
        %v2929 = vpop.xlane.xlu0 %2928
        %v2930 = vsel %vm2863, %v2757, 0.0
        %2931 = vadd.xlane.f32.xlu0 %v2930
        %v2932 = vpop.xlane.xlu0 %2931
        %v2933 = vsel %vm2863, %v2758, 0.0
        %2934 = vadd.xlane.f32.xlu0 %v2933
        %v2935 = vpop.xlane.xlu0 %2934
        %v2936 = vsel %vm2863, %v2759, 0.0
        %2937 = vadd.xlane.f32.xlu0 %v2936
        %v2938 = vpop.xlane.xlu0 %2937
        %v2939 = vsel %vm2863, %v2760, 0.0
        %2940 = vadd.xlane.f32.xlu0 %v2939
        %v2941 = vpop.xlane.xlu0 %2940
        %v2942 = vsel %vm2863, %v2761, 0.0
        %2943 = vadd.xlane.f32.xlu0 %v2942
        %v2944 = vpop.xlane.xlu0 %2943
        %v2945 = vsel %vm2863, %v2762, 0.0
        %2946 = vadd.xlane.f32.xlu0 %v2945
        %v2947 = vpop.xlane.xlu0 %2946
        %v2948 = vsel %vm2863, %v2763, 0.0
        %2949 = vadd.xlane.f32.xlu0 %v2948
        %v2950 = vpop.xlane.xlu0 %2949
        %v2951 = vsel %vm2863, %v2764, 0.0
        %2952 = vadd.xlane.f32.xlu0 %v2951
        %v2953 = vpop.xlane.xlu0 %2952
        %v2954 = vsel %vm2863, %v2765, 0.0
        %2955 = vadd.xlane.f32.xlu0 %v2954
        %v2956 = vpop.xlane.xlu0 %2955
        %v2957 = vsel %vm2863, %v2766, 0.0
        %2958 = vadd.xlane.f32.xlu0 %v2957
        %v2959 = vpop.xlane.xlu0 %2958
        %v2960 = vsel %vm2863, %v2767, 0.0
        %2961 = vadd.xlane.f32.xlu0 %v2960
        %v2962 = vpop.xlane.xlu0 %2961
        %v2963 = vsel %vm2863, %v2768, 0.0
        %2964 = vadd.xlane.f32.xlu0 %v2963
        %v2965 = vpop.xlane.xlu0 %2964
        %v2966 = vsel %vm2863, %v2769, 0.0
        %2967 = vadd.xlane.f32.xlu0 %v2966
        %v2968 = vpop.xlane.xlu0 %2967
        %v2969 = vsel %vm2863, %v2770, 0.0
        %2970 = vadd.xlane.f32.xlu0 %v2969
        %v2971 = vpop.xlane.xlu0 %2970
        %v2972 = vsel %vm2863, %v2771, 0.0
        %2973 = vadd.xlane.f32.xlu0 %v2972
        %v2974 = vpop.xlane.xlu0 %2973
        %v2975 = vsel %vm2863, %v2772, 0.0
        %2976 = vadd.xlane.f32.xlu0 %v2975
        %v2977 = vpop.xlane.xlu0 %2976
        %v2978 = vsel %vm2863, %v2773, 0.0
        %2979 = vadd.xlane.f32.xlu0 %v2978
        %v2980 = vpop.xlane.xlu0 %2979
        %v2981 = vsel %vm2863, %v2774, 0.0
        %2982 = vadd.xlane.f32.xlu0 %v2981
        %v2983 = vpop.xlane.xlu0 %2982
        %v2984 = vsel %vm2863, %v2775, 0.0
        %2985 = vadd.xlane.f32.xlu0 %v2984
        %v2986 = vpop.xlane.xlu0 %2985
        %v2987 = vsel %vm2863, %v2776, 0.0
        %2988 = vadd.xlane.f32.xlu0 %v2987
        %v2989 = vpop.xlane.xlu0 %2988
        %v2990 = vsel %vm2863, %v2777, 0.0
        %2991 = vadd.xlane.f32.xlu0 %v2990
        %v2992 = vpop.xlane.xlu0 %2991
        %v2993 = vsel %vm2863, %v2778, 0.0
        %2994 = vadd.xlane.f32.xlu0 %v2993
        %v2995 = vpop.xlane.xlu0 %2994
        %v2996 = vsel %vm2863, %v2779, 0.0
        %2997 = vadd.xlane.f32.xlu0 %v2996
        %v2998 = vpop.xlane.xlu0 %2997
        %v2999 = vsel %vm2863, %v2780, 0.0
        %3000 = vadd.xlane.f32.xlu0 %v2999
        %v3001 = vpop.xlane.xlu0 %3000
        %v3002 = vsel %vm2863, %v2781, 0.0
        %3003 = vadd.xlane.f32.xlu0 %v3002
        %v3004 = vpop.xlane.xlu0 %3003
        %v3005 = vsel %vm2863, %v2782, 0.0
        %3006 = vadd.xlane.f32.xlu0 %v3005
        %v3007 = vpop.xlane.xlu0 %3006
        %v3008 = vsel %vm2863, %v2783, 0.0
        %3009 = vadd.xlane.f32.xlu0 %v3008
        %v3010 = vpop.xlane.xlu0 %3009
        %v3011 = vsel %vm2863, %v2784, 0.0
        %3012 = vadd.xlane.f32.xlu0 %v3011
        %v3013 = vpop.xlane.xlu0 %3012
        %v3014 = vsel %vm2863, %v2785, 0.0
        %3015 = vadd.xlane.f32.xlu0 %v3014
        %v3016 = vpop.xlane.xlu0 %3015
        %v3017 = vsel %vm2863, %v2786, 0.0
        %3018 = vadd.xlane.f32.xlu0 %v3017
        %v3019 = vpop.xlane.xlu0 %3018
        %v3020 = vsel %vm2863, %v2787, 0.0
        %3021 = vadd.xlane.f32.xlu0 %v3020
        %v3022 = vpop.xlane.xlu0 %3021
        %v3023 = vsel %vm2863, %v2788, 0.0
        %3024 = vadd.xlane.f32.xlu0 %v3023
        %v3025 = vpop.xlane.xlu0 %3024
        %v3026 = vsel %vm2863, %v2789, 0.0
        %3027 = vadd.xlane.f32.xlu0 %v3026
        %v3028 = vpop.xlane.xlu0 %3027
        %v3029 = vsel %vm2863, %v2790, 0.0
        %3030 = vadd.xlane.f32.xlu0 %v3029
        %v3031 = vpop.xlane.xlu0 %3030
        %v3032 = vsel %vm2863, %v2791, 0.0
        %3033 = vadd.xlane.f32.xlu0 %v3032
        %v3034 = vpop.xlane.xlu0 %3033
        %v3035 = vsel %vm2863, %v2792, 0.0
        %3036 = vadd.xlane.f32.xlu0 %v3035
        %v3037 = vpop.xlane.xlu0 %3036
        %v3038 = vsel %vm2863, %v2793, 0.0
        %3039 = vadd.xlane.f32.xlu0 %v3038
        %v3040 = vpop.xlane.xlu0 %3039
        %v3041 = vsel %vm2863, %v2794, 0.0
        %3042 = vadd.xlane.f32.xlu0 %v3041
        %v3043 = vpop.xlane.xlu0 %3042
        %v3044 = vsel %vm2863, %v2795, 0.0
        %3045 = vadd.xlane.f32.xlu0 %v3044
        %v3046 = vpop.xlane.xlu0 %3045
        %v3047 = vsel %vm2863, %v2796, 0.0
        %3048 = vadd.xlane.f32.xlu0 %v3047
        %v3049 = vpop.xlane.xlu0 %3048
        %v3050 = vsel %vm2863, %v2797, 0.0
        %3051 = vadd.xlane.f32.xlu0 %v3050
        %v3052 = vpop.xlane.xlu0 %3051
        %v3053 = vsel %vm2863, %v2798, 0.0
        %3054 = vadd.xlane.f32.xlu0 %v3053
        %v3055 = vpop.xlane.xlu0 %3054
        %v3056 = vsel %vm2863, %v2799, 0.0
        %3057 = vadd.xlane.f32.xlu0 %v3056
        %v3058 = vpop.xlane.xlu0 %3057
        %v3059 = vsel %vm2863, %v2800, 0.0
        %3060 = vadd.xlane.f32.xlu0 %v3059
        %v3061 = vpop.xlane.xlu0 %3060
        %v3062 = vsel %vm2863, %v2801, 0.0
        %3063 = vadd.xlane.f32.xlu0 %v3062
        %v3064 = vpop.xlane.xlu0 %3063
        %v3065 = vsel %vm2863, %v2802, 0.0
        %3066 = vadd.xlane.f32.xlu0 %v3065
        %v3067 = vpop.xlane.xlu0 %3066
        %v3068 = vsel %vm2863, %v2803, 0.0
        %3069 = vadd.xlane.f32.xlu0 %v3068
        %v3070 = vpop.xlane.xlu0 %3069
        %v3071 = vsel %vm2863, %v2804, 0.0
        %3072 = vadd.xlane.f32.xlu0 %v3071
        %v3073 = vpop.xlane.xlu0 %3072
        %v3074 = vsel %vm2863, %v2805, 0.0
        %3075 = vadd.xlane.f32.xlu0 %v3074
        %v3076 = vpop.xlane.xlu0 %3075
        %v3077 = vsel %vm2863, %v2806, 0.0
        %3078 = vadd.xlane.f32.xlu0 %v3077
        %v3079 = vpop.xlane.xlu0 %3078
        %v3080 = vsel %vm2863, %v2807, 0.0
        %3081 = vadd.xlane.f32.xlu0 %v3080
        %v3082 = vpop.xlane.xlu0 %3081
        %v3083 = vsel %vm2863, %v2808, 0.0
        %3084 = vadd.xlane.f32.xlu0 %v3083
        %v3085 = vpop.xlane.xlu0 %3084
        %v3086 = vsel %vm2863, %v2809, 0.0
        %3087 = vadd.xlane.f32.xlu0 %v3086
        %v3088 = vpop.xlane.xlu0 %3087
        %v3089 = vsel %vm2863, %v2810, 0.0
        %3090 = vadd.xlane.f32.xlu0 %v3089
        %v3091 = vpop.xlane.xlu0 %3090
        %v3092 = vsel %vm2863, %v2811, 0.0
        %3093 = vadd.xlane.f32.xlu0 %v3092
        %v3094 = vpop.xlane.xlu0 %3093
        %v3095 = vsel %vm2863, %v2812, 0.0
        %3096 = vadd.xlane.f32.xlu0 %v3095
        %v3097 = vpop.xlane.xlu0 %3096
        %v3098 = vsel %vm2863, %v2813, 0.0
        %3099 = vadd.xlane.f32.xlu0 %v3098
        %v3100 = vpop.xlane.xlu0 %3099
        %v3101 = vsel %vm2863, %v2814, 0.0
        %3102 = vadd.xlane.f32.xlu0 %v3101
        %v3103 = vpop.xlane.xlu0 %3102
        %v3104 = vsel %vm2863, %v2815, 0.0
        %3105 = vadd.xlane.f32.xlu0 %v3104
        %v3106 = vpop.xlane.xlu0 %3105
        %v3107 = vsel %vm2863, %v2816, 0.0
        %3108 = vadd.xlane.f32.xlu0 %v3107
        %v3109 = vpop.xlane.xlu0 %3108
        %v3110 = vsel %vm2863, %v2817, 0.0
        %3111 = vadd.xlane.f32.xlu0 %v3110
        %v3112 = vpop.xlane.xlu0 %3111
        %v3113 = vsel %vm2863, %v2818, 0.0
        %3114 = vadd.xlane.f32.xlu0 %v3113
        %v3115 = vpop.xlane.xlu0 %3114
        %v3116 = vsel %vm2863, %v2819, 0.0
        %3117 = vadd.xlane.f32.xlu0 %v3116
        %v3118 = vpop.xlane.xlu0 %3117
        %v3119 = vsel %vm2863, %v2820, 0.0
        %3120 = vadd.xlane.f32.xlu0 %v3119
        %v3121 = vpop.xlane.xlu0 %3120
        %v3122 = vsel %vm2863, %v2821, 0.0
        %3123 = vadd.xlane.f32.xlu0 %v3122
        %v3124 = vpop.xlane.xlu0 %3123
        %v3125 = vsel %vm2863, %v2822, 0.0
        %3126 = vadd.xlane.f32.xlu0 %v3125
        %v3127 = vpop.xlane.xlu0 %3126
        %v3128 = vsel %vm2863, %v2823, 0.0
        %3129 = vadd.xlane.f32.xlu0 %v3128
        %v3130 = vpop.xlane.xlu0 %3129
        %v3131 = vsel %vm2863, %v2824, 0.0
        %3132 = vadd.xlane.f32.xlu0 %v3131
        %v3133 = vpop.xlane.xlu0 %3132
        %v3134 = vsel %vm2863, %v2825, 0.0
        %3135 = vadd.xlane.f32.xlu0 %v3134
        %v3136 = vpop.xlane.xlu0 %3135
        %v3137 = vsel %vm2863, %v2826, 0.0
        %3138 = vadd.xlane.f32.xlu0 %v3137
        %v3139 = vpop.xlane.xlu0 %3138
        %v3140 = vsel %vm2863, %v2827, 0.0
        %3141 = vadd.xlane.f32.xlu0 %v3140
        %v3142 = vpop.xlane.xlu0 %3141
        %v3143 = vsel %vm2863, %v2828, 0.0
        %3144 = vadd.xlane.f32.xlu0 %v3143
        %v3145 = vpop.xlane.xlu0 %3144
        %v3146 = vsel %vm2863, %v2829, 0.0
        %3147 = vadd.xlane.f32.xlu0 %v3146
        %v3148 = vpop.xlane.xlu0 %3147
        %v3149 = vsel %vm2863, %v2830, 0.0
        %3150 = vadd.xlane.f32.xlu0 %v3149
        %v3151 = vpop.xlane.xlu0 %3150
        %v3152 = vsel %vm2863, %v2831, 0.0
        %3153 = vadd.xlane.f32.xlu0 %v3152
        %v3154 = vpop.xlane.xlu0 %3153
        %v3155 = vsel %vm2863, %v2832, 0.0
        %3156 = vadd.xlane.f32.xlu0 %v3155
        %v3157 = vpop.xlane.xlu0 %3156
        %v3158 = vsel %vm2863, %v2833, 0.0
        %3159 = vadd.xlane.f32.xlu0 %v3158
        %v3160 = vpop.xlane.xlu0 %3159
        %v3161 = vsel %vm2863, %v2834, 0.0
        %3162 = vadd.xlane.f32.xlu0 %v3161
        %v3163 = vpop.xlane.xlu0 %3162
        %v3164 = vsel %vm2863, %v2835, 0.0
        %3165 = vadd.xlane.f32.xlu0 %v3164
        %v3166 = vpop.xlane.xlu0 %3165
        %v3167 = vsel %vm2863, %v2836, 0.0
        %3168 = vadd.xlane.f32.xlu0 %v3167
        %v3169 = vpop.xlane.xlu0 %3168
        %v3170 = vsel %vm2863, %v2837, 0.0
        %3171 = vadd.xlane.f32.xlu0 %v3170
        %v3172 = vpop.xlane.xlu0 %3171
        %v3173 = vsel %vm2863, %v2838, 0.0
        %3174 = vadd.xlane.f32.xlu0 %v3173
        %v3175 = vpop.xlane.xlu0 %3174
        %v3176 = vsel %vm2863, %v2839, 0.0
        %3177 = vadd.xlane.f32.xlu0 %v3176
        %v3178 = vpop.xlane.xlu0 %3177
        %v3179 = vsel %vm2863, %v2840, 0.0
        %3180 = vadd.xlane.f32.xlu0 %v3179
        %v3181 = vpop.xlane.xlu0 %3180
        %v3182 = vsel %vm2863, %v2841, 0.0
        %3183 = vadd.xlane.f32.xlu0 %v3182
        %v3184 = vpop.xlane.xlu0 %3183
        %v3185 = vsel %vm2863, %v2842, 0.0
        %3186 = vadd.xlane.f32.xlu0 %v3185
        %v3187 = vpop.xlane.xlu0 %3186
        %v3188 = vsel %vm2863, %v2843, 0.0
        %3189 = vadd.xlane.f32.xlu0 %v3188
        %v3190 = vpop.xlane.xlu0 %3189
        %v3191 = vsel %vm2863, %v2844, 0.0
        %3192 = vadd.xlane.f32.xlu0 %v3191
        %v3193 = vpop.xlane.xlu0 %3192
        %v3194 = vsel %vm2863, %v2845, 0.0
        %3195 = vadd.xlane.f32.xlu0 %v3194
        %v3196 = vpop.xlane.xlu0 %3195
        %v3197 = vsel %vm2863, %v2846, 0.0
        %3198 = vadd.xlane.f32.xlu0 %v3197
        %v3199 = vpop.xlane.xlu0 %3198
        %v3200 = vsel %vm2863, %v2847, 0.0
        %3201 = vadd.xlane.f32.xlu0 %v3200
        %v3202 = vpop.xlane.xlu0 %3201
        %v3203 = vsel %vm2863, %v2848, 0.0
        %3204 = vadd.xlane.f32.xlu0 %v3203
        %v3205 = vpop.xlane.xlu0 %3204
        %v3206 = vsel %vm2863, %v2849, 0.0
        %3207 = vadd.xlane.f32.xlu0 %v3206
        %v3208 = vpop.xlane.xlu0 %3207
        %v3209 = vsel %vm2863, %v2850, 0.0
        %3210 = vadd.xlane.f32.xlu0 %v3209
        %v3211 = vpop.xlane.xlu0 %3210
        %v3212 = vsel %vm2863, %v2851, 0.0
        %3213 = vadd.xlane.f32.xlu0 %v3212
        %v3214 = vpop.xlane.xlu0 %3213
        %v3215 = vsel %vm2863, %v2852, 0.0
        %3216 = vadd.xlane.f32.xlu0 %v3215
        %v3217 = vpop.xlane.xlu0 %3216
        %v3218 = vsel %vm2863, %v2853, 0.0
        %3219 = vadd.xlane.f32.xlu0 %v3218
        %v3220 = vpop.xlane.xlu0 %3219
        %v3221 = vsel %vm2863, %v2854, 0.0
        %3222 = vadd.xlane.f32.xlu0 %v3221
        %v3223 = vpop.xlane.xlu0 %3222
        %v3224 = vsel %vm2863, %v2855, 0.0
        %3225 = vadd.xlane.f32.xlu0 %v3224
        %v3226 = vpop.xlane.xlu0 %3225
        %v3227 = vsel %vm2863, %v2856, 0.0
        %3228 = vadd.xlane.f32.xlu0 %v3227
        %v3229 = vpop.xlane.xlu0 %3228
        %v3230 = vsel %vm2863, %v2857, 0.0
        %3231 = vadd.xlane.f32.xlu0 %v3230
        %v3232 = vpop.xlane.xlu0 %3231
        %v3233 = vsel %vm2863, %v2858, 0.0
        %3234 = vadd.xlane.f32.xlu0 %v3233
        %v3235 = vpop.xlane.xlu0 %3234
        %v3236 = vsel %vm2863, %v2859, 0.0
        %3237 = vadd.xlane.f32.xlu0 %v3236
        %v3238 = vpop.xlane.xlu0 %3237
        %v3239 = vsel %vm2863, %v2860, 0.0
        %3240 = vadd.xlane.f32.xlu0 %v3239
        %v3241 = vpop.xlane.xlu0 %3240
        %v3242 = vsel %vm2863, %v2861, 0.0
        %3243 = vadd.xlane.f32.xlu0 %v3242
        %v3244 = vpop.xlane.xlu0 %3243
        %v3245 = vsel %vm2863, %v2862, 0.0
        %3246 = vadd.xlane.f32.xlu0 %v3245
        %v3247 = vpop.xlane.xlu0 %3246
        %v3248 = vld [vmem:[%s1967] sm:$0xff]
        %vm3249 = vcmp.gt.f32.partialorder %v3248, 0.0
        %v3378 = vlaneseq
        %v3379 = vand.u32 %v3378, 127
        %v3380 = vlaneseq
        %v3381 = vshrl.u32 %v3380, 7
        %v3382 = vsub.s32 %v3379, %v3381
        %v3383 = vrot.slane %v2866, %v3382
        %v3384 = vadd.s32 %v3379, 4294967288
        %v3385 = vlaneseq
        %v3386 = vshrl.u32 %v3385, 7
        %v3387 = vsub.s32 %v3384, %v3386
        %v3388 = vrot.slane %v2869, %v3387
        %vm3389 = vcmask 130112
        %v3390 = vsel %vm3389, %v3388, %v3383
        %v3391 = vadd.s32 %v3379, 4294967280
        %v3392 = vlaneseq
        %v3393 = vshrl.u32 %v3392, 7
        %v3394 = vsub.s32 %v3391, %v3393
        %v3395 = vrot.slane %v2872, %v3394
        %vm3396 = vcmask 195712
        %v3397 = vsel %vm3396, %v3395, %v3390
        %v3398 = vadd.s32 %v3379, 4294967272
        %v3399 = vlaneseq
        %v3400 = vshrl.u32 %v3399, 7
        %v3401 = vsub.s32 %v3398, %v3400
        %v3402 = vrot.slane %v2875, %v3401
        %vm3403 = vcmask 261312
        %v3404 = vsel %vm3403, %v3402, %v3397
        %v3405 = vadd.s32 %v3379, 4294967264
        %v3406 = vlaneseq
        %v3407 = vshrl.u32 %v3406, 7
        %v3408 = vsub.s32 %v3405, %v3407
        %v3409 = vrot.slane %v2878, %v3408
        %vm3410 = vcmask 326912
        %v3411 = vsel %vm3410, %v3409, %v3404
        %v3412 = vadd.s32 %v3379, 4294967256
        %v3413 = vlaneseq
        %v3414 = vshrl.u32 %v3413, 7
        %v3415 = vsub.s32 %v3412, %v3414
        %v3416 = vrot.slane %v2881, %v3415
        %vm3417 = vcmask 392512
        %v3418 = vsel %vm3417, %v3416, %v3411
        %v3419 = vadd.s32 %v3379, 4294967248
        %v3420 = vlaneseq
        %v3421 = vshrl.u32 %v3420, 7
        %v3422 = vsub.s32 %v3419, %v3421
        %v3423 = vrot.slane %v2884, %v3422
        %vm3424 = vcmask 458112
        %v3425 = vsel %vm3424, %v3423, %v3418
        %v3426 = vadd.s32 %v3379, 4294967240
        %v3427 = vlaneseq
        %v3428 = vshrl.u32 %v3427, 7
        %v3429 = vsub.s32 %v3426, %v3428
        %v3430 = vrot.slane %v2887, %v3429
        %vm3431 = vcmask 523712
        %v3432 = vsel %vm3431, %v3430, %v3425
        %v3433 = vadd.s32 %v3379, 4294967232
        %v3434 = vlaneseq
        %v3435 = vshrl.u32 %v3434, 7
        %v3436 = vsub.s32 %v3433, %v3435
        %v3437 = vrot.slane %v2890, %v3436
        %vm3438 = vcmask 589312
        %v3439 = vsel %vm3438, %v3437, %v3432
        %v3440 = vadd.s32 %v3379, 4294967224
        %v3441 = vlaneseq
        %v3442 = vshrl.u32 %v3441, 7
        %v3443 = vsub.s32 %v3440, %v3442
        %v3444 = vrot.slane %v2893, %v3443
        %vm3445 = vcmask 654912
        %v3446 = vsel %vm3445, %v3444, %v3439
        %v3447 = vadd.s32 %v3379, 4294967216
        %v3448 = vlaneseq
        %v3449 = vshrl.u32 %v3448, 7
        %v3450 = vsub.s32 %v3447, %v3449
        %v3451 = vrot.slane %v2896, %v3450
        %vm3452 = vcmask 720512
        %v3453 = vsel %vm3452, %v3451, %v3446
        %v3454 = vadd.s32 %v3379, 4294967208
        %v3455 = vlaneseq
        %v3456 = vshrl.u32 %v3455, 7
        %v3457 = vsub.s32 %v3454, %v3456
        %v3458 = vrot.slane %v2899, %v3457
        %vm3459 = vcmask 786112
        %v3460 = vsel %vm3459, %v3458, %v3453
        %v3461 = vadd.s32 %v3379, 4294967200
        %v3462 = vlaneseq
        %v3463 = vshrl.u32 %v3462, 7
        %v3464 = vsub.s32 %v3461, %v3463
        %v3465 = vrot.slane %v2902, %v3464
        %vm3466 = vcmask 851712
        %v3467 = vsel %vm3466, %v3465, %v3460
        %v3468 = vadd.s32 %v3379, 4294967192
        %v3469 = vlaneseq
        %v3470 = vshrl.u32 %v3469, 7
        %v3471 = vsub.s32 %v3468, %v3470
        %v3472 = vrot.slane %v2905, %v3471
        %vm3473 = vcmask 917312
        %v3474 = vsel %vm3473, %v3472, %v3467
        %v3475 = vadd.s32 %v3379, 4294967184
        %v3476 = vlaneseq
        %v3477 = vshrl.u32 %v3476, 7
        %v3478 = vsub.s32 %v3475, %v3477
        %v3479 = vrot.slane %v2908, %v3478
        %vm3480 = vcmask 982912
        %v3481 = vsel %vm3480, %v3479, %v3474
        %v3482 = vadd.s32 %v3379, 4294967176
        %v3483 = vlaneseq
        %v3484 = vshrl.u32 %v3483, 7
        %v3485 = vsub.s32 %v3482, %v3484
        %v3486 = vrot.slane %v2911, %v3485
        %vm3487 = vcmask 1048512
        %v3488 = vsel %vm3487, %v3486, %v3481
        %v3489 = vlaneseq
        %v3490 = vshrl.u32 %v3489, 7
        %v3491 = vsub.s32 %v3379, %v3490
        %v3492 = vrot.slane %v2914, %v3491
        %v3493 = vlaneseq
        %v3494 = vshrl.u32 %v3493, 7
        %v3495 = vsub.s32 %v3384, %v3494
        %v3496 = vrot.slane %v2917, %v3495
        %v3497 = vsel %vm3389, %v3496, %v3492
        %v3498 = vlaneseq
        %v3499 = vshrl.u32 %v3498, 7
        %v3500 = vsub.s32 %v3391, %v3499
        %v3501 = vrot.slane %v2920, %v3500
        %v3502 = vsel %vm3396, %v3501, %v3497
        %v3503 = vlaneseq
        %v3504 = vshrl.u32 %v3503, 7
        %v3505 = vsub.s32 %v3398, %v3504
        %v3506 = vrot.slane %v2923, %v3505
        %v3507 = vsel %vm3403, %v3506, %v3502
        %v3508 = vlaneseq
        %v3509 = vshrl.u32 %v3508, 7
        %v3510 = vsub.s32 %v3405, %v3509
        %v3511 = vrot.slane %v2926, %v3510
        %v3512 = vsel %vm3410, %v3511, %v3507
        %v3513 = vlaneseq
        %v3514 = vshrl.u32 %v3513, 7
        %v3515 = vsub.s32 %v3412, %v3514
        %v3516 = vrot.slane %v2929, %v3515
        %v3517 = vsel %vm3417, %v3516, %v3512
        %v3518 = vlaneseq
        %v3519 = vshrl.u32 %v3518, 7
        %v3520 = vsub.s32 %v3419, %v3519
        %v3521 = vrot.slane %v2932, %v3520
        %v3522 = vsel %vm3424, %v3521, %v3517
        %v3523 = vlaneseq
        %v3524 = vshrl.u32 %v3523, 7
        %v3525 = vsub.s32 %v3426, %v3524
        %v3526 = vrot.slane %v2935, %v3525
        %v3527 = vsel %vm3431, %v3526, %v3522
        %v3528 = vlaneseq
        %v3529 = vshrl.u32 %v3528, 7
        %v3530 = vsub.s32 %v3433, %v3529
        %v3531 = vrot.slane %v2938, %v3530
        %v3532 = vsel %vm3438, %v3531, %v3527
        %v3533 = vlaneseq
        %v3534 = vshrl.u32 %v3533, 7
        %v3535 = vsub.s32 %v3440, %v3534
        %v3536 = vrot.slane %v2941, %v3535
        %v3537 = vsel %vm3445, %v3536, %v3532
        %v3538 = vlaneseq
        %v3539 = vshrl.u32 %v3538, 7
        %v3540 = vsub.s32 %v3447, %v3539
        %v3541 = vrot.slane %v2944, %v3540
        %v3542 = vsel %vm3452, %v3541, %v3537
        %v3543 = vlaneseq
        %v3544 = vshrl.u32 %v3543, 7
        %v3545 = vsub.s32 %v3454, %v3544
        %v3546 = vrot.slane %v2947, %v3545
        %v3547 = vsel %vm3459, %v3546, %v3542
        %v3548 = vlaneseq
        %v3549 = vshrl.u32 %v3548, 7
        %v3550 = vsub.s32 %v3461, %v3549
        %v3551 = vrot.slane %v2950, %v3550
        %v3552 = vsel %vm3466, %v3551, %v3547
        %v3553 = vlaneseq
        %v3554 = vshrl.u32 %v3553, 7
        %v3555 = vsub.s32 %v3468, %v3554
        %v3556 = vrot.slane %v2953, %v3555
        %v3557 = vsel %vm3473, %v3556, %v3552
        %v3558 = vlaneseq
        %v3559 = vshrl.u32 %v3558, 7
        %v3560 = vsub.s32 %v3475, %v3559
        %v3561 = vrot.slane %v2956, %v3560
        %v3562 = vsel %vm3480, %v3561, %v3557
        %v3563 = vlaneseq
        %v3564 = vshrl.u32 %v3563, 7
        %v3565 = vsub.s32 %v3482, %v3564
        %v3566 = vrot.slane %v2959, %v3565
        %v3567 = vsel %vm3487, %v3566, %v3562
        %v3568 = vlaneseq
        %v3569 = vshrl.u32 %v3568, 7
        %v3570 = vsub.s32 %v3379, %v3569
        %v3571 = vrot.slane %v2962, %v3570
        %v3572 = vlaneseq
        %v3573 = vshrl.u32 %v3572, 7
        %v3574 = vsub.s32 %v3384, %v3573
        %v3575 = vrot.slane %v2965, %v3574
        %v3576 = vsel %vm3389, %v3575, %v3571
        %v3577 = vlaneseq
        %v3578 = vshrl.u32 %v3577, 7
        %v3579 = vsub.s32 %v3391, %v3578
        %v3580 = vrot.slane %v2968, %v3579
        %v3581 = vsel %vm3396, %v3580, %v3576
        %v3582 = vlaneseq
        %v3583 = vshrl.u32 %v3582, 7
        %v3584 = vsub.s32 %v3398, %v3583
        %v3585 = vrot.slane %v2971, %v3584
        %v3586 = vsel %vm3403, %v3585, %v3581
        %v3587 = vlaneseq
        %v3588 = vshrl.u32 %v3587, 7
        %v3589 = vsub.s32 %v3405, %v3588
        %v3590 = vrot.slane %v2974, %v3589
        %v3591 = vsel %vm3410, %v3590, %v3586
        %v3592 = vlaneseq
        %v3593 = vshrl.u32 %v3592, 7
        %v3594 = vsub.s32 %v3412, %v3593
        %v3595 = vrot.slane %v2977, %v3594
        %v3596 = vsel %vm3417, %v3595, %v3591
        %v3597 = vlaneseq
        %v3598 = vshrl.u32 %v3597, 7
        %v3599 = vsub.s32 %v3419, %v3598
        %v3600 = vrot.slane %v2980, %v3599
        %v3601 = vsel %vm3424, %v3600, %v3596
        %v3602 = vlaneseq
        %v3603 = vshrl.u32 %v3602, 7
        %v3604 = vsub.s32 %v3426, %v3603
        %v3605 = vrot.slane %v2983, %v3604
        %v3606 = vsel %vm3431, %v3605, %v3601
        %v3607 = vlaneseq
        %v3608 = vshrl.u32 %v3607, 7
        %v3609 = vsub.s32 %v3433, %v3608
        %v3610 = vrot.slane %v2986, %v3609
        %v3611 = vsel %vm3438, %v3610, %v3606
        %v3612 = vlaneseq
        %v3613 = vshrl.u32 %v3612, 7
        %v3614 = vsub.s32 %v3440, %v3613
        %v3615 = vrot.slane %v2989, %v3614
        %v3616 = vsel %vm3445, %v3615, %v3611
        %v3617 = vlaneseq
        %v3618 = vshrl.u32 %v3617, 7
        %v3619 = vsub.s32 %v3447, %v3618
        %v3620 = vrot.slane %v2992, %v3619
        %v3621 = vsel %vm3452, %v3620, %v3616
        %v3622 = vlaneseq
        %v3623 = vshrl.u32 %v3622, 7
        %v3624 = vsub.s32 %v3454, %v3623
        %v3625 = vrot.slane %v2995, %v3624
        %v3626 = vsel %vm3459, %v3625, %v3621
        %v3627 = vlaneseq
        %v3628 = vshrl.u32 %v3627, 7
        %v3629 = vsub.s32 %v3461, %v3628
        %v3630 = vrot.slane %v2998, %v3629
        %v3631 = vsel %vm3466, %v3630, %v3626
        %v3632 = vlaneseq
        %v3633 = vshrl.u32 %v3632, 7
        %v3634 = vsub.s32 %v3468, %v3633
        %v3635 = vrot.slane %v3001, %v3634
        %v3636 = vsel %vm3473, %v3635, %v3631
        %v3637 = vlaneseq
        %v3638 = vshrl.u32 %v3637, 7
        %v3639 = vsub.s32 %v3475, %v3638
        %v3640 = vrot.slane %v3004, %v3639
        %v3641 = vsel %vm3480, %v3640, %v3636
        %v3642 = vlaneseq
        %v3643 = vshrl.u32 %v3642, 7
        %v3644 = vsub.s32 %v3482, %v3643
        %v3645 = vrot.slane %v3007, %v3644
        %v3646 = vsel %vm3487, %v3645, %v3641
        %v3647 = vlaneseq
        %v3648 = vshrl.u32 %v3647, 7
        %v3649 = vsub.s32 %v3379, %v3648
        %v3650 = vrot.slane %v3010, %v3649
        %v3651 = vlaneseq
        %v3652 = vshrl.u32 %v3651, 7
        %v3653 = vsub.s32 %v3384, %v3652
        %v3654 = vrot.slane %v3013, %v3653
        %v3655 = vsel %vm3389, %v3654, %v3650
        %v3656 = vlaneseq
        %v3657 = vshrl.u32 %v3656, 7
        %v3658 = vsub.s32 %v3391, %v3657
        %v3659 = vrot.slane %v3016, %v3658
        %v3660 = vsel %vm3396, %v3659, %v3655
        %v3661 = vlaneseq
        %v3662 = vshrl.u32 %v3661, 7
        %v3663 = vsub.s32 %v3398, %v3662
        %v3664 = vrot.slane %v3019, %v3663
        %v3665 = vsel %vm3403, %v3664, %v3660
        %v3666 = vlaneseq
        %v3667 = vshrl.u32 %v3666, 7
        %v3668 = vsub.s32 %v3405, %v3667
        %v3669 = vrot.slane %v3022, %v3668
        %v3670 = vsel %vm3410, %v3669, %v3665
        %v3671 = vlaneseq
        %v3672 = vshrl.u32 %v3671, 7
        %v3673 = vsub.s32 %v3412, %v3672
        %v3674 = vrot.slane %v3025, %v3673
        %v3675 = vsel %vm3417, %v3674, %v3670
        %v3676 = vlaneseq
        %v3677 = vshrl.u32 %v3676, 7
        %v3678 = vsub.s32 %v3419, %v3677
        %v3679 = vrot.slane %v3028, %v3678
        %v3680 = vsel %vm3424, %v3679, %v3675
        %v3681 = vlaneseq
        %v3682 = vshrl.u32 %v3681, 7
        %v3683 = vsub.s32 %v3426, %v3682
        %v3684 = vrot.slane %v3031, %v3683
        %v3685 = vsel %vm3431, %v3684, %v3680
        %v3686 = vlaneseq
        %v3687 = vshrl.u32 %v3686, 7
        %v3688 = vsub.s32 %v3433, %v3687
        %v3689 = vrot.slane %v3034, %v3688
        %v3690 = vsel %vm3438, %v3689, %v3685
        %v3691 = vlaneseq
        %v3692 = vshrl.u32 %v3691, 7
        %v3693 = vsub.s32 %v3440, %v3692
        %v3694 = vrot.slane %v3037, %v3693
        %v3695 = vsel %vm3445, %v3694, %v3690
        %v3696 = vlaneseq
        %v3697 = vshrl.u32 %v3696, 7
        %v3698 = vsub.s32 %v3447, %v3697
        %v3699 = vrot.slane %v3040, %v3698
        %v3700 = vsel %vm3452, %v3699, %v3695
        %v3701 = vlaneseq
        %v3702 = vshrl.u32 %v3701, 7
        %v3703 = vsub.s32 %v3454, %v3702
        %v3704 = vrot.slane %v3043, %v3703
        %v3705 = vsel %vm3459, %v3704, %v3700
        %v3706 = vlaneseq
        %v3707 = vshrl.u32 %v3706, 7
        %v3708 = vsub.s32 %v3461, %v3707
        %v3709 = vrot.slane %v3046, %v3708
        %v3710 = vsel %vm3466, %v3709, %v3705
        %v3711 = vlaneseq
        %v3712 = vshrl.u32 %v3711, 7
        %v3713 = vsub.s32 %v3468, %v3712
        %v3714 = vrot.slane %v3049, %v3713
        %v3715 = vsel %vm3473, %v3714, %v3710
        %v3716 = vlaneseq
        %v3717 = vshrl.u32 %v3716, 7
        %v3718 = vsub.s32 %v3475, %v3717
        %v3719 = vrot.slane %v3052, %v3718
        %v3720 = vsel %vm3480, %v3719, %v3715
        %v3721 = vlaneseq
        %v3722 = vshrl.u32 %v3721, 7
        %v3723 = vsub.s32 %v3482, %v3722
        %v3724 = vrot.slane %v3055, %v3723
        %v3725 = vsel %vm3487, %v3724, %v3720
        %v3726 = vlaneseq
        %v3727 = vshrl.u32 %v3726, 7
        %v3728 = vsub.s32 %v3379, %v3727
        %v3729 = vrot.slane %v3058, %v3728
        %v3730 = vlaneseq
        %v3731 = vshrl.u32 %v3730, 7
        %v3732 = vsub.s32 %v3384, %v3731
        %v3733 = vrot.slane %v3061, %v3732
        %v3734 = vsel %vm3389, %v3733, %v3729
        %v3735 = vlaneseq
        %v3736 = vshrl.u32 %v3735, 7
        %v3737 = vsub.s32 %v3391, %v3736
        %v3738 = vrot.slane %v3064, %v3737
        %v3739 = vsel %vm3396, %v3738, %v3734
        %v3740 = vlaneseq
        %v3741 = vshrl.u32 %v3740, 7
        %v3742 = vsub.s32 %v3398, %v3741
        %v3743 = vrot.slane %v3067, %v3742
        %v3744 = vsel %vm3403, %v3743, %v3739
        %v3745 = vlaneseq
        %v3746 = vshrl.u32 %v3745, 7
        %v3747 = vsub.s32 %v3405, %v3746
        %v3748 = vrot.slane %v3070, %v3747
        %v3749 = vsel %vm3410, %v3748, %v3744
        %v3750 = vlaneseq
        %v3751 = vshrl.u32 %v3750, 7
        %v3752 = vsub.s32 %v3412, %v3751
        %v3753 = vrot.slane %v3073, %v3752
        %v3754 = vsel %vm3417, %v3753, %v3749
        %v3755 = vlaneseq
        %v3756 = vshrl.u32 %v3755, 7
        %v3757 = vsub.s32 %v3419, %v3756
        %v3758 = vrot.slane %v3076, %v3757
        %v3759 = vsel %vm3424, %v3758, %v3754
        %v3760 = vlaneseq
        %v3761 = vshrl.u32 %v3760, 7
        %v3762 = vsub.s32 %v3426, %v3761
        %v3763 = vrot.slane %v3079, %v3762
        %v3764 = vsel %vm3431, %v3763, %v3759
        %v3765 = vlaneseq
        %v3766 = vshrl.u32 %v3765, 7
        %v3767 = vsub.s32 %v3433, %v3766
        %v3768 = vrot.slane %v3082, %v3767
        %v3769 = vsel %vm3438, %v3768, %v3764
        %v3770 = vlaneseq
        %v3771 = vshrl.u32 %v3770, 7
        %v3772 = vsub.s32 %v3440, %v3771
        %v3773 = vrot.slane %v3085, %v3772
        %v3774 = vsel %vm3445, %v3773, %v3769
        %v3775 = vlaneseq
        %v3776 = vshrl.u32 %v3775, 7
        %v3777 = vsub.s32 %v3447, %v3776
        %v3778 = vrot.slane %v3088, %v3777
        %v3779 = vsel %vm3452, %v3778, %v3774
        %v3780 = vlaneseq
        %v3781 = vshrl.u32 %v3780, 7
        %v3782 = vsub.s32 %v3454, %v3781
        %v3783 = vrot.slane %v3091, %v3782
        %v3784 = vsel %vm3459, %v3783, %v3779
        %v3785 = vlaneseq
        %v3786 = vshrl.u32 %v3785, 7
        %v3787 = vsub.s32 %v3461, %v3786
        %v3788 = vrot.slane %v3094, %v3787
        %v3789 = vsel %vm3466, %v3788, %v3784
        %v3790 = vlaneseq
        %v3791 = vshrl.u32 %v3790, 7
        %v3792 = vsub.s32 %v3468, %v3791
        %v3793 = vrot.slane %v3097, %v3792
        %v3794 = vsel %vm3473, %v3793, %v3789
        %v3795 = vlaneseq
        %v3796 = vshrl.u32 %v3795, 7
        %v3797 = vsub.s32 %v3475, %v3796
        %v3798 = vrot.slane %v3100, %v3797
        %v3799 = vsel %vm3480, %v3798, %v3794
        %v3800 = vlaneseq
        %v3801 = vshrl.u32 %v3800, 7
        %v3802 = vsub.s32 %v3482, %v3801
        %v3803 = vrot.slane %v3103, %v3802
        %v3804 = vsel %vm3487, %v3803, %v3799
        %v3805 = vlaneseq
        %v3806 = vshrl.u32 %v3805, 7
        %v3807 = vsub.s32 %v3379, %v3806
        %v3808 = vrot.slane %v3106, %v3807
        %v3809 = vlaneseq
        %v3810 = vshrl.u32 %v3809, 7
        %v3811 = vsub.s32 %v3384, %v3810
        %v3812 = vrot.slane %v3109, %v3811
        %v3813 = vsel %vm3389, %v3812, %v3808
        %v3814 = vlaneseq
        %v3815 = vshrl.u32 %v3814, 7
        %v3816 = vsub.s32 %v3391, %v3815
        %v3817 = vrot.slane %v3112, %v3816
        %v3818 = vsel %vm3396, %v3817, %v3813
        %v3819 = vlaneseq
        %v3820 = vshrl.u32 %v3819, 7
        %v3821 = vsub.s32 %v3398, %v3820
        %v3822 = vrot.slane %v3115, %v3821
        %v3823 = vsel %vm3403, %v3822, %v3818
        %v3824 = vlaneseq
        %v3825 = vshrl.u32 %v3824, 7
        %v3826 = vsub.s32 %v3405, %v3825
        %v3827 = vrot.slane %v3118, %v3826
        %v3828 = vsel %vm3410, %v3827, %v3823
        %v3829 = vlaneseq
        %v3830 = vshrl.u32 %v3829, 7
        %v3831 = vsub.s32 %v3412, %v3830
        %v3832 = vrot.slane %v3121, %v3831
        %v3833 = vsel %vm3417, %v3832, %v3828
        %v3834 = vlaneseq
        %v3835 = vshrl.u32 %v3834, 7
        %v3836 = vsub.s32 %v3419, %v3835
        %v3837 = vrot.slane %v3124, %v3836
        %v3838 = vsel %vm3424, %v3837, %v3833
        %v3839 = vlaneseq
        %v3840 = vshrl.u32 %v3839, 7
        %v3841 = vsub.s32 %v3426, %v3840
        %v3842 = vrot.slane %v3127, %v3841
        %v3843 = vsel %vm3431, %v3842, %v3838
        %v3844 = vlaneseq
        %v3845 = vshrl.u32 %v3844, 7
        %v3846 = vsub.s32 %v3433, %v3845
        %v3847 = vrot.slane %v3130, %v3846
        %v3848 = vsel %vm3438, %v3847, %v3843
        %v3849 = vlaneseq
        %v3850 = vshrl.u32 %v3849, 7
        %v3851 = vsub.s32 %v3440, %v3850
        %v3852 = vrot.slane %v3133, %v3851
        %v3853 = vsel %vm3445, %v3852, %v3848
        %v3854 = vlaneseq
        %v3855 = vshrl.u32 %v3854, 7
        %v3856 = vsub.s32 %v3447, %v3855
        %v3857 = vrot.slane %v3136, %v3856
        %v3858 = vsel %vm3452, %v3857, %v3853
        %v3859 = vlaneseq
        %v3860 = vshrl.u32 %v3859, 7
        %v3861 = vsub.s32 %v3454, %v3860
        %v3862 = vrot.slane %v3139, %v3861
        %v3863 = vsel %vm3459, %v3862, %v3858
        %v3864 = vlaneseq
        %v3865 = vshrl.u32 %v3864, 7
        %v3866 = vsub.s32 %v3461, %v3865
        %v3867 = vrot.slane %v3142, %v3866
        %v3868 = vsel %vm3466, %v3867, %v3863
        %v3869 = vlaneseq
        %v3870 = vshrl.u32 %v3869, 7
        %v3871 = vsub.s32 %v3468, %v3870
        %v3872 = vrot.slane %v3145, %v3871
        %v3873 = vsel %vm3473, %v3872, %v3868
        %v3874 = vlaneseq
        %v3875 = vshrl.u32 %v3874, 7
        %v3876 = vsub.s32 %v3475, %v3875
        %v3877 = vrot.slane %v3148, %v3876
        %v3878 = vsel %vm3480, %v3877, %v3873
        %v3879 = vlaneseq
        %v3880 = vshrl.u32 %v3879, 7
        %v3881 = vsub.s32 %v3482, %v3880
        %v3882 = vrot.slane %v3151, %v3881
        %v3883 = vsel %vm3487, %v3882, %v3878
        %v3884 = vlaneseq
        %v3885 = vshrl.u32 %v3884, 7
        %v3886 = vsub.s32 %v3379, %v3885
        %v3887 = vrot.slane %v3154, %v3886
        %v3888 = vlaneseq
        %v3889 = vshrl.u32 %v3888, 7
        %v3890 = vsub.s32 %v3384, %v3889
        %v3891 = vrot.slane %v3157, %v3890
        %v3892 = vsel %vm3389, %v3891, %v3887
        %v3893 = vlaneseq
        %v3894 = vshrl.u32 %v3893, 7
        %v3895 = vsub.s32 %v3391, %v3894
        %v3896 = vrot.slane %v3160, %v3895
        %v3897 = vsel %vm3396, %v3896, %v3892
        %v3898 = vlaneseq
        %v3899 = vshrl.u32 %v3898, 7
        %v3900 = vsub.s32 %v3398, %v3899
        %v3901 = vrot.slane %v3163, %v3900
        %v3902 = vsel %vm3403, %v3901, %v3897
        %v3903 = vlaneseq
        %v3904 = vshrl.u32 %v3903, 7
        %v3905 = vsub.s32 %v3405, %v3904
        %v3906 = vrot.slane %v3166, %v3905
        %v3907 = vsel %vm3410, %v3906, %v3902
        %v3908 = vlaneseq
        %v3909 = vshrl.u32 %v3908, 7
        %v3910 = vsub.s32 %v3412, %v3909
        %v3911 = vrot.slane %v3169, %v3910
        %v3912 = vsel %vm3417, %v3911, %v3907
        %v3913 = vlaneseq
        %v3914 = vshrl.u32 %v3913, 7
        %v3915 = vsub.s32 %v3419, %v3914
        %v3916 = vrot.slane %v3172, %v3915
        %v3917 = vsel %vm3424, %v3916, %v3912
        %v3918 = vlaneseq
        %v3919 = vshrl.u32 %v3918, 7
        %v3920 = vsub.s32 %v3426, %v3919
        %v3921 = vrot.slane %v3175, %v3920
        %v3922 = vsel %vm3431, %v3921, %v3917
        %v3923 = vlaneseq
        %v3924 = vshrl.u32 %v3923, 7
        %v3925 = vsub.s32 %v3433, %v3924
        %v3926 = vrot.slane %v3178, %v3925
        %v3927 = vsel %vm3438, %v3926, %v3922
        %v3928 = vlaneseq
        %v3929 = vshrl.u32 %v3928, 7
        %v3930 = vsub.s32 %v3440, %v3929
        %v3931 = vrot.slane %v3181, %v3930
        %v3932 = vsel %vm3445, %v3931, %v3927
        %v3933 = vlaneseq
        %v3934 = vshrl.u32 %v3933, 7
        %v3935 = vsub.s32 %v3447, %v3934
        %v3936 = vrot.slane %v3184, %v3935
        %v3937 = vsel %vm3452, %v3936, %v3932
        %v3938 = vlaneseq
        %v3939 = vshrl.u32 %v3938, 7
        %v3940 = vsub.s32 %v3454, %v3939
        %v3941 = vrot.slane %v3187, %v3940
        %v3942 = vsel %vm3459, %v3941, %v3937
        %v3943 = vlaneseq
        %v3944 = vshrl.u32 %v3943, 7
        %v3945 = vsub.s32 %v3461, %v3944
        %v3946 = vrot.slane %v3190, %v3945
        %v3947 = vsel %vm3466, %v3946, %v3942
        %v3948 = vlaneseq
        %v3949 = vshrl.u32 %v3948, 7
        %v3950 = vsub.s32 %v3468, %v3949
        %v3951 = vrot.slane %v3193, %v3950
        %v3952 = vsel %vm3473, %v3951, %v3947
        %v3953 = vlaneseq
        %v3954 = vshrl.u32 %v3953, 7
        %v3955 = vsub.s32 %v3475, %v3954
        %v3956 = vrot.slane %v3196, %v3955
        %v3957 = vsel %vm3480, %v3956, %v3952
        %v3958 = vlaneseq
        %v3959 = vshrl.u32 %v3958, 7
        %v3960 = vsub.s32 %v3482, %v3959
        %v3961 = vrot.slane %v3199, %v3960
        %v3962 = vsel %vm3487, %v3961, %v3957
        %v3963 = vlaneseq
        %v3964 = vshrl.u32 %v3963, 7
        %v3965 = vsub.s32 %v3379, %v3964
        %v3966 = vrot.slane %v3202, %v3965
        %v3967 = vlaneseq
        %v3968 = vshrl.u32 %v3967, 7
        %v3969 = vsub.s32 %v3384, %v3968
        %v3970 = vrot.slane %v3205, %v3969
        %v3971 = vsel %vm3389, %v3970, %v3966
        %v3972 = vlaneseq
        %v3973 = vshrl.u32 %v3972, 7
        %v3974 = vsub.s32 %v3391, %v3973
        %v3975 = vrot.slane %v3208, %v3974
        %v3976 = vsel %vm3396, %v3975, %v3971
        %v3977 = vlaneseq
        %v3978 = vshrl.u32 %v3977, 7
        %v3979 = vsub.s32 %v3398, %v3978
        %v3980 = vrot.slane %v3211, %v3979
        %v3981 = vsel %vm3403, %v3980, %v3976
        %v3982 = vlaneseq
        %v3983 = vshrl.u32 %v3982, 7
        %v3984 = vsub.s32 %v3405, %v3983
        %v3985 = vrot.slane %v3214, %v3984
        %v3986 = vsel %vm3410, %v3985, %v3981
        %v3987 = vlaneseq
        %v3988 = vshrl.u32 %v3987, 7
        %v3989 = vsub.s32 %v3412, %v3988
        %v3990 = vrot.slane %v3217, %v3989
        %v3991 = vsel %vm3417, %v3990, %v3986
        %v3992 = vlaneseq
        %v3993 = vshrl.u32 %v3992, 7
        %v3994 = vsub.s32 %v3419, %v3993
        %v3995 = vrot.slane %v3220, %v3994
        %v3996 = vsel %vm3424, %v3995, %v3991
        %v3997 = vlaneseq
        %v3998 = vshrl.u32 %v3997, 7
        %v3999 = vsub.s32 %v3426, %v3998
        %v4000 = vrot.slane %v3223, %v3999
        %v4001 = vsel %vm3431, %v4000, %v3996
        %v4002 = vlaneseq
        %v4003 = vshrl.u32 %v4002, 7
        %v4004 = vsub.s32 %v3433, %v4003
        %v4005 = vrot.slane %v3226, %v4004
        %v4006 = vsel %vm3438, %v4005, %v4001
        %v4007 = vlaneseq
        %v4008 = vshrl.u32 %v4007, 7
        %v4009 = vsub.s32 %v3440, %v4008
        %v4010 = vrot.slane %v3229, %v4009
        %v4011 = vsel %vm3445, %v4010, %v4006
        %v4012 = vlaneseq
        %v4013 = vshrl.u32 %v4012, 7
        %v4014 = vsub.s32 %v3447, %v4013
        %v4015 = vrot.slane %v3232, %v4014
        %v4016 = vsel %vm3452, %v4015, %v4011
        %v4017 = vlaneseq
        %v4018 = vshrl.u32 %v4017, 7
        %v4019 = vsub.s32 %v3454, %v4018
        %v4020 = vrot.slane %v3235, %v4019
        %v4021 = vsel %vm3459, %v4020, %v4016
        %v4022 = vlaneseq
        %v4023 = vshrl.u32 %v4022, 7
        %v4024 = vsub.s32 %v3461, %v4023
        %v4025 = vrot.slane %v3238, %v4024
        %v4026 = vsel %vm3466, %v4025, %v4021
        %v4027 = vlaneseq
        %v4028 = vshrl.u32 %v4027, 7
        %v4029 = vsub.s32 %v3468, %v4028
        %v4030 = vrot.slane %v3241, %v4029
        %v4031 = vsel %vm3473, %v4030, %v4026
        %v4032 = vlaneseq
        %v4033 = vshrl.u32 %v4032, 7
        %v4034 = vsub.s32 %v3475, %v4033
        %v4035 = vrot.slane %v3244, %v4034
        %v4036 = vsel %vm3480, %v4035, %v4031
        %v4037 = vlaneseq
        %v4038 = vshrl.u32 %v4037, 7
        %v4039 = vsub.s32 %v3482, %v4038
        %v4040 = vrot.slane %v3247, %v4039
        %v4041 = vsel %vm3487, %v4040, %v4036
        %vm4042 = vcmask 1041409
        %v4043 = vsel %vm4042, %v3567, %v3488
        %vm4044 = vcmask 1042434
        %v4045 = vsel %vm4044, %v3646, %v4043
        %vm4046 = vcmask 1043459
        %v4047 = vsel %vm4046, %v3725, %v4045
        %vm4048 = vcmask 1044484
        %v4049 = vsel %vm4048, %v3804, %v4047
        %vm4050 = vcmask 1045509
        %v4051 = vsel %vm4050, %v3883, %v4049
        %vm4052 = vcmask 1046534
        %v4053 = vsel %vm4052, %v3962, %v4051
        %vm4054 = vcmask 1047559
        %v4055 = vsel %vm4054, %v4041, %v4053
        %v4057 = vsel %vm3249, %v4055, -1e+10
        %v4058 = vld [vmem:[#allocation3] sm:$0xff]
        %4059 = vmax.xlane.f32.xlu0 %v4057
        %v4060 = vpop.xlane.xlu0 %4059
        %v4061 = vmax.f32 %v4058, %v4060
        %v4062 = vsub.f32 %v4058, %v4061
        %v4063 = vmul.f32 %v4062, 1.442695
        %v4064 = vpow.pop %v4063
        %4066 = vset.pattern.permute.xlu0 0
        %4067 = vperm.xlu0 %4066, %v4061
        %v4068 = vpop.permute.xlu0 %4067
        %v4070 = vsub.f32 %v4057, %v4068
        %v4071 = vmul.f32 %v4070, 1.442695
        %v4072 = vpow.pop %v4071
        %v4073 = vld [vmem:[#allocation4] sm:$0xff]
        %v4074 = vmul.f32 %v4064, %v4073
        %4075 = vadd.xlane.f32.xlu0 %v4072
        %v4076 = vpop.xlane.xlu0 %4075
        %v4077 = vadd.f32 %v4074, %v4076
        %vm4078 = vcmask 7168
        %4079 = vst.msk [vmem:[#allocation4] sm:$0xff] %vm4078, %v4077
        %v4080 = vlaneseq
        %v4081 = vshrl.u32 %v4080, 7
        %v4082 = vsub.s32 0, %v4081
        %v4083 = vrot.slane %v4072, %v4082
        %4085 = vbcast.lane.b32.xlu0 %v4083, 256
        %v4086 = vpop.permute.xlu0 %4085
        %s4088 = sor.u32 256, 8
        %4089 = vbcast.lane.b32.xlu0 %v4083, %s4088
        %v4090 = vpop.permute.xlu0 %4089
        %s4092 = sor.u32 256, 16
        %4093 = vbcast.lane.b32.xlu0 %v4083, %s4092
        %v4094 = vpop.permute.xlu0 %4093
        %s4096 = sor.u32 256, 24
        %4097 = vbcast.lane.b32.xlu0 %v4083, %s4096
        %v4098 = vpop.permute.xlu0 %4097
        %s4100 = sor.u32 256, 32
        %4101 = vbcast.lane.b32.xlu0 %v4083, %s4100
        %v4102 = vpop.permute.xlu0 %4101
        %s4104 = sor.u32 256, 40
        %4105 = vbcast.lane.b32.xlu0 %v4083, %s4104
        %v4106 = vpop.permute.xlu0 %4105
        %s4108 = sor.u32 256, 48
        %4109 = vbcast.lane.b32.xlu0 %v4083, %s4108
        %v4110 = vpop.permute.xlu0 %4109
        %s4112 = sor.u32 256, 56
        %4113 = vbcast.lane.b32.xlu0 %v4083, %s4112
        %v4114 = vpop.permute.xlu0 %4113
        %s4116 = sor.u32 256, 64
        %4117 = vbcast.lane.b32.xlu0 %v4083, %s4116
        %v4118 = vpop.permute.xlu0 %4117
        %s4120 = sor.u32 256, 72
        %4121 = vbcast.lane.b32.xlu0 %v4083, %s4120
        %v4122 = vpop.permute.xlu0 %4121
        %s4124 = sor.u32 256, 80
        %4125 = vbcast.lane.b32.xlu0 %v4083, %s4124
        %v4126 = vpop.permute.xlu0 %4125
        %s4128 = sor.u32 256, 88
        %4129 = vbcast.lane.b32.xlu0 %v4083, %s4128
        %v4130 = vpop.permute.xlu0 %4129
        %s4132 = sor.u32 256, 96
        %4133 = vbcast.lane.b32.xlu0 %v4083, %s4132
        %v4134 = vpop.permute.xlu0 %4133
        %s4136 = sor.u32 256, 104
        %4137 = vbcast.lane.b32.xlu0 %v4083, %s4136
        %v4138 = vpop.permute.xlu0 %4137
        %s4140 = sor.u32 256, 112
        %4141 = vbcast.lane.b32.xlu0 %v4083, %s4140
        %v4142 = vpop.permute.xlu0 %4141
        %s4144 = sor.u32 256, 120
        %4145 = vbcast.lane.b32.xlu0 %v4083, %s4144
        %v4146 = vpop.permute.xlu0 %4145
        %v4147 = vlaneseq
        %v4148 = vshrl.u32 %v4147, 7
        %v4149 = vsub.s32 1, %v4148
        %v4150 = vrot.slane %v4072, %v4149
        %4152 = vbcast.lane.b32.xlu0 %v4150, 256
        %v4153 = vpop.permute.xlu0 %4152
        %s4155 = sor.u32 256, 8
        %4156 = vbcast.lane.b32.xlu0 %v4150, %s4155
        %v4157 = vpop.permute.xlu0 %4156
        %s4159 = sor.u32 256, 16
        %4160 = vbcast.lane.b32.xlu0 %v4150, %s4159
        %v4161 = vpop.permute.xlu0 %4160
        %s4163 = sor.u32 256, 24
        %4164 = vbcast.lane.b32.xlu0 %v4150, %s4163
        %v4165 = vpop.permute.xlu0 %4164
        %s4167 = sor.u32 256, 32
        %4168 = vbcast.lane.b32.xlu0 %v4150, %s4167
        %v4169 = vpop.permute.xlu0 %4168
        %s4171 = sor.u32 256, 40
        %4172 = vbcast.lane.b32.xlu0 %v4150, %s4171
        %v4173 = vpop.permute.xlu0 %4172
        %s4175 = sor.u32 256, 48
        %4176 = vbcast.lane.b32.xlu0 %v4150, %s4175
        %v4177 = vpop.permute.xlu0 %4176
        %s4179 = sor.u32 256, 56
        %4180 = vbcast.lane.b32.xlu0 %v4150, %s4179
        %v4181 = vpop.permute.xlu0 %4180
        %s4183 = sor.u32 256, 64
        %4184 = vbcast.lane.b32.xlu0 %v4150, %s4183
        %v4185 = vpop.permute.xlu0 %4184
        %s4187 = sor.u32 256, 72
        %4188 = vbcast.lane.b32.xlu0 %v4150, %s4187
        %v4189 = vpop.permute.xlu0 %4188
        %s4191 = sor.u32 256, 80
        %4192 = vbcast.lane.b32.xlu0 %v4150, %s4191
        %v4193 = vpop.permute.xlu0 %4192
        %s4195 = sor.u32 256, 88
        %4196 = vbcast.lane.b32.xlu0 %v4150, %s4195
        %v4197 = vpop.permute.xlu0 %4196
        %s4199 = sor.u32 256, 96
        %4200 = vbcast.lane.b32.xlu0 %v4150, %s4199
        %v4201 = vpop.permute.xlu0 %4200
        %s4203 = sor.u32 256, 104
        %4204 = vbcast.lane.b32.xlu0 %v4150, %s4203
        %v4205 = vpop.permute.xlu0 %4204
        %s4207 = sor.u32 256, 112
        %4208 = vbcast.lane.b32.xlu0 %v4150, %s4207
        %v4209 = vpop.permute.xlu0 %4208
        %s4211 = sor.u32 256, 120
        %4212 = vbcast.lane.b32.xlu0 %v4150, %s4211
        %v4213 = vpop.permute.xlu0 %4212
        %v4214 = vlaneseq
        %v4215 = vshrl.u32 %v4214, 7
        %v4216 = vsub.s32 2, %v4215
        %v4217 = vrot.slane %v4072, %v4216
        %4219 = vbcast.lane.b32.xlu0 %v4217, 256
        %v4220 = vpop.permute.xlu0 %4219
        %s4222 = sor.u32 256, 8
        %4223 = vbcast.lane.b32.xlu0 %v4217, %s4222
        %v4224 = vpop.permute.xlu0 %4223
        %s4226 = sor.u32 256, 16
        %4227 = vbcast.lane.b32.xlu0 %v4217, %s4226
        %v4228 = vpop.permute.xlu0 %4227
        %s4230 = sor.u32 256, 24
        %4231 = vbcast.lane.b32.xlu0 %v4217, %s4230
        %v4232 = vpop.permute.xlu0 %4231
        %s4234 = sor.u32 256, 32
        %4235 = vbcast.lane.b32.xlu0 %v4217, %s4234
        %v4236 = vpop.permute.xlu0 %4235
        %s4238 = sor.u32 256, 40
        %4239 = vbcast.lane.b32.xlu0 %v4217, %s4238
        %v4240 = vpop.permute.xlu0 %4239
        %s4242 = sor.u32 256, 48
        %4243 = vbcast.lane.b32.xlu0 %v4217, %s4242
        %v4244 = vpop.permute.xlu0 %4243
        %s4246 = sor.u32 256, 56
        %4247 = vbcast.lane.b32.xlu0 %v4217, %s4246
        %v4248 = vpop.permute.xlu0 %4247
        %s4250 = sor.u32 256, 64
        %4251 = vbcast.lane.b32.xlu0 %v4217, %s4250
        %v4252 = vpop.permute.xlu0 %4251
        %s4254 = sor.u32 256, 72
        %4255 = vbcast.lane.b32.xlu0 %v4217, %s4254
        %v4256 = vpop.permute.xlu0 %4255
        %s4258 = sor.u32 256, 80
        %4259 = vbcast.lane.b32.xlu0 %v4217, %s4258
        %v4260 = vpop.permute.xlu0 %4259
        %s4262 = sor.u32 256, 88
        %4263 = vbcast.lane.b32.xlu0 %v4217, %s4262
        %v4264 = vpop.permute.xlu0 %4263
        %s4266 = sor.u32 256, 96
        %4267 = vbcast.lane.b32.xlu0 %v4217, %s4266
        %v4268 = vpop.permute.xlu0 %4267
        %s4270 = sor.u32 256, 104
        %4271 = vbcast.lane.b32.xlu0 %v4217, %s4270
        %v4272 = vpop.permute.xlu0 %4271
        %s4274 = sor.u32 256, 112
        %4275 = vbcast.lane.b32.xlu0 %v4217, %s4274
        %v4276 = vpop.permute.xlu0 %4275
        %s4278 = sor.u32 256, 120
        %4279 = vbcast.lane.b32.xlu0 %v4217, %s4278
        %v4280 = vpop.permute.xlu0 %4279
        %v4281 = vlaneseq
        %v4282 = vshrl.u32 %v4281, 7
        %v4283 = vsub.s32 3, %v4282
        %v4284 = vrot.slane %v4072, %v4283
        %4286 = vbcast.lane.b32.xlu0 %v4284, 256
        %v4287 = vpop.permute.xlu0 %4286
        %s4289 = sor.u32 256, 8
        %4290 = vbcast.lane.b32.xlu0 %v4284, %s4289
        %v4291 = vpop.permute.xlu0 %4290
        %s4293 = sor.u32 256, 16
        %4294 = vbcast.lane.b32.xlu0 %v4284, %s4293
        %v4295 = vpop.permute.xlu0 %4294
        %s4297 = sor.u32 256, 24
        %4298 = vbcast.lane.b32.xlu0 %v4284, %s4297
        %v4299 = vpop.permute.xlu0 %4298
        %s4301 = sor.u32 256, 32
        %4302 = vbcast.lane.b32.xlu0 %v4284, %s4301
        %v4303 = vpop.permute.xlu0 %4302
        %s4305 = sor.u32 256, 40
        %4306 = vbcast.lane.b32.xlu0 %v4284, %s4305
        %v4307 = vpop.permute.xlu0 %4306
        %s4309 = sor.u32 256, 48
        %4310 = vbcast.lane.b32.xlu0 %v4284, %s4309
        %v4311 = vpop.permute.xlu0 %4310
        %s4313 = sor.u32 256, 56
        %4314 = vbcast.lane.b32.xlu0 %v4284, %s4313
        %v4315 = vpop.permute.xlu0 %4314
        %s4317 = sor.u32 256, 64
        %4318 = vbcast.lane.b32.xlu0 %v4284, %s4317
        %v4319 = vpop.permute.xlu0 %4318
        %s4321 = sor.u32 256, 72
        %4322 = vbcast.lane.b32.xlu0 %v4284, %s4321
        %v4323 = vpop.permute.xlu0 %4322
        %s4325 = sor.u32 256, 80
        %4326 = vbcast.lane.b32.xlu0 %v4284, %s4325
        %v4327 = vpop.permute.xlu0 %4326
        %s4329 = sor.u32 256, 88
        %4330 = vbcast.lane.b32.xlu0 %v4284, %s4329
        %v4331 = vpop.permute.xlu0 %4330
        %s4333 = sor.u32 256, 96
        %4334 = vbcast.lane.b32.xlu0 %v4284, %s4333
        %v4335 = vpop.permute.xlu0 %4334
        %s4337 = sor.u32 256, 104
        %4338 = vbcast.lane.b32.xlu0 %v4284, %s4337
        %v4339 = vpop.permute.xlu0 %4338
        %s4341 = sor.u32 256, 112
        %4342 = vbcast.lane.b32.xlu0 %v4284, %s4341
        %v4343 = vpop.permute.xlu0 %4342
        %s4345 = sor.u32 256, 120
        %4346 = vbcast.lane.b32.xlu0 %v4284, %s4345
        %v4347 = vpop.permute.xlu0 %4346
        %v4348 = vlaneseq
        %v4349 = vshrl.u32 %v4348, 7
        %v4350 = vsub.s32 4, %v4349
        %v4351 = vrot.slane %v4072, %v4350
        %4353 = vbcast.lane.b32.xlu0 %v4351, 256
        %v4354 = vpop.permute.xlu0 %4353
        %s4356 = sor.u32 256, 8
        %4357 = vbcast.lane.b32.xlu0 %v4351, %s4356
        %v4358 = vpop.permute.xlu0 %4357
        %s4360 = sor.u32 256, 16
        %4361 = vbcast.lane.b32.xlu0 %v4351, %s4360
        %v4362 = vpop.permute.xlu0 %4361
        %s4364 = sor.u32 256, 24
        %4365 = vbcast.lane.b32.xlu0 %v4351, %s4364
        %v4366 = vpop.permute.xlu0 %4365
        %s4368 = sor.u32 256, 32
        %4369 = vbcast.lane.b32.xlu0 %v4351, %s4368
        %v4370 = vpop.permute.xlu0 %4369
        %s4372 = sor.u32 256, 40
        %4373 = vbcast.lane.b32.xlu0 %v4351, %s4372
        %v4374 = vpop.permute.xlu0 %4373
        %s4376 = sor.u32 256, 48
        %4377 = vbcast.lane.b32.xlu0 %v4351, %s4376
        %v4378 = vpop.permute.xlu0 %4377
        %s4380 = sor.u32 256, 56
        %4381 = vbcast.lane.b32.xlu0 %v4351, %s4380
        %v4382 = vpop.permute.xlu0 %4381
        %s4384 = sor.u32 256, 64
        %4385 = vbcast.lane.b32.xlu0 %v4351, %s4384
        %v4386 = vpop.permute.xlu0 %4385
        %s4388 = sor.u32 256, 72
        %4389 = vbcast.lane.b32.xlu0 %v4351, %s4388
        %v4390 = vpop.permute.xlu0 %4389
        %s4392 = sor.u32 256, 80
        %4393 = vbcast.lane.b32.xlu0 %v4351, %s4392
        %v4394 = vpop.permute.xlu0 %4393
        %s4396 = sor.u32 256, 88
        %4397 = vbcast.lane.b32.xlu0 %v4351, %s4396
        %v4398 = vpop.permute.xlu0 %4397
        %s4400 = sor.u32 256, 96
        %4401 = vbcast.lane.b32.xlu0 %v4351, %s4400
        %v4402 = vpop.permute.xlu0 %4401
        %s4404 = sor.u32 256, 104
        %4405 = vbcast.lane.b32.xlu0 %v4351, %s4404
        %v4406 = vpop.permute.xlu0 %4405
        %s4408 = sor.u32 256, 112
        %4409 = vbcast.lane.b32.xlu0 %v4351, %s4408
        %v4410 = vpop.permute.xlu0 %4409
        %s4412 = sor.u32 256, 120
        %4413 = vbcast.lane.b32.xlu0 %v4351, %s4412
        %v4414 = vpop.permute.xlu0 %4413
        %v4415 = vlaneseq
        %v4416 = vshrl.u32 %v4415, 7
        %v4417 = vsub.s32 5, %v4416
        %v4418 = vrot.slane %v4072, %v4417
        %4420 = vbcast.lane.b32.xlu0 %v4418, 256
        %v4421 = vpop.permute.xlu0 %4420
        %s4423 = sor.u32 256, 8
        %4424 = vbcast.lane.b32.xlu0 %v4418, %s4423
        %v4425 = vpop.permute.xlu0 %4424
        %s4427 = sor.u32 256, 16
        %4428 = vbcast.lane.b32.xlu0 %v4418, %s4427
        %v4429 = vpop.permute.xlu0 %4428
        %s4431 = sor.u32 256, 24
        %4432 = vbcast.lane.b32.xlu0 %v4418, %s4431
        %v4433 = vpop.permute.xlu0 %4432
        %s4435 = sor.u32 256, 32
        %4436 = vbcast.lane.b32.xlu0 %v4418, %s4435
        %v4437 = vpop.permute.xlu0 %4436
        %s4439 = sor.u32 256, 40
        %4440 = vbcast.lane.b32.xlu0 %v4418, %s4439
        %v4441 = vpop.permute.xlu0 %4440
        %s4443 = sor.u32 256, 48
        %4444 = vbcast.lane.b32.xlu0 %v4418, %s4443
        %v4445 = vpop.permute.xlu0 %4444
        %s4447 = sor.u32 256, 56
        %4448 = vbcast.lane.b32.xlu0 %v4418, %s4447
        %v4449 = vpop.permute.xlu0 %4448
        %s4451 = sor.u32 256, 64
        %4452 = vbcast.lane.b32.xlu0 %v4418, %s4451
        %v4453 = vpop.permute.xlu0 %4452
        %s4455 = sor.u32 256, 72
        %4456 = vbcast.lane.b32.xlu0 %v4418, %s4455
        %v4457 = vpop.permute.xlu0 %4456
        %s4459 = sor.u32 256, 80
        %4460 = vbcast.lane.b32.xlu0 %v4418, %s4459
        %v4461 = vpop.permute.xlu0 %4460
        %s4463 = sor.u32 256, 88
        %4464 = vbcast.lane.b32.xlu0 %v4418, %s4463
        %v4465 = vpop.permute.xlu0 %4464
        %s4467 = sor.u32 256, 96
        %4468 = vbcast.lane.b32.xlu0 %v4418, %s4467
        %v4469 = vpop.permute.xlu0 %4468
        %s4471 = sor.u32 256, 104
        %4472 = vbcast.lane.b32.xlu0 %v4418, %s4471
        %v4473 = vpop.permute.xlu0 %4472
        %s4475 = sor.u32 256, 112
        %4476 = vbcast.lane.b32.xlu0 %v4418, %s4475
        %v4477 = vpop.permute.xlu0 %4476
        %s4479 = sor.u32 256, 120
        %4480 = vbcast.lane.b32.xlu0 %v4418, %s4479
        %v4481 = vpop.permute.xlu0 %4480
        %v4482 = vlaneseq
        %v4483 = vshrl.u32 %v4482, 7
        %v4484 = vsub.s32 6, %v4483
        %v4485 = vrot.slane %v4072, %v4484
        %4487 = vbcast.lane.b32.xlu0 %v4485, 256
        %v4488 = vpop.permute.xlu0 %4487
        %s4490 = sor.u32 256, 8
        %4491 = vbcast.lane.b32.xlu0 %v4485, %s4490
        %v4492 = vpop.permute.xlu0 %4491
        %s4494 = sor.u32 256, 16
        %4495 = vbcast.lane.b32.xlu0 %v4485, %s4494
        %v4496 = vpop.permute.xlu0 %4495
        %s4498 = sor.u32 256, 24
        %4499 = vbcast.lane.b32.xlu0 %v4485, %s4498
        %v4500 = vpop.permute.xlu0 %4499
        %s4502 = sor.u32 256, 32
        %4503 = vbcast.lane.b32.xlu0 %v4485, %s4502
        %v4504 = vpop.permute.xlu0 %4503
        %s4506 = sor.u32 256, 40
        %4507 = vbcast.lane.b32.xlu0 %v4485, %s4506
        %v4508 = vpop.permute.xlu0 %4507
        %s4510 = sor.u32 256, 48
        %4511 = vbcast.lane.b32.xlu0 %v4485, %s4510
        %v4512 = vpop.permute.xlu0 %4511
        %s4514 = sor.u32 256, 56
        %4515 = vbcast.lane.b32.xlu0 %v4485, %s4514
        %v4516 = vpop.permute.xlu0 %4515
        %s4518 = sor.u32 256, 64
        %4519 = vbcast.lane.b32.xlu0 %v4485, %s4518
        %v4520 = vpop.permute.xlu0 %4519
        %s4522 = sor.u32 256, 72
        %4523 = vbcast.lane.b32.xlu0 %v4485, %s4522
        %v4524 = vpop.permute.xlu0 %4523
        %s4526 = sor.u32 256, 80
        %4527 = vbcast.lane.b32.xlu0 %v4485, %s4526
        %v4528 = vpop.permute.xlu0 %4527
        %s4530 = sor.u32 256, 88
        %4531 = vbcast.lane.b32.xlu0 %v4485, %s4530
        %v4532 = vpop.permute.xlu0 %4531
        %s4534 = sor.u32 256, 96
        %4535 = vbcast.lane.b32.xlu0 %v4485, %s4534
        %v4536 = vpop.permute.xlu0 %4535
        %s4538 = sor.u32 256, 104
        %4539 = vbcast.lane.b32.xlu0 %v4485, %s4538
        %v4540 = vpop.permute.xlu0 %4539
        %s4542 = sor.u32 256, 112
        %4543 = vbcast.lane.b32.xlu0 %v4485, %s4542
        %v4544 = vpop.permute.xlu0 %4543
        %s4546 = sor.u32 256, 120
        %4547 = vbcast.lane.b32.xlu0 %v4485, %s4546
        %v4548 = vpop.permute.xlu0 %4547
        %v4549 = vlaneseq
        %v4550 = vshrl.u32 %v4549, 7
        %v4551 = vsub.s32 7, %v4550
        %v4552 = vrot.slane %v4072, %v4551
        %4554 = vbcast.lane.b32.xlu0 %v4552, 256
        %v4555 = vpop.permute.xlu0 %4554
        %s4557 = sor.u32 256, 8
        %4558 = vbcast.lane.b32.xlu0 %v4552, %s4557
        %v4559 = vpop.permute.xlu0 %4558
        %s4561 = sor.u32 256, 16
        %4562 = vbcast.lane.b32.xlu0 %v4552, %s4561
        %v4563 = vpop.permute.xlu0 %4562
        %s4565 = sor.u32 256, 24
        %4566 = vbcast.lane.b32.xlu0 %v4552, %s4565
        %v4567 = vpop.permute.xlu0 %4566
        %s4569 = sor.u32 256, 32
        %4570 = vbcast.lane.b32.xlu0 %v4552, %s4569
        %v4571 = vpop.permute.xlu0 %4570
        %s4573 = sor.u32 256, 40
        %4574 = vbcast.lane.b32.xlu0 %v4552, %s4573
        %v4575 = vpop.permute.xlu0 %4574
        %s4577 = sor.u32 256, 48
        %4578 = vbcast.lane.b32.xlu0 %v4552, %s4577
        %v4579 = vpop.permute.xlu0 %4578
        %s4581 = sor.u32 256, 56
        %4582 = vbcast.lane.b32.xlu0 %v4552, %s4581
        %v4583 = vpop.permute.xlu0 %4582
        %s4585 = sor.u32 256, 64
        %4586 = vbcast.lane.b32.xlu0 %v4552, %s4585
        %v4587 = vpop.permute.xlu0 %4586
        %s4589 = sor.u32 256, 72
        %4590 = vbcast.lane.b32.xlu0 %v4552, %s4589
        %v4591 = vpop.permute.xlu0 %4590
        %s4593 = sor.u32 256, 80
        %4594 = vbcast.lane.b32.xlu0 %v4552, %s4593
        %v4595 = vpop.permute.xlu0 %4594
        %s4597 = sor.u32 256, 88
        %4598 = vbcast.lane.b32.xlu0 %v4552, %s4597
        %v4599 = vpop.permute.xlu0 %4598
        %s4601 = sor.u32 256, 96
        %4602 = vbcast.lane.b32.xlu0 %v4552, %s4601
        %v4603 = vpop.permute.xlu0 %4602
        %s4605 = sor.u32 256, 104
        %4606 = vbcast.lane.b32.xlu0 %v4552, %s4605
        %v4607 = vpop.permute.xlu0 %4606
        %s4609 = sor.u32 256, 112
        %4610 = vbcast.lane.b32.xlu0 %v4552, %s4609
        %v4611 = vpop.permute.xlu0 %4610
        %s4613 = sor.u32 256, 120
        %4614 = vbcast.lane.b32.xlu0 %v4552, %s4613
        %v4615 = vpop.permute.xlu0 %4614
        %v4616 = vld [vmem:[%s1882] sm:$0xf]
        %v4617 = vld [vmem:[%s1882 + $0x4] sm:$0xf]
        %v4618 = vld [vmem:[%s1882 + $0x8] sm:$0xf]
        %v4619 = vld [vmem:[%s1882 + $0xc] sm:$0xf]
        %v4620 = vld [vmem:[%s1882 + $0x10] sm:$0xf]
        %v4621 = vld [vmem:[%s1882 + $0x14] sm:$0xf]
        %v4622 = vld [vmem:[%s1882 + $0x18] sm:$0xf]
        %v4623 = vld [vmem:[%s1882 + $0x1c] sm:$0xf]
        %v4624 = vld [vmem:[%s1882 + $0x20] sm:$0xf]
        %v4625 = vld [vmem:[%s1882 + $0x24] sm:$0xf]
        %v4626 = vld [vmem:[%s1882 + $0x28] sm:$0xf]
        %v4627 = vld [vmem:[%s1882 + $0x2c] sm:$0xf]
        %v4628 = vld [vmem:[%s1882 + $0x30] sm:$0xf]
        %v4629 = vld [vmem:[%s1882 + $0x34] sm:$0xf]
        %v4630 = vld [vmem:[%s1882 + $0x38] sm:$0xf]
        %v4631 = vld [vmem:[%s1882 + $0x3c] sm:$0xf]
        %v4632 = vld [vmem:[%s1882 + $0x40] sm:$0xf]
        %v4633 = vld [vmem:[%s1882 + $0x44] sm:$0xf]
        %v4634 = vld [vmem:[%s1882 + $0x48] sm:$0xf]
        %v4635 = vld [vmem:[%s1882 + $0x4c] sm:$0xf]
        %v4636 = vld [vmem:[%s1882 + $0x50] sm:$0xf]
        %v4637 = vld [vmem:[%s1882 + $0x54] sm:$0xf]
        %v4638 = vld [vmem:[%s1882 + $0x58] sm:$0xf]
        %v4639 = vld [vmem:[%s1882 + $0x5c] sm:$0xf]
        %v4640 = vld [vmem:[%s1882 + $0x60] sm:$0xf]
        %v4641 = vld [vmem:[%s1882 + $0x64] sm:$0xf]
        %v4642 = vld [vmem:[%s1882 + $0x68] sm:$0xf]
        %v4643 = vld [vmem:[%s1882 + $0x6c] sm:$0xf]
        %v4644 = vld [vmem:[%s1882 + $0x70] sm:$0xf]
        %v4645 = vld [vmem:[%s1882 + $0x74] sm:$0xf]
        %v4646 = vld [vmem:[%s1882 + $0x78] sm:$0xf]
        %v4647 = vld [vmem:[%s1882 + $0x7c] sm:$0xf]
        %v4648 = vld [vmem:[%s1882 + $0x80] sm:$0xf]
        %v4649 = vld [vmem:[%s1882 + $0x84] sm:$0xf]
        %v4650 = vld [vmem:[%s1882 + $0x88] sm:$0xf]
        %v4651 = vld [vmem:[%s1882 + $0x8c] sm:$0xf]
        %v4652 = vld [vmem:[%s1882 + $0x90] sm:$0xf]
        %v4653 = vld [vmem:[%s1882 + $0x94] sm:$0xf]
        %v4654 = vld [vmem:[%s1882 + $0x98] sm:$0xf]
        %v4655 = vld [vmem:[%s1882 + $0x9c] sm:$0xf]
        %v4656 = vld [vmem:[%s1882 + $0xa0] sm:$0xf]
        %v4657 = vld [vmem:[%s1882 + $0xa4] sm:$0xf]
        %v4658 = vld [vmem:[%s1882 + $0xa8] sm:$0xf]
        %v4659 = vld [vmem:[%s1882 + $0xac] sm:$0xf]
        %v4660 = vld [vmem:[%s1882 + $0xb0] sm:$0xf]
        %v4661 = vld [vmem:[%s1882 + $0xb4] sm:$0xf]
        %v4662 = vld [vmem:[%s1882 + $0xb8] sm:$0xf]
        %v4663 = vld [vmem:[%s1882 + $0xbc] sm:$0xf]
        %v4664 = vld [vmem:[%s1882 + $0xc0] sm:$0xf]
        %v4665 = vld [vmem:[%s1882 + $0xc4] sm:$0xf]
        %v4666 = vld [vmem:[%s1882 + $0xc8] sm:$0xf]
        %v4667 = vld [vmem:[%s1882 + $0xcc] sm:$0xf]
        %v4668 = vld [vmem:[%s1882 + $0xd0] sm:$0xf]
        %v4669 = vld [vmem:[%s1882 + $0xd4] sm:$0xf]
        %v4670 = vld [vmem:[%s1882 + $0xd8] sm:$0xf]
        %v4671 = vld [vmem:[%s1882 + $0xdc] sm:$0xf]
        %v4672 = vld [vmem:[%s1882 + $0xe0] sm:$0xf]
        %v4673 = vld [vmem:[%s1882 + $0xe4] sm:$0xf]
        %v4674 = vld [vmem:[%s1882 + $0xe8] sm:$0xf]
        %v4675 = vld [vmem:[%s1882 + $0xec] sm:$0xf]
        %v4676 = vld [vmem:[%s1882 + $0xf0] sm:$0xf]
        %v4677 = vld [vmem:[%s1882 + $0xf4] sm:$0xf]
        %v4678 = vld [vmem:[%s1882 + $0xf8] sm:$0xf]
        %v4679 = vld [vmem:[%s1882 + $0xfc] sm:$0xf]
        %v4680 = vld [vmem:[%s1882 + $0x100] sm:$0xf]
        %v4681 = vld [vmem:[%s1882 + $0x104] sm:$0xf]
        %v4682 = vld [vmem:[%s1882 + $0x108] sm:$0xf]
        %v4683 = vld [vmem:[%s1882 + $0x10c] sm:$0xf]
        %v4684 = vld [vmem:[%s1882 + $0x110] sm:$0xf]
        %v4685 = vld [vmem:[%s1882 + $0x114] sm:$0xf]
        %v4686 = vld [vmem:[%s1882 + $0x118] sm:$0xf]
        %v4687 = vld [vmem:[%s1882 + $0x11c] sm:$0xf]
        %v4688 = vld [vmem:[%s1882 + $0x120] sm:$0xf]
        %v4689 = vld [vmem:[%s1882 + $0x124] sm:$0xf]
        %v4690 = vld [vmem:[%s1882 + $0x128] sm:$0xf]
        %v4691 = vld [vmem:[%s1882 + $0x12c] sm:$0xf]
        %v4692 = vld [vmem:[%s1882 + $0x130] sm:$0xf]
        %v4693 = vld [vmem:[%s1882 + $0x134] sm:$0xf]
        %v4694 = vld [vmem:[%s1882 + $0x138] sm:$0xf]
        %v4695 = vld [vmem:[%s1882 + $0x13c] sm:$0xf]
        %v4696 = vld [vmem:[%s1882 + $0x140] sm:$0xf]
        %v4697 = vld [vmem:[%s1882 + $0x144] sm:$0xf]
        %v4698 = vld [vmem:[%s1882 + $0x148] sm:$0xf]
        %v4699 = vld [vmem:[%s1882 + $0x14c] sm:$0xf]
        %v4700 = vld [vmem:[%s1882 + $0x150] sm:$0xf]
        %v4701 = vld [vmem:[%s1882 + $0x154] sm:$0xf]
        %v4702 = vld [vmem:[%s1882 + $0x158] sm:$0xf]
        %v4703 = vld [vmem:[%s1882 + $0x15c] sm:$0xf]
        %v4704 = vld [vmem:[%s1882 + $0x160] sm:$0xf]
        %v4705 = vld [vmem:[%s1882 + $0x164] sm:$0xf]
        %v4706 = vld [vmem:[%s1882 + $0x168] sm:$0xf]
        %v4707 = vld [vmem:[%s1882 + $0x16c] sm:$0xf]
        %v4708 = vld [vmem:[%s1882 + $0x170] sm:$0xf]
        %v4709 = vld [vmem:[%s1882 + $0x174] sm:$0xf]
        %v4710 = vld [vmem:[%s1882 + $0x178] sm:$0xf]
        %v4711 = vld [vmem:[%s1882 + $0x17c] sm:$0xf]
        %v4712 = vld [vmem:[%s1882 + $0x180] sm:$0xf]
        %v4713 = vld [vmem:[%s1882 + $0x184] sm:$0xf]
        %v4714 = vld [vmem:[%s1882 + $0x188] sm:$0xf]
        %v4715 = vld [vmem:[%s1882 + $0x18c] sm:$0xf]
        %v4716 = vld [vmem:[%s1882 + $0x190] sm:$0xf]
        %v4717 = vld [vmem:[%s1882 + $0x194] sm:$0xf]
        %v4718 = vld [vmem:[%s1882 + $0x198] sm:$0xf]
        %v4719 = vld [vmem:[%s1882 + $0x19c] sm:$0xf]
        %v4720 = vld [vmem:[%s1882 + $0x1a0] sm:$0xf]
        %v4721 = vld [vmem:[%s1882 + $0x1a4] sm:$0xf]
        %v4722 = vld [vmem:[%s1882 + $0x1a8] sm:$0xf]
        %v4723 = vld [vmem:[%s1882 + $0x1ac] sm:$0xf]
        %v4724 = vld [vmem:[%s1882 + $0x1b0] sm:$0xf]
        %v4725 = vld [vmem:[%s1882 + $0x1b4] sm:$0xf]
        %v4726 = vld [vmem:[%s1882 + $0x1b8] sm:$0xf]
        %v4727 = vld [vmem:[%s1882 + $0x1bc] sm:$0xf]
        %v4728 = vld [vmem:[%s1882 + $0x1c0] sm:$0xf]
        %v4729 = vld [vmem:[%s1882 + $0x1c4] sm:$0xf]
        %v4730 = vld [vmem:[%s1882 + $0x1c8] sm:$0xf]
        %v4731 = vld [vmem:[%s1882 + $0x1cc] sm:$0xf]
        %v4732 = vld [vmem:[%s1882 + $0x1d0] sm:$0xf]
        %v4733 = vld [vmem:[%s1882 + $0x1d4] sm:$0xf]
        %v4734 = vld [vmem:[%s1882 + $0x1d8] sm:$0xf]
        %v4735 = vld [vmem:[%s1882 + $0x1dc] sm:$0xf]
        %v4736 = vld [vmem:[%s1882 + $0x1e0] sm:$0xf]
        %v4737 = vld [vmem:[%s1882 + $0x1e4] sm:$0xf]
        %v4738 = vld [vmem:[%s1882 + $0x1e8] sm:$0xf]
        %v4739 = vld [vmem:[%s1882 + $0x1ec] sm:$0xf]
        %v4740 = vld [vmem:[%s1882 + $0x1f0] sm:$0xf]
        %v4741 = vld [vmem:[%s1882 + $0x1f4] sm:$0xf]
        %v4742 = vld [vmem:[%s1882 + $0x1f8] sm:$0xf]
        %v4743 = vld [vmem:[%s1882 + $0x1fc] sm:$0xf]
        %v4744 = vunpack.c.l.bf16 %v4616
        %v4745 = vunpack.c.l.bf16 %v4617
        %v4746 = vunpack.c.l.bf16 %v4618
        %v4747 = vunpack.c.l.bf16 %v4619
        %v4748 = vunpack.c.l.bf16 %v4620
        %v4749 = vunpack.c.l.bf16 %v4621
        %v4750 = vunpack.c.l.bf16 %v4622
        %v4751 = vunpack.c.l.bf16 %v4623
        %v4752 = vunpack.c.l.bf16 %v4624
        %v4753 = vunpack.c.l.bf16 %v4625
        %v4754 = vunpack.c.l.bf16 %v4626
        %v4755 = vunpack.c.l.bf16 %v4627
        %v4756 = vunpack.c.l.bf16 %v4628
        %v4757 = vunpack.c.l.bf16 %v4629
        %v4758 = vunpack.c.l.bf16 %v4630
        %v4759 = vunpack.c.l.bf16 %v4631
        %v4760 = vunpack.c.l.bf16 %v4632
        %v4761 = vunpack.c.l.bf16 %v4633
        %v4762 = vunpack.c.l.bf16 %v4634
        %v4763 = vunpack.c.l.bf16 %v4635
        %v4764 = vunpack.c.l.bf16 %v4636
        %v4765 = vunpack.c.l.bf16 %v4637
        %v4766 = vunpack.c.l.bf16 %v4638
        %v4767 = vunpack.c.l.bf16 %v4639
        %v4768 = vunpack.c.l.bf16 %v4640
        %v4769 = vunpack.c.l.bf16 %v4641
        %v4770 = vunpack.c.l.bf16 %v4642
        %v4771 = vunpack.c.l.bf16 %v4643
        %v4772 = vunpack.c.l.bf16 %v4644
        %v4773 = vunpack.c.l.bf16 %v4645
        %v4774 = vunpack.c.l.bf16 %v4646
        %v4775 = vunpack.c.l.bf16 %v4647
        %v4776 = vunpack.c.l.bf16 %v4648
        %v4777 = vunpack.c.l.bf16 %v4649
        %v4778 = vunpack.c.l.bf16 %v4650
        %v4779 = vunpack.c.l.bf16 %v4651
        %v4780 = vunpack.c.l.bf16 %v4652
        %v4781 = vunpack.c.l.bf16 %v4653
        %v4782 = vunpack.c.l.bf16 %v4654
        %v4783 = vunpack.c.l.bf16 %v4655
        %v4784 = vunpack.c.l.bf16 %v4656
        %v4785 = vunpack.c.l.bf16 %v4657
        %v4786 = vunpack.c.l.bf16 %v4658
        %v4787 = vunpack.c.l.bf16 %v4659
        %v4788 = vunpack.c.l.bf16 %v4660
        %v4789 = vunpack.c.l.bf16 %v4661
        %v4790 = vunpack.c.l.bf16 %v4662
        %v4791 = vunpack.c.l.bf16 %v4663
        %v4792 = vunpack.c.l.bf16 %v4664
        %v4793 = vunpack.c.l.bf16 %v4665
        %v4794 = vunpack.c.l.bf16 %v4666
        %v4795 = vunpack.c.l.bf16 %v4667
        %v4796 = vunpack.c.l.bf16 %v4668
        %v4797 = vunpack.c.l.bf16 %v4669
        %v4798 = vunpack.c.l.bf16 %v4670
        %v4799 = vunpack.c.l.bf16 %v4671
        %v4800 = vunpack.c.l.bf16 %v4672
        %v4801 = vunpack.c.l.bf16 %v4673
        %v4802 = vunpack.c.l.bf16 %v4674
        %v4803 = vunpack.c.l.bf16 %v4675
        %v4804 = vunpack.c.l.bf16 %v4676
        %v4805 = vunpack.c.l.bf16 %v4677
        %v4806 = vunpack.c.l.bf16 %v4678
        %v4807 = vunpack.c.l.bf16 %v4679
        %v4808 = vunpack.c.l.bf16 %v4680
        %v4809 = vunpack.c.l.bf16 %v4681
        %v4810 = vunpack.c.l.bf16 %v4682
        %v4811 = vunpack.c.l.bf16 %v4683
        %v4812 = vunpack.c.l.bf16 %v4684
        %v4813 = vunpack.c.l.bf16 %v4685
        %v4814 = vunpack.c.l.bf16 %v4686
        %v4815 = vunpack.c.l.bf16 %v4687
        %v4816 = vunpack.c.l.bf16 %v4688
        %v4817 = vunpack.c.l.bf16 %v4689
        %v4818 = vunpack.c.l.bf16 %v4690
        %v4819 = vunpack.c.l.bf16 %v4691
        %v4820 = vunpack.c.l.bf16 %v4692
        %v4821 = vunpack.c.l.bf16 %v4693
        %v4822 = vunpack.c.l.bf16 %v4694
        %v4823 = vunpack.c.l.bf16 %v4695
        %v4824 = vunpack.c.l.bf16 %v4696
        %v4825 = vunpack.c.l.bf16 %v4697
        %v4826 = vunpack.c.l.bf16 %v4698
        %v4827 = vunpack.c.l.bf16 %v4699
        %v4828 = vunpack.c.l.bf16 %v4700
        %v4829 = vunpack.c.l.bf16 %v4701
        %v4830 = vunpack.c.l.bf16 %v4702
        %v4831 = vunpack.c.l.bf16 %v4703
        %v4832 = vunpack.c.l.bf16 %v4704
        %v4833 = vunpack.c.l.bf16 %v4705
        %v4834 = vunpack.c.l.bf16 %v4706
        %v4835 = vunpack.c.l.bf16 %v4707
        %v4836 = vunpack.c.l.bf16 %v4708
        %v4837 = vunpack.c.l.bf16 %v4709
        %v4838 = vunpack.c.l.bf16 %v4710
        %v4839 = vunpack.c.l.bf16 %v4711
        %v4840 = vunpack.c.l.bf16 %v4712
        %v4841 = vunpack.c.l.bf16 %v4713
        %v4842 = vunpack.c.l.bf16 %v4714
        %v4843 = vunpack.c.l.bf16 %v4715
        %v4844 = vunpack.c.l.bf16 %v4716
        %v4845 = vunpack.c.l.bf16 %v4717
        %v4846 = vunpack.c.l.bf16 %v4718
        %v4847 = vunpack.c.l.bf16 %v4719
        %v4848 = vunpack.c.l.bf16 %v4720
        %v4849 = vunpack.c.l.bf16 %v4721
        %v4850 = vunpack.c.l.bf16 %v4722
        %v4851 = vunpack.c.l.bf16 %v4723
        %v4852 = vunpack.c.l.bf16 %v4724
        %v4853 = vunpack.c.l.bf16 %v4725
        %v4854 = vunpack.c.l.bf16 %v4726
        %v4855 = vunpack.c.l.bf16 %v4727
        %v4856 = vunpack.c.l.bf16 %v4728
        %v4857 = vunpack.c.l.bf16 %v4729
        %v4858 = vunpack.c.l.bf16 %v4730
        %v4859 = vunpack.c.l.bf16 %v4731
        %v4860 = vunpack.c.l.bf16 %v4732
        %v4861 = vunpack.c.l.bf16 %v4733
        %v4862 = vunpack.c.l.bf16 %v4734
        %v4863 = vunpack.c.l.bf16 %v4735
        %v4864 = vunpack.c.l.bf16 %v4736
        %v4865 = vunpack.c.l.bf16 %v4737
        %v4866 = vunpack.c.l.bf16 %v4738
        %v4867 = vunpack.c.l.bf16 %v4739
        %v4868 = vunpack.c.l.bf16 %v4740
        %v4869 = vunpack.c.l.bf16 %v4741
        %v4870 = vunpack.c.l.bf16 %v4742
        %v4871 = vunpack.c.l.bf16 %v4743
        %v4872 = vmul.f32 %v4086, %v4744
        %v4873 = vmul.f32 %v4090, %v4745
        %v4874 = vmul.f32 %v4094, %v4746
        %v4875 = vmul.f32 %v4098, %v4747
        %v4876 = vmul.f32 %v4102, %v4748
        %v4877 = vmul.f32 %v4106, %v4749
        %v4878 = vmul.f32 %v4110, %v4750
        %v4879 = vmul.f32 %v4114, %v4751
        %v4880 = vmul.f32 %v4118, %v4752
        %v4881 = vmul.f32 %v4122, %v4753
        %v4882 = vmul.f32 %v4126, %v4754
        %v4883 = vmul.f32 %v4130, %v4755
        %v4884 = vmul.f32 %v4134, %v4756
        %v4885 = vmul.f32 %v4138, %v4757
        %v4886 = vmul.f32 %v4142, %v4758
        %v4887 = vmul.f32 %v4146, %v4759
        %v4888 = vmul.f32 %v4153, %v4760
        %v4889 = vmul.f32 %v4157, %v4761
        %v4890 = vmul.f32 %v4161, %v4762
        %v4891 = vmul.f32 %v4165, %v4763
        %v4892 = vmul.f32 %v4169, %v4764
        %v4893 = vmul.f32 %v4173, %v4765
        %v4894 = vmul.f32 %v4177, %v4766
        %v4895 = vmul.f32 %v4181, %v4767
        %v4896 = vmul.f32 %v4185, %v4768
        %v4897 = vmul.f32 %v4189, %v4769
        %v4898 = vmul.f32 %v4193, %v4770
        %v4899 = vmul.f32 %v4197, %v4771
        %v4900 = vmul.f32 %v4201, %v4772
        %v4901 = vmul.f32 %v4205, %v4773
        %v4902 = vmul.f32 %v4209, %v4774
        %v4903 = vmul.f32 %v4213, %v4775
        %v4904 = vmul.f32 %v4220, %v4776
        %v4905 = vmul.f32 %v4224, %v4777
        %v4906 = vmul.f32 %v4228, %v4778
        %v4907 = vmul.f32 %v4232, %v4779
        %v4908 = vmul.f32 %v4236, %v4780
        %v4909 = vmul.f32 %v4240, %v4781
        %v4910 = vmul.f32 %v4244, %v4782
        %v4911 = vmul.f32 %v4248, %v4783
        %v4912 = vmul.f32 %v4252, %v4784
        %v4913 = vmul.f32 %v4256, %v4785
        %v4914 = vmul.f32 %v4260, %v4786
        %v4915 = vmul.f32 %v4264, %v4787
        %v4916 = vmul.f32 %v4268, %v4788
        %v4917 = vmul.f32 %v4272, %v4789
        %v4918 = vmul.f32 %v4276, %v4790
        %v4919 = vmul.f32 %v4280, %v4791
        %v4920 = vmul.f32 %v4287, %v4792
        %v4921 = vmul.f32 %v4291, %v4793
        %v4922 = vmul.f32 %v4295, %v4794
        %v4923 = vmul.f32 %v4299, %v4795
        %v4924 = vmul.f32 %v4303, %v4796
        %v4925 = vmul.f32 %v4307, %v4797
        %v4926 = vmul.f32 %v4311, %v4798
        %v4927 = vmul.f32 %v4315, %v4799
        %v4928 = vmul.f32 %v4319, %v4800
        %v4929 = vmul.f32 %v4323, %v4801
        %v4930 = vmul.f32 %v4327, %v4802
        %v4931 = vmul.f32 %v4331, %v4803
        %v4932 = vmul.f32 %v4335, %v4804
        %v4933 = vmul.f32 %v4339, %v4805
        %v4934 = vmul.f32 %v4343, %v4806
        %v4935 = vmul.f32 %v4347, %v4807
        %v4936 = vmul.f32 %v4354, %v4808
        %v4937 = vmul.f32 %v4358, %v4809
        %v4938 = vmul.f32 %v4362, %v4810
        %v4939 = vmul.f32 %v4366, %v4811
        %v4940 = vmul.f32 %v4370, %v4812
        %v4941 = vmul.f32 %v4374, %v4813
        %v4942 = vmul.f32 %v4378, %v4814
        %v4943 = vmul.f32 %v4382, %v4815
        %v4944 = vmul.f32 %v4386, %v4816
        %v4945 = vmul.f32 %v4390, %v4817
        %v4946 = vmul.f32 %v4394, %v4818
        %v4947 = vmul.f32 %v4398, %v4819
        %v4948 = vmul.f32 %v4402, %v4820
        %v4949 = vmul.f32 %v4406, %v4821
        %v4950 = vmul.f32 %v4410, %v4822
        %v4951 = vmul.f32 %v4414, %v4823
        %v4952 = vmul.f32 %v4421, %v4824
        %v4953 = vmul.f32 %v4425, %v4825
        %v4954 = vmul.f32 %v4429, %v4826
        %v4955 = vmul.f32 %v4433, %v4827
        %v4956 = vmul.f32 %v4437, %v4828
        %v4957 = vmul.f32 %v4441, %v4829
        %v4958 = vmul.f32 %v4445, %v4830
        %v4959 = vmul.f32 %v4449, %v4831
        %v4960 = vmul.f32 %v4453, %v4832
        %v4961 = vmul.f32 %v4457, %v4833
        %v4962 = vmul.f32 %v4461, %v4834
        %v4963 = vmul.f32 %v4465, %v4835
        %v4964 = vmul.f32 %v4469, %v4836
        %v4965 = vmul.f32 %v4473, %v4837
        %v4966 = vmul.f32 %v4477, %v4838
        %v4967 = vmul.f32 %v4481, %v4839
        %v4968 = vmul.f32 %v4488, %v4840
        %v4969 = vmul.f32 %v4492, %v4841
        %v4970 = vmul.f32 %v4496, %v4842
        %v4971 = vmul.f32 %v4500, %v4843
        %v4972 = vmul.f32 %v4504, %v4844
        %v4973 = vmul.f32 %v4508, %v4845
        %v4974 = vmul.f32 %v4512, %v4846
        %v4975 = vmul.f32 %v4516, %v4847
        %v4976 = vmul.f32 %v4520, %v4848
        %v4977 = vmul.f32 %v4524, %v4849
        %v4978 = vmul.f32 %v4528, %v4850
        %v4979 = vmul.f32 %v4532, %v4851
        %v4980 = vmul.f32 %v4536, %v4852
        %v4981 = vmul.f32 %v4540, %v4853
        %v4982 = vmul.f32 %v4544, %v4854
        %v4983 = vmul.f32 %v4548, %v4855
        %v4984 = vmul.f32 %v4555, %v4856
        %v4985 = vmul.f32 %v4559, %v4857
        %v4986 = vmul.f32 %v4563, %v4858
        %v4987 = vmul.f32 %v4567, %v4859
        %v4988 = vmul.f32 %v4571, %v4860
        %v4989 = vmul.f32 %v4575, %v4861
        %v4990 = vmul.f32 %v4579, %v4862
        %v4991 = vmul.f32 %v4583, %v4863
        %v4992 = vmul.f32 %v4587, %v4864
        %v4993 = vmul.f32 %v4591, %v4865
        %v4994 = vmul.f32 %v4595, %v4866
        %v4995 = vmul.f32 %v4599, %v4867
        %v4996 = vmul.f32 %v4603, %v4868
        %v4997 = vmul.f32 %v4607, %v4869
        %v4998 = vmul.f32 %v4611, %v4870
        %v4999 = vmul.f32 %v4615, %v4871
        %v5000 = vsel %vm2863, %v4872, 0.0
        %v5001 = vsel %vm2863, %v4873, 0.0
        %v5002 = vadd.f32 %v5000, %v5001
        %v5003 = vsel %vm2863, %v4874, 0.0
        %v5004 = vadd.f32 %v5002, %v5003
        %v5005 = vsel %vm2863, %v4875, 0.0
        %v5006 = vadd.f32 %v5004, %v5005
        %v5007 = vsel %vm2863, %v4876, 0.0
        %v5008 = vadd.f32 %v5006, %v5007
        %v5009 = vsel %vm2863, %v4877, 0.0
        %v5010 = vadd.f32 %v5008, %v5009
        %v5011 = vsel %vm2863, %v4878, 0.0
        %v5012 = vadd.f32 %v5010, %v5011
        %v5013 = vsel %vm2863, %v4879, 0.0
        %v5014 = vadd.f32 %v5012, %v5013
        %v5015 = vsel %vm2863, %v4880, 0.0
        %v5016 = vadd.f32 %v5014, %v5015
        %v5017 = vsel %vm2863, %v4881, 0.0
        %v5018 = vadd.f32 %v5016, %v5017
        %v5019 = vsel %vm2863, %v4882, 0.0
        %v5020 = vadd.f32 %v5018, %v5019
        %v5021 = vsel %vm2863, %v4883, 0.0
        %v5022 = vadd.f32 %v5020, %v5021
        %v5023 = vsel %vm2863, %v4884, 0.0
        %v5024 = vadd.f32 %v5022, %v5023
        %v5025 = vsel %vm2863, %v4885, 0.0
        %v5026 = vadd.f32 %v5024, %v5025
        %v5027 = vsel %vm2863, %v4886, 0.0
        %v5028 = vadd.f32 %v5026, %v5027
        %v5029 = vsel %vm2863, %v4887, 0.0
        %v5030 = vadd.f32 %v5028, %v5029
        %v5031 = vrot.slane %v5030, 4
        %v5032 = vadd.f32 %v5030, %v5031
        %v5033 = vrot.slane %v5032, 2
        %v5034 = vadd.f32 %v5032, %v5033
        %v5035 = vrot.slane %v5034, 1
        %v5036 = vadd.f32 %v5034, %v5035
        %v5037 = vsel %vm2863, %v4888, 0.0
        %v5038 = vsel %vm2863, %v4889, 0.0
        %v5039 = vadd.f32 %v5037, %v5038
        %v5040 = vsel %vm2863, %v4890, 0.0
        %v5041 = vadd.f32 %v5039, %v5040
        %v5042 = vsel %vm2863, %v4891, 0.0
        %v5043 = vadd.f32 %v5041, %v5042
        %v5044 = vsel %vm2863, %v4892, 0.0
        %v5045 = vadd.f32 %v5043, %v5044
        %v5046 = vsel %vm2863, %v4893, 0.0
        %v5047 = vadd.f32 %v5045, %v5046
        %v5048 = vsel %vm2863, %v4894, 0.0
        %v5049 = vadd.f32 %v5047, %v5048
        %v5050 = vsel %vm2863, %v4895, 0.0
        %v5051 = vadd.f32 %v5049, %v5050
        %v5052 = vsel %vm2863, %v4896, 0.0
        %v5053 = vadd.f32 %v5051, %v5052
        %v5054 = vsel %vm2863, %v4897, 0.0
        %v5055 = vadd.f32 %v5053, %v5054
        %v5056 = vsel %vm2863, %v4898, 0.0
        %v5057 = vadd.f32 %v5055, %v5056
        %v5058 = vsel %vm2863, %v4899, 0.0
        %v5059 = vadd.f32 %v5057, %v5058
        %v5060 = vsel %vm2863, %v4900, 0.0
        %v5061 = vadd.f32 %v5059, %v5060
        %v5062 = vsel %vm2863, %v4901, 0.0
        %v5063 = vadd.f32 %v5061, %v5062
        %v5064 = vsel %vm2863, %v4902, 0.0
        %v5065 = vadd.f32 %v5063, %v5064
        %v5066 = vsel %vm2863, %v4903, 0.0
        %v5067 = vadd.f32 %v5065, %v5066
        %v5068 = vrot.slane %v5067, 4
        %v5069 = vadd.f32 %v5067, %v5068
        %v5070 = vrot.slane %v5069, 2
        %v5071 = vadd.f32 %v5069, %v5070
        %v5072 = vrot.slane %v5071, 1
        %v5073 = vadd.f32 %v5071, %v5072
        %v5074 = vsel %vm2863, %v4904, 0.0
        %v5075 = vsel %vm2863, %v4905, 0.0
        %v5076 = vadd.f32 %v5074, %v5075
        %v5077 = vsel %vm2863, %v4906, 0.0
        %v5078 = vadd.f32 %v5076, %v5077
        %v5079 = vsel %vm2863, %v4907, 0.0
        %v5080 = vadd.f32 %v5078, %v5079
        %v5081 = vsel %vm2863, %v4908, 0.0
        %v5082 = vadd.f32 %v5080, %v5081
        %v5083 = vsel %vm2863, %v4909, 0.0
        %v5084 = vadd.f32 %v5082, %v5083
        %v5085 = vsel %vm2863, %v4910, 0.0
        %v5086 = vadd.f32 %v5084, %v5085
        %v5087 = vsel %vm2863, %v4911, 0.0
        %v5088 = vadd.f32 %v5086, %v5087
        %v5089 = vsel %vm2863, %v4912, 0.0
        %v5090 = vadd.f32 %v5088, %v5089
        %v5091 = vsel %vm2863, %v4913, 0.0
        %v5092 = vadd.f32 %v5090, %v5091
        %v5093 = vsel %vm2863, %v4914, 0.0
        %v5094 = vadd.f32 %v5092, %v5093
        %v5095 = vsel %vm2863, %v4915, 0.0
        %v5096 = vadd.f32 %v5094, %v5095
        %v5097 = vsel %vm2863, %v4916, 0.0
        %v5098 = vadd.f32 %v5096, %v5097
        %v5099 = vsel %vm2863, %v4917, 0.0
        %v5100 = vadd.f32 %v5098, %v5099
        %v5101 = vsel %vm2863, %v4918, 0.0
        %v5102 = vadd.f32 %v5100, %v5101
        %v5103 = vsel %vm2863, %v4919, 0.0
        %v5104 = vadd.f32 %v5102, %v5103
        %v5105 = vrot.slane %v5104, 4
        %v5106 = vadd.f32 %v5104, %v5105
        %v5107 = vrot.slane %v5106, 2
        %v5108 = vadd.f32 %v5106, %v5107
        %v5109 = vrot.slane %v5108, 1
        %v5110 = vadd.f32 %v5108, %v5109
        %v5111 = vsel %vm2863, %v4920, 0.0
        %v5112 = vsel %vm2863, %v4921, 0.0
        %v5113 = vadd.f32 %v5111, %v5112
        %v5114 = vsel %vm2863, %v4922, 0.0
        %v5115 = vadd.f32 %v5113, %v5114
        %v5116 = vsel %vm2863, %v4923, 0.0
        %v5117 = vadd.f32 %v5115, %v5116
        %v5118 = vsel %vm2863, %v4924, 0.0
        %v5119 = vadd.f32 %v5117, %v5118
        %v5120 = vsel %vm2863, %v4925, 0.0
        %v5121 = vadd.f32 %v5119, %v5120
        %v5122 = vsel %vm2863, %v4926, 0.0
        %v5123 = vadd.f32 %v5121, %v5122
        %v5124 = vsel %vm2863, %v4927, 0.0
        %v5125 = vadd.f32 %v5123, %v5124
        %v5126 = vsel %vm2863, %v4928, 0.0
        %v5127 = vadd.f32 %v5125, %v5126
        %v5128 = vsel %vm2863, %v4929, 0.0
        %v5129 = vadd.f32 %v5127, %v5128
        %v5130 = vsel %vm2863, %v4930, 0.0
        %v5131 = vadd.f32 %v5129, %v5130
        %v5132 = vsel %vm2863, %v4931, 0.0
        %v5133 = vadd.f32 %v5131, %v5132
        %v5134 = vsel %vm2863, %v4932, 0.0
        %v5135 = vadd.f32 %v5133, %v5134
        %v5136 = vsel %vm2863, %v4933, 0.0
        %v5137 = vadd.f32 %v5135, %v5136
        %v5138 = vsel %vm2863, %v4934, 0.0
        %v5139 = vadd.f32 %v5137, %v5138
        %v5140 = vsel %vm2863, %v4935, 0.0
        %v5141 = vadd.f32 %v5139, %v5140
        %v5142 = vrot.slane %v5141, 4
        %v5143 = vadd.f32 %v5141, %v5142
        %v5144 = vrot.slane %v5143, 2
        %v5145 = vadd.f32 %v5143, %v5144
        %v5146 = vrot.slane %v5145, 1
        %v5147 = vadd.f32 %v5145, %v5146
        %v5148 = vsel %vm2863, %v4936, 0.0
        %v5149 = vsel %vm2863, %v4937, 0.0
        %v5150 = vadd.f32 %v5148, %v5149
        %v5151 = vsel %vm2863, %v4938, 0.0
        %v5152 = vadd.f32 %v5150, %v5151
        %v5153 = vsel %vm2863, %v4939, 0.0
        %v5154 = vadd.f32 %v5152, %v5153
        %v5155 = vsel %vm2863, %v4940, 0.0
        %v5156 = vadd.f32 %v5154, %v5155
        %v5157 = vsel %vm2863, %v4941, 0.0
        %v5158 = vadd.f32 %v5156, %v5157
        %v5159 = vsel %vm2863, %v4942, 0.0
        %v5160 = vadd.f32 %v5158, %v5159
        %v5161 = vsel %vm2863, %v4943, 0.0
        %v5162 = vadd.f32 %v5160, %v5161
        %v5163 = vsel %vm2863, %v4944, 0.0
        %v5164 = vadd.f32 %v5162, %v5163
        %v5165 = vsel %vm2863, %v4945, 0.0
        %v5166 = vadd.f32 %v5164, %v5165
        %v5167 = vsel %vm2863, %v4946, 0.0
        %v5168 = vadd.f32 %v5166, %v5167
        %v5169 = vsel %vm2863, %v4947, 0.0
        %v5170 = vadd.f32 %v5168, %v5169
        %v5171 = vsel %vm2863, %v4948, 0.0
        %v5172 = vadd.f32 %v5170, %v5171
        %v5173 = vsel %vm2863, %v4949, 0.0
        %v5174 = vadd.f32 %v5172, %v5173
        %v5175 = vsel %vm2863, %v4950, 0.0
        %v5176 = vadd.f32 %v5174, %v5175
        %v5177 = vsel %vm2863, %v4951, 0.0
        %v5178 = vadd.f32 %v5176, %v5177
        %v5179 = vrot.slane %v5178, 4
        %v5180 = vadd.f32 %v5178, %v5179
        %v5181 = vrot.slane %v5180, 2
        %v5182 = vadd.f32 %v5180, %v5181
        %v5183 = vrot.slane %v5182, 1
        %v5184 = vadd.f32 %v5182, %v5183
        %v5185 = vsel %vm2863, %v4952, 0.0
        %v5186 = vsel %vm2863, %v4953, 0.0
        %v5187 = vadd.f32 %v5185, %v5186
        %v5188 = vsel %vm2863, %v4954, 0.0
        %v5189 = vadd.f32 %v5187, %v5188
        %v5190 = vsel %vm2863, %v4955, 0.0
        %v5191 = vadd.f32 %v5189, %v5190
        %v5192 = vsel %vm2863, %v4956, 0.0
        %v5193 = vadd.f32 %v5191, %v5192
        %v5194 = vsel %vm2863, %v4957, 0.0
        %v5195 = vadd.f32 %v5193, %v5194
        %v5196 = vsel %vm2863, %v4958, 0.0
        %v5197 = vadd.f32 %v5195, %v5196
        %v5198 = vsel %vm2863, %v4959, 0.0
        %v5199 = vadd.f32 %v5197, %v5198
        %v5200 = vsel %vm2863, %v4960, 0.0
        %v5201 = vadd.f32 %v5199, %v5200
        %v5202 = vsel %vm2863, %v4961, 0.0
        %v5203 = vadd.f32 %v5201, %v5202
        %v5204 = vsel %vm2863, %v4962, 0.0
        %v5205 = vadd.f32 %v5203, %v5204
        %v5206 = vsel %vm2863, %v4963, 0.0
        %v5207 = vadd.f32 %v5205, %v5206
        %v5208 = vsel %vm2863, %v4964, 0.0
        %v5209 = vadd.f32 %v5207, %v5208
        %v5210 = vsel %vm2863, %v4965, 0.0
        %v5211 = vadd.f32 %v5209, %v5210
        %v5212 = vsel %vm2863, %v4966, 0.0
        %v5213 = vadd.f32 %v5211, %v5212
        %v5214 = vsel %vm2863, %v4967, 0.0
        %v5215 = vadd.f32 %v5213, %v5214
        %v5216 = vrot.slane %v5215, 4
        %v5217 = vadd.f32 %v5215, %v5216
        %v5218 = vrot.slane %v5217, 2
        %v5219 = vadd.f32 %v5217, %v5218
        %v5220 = vrot.slane %v5219, 1
        %v5221 = vadd.f32 %v5219, %v5220
        %v5222 = vsel %vm2863, %v4968, 0.0
        %v5223 = vsel %vm2863, %v4969, 0.0
        %v5224 = vadd.f32 %v5222, %v5223
        %v5225 = vsel %vm2863, %v4970, 0.0
        %v5226 = vadd.f32 %v5224, %v5225
        %v5227 = vsel %vm2863, %v4971, 0.0
        %v5228 = vadd.f32 %v5226, %v5227
        %v5229 = vsel %vm2863, %v4972, 0.0
        %v5230 = vadd.f32 %v5228, %v5229
        %v5231 = vsel %vm2863, %v4973, 0.0
        %v5232 = vadd.f32 %v5230, %v5231
        %v5233 = vsel %vm2863, %v4974, 0.0
        %v5234 = vadd.f32 %v5232, %v5233
        %v5235 = vsel %vm2863, %v4975, 0.0
        %v5236 = vadd.f32 %v5234, %v5235
        %v5237 = vsel %vm2863, %v4976, 0.0
        %v5238 = vadd.f32 %v5236, %v5237
        %v5239 = vsel %vm2863, %v4977, 0.0
        %v5240 = vadd.f32 %v5238, %v5239
        %v5241 = vsel %vm2863, %v4978, 0.0
        %v5242 = vadd.f32 %v5240, %v5241
        %v5243 = vsel %vm2863, %v4979, 0.0
        %v5244 = vadd.f32 %v5242, %v5243
        %v5245 = vsel %vm2863, %v4980, 0.0
        %v5246 = vadd.f32 %v5244, %v5245
        %v5247 = vsel %vm2863, %v4981, 0.0
        %v5248 = vadd.f32 %v5246, %v5247
        %v5249 = vsel %vm2863, %v4982, 0.0
        %v5250 = vadd.f32 %v5248, %v5249
        %v5251 = vsel %vm2863, %v4983, 0.0
        %v5252 = vadd.f32 %v5250, %v5251
        %v5253 = vrot.slane %v5252, 4
        %v5254 = vadd.f32 %v5252, %v5253
        %v5255 = vrot.slane %v5254, 2
        %v5256 = vadd.f32 %v5254, %v5255
        %v5257 = vrot.slane %v5256, 1
        %v5258 = vadd.f32 %v5256, %v5257
        %v5259 = vsel %vm2863, %v4984, 0.0
        %v5260 = vsel %vm2863, %v4985, 0.0
        %v5261 = vadd.f32 %v5259, %v5260
        %v5262 = vsel %vm2863, %v4986, 0.0
        %v5263 = vadd.f32 %v5261, %v5262
        %v5264 = vsel %vm2863, %v4987, 0.0
        %v5265 = vadd.f32 %v5263, %v5264
        %v5266 = vsel %vm2863, %v4988, 0.0
        %v5267 = vadd.f32 %v5265, %v5266
        %v5268 = vsel %vm2863, %v4989, 0.0
        %v5269 = vadd.f32 %v5267, %v5268
        %v5270 = vsel %vm2863, %v4990, 0.0
        %v5271 = vadd.f32 %v5269, %v5270
        %v5272 = vsel %vm2863, %v4991, 0.0
        %v5273 = vadd.f32 %v5271, %v5272
        %v5274 = vsel %vm2863, %v4992, 0.0
        %v5275 = vadd.f32 %v5273, %v5274
        %v5276 = vsel %vm2863, %v4993, 0.0
        %v5277 = vadd.f32 %v5275, %v5276
        %v5278 = vsel %vm2863, %v4994, 0.0
        %v5279 = vadd.f32 %v5277, %v5278
        %v5280 = vsel %vm2863, %v4995, 0.0
        %v5281 = vadd.f32 %v5279, %v5280
        %v5282 = vsel %vm2863, %v4996, 0.0
        %v5283 = vadd.f32 %v5281, %v5282
        %v5284 = vsel %vm2863, %v4997, 0.0
        %v5285 = vadd.f32 %v5283, %v5284
        %v5286 = vsel %vm2863, %v4998, 0.0
        %v5287 = vadd.f32 %v5285, %v5286
        %v5288 = vsel %vm2863, %v4999, 0.0
        %v5289 = vadd.f32 %v5287, %v5288
        %v5290 = vrot.slane %v5289, 4
        %v5291 = vadd.f32 %v5289, %v5290
        %v5292 = vrot.slane %v5291, 2
        %v5293 = vadd.f32 %v5291, %v5292
        %v5294 = vrot.slane %v5293, 1
        %v5295 = vadd.f32 %v5293, %v5294
        %v5296 = vld [vmem:[#allocation5] sm:$0xff]
        %5298 = vset.pattern.permute.xlu0 0
        %5299 = vperm.xlu0 %5298, %v4064
        %v5300 = vpop.permute.xlu0 %5299
        %v5302 = vmul.f32 %v5300, %v5296
        %v5311 = vsel %vm4042, %v5073, %v5036
        %v5312 = vsel %vm4044, %v5110, %v5311
        %v5313 = vsel %vm4046, %v5147, %v5312
        %v5314 = vsel %vm4048, %v5184, %v5313
        %v5315 = vsel %vm4050, %v5221, %v5314
        %v5316 = vsel %vm4052, %v5258, %v5315
        %v5317 = vsel %vm4054, %v5295, %v5316
        %v5319 = vadd.f32 %v5302, %v5317
        %5320 = vst.msk [vmem:[#allocation5] sm:$0xff] %vm2863, %v5319
        %5321 = vst.msk [vmem:[#allocation3] sm:$0xff] %vm4078, %v4061
        %s5322 = smul.u32 %s44, 128
        %s5323 = sshra.s32 %s5322, 7
        %s5324 = sand.u32 %s5322, 127
        %s5325 = smul.addr %s5323, 8
        %s5326 = scalar_lea.vmem [#allocation6], %s5325
        %5327 = vst [vmem:[%s5326] sm:$0xff] %v4057
        %p5328 = scmp.eq.s32.totalorder %s44, 1
        // Predicated region
        $region211: #{tpu_custom_call.1} parent=189 // pred_check
          %p5329 = pneg %p5328
        $region212: #{tpu_custom_call.1} parent=189 // pred_check_branch
          %5331 = sbr.rel (%p5329) target = $region214
        $region213: #{tpu_custom_call.1} parent=189 // pred_region
          %v5332 = vld [vmem:[%s0] sm:$0xff]
          %v5333 = vld [vmem:[#allocation9] sm:$0xff]
          %v5334 = vld [vmem:[%s5] sm:$0xff]
          %v5335 = vld [vmem:[#allocation12] sm:$0xff]
          %v5336 = vld [vmem:[#allocation4] sm:$0xff]
          %v5337 = vrcp.pop %v5336
          %v5338 = vmul.f32 1.0, %v5337
          %v5339 = vld [vmem:[#allocation6] sm:$0xff]
          %v5340 = vld [vmem:[#allocation6 + $0x8] sm:$0xff]
          %v5341 = vld [vmem:[#allocation3] sm:$0xff]
          %5343 = vset.pattern.permute.xlu0 0
          %5344 = vperm.xlu0 %5343, %v5341
          %v5345 = vpop.permute.xlu0 %5344
          %v5347 = vsub.f32 %v5339, %v5345
          %v5348 = vsub.f32 %v5340, %v5345
          %v5349 = vmul.f32 %v5347, 1.442695
          %v5350 = vpow.pop %v5349
          %v5351 = vmul.f32 %v5348, 1.442695
          %v5352 = vpow.pop %v5351
          %5354 = vset.pattern.permute.xlu0 0
          %5355 = vperm.xlu0 %5354, %v5338
          %v5356 = vpop.permute.xlu0 %5355
          %v5358 = vmul.f32 %v5350, %v5356
          %v5359 = vmul.f32 %v5352, %v5356
          %5360 = vst [vmem:[#allocation15] sm:$0xff] %v5358
          %5361 = vst [vmem:[#allocation15 + $0x8] sm:$0xff] %v5359
          %v5362 = vld [vmem:[#allocation5] sm:$0xff]
          %v5363 = vmul.f32 %v5362, %v5356
          %v5364 = vld [vmem:[%s9] sm:$0xff]
          %v5365 = vld [vmem:[%s9 + $0x8] sm:$0xff]
          %v5366 = vld [vmem:[%s9 + $0x10] sm:$0xff]
          %v5367 = vld [vmem:[%s9 + $0x18] sm:$0xff]
          %v5368 = vld [vmem:[%s9 + $0x20] sm:$0xff]
          %v5369 = vld [vmem:[%s9 + $0x28] sm:$0xff]
          %v5370 = vld [vmem:[%s9 + $0x30] sm:$0xff]
          %v5371 = vld [vmem:[%s9 + $0x38] sm:$0xff]
          %v5372 = vld [vmem:[%s9 + $0x40] sm:$0xff]
          %v5373 = vld [vmem:[%s9 + $0x48] sm:$0xff]
          %v5374 = vld [vmem:[%s9 + $0x50] sm:$0xff]
          %v5375 = vld [vmem:[%s9 + $0x58] sm:$0xff]
          %v5376 = vld [vmem:[%s9 + $0x60] sm:$0xff]
          %v5377 = vld [vmem:[%s9 + $0x68] sm:$0xff]
          %v5378 = vld [vmem:[%s9 + $0x70] sm:$0xff]
          %v5379 = vld [vmem:[%s9 + $0x78] sm:$0xff]
          %v5380 = vld [vmem:[%s10] sm:$0x3]
          %v5382 = vlaneseq
          %v5383 = vshrl.u32 %v5382, 7
          %v5384 = vsub.s32 0, %v5383
          %v5385 = vrot.slane %v5380, %v5384
          %v5386 = vlaneseq
          %v5387 = vshrl.u32 %v5386, 7
          %v5388 = vsub.s32 1, %v5387
          %v5389 = vrot.slane %v5380, %v5388
          %v5393 = vsel %vm2863, %v5332, 0
          %5395 = vmatprep.subr.mxu0 0.0
          %5396 = vmatpush1.msra.mxu0 0.0
          %5397 = vmatprep.subr.mxu0 0.0
          %5398 = vmatpush1.msra.mxu0 0.0
          %5399 = vmatprep.subr.mxu0 0.0
          %5400 = vmatpush1.msra.mxu0 0.0
          %5401 = vmatprep.subr.mxu0 0.0
          %5402 = vmatpush1.msra.mxu0 0.0
          %5403 = vmatprep.subr.mxu0 0.0
          %5404 = vmatpush1.msra.mxu0 0.0
          %5405 = vmatprep.subr.mxu0 0.0
          %5406 = vmatpush1.msra.mxu0 0.0
          %5407 = vmatprep.subr.mxu0 0.0
          %5408 = vmatpush1.msra.mxu0 0.0
          %5409 = vmatprep.subr.mxu0 0.0
          %5410 = vmatpush1.msra.mxu0 0.0
          %5411 = vmatprep.subr.mxu0 %v5379
          %5412 = vmatpush1.msra.mxu0 %v5378
          %5413 = vmatprep.subr.mxu0 %v5377
          %5414 = vmatpush1.msra.mxu0 %v5376
          %5415 = vmatprep.subr.mxu0 %v5375
          %5416 = vmatpush1.msra.mxu0 %v5374
          %5417 = vmatprep.subr.mxu0 %v5373
          %5418 = vmatpush1.msra.mxu0 %v5372
          %5419 = vmatprep.subr.mxu0 %v5371
          %5420 = vmatpush1.msra.mxu0 %v5370
          %5421 = vmatprep.subr.mxu0 %v5369
          %5422 = vmatpush1.msra.mxu0 %v5368
          %5423 = vmatprep.subr.mxu0 %v5367
          %5424 = vmatpush1.msra.mxu0 %v5366
          %5425 = vmatprep.subr.mxu0 %v5365
          %5426 = vmatpush1.msra.mxu0 %v5364
          %5427 = vmatprep.subr.mxu0 0.0
          %5428 = vmatpush2.msra.mxu0 0.0
          %5429 = vmatprep.subr.mxu0 0.0
          %5430 = vmatpush2.msra.mxu0 0.0
          %5431 = vmatprep.subr.mxu0 0.0
          %5432 = vmatpush2.msra.mxu0 0.0
          %5433 = vmatprep.subr.mxu0 0.0
          %5434 = vmatpush2.msra.mxu0 0.0
          %5435 = vmatprep.subr.mxu0 0.0
          %5436 = vmatpush2.msra.mxu0 0.0
          %5437 = vmatprep.subr.mxu0 0.0
          %5438 = vmatpush2.msra.mxu0 0.0
          %5439 = vmatprep.subr.mxu0 0.0
          %5440 = vmatpush2.msra.mxu0 0.0
          %5441 = vmatprep.subr.mxu0 0.0
          %5442 = vmatpush2.msra.mxu0 0.0
          %5443 = vmatprep.subr.mxu0 0.0
          %5444 = vmatpush2.msra.mxu0 0.0
          %5445 = vmatprep.subr.mxu0 0.0
          %5446 = vmatpush2.msra.mxu0 0.0
          %5447 = vmatprep.subr.mxu0 0.0
          %5448 = vmatpush2.msra.mxu0 0.0
          %5449 = vmatprep.subr.mxu0 0.0
          %5450 = vmatpush2.msra.mxu0 0.0
          %5451 = vmatprep.subr.mxu0 0.0
          %5452 = vmatpush2.msra.mxu0 0.0
          %5453 = vmatprep.subr.mxu0 0.0
          %5454 = vmatpush2.msra.mxu0 0.0
          %5455 = vmatprep.subr.mxu0 0.0
          %5456 = vmatpush2.msra.mxu0 0.0
          %5457 = vmatprep.subr.mxu0 0.0
          %5458 = vmatpush2.msra.mxu0 0.0
          %5459 = vmatprep.mubr.f32.mxu0 0.0
          %5460 = vmatmul.mubr.f32.gmra.mxu0 %v5393
          %v5461 = vpop.f32.mrf.mxu0
          %v5462 = vadd.f32 %v5385, %v5461
          %v5463 = vpop.f32.mrf.mxu0
          %v5464 = vadd.f32 %v5389, %v5463
          %5465 = vdwg.mxu0
          %v5466 = vld [vmem:[%s11] sm:$0xff]
          %v5467 = vld [vmem:[%s11 + $0x8] sm:$0xff]
          %v5468 = vld [vmem:[%s11 + $0x10] sm:$0xff]
          %v5469 = vld [vmem:[%s11 + $0x18] sm:$0xff]
          %v5470 = vld [vmem:[%s11 + $0x20] sm:$0xff]
          %v5471 = vld [vmem:[%s11 + $0x28] sm:$0xff]
          %v5472 = vld [vmem:[%s11 + $0x30] sm:$0xff]
          %v5473 = vld [vmem:[%s11 + $0x38] sm:$0xff]
          %v5474 = vld [vmem:[%s11 + $0x40] sm:$0xff]
          %v5475 = vld [vmem:[%s11 + $0x48] sm:$0xff]
          %v5476 = vld [vmem:[%s11 + $0x50] sm:$0xff]
          %v5477 = vld [vmem:[%s11 + $0x58] sm:$0xff]
          %v5478 = vld [vmem:[%s11 + $0x60] sm:$0xff]
          %v5479 = vld [vmem:[%s11 + $0x68] sm:$0xff]
          %v5480 = vld [vmem:[%s11 + $0x70] sm:$0xff]
          %v5481 = vld [vmem:[%s11 + $0x78] sm:$0xff]
          %v5482 = vld [vmem:[%s12] sm:$0x3]
          %v5484 = vlaneseq
          %v5485 = vshrl.u32 %v5484, 7
          %v5486 = vsub.s32 0, %v5485
          %v5487 = vrot.slane %v5482, %v5486
          %v5488 = vlaneseq
          %v5489 = vshrl.u32 %v5488, 7
          %v5490 = vsub.s32 1, %v5489
          %v5491 = vrot.slane %v5482, %v5490
          %v5495 = vsel %vm2863, %v5333, 0
          %5497 = vmatprep.subr.mxu0 0.0
          %5498 = vmatpush1.msra.mxu0 0.0
          %5499 = vmatprep.subr.mxu0 0.0
          %5500 = vmatpush1.msra.mxu0 0.0
          %5501 = vmatprep.subr.mxu0 0.0
          %5502 = vmatpush1.msra.mxu0 0.0
          %5503 = vmatprep.subr.mxu0 0.0
          %5504 = vmatpush1.msra.mxu0 0.0
          %5505 = vmatprep.subr.mxu0 0.0
          %5506 = vmatpush1.msra.mxu0 0.0
          %5507 = vmatprep.subr.mxu0 0.0
          %5508 = vmatpush1.msra.mxu0 0.0
          %5509 = vmatprep.subr.mxu0 0.0
          %5510 = vmatpush1.msra.mxu0 0.0
          %5511 = vmatprep.subr.mxu0 0.0
          %5512 = vmatpush1.msra.mxu0 0.0
          %5513 = vmatprep.subr.mxu0 %v5481
          %5514 = vmatpush1.msra.mxu0 %v5480
          %5515 = vmatprep.subr.mxu0 %v5479
          %5516 = vmatpush1.msra.mxu0 %v5478
          %5517 = vmatprep.subr.mxu0 %v5477
          %5518 = vmatpush1.msra.mxu0 %v5476
          %5519 = vmatprep.subr.mxu0 %v5475
          %5520 = vmatpush1.msra.mxu0 %v5474
          %5521 = vmatprep.subr.mxu0 %v5473
          %5522 = vmatpush1.msra.mxu0 %v5472
          %5523 = vmatprep.subr.mxu0 %v5471
          %5524 = vmatpush1.msra.mxu0 %v5470
          %5525 = vmatprep.subr.mxu0 %v5469
          %5526 = vmatpush1.msra.mxu0 %v5468
          %5527 = vmatprep.subr.mxu0 %v5467
          %5528 = vmatpush1.msra.mxu0 %v5466
          %5529 = vmatprep.subr.mxu0 0.0
          %5530 = vmatpush2.msra.mxu0 0.0
          %5531 = vmatprep.subr.mxu0 0.0
          %5532 = vmatpush2.msra.mxu0 0.0
          %5533 = vmatprep.subr.mxu0 0.0
          %5534 = vmatpush2.msra.mxu0 0.0
          %5535 = vmatprep.subr.mxu0 0.0
          %5536 = vmatpush2.msra.mxu0 0.0
          %5537 = vmatprep.subr.mxu0 0.0
          %5538 = vmatpush2.msra.mxu0 0.0
          %5539 = vmatprep.subr.mxu0 0.0
          %5540 = vmatpush2.msra.mxu0 0.0
          %5541 = vmatprep.subr.mxu0 0.0
          %5542 = vmatpush2.msra.mxu0 0.0
          %5543 = vmatprep.subr.mxu0 0.0
          %5544 = vmatpush2.msra.mxu0 0.0
          %5545 = vmatprep.subr.mxu0 0.0
          %5546 = vmatpush2.msra.mxu0 0.0
          %5547 = vmatprep.subr.mxu0 0.0
          %5548 = vmatpush2.msra.mxu0 0.0
          %5549 = vmatprep.subr.mxu0 0.0
          %5550 = vmatpush2.msra.mxu0 0.0
          %5551 = vmatprep.subr.mxu0 0.0
          %5552 = vmatpush2.msra.mxu0 0.0
          %5553 = vmatprep.subr.mxu0 0.0
          %5554 = vmatpush2.msra.mxu0 0.0
          %5555 = vmatprep.subr.mxu0 0.0
          %5556 = vmatpush2.msra.mxu0 0.0
          %5557 = vmatprep.subr.mxu0 0.0
          %5558 = vmatpush2.msra.mxu0 0.0
          %5559 = vmatprep.subr.mxu0 0.0
          %5560 = vmatpush2.msra.mxu0 0.0
          %5561 = vmatprep.mubr.f32.mxu0 0.0
          %5562 = vmatmul.mubr.f32.gmra.mxu0 %v5495
          %v5563 = vpop.f32.mrf.mxu0
          %v5564 = vadd.f32 %v5487, %v5563
          %v5565 = vpop.f32.mrf.mxu0
          %v5566 = vadd.f32 %v5491, %v5565
          %5567 = vdwg.mxu0
          %v5568 = vadd.f32 %v5462, %v5564
          %v5569 = vxor.u32 %v5568, 2147483648
          %v5570 = vmul.f32 %v5569, 1.442695
          %v5571 = vpow.pop %v5570
          %v5572 = vadd.f32 %v5571, 1.0
          %v5573 = vrcp.pop %v5572
          %v5574 = vmul.f32 1.0, %v5573
          %v5575 = vmul.f32 %v5574, %v5566
          %v5576 = vadd.f32 %v5464, %v5575
          %v5577 = vtanh.pop %v5576
          %v5578 = vsub.f32 1.0, %v5574
          %5580 = vrot.lane.b32.xlu0 %v5577, 64
          %v5581 = vpop.permute.xlu0 %5580
          %v5583 = vmul.f32 %v5578, %v5581
          %5584 = vrot.lane.b32.xlu0 %v5333, 64
          %v5585 = vpop.permute.xlu0 %5584
          %v5587 = vmul.f32 %v5574, %v5585
          %v5588 = vadd.f32 %v5583, %v5587
          %5590 = vset.pattern.permute.xlu0 0
          %5591 = vperm.xlu0 %5590, %v5334
          %v5592 = vpop.permute.xlu0 %5591
          %v5594 = vmul.f32 %v5592, %v5588
          %v5595 = vsub.f32 1.0, %v5334
          %5597 = vset.pattern.permute.xlu0 0
          %5598 = vperm.xlu0 %5597, %v5595
          %v5599 = vpop.permute.xlu0 %5598
          %v5601 = vmul.f32 %v5599, %v5333
          %5603 = vrot.lane.b32.xlu0 %v5601, 64
          %v5604 = vpop.permute.xlu0 %5603
          %v5606 = vadd.f32 %v5594, %v5604
          %v5607 = vmul.f32 %v5592, %v5363
          %v5608 = vmul.f32 %v5599, %v5335
          %v5609 = vadd.f32 %v5607, %v5608
          %5611 = vrot.lane.b32.xlu0 %v5606, 64
          %v5612 = vpop.permute.xlu0 %5611
          %5614 = vst.msk [vmem:[#allocation18] sm:$0xff] %vm2863, %v5612
          %5615 = vst.msk [vmem:[#allocation17] sm:$0xff] %vm2863, %v5609
          %v5616 = vpack.c.bf16 %v5606, %v5606
          %v5617 = vpack.c.bf16 %v5609, %v5609
          %v5618 = vpack.c.bf16 %v5332, %v5332
          %v5619 = vld [vmem:[%s13] sm:$0xf]
          %v5620 = vld [vmem:[%s13 + $0x4] sm:$0xf]
          %v5621 = vld [vmem:[%s13 + $0x8] sm:$0xf]
          %v5622 = vld [vmem:[%s13 + $0xc] sm:$0xf]
          %v5623 = vld [vmem:[%s13 + $0x10] sm:$0xf]
          %v5624 = vld [vmem:[%s13 + $0x14] sm:$0xf]
          %v5625 = vld [vmem:[%s13 + $0x18] sm:$0xf]
          %v5626 = vld [vmem:[%s13 + $0x1c] sm:$0xf]
          %v5627 = vld [vmem:[%s14] sm:$0xf]
          %v5628 = vld [vmem:[%s14 + $0x4] sm:$0xf]
          %v5629 = vld [vmem:[%s14 + $0x8] sm:$0xf]
          %v5630 = vld [vmem:[%s14 + $0xc] sm:$0xf]
          %v5631 = vld [vmem:[%s14 + $0x10] sm:$0xf]
          %v5632 = vld [vmem:[%s14 + $0x14] sm:$0xf]
          %v5633 = vld [vmem:[%s14 + $0x18] sm:$0xf]
          %v5634 = vld [vmem:[%s14 + $0x1c] sm:$0xf]
          %v5643 = vunpack.c.l.b16 %v5627
          %v5644 = vunpack.c.l.b16 %v5628
          %v5645 = vunpack.c.l.b16 %v5629
          %v5646 = vunpack.c.l.b16 %v5630
          %v5647 = vunpack.c.l.b16 %v5631
          %v5648 = vunpack.c.l.b16 %v5632
          %v5649 = vunpack.c.l.b16 %v5633
          %v5650 = vunpack.c.l.b16 %v5634
          %v5651 = vpack.c.b16 %v5644, %v5643
          %v5652 = vpack.c.b16 %v5646, %v5645
          %v5653 = vpack.c.b16 %v5648, %v5647
          %v5654 = vpack.c.b16 %v5650, %v5649
          %v5660 = vsel %vm2863, %v5617, 0
          %5662 = vmatprep.subr.bf16.mxu0 0
          %5663 = vmatpush1.bf16.msra.mxu0 0
          %5664 = vmatprep.subr.bf16.mxu0 0
          %5665 = vmatpush1.bf16.msra.mxu0 0
          %5666 = vmatprep.subr.bf16.mxu0 0
          %5667 = vmatpush1.bf16.msra.mxu0 0
          %5668 = vmatprep.subr.bf16.mxu0 0
          %5669 = vmatpush1.bf16.msra.mxu0 0
          %5670 = vmatprep.subr.bf16.mxu0 0
          %5671 = vmatpush1.bf16.msra.mxu0 %v5654
          %5672 = vmatprep.subr.bf16.mxu0 0
          %5673 = vmatpush1.bf16.msra.mxu0 %v5653
          %5674 = vmatprep.subr.bf16.mxu0 0
          %5675 = vmatpush1.bf16.msra.mxu0 %v5652
          %5676 = vmatprep.subr.bf16.mxu0 0
          %5677 = vmatpush1.bf16.msra.mxu0 %v5651
          %5678 = vmatprep.subr.bf16.mxu0 0
          %5679 = vmatpush2.bf16.msra.mxu0 0
          %5680 = vmatprep.subr.bf16.mxu0 0
          %5681 = vmatpush2.bf16.msra.mxu0 0
          %5682 = vmatprep.subr.bf16.mxu0 0
          %5683 = vmatpush2.bf16.msra.mxu0 0
          %5684 = vmatprep.subr.bf16.mxu0 0
          %5685 = vmatpush2.bf16.msra.mxu0 0
          %5686 = vmatprep.subr.bf16.mxu0 0
          %5687 = vmatpush2.bf16.msra.mxu0 0
          %5688 = vmatprep.subr.bf16.mxu0 0
          %5689 = vmatpush2.bf16.msra.mxu0 0
          %5690 = vmatprep.subr.bf16.mxu0 0
          %5691 = vmatpush2.bf16.msra.mxu0 0
          %5692 = vmatprep.subr.bf16.mxu0 0
          %5693 = vmatpush2.bf16.msra.mxu0 0
          %5694 = vmatprep.mubr.bf16.mxu0 0
          %5695 = vmatmul.mubr.bf16.gmra.mxu0 %v5660
          %v5696 = vpop.f32.mrf.mxu0
          %v5697 = vadd.f32 0.0, %v5696
          %v5698 = vpop.f32.mrf.mxu0
          %v5699 = vpop.f32.mrf.mxu0
          %v5700 = vpop.f32.mrf.mxu0
          %5701 = vdwg.mxu0
          %5703 = vrot.lane.b32.xlu0 %v5616, 64
          %v5704 = vpop.permute.xlu0 %5703
          %v5713 = vunpack.c.l.b16 %v5619
          %v5714 = vunpack.c.l.b16 %v5620
          %v5715 = vunpack.c.l.b16 %v5621
          %v5716 = vunpack.c.l.b16 %v5622
          %v5717 = vunpack.c.l.b16 %v5623
          %v5718 = vunpack.c.l.b16 %v5624
          %v5719 = vunpack.c.l.b16 %v5625
          %v5720 = vunpack.c.l.b16 %v5626
          %v5721 = vpack.c.b16 %v5714, %v5713
          %v5722 = vpack.c.b16 %v5716, %v5715
          %v5723 = vpack.c.b16 %v5718, %v5717
          %v5724 = vpack.c.b16 %v5720, %v5719
          %v5730 = vsel %vm2863, %v5704, 0
          %5732 = vmatprep.subr.bf16.mxu0 0
          %5733 = vmatpush1.bf16.msra.mxu0 0
          %5734 = vmatprep.subr.bf16.mxu0 0
          %5735 = vmatpush1.bf16.msra.mxu0 0
          %5736 = vmatprep.subr.bf16.mxu0 0
          %5737 = vmatpush1.bf16.msra.mxu0 0
          %5738 = vmatprep.subr.bf16.mxu0 0
          %5739 = vmatpush1.bf16.msra.mxu0 0
          %5740 = vmatprep.subr.bf16.mxu0 0
          %5741 = vmatpush1.bf16.msra.mxu0 %v5724
          %5742 = vmatprep.subr.bf16.mxu0 0
          %5743 = vmatpush1.bf16.msra.mxu0 %v5723
          %5744 = vmatprep.subr.bf16.mxu0 0
          %5745 = vmatpush1.bf16.msra.mxu0 %v5722
          %5746 = vmatprep.subr.bf16.mxu0 0
          %5747 = vmatpush1.bf16.msra.mxu0 %v5721
          %5748 = vmatprep.subr.bf16.mxu0 0
          %5749 = vmatpush2.bf16.msra.mxu0 0
          %5750 = vmatprep.subr.bf16.mxu0 0
          %5751 = vmatpush2.bf16.msra.mxu0 0
          %5752 = vmatprep.subr.bf16.mxu0 0
          %5753 = vmatpush2.bf16.msra.mxu0 0
          %5754 = vmatprep.subr.bf16.mxu0 0
          %5755 = vmatpush2.bf16.msra.mxu0 0
          %5756 = vmatprep.subr.bf16.mxu0 0
          %5757 = vmatpush2.bf16.msra.mxu0 0
          %5758 = vmatprep.subr.bf16.mxu0 0
          %5759 = vmatpush2.bf16.msra.mxu0 0
          %5760 = vmatprep.subr.bf16.mxu0 0
          %5761 = vmatpush2.bf16.msra.mxu0 0
          %5762 = vmatprep.subr.bf16.mxu0 0
          %5763 = vmatpush2.bf16.msra.mxu0 0
          %5764 = vmatprep.mubr.bf16.mxu0 0
          %5765 = vmatmul.mubr.bf16.gmra.mxu0 %v5730
          %v5766 = vpop.f32.mrf.mxu0
          %v5767 = vadd.f32 %v5697, %v5766
          %v5768 = vpop.f32.mrf.mxu0
          %v5769 = vpop.f32.mrf.mxu0
          %v5770 = vpop.f32.mrf.mxu0
          %5771 = vdwg.mxu0
          %v5772 = vld [vmem:[%s15] sm:$0xf]
          %v5773 = vld [vmem:[%s15 + $0x4] sm:$0xf]
          %v5774 = vld [vmem:[%s15 + $0x8] sm:$0xf]
          %v5775 = vld [vmem:[%s15 + $0xc] sm:$0xf]
          %v5776 = vld [vmem:[%s15 + $0x10] sm:$0xf]
          %v5777 = vld [vmem:[%s15 + $0x14] sm:$0xf]
          %v5778 = vld [vmem:[%s15 + $0x18] sm:$0xf]
          %v5779 = vld [vmem:[%s15 + $0x1c] sm:$0xf]
          %v5788 = vunpack.c.l.b16 %v5772
          %v5789 = vunpack.c.l.b16 %v5773
          %v5790 = vunpack.c.l.b16 %v5774
          %v5791 = vunpack.c.l.b16 %v5775
          %v5792 = vunpack.c.l.b16 %v5776
          %v5793 = vunpack.c.l.b16 %v5777
          %v5794 = vunpack.c.l.b16 %v5778
          %v5795 = vunpack.c.l.b16 %v5779
          %v5796 = vpack.c.b16 %v5789, %v5788
          %v5797 = vpack.c.b16 %v5791, %v5790
          %v5798 = vpack.c.b16 %v5793, %v5792
          %v5799 = vpack.c.b16 %v5795, %v5794
          %v5805 = vsel %vm2863, %v5618, 0
          %5807 = vmatprep.subr.bf16.mxu0 0
          %5808 = vmatpush1.bf16.msra.mxu0 0
          %5809 = vmatprep.subr.bf16.mxu0 0
          %5810 = vmatpush1.bf16.msra.mxu0 0
          %5811 = vmatprep.subr.bf16.mxu0 0
          %5812 = vmatpush1.bf16.msra.mxu0 0
          %5813 = vmatprep.subr.bf16.mxu0 0
          %5814 = vmatpush1.bf16.msra.mxu0 0
          %5815 = vmatprep.subr.bf16.mxu0 0
          %5816 = vmatpush1.bf16.msra.mxu0 %v5799
          %5817 = vmatprep.subr.bf16.mxu0 0
          %5818 = vmatpush1.bf16.msra.mxu0 %v5798
          %5819 = vmatprep.subr.bf16.mxu0 0
          %5820 = vmatpush1.bf16.msra.mxu0 %v5797
          %5821 = vmatprep.subr.bf16.mxu0 0
          %5822 = vmatpush1.bf16.msra.mxu0 %v5796
          %5823 = vmatprep.subr.bf16.mxu0 0
          %5824 = vmatpush2.bf16.msra.mxu0 0
          %5825 = vmatprep.subr.bf16.mxu0 0
          %5826 = vmatpush2.bf16.msra.mxu0 0
          %5827 = vmatprep.subr.bf16.mxu0 0
          %5828 = vmatpush2.bf16.msra.mxu0 0
          %5829 = vmatprep.subr.bf16.mxu0 0
          %5830 = vmatpush2.bf16.msra.mxu0 0
          %5831 = vmatprep.subr.bf16.mxu0 0
          %5832 = vmatpush2.bf16.msra.mxu0 0
          %5833 = vmatprep.subr.bf16.mxu0 0
          %5834 = vmatpush2.bf16.msra.mxu0 0
          %5835 = vmatprep.subr.bf16.mxu0 0
          %5836 = vmatpush2.bf16.msra.mxu0 0
          %5837 = vmatprep.subr.bf16.mxu0 0
          %5838 = vmatpush2.bf16.msra.mxu0 0
          %5839 = vmatprep.mubr.bf16.mxu0 0
          %5840 = vmatmul.mubr.bf16.gmra.mxu0 %v5805
          %v5841 = vpop.f32.mrf.mxu0
          %v5842 = vadd.f32 0.0, %v5841
          %v5843 = vpop.f32.mrf.mxu0
          %v5844 = vpop.f32.mrf.mxu0
          %v5845 = vpop.f32.mrf.mxu0
          %5846 = vdwg.mxu0
          %v5847 = vadd.f32 %v5767, %v5842
          %v5848 = vld [vmem:[%s16] sm:$0xf]
          %v5849 = vld [vmem:[%s16 + $0x4] sm:$0xf]
          %v5850 = vld [vmem:[%s16 + $0x8] sm:$0xf]
          %v5851 = vld [vmem:[%s16 + $0xc] sm:$0xf]
          %v5852 = vld [vmem:[%s16 + $0x10] sm:$0xf]
          %v5853 = vld [vmem:[%s16 + $0x14] sm:$0xf]
          %v5854 = vld [vmem:[%s16 + $0x18] sm:$0xf]
          %v5855 = vld [vmem:[%s16 + $0x1c] sm:$0xf]
          %v5856 = vld [vmem:[%s17] sm:$0xf]
          %v5857 = vld [vmem:[%s17 + $0x4] sm:$0xf]
          %v5858 = vld [vmem:[%s17 + $0x8] sm:$0xf]
          %v5859 = vld [vmem:[%s17 + $0xc] sm:$0xf]
          %v5860 = vld [vmem:[%s17 + $0x10] sm:$0xf]
          %v5861 = vld [vmem:[%s17 + $0x14] sm:$0xf]
          %v5862 = vld [vmem:[%s17 + $0x18] sm:$0xf]
          %v5863 = vld [vmem:[%s17 + $0x1c] sm:$0xf]
          %v5872 = vunpack.c.l.b16 %v5856
          %v5873 = vunpack.c.l.b16 %v5857
          %v5874 = vunpack.c.l.b16 %v5858
          %v5875 = vunpack.c.l.b16 %v5859
          %v5876 = vunpack.c.l.b16 %v5860
          %v5877 = vunpack.c.l.b16 %v5861
          %v5878 = vunpack.c.l.b16 %v5862
          %v5879 = vunpack.c.l.b16 %v5863
          %v5880 = vpack.c.b16 %v5873, %v5872
          %v5881 = vpack.c.b16 %v5875, %v5874
          %v5882 = vpack.c.b16 %v5877, %v5876
          %v5883 = vpack.c.b16 %v5879, %v5878
          %5888 = vmatprep.subr.bf16.mxu0 0
          %5889 = vmatpush1.bf16.msra.mxu0 0
          %5890 = vmatprep.subr.bf16.mxu0 0
          %5891 = vmatpush1.bf16.msra.mxu0 0
          %5892 = vmatprep.subr.bf16.mxu0 0
          %5893 = vmatpush1.bf16.msra.mxu0 0
          %5894 = vmatprep.subr.bf16.mxu0 0
          %5895 = vmatpush1.bf16.msra.mxu0 0
          %5896 = vmatprep.subr.bf16.mxu0 0
          %5897 = vmatpush1.bf16.msra.mxu0 %v5883
          %5898 = vmatprep.subr.bf16.mxu0 0
          %5899 = vmatpush1.bf16.msra.mxu0 %v5882
          %5900 = vmatprep.subr.bf16.mxu0 0
          %5901 = vmatpush1.bf16.msra.mxu0 %v5881
          %5902 = vmatprep.subr.bf16.mxu0 0
          %5903 = vmatpush1.bf16.msra.mxu0 %v5880
          %5904 = vmatprep.subr.bf16.mxu0 0
          %5905 = vmatpush2.bf16.msra.mxu0 0
          %5906 = vmatprep.subr.bf16.mxu0 0
          %5907 = vmatpush2.bf16.msra.mxu0 0
          %5908 = vmatprep.subr.bf16.mxu0 0
          %5909 = vmatpush2.bf16.msra.mxu0 0
          %5910 = vmatprep.subr.bf16.mxu0 0
          %5911 = vmatpush2.bf16.msra.mxu0 0
          %5912 = vmatprep.subr.bf16.mxu0 0
          %5913 = vmatpush2.bf16.msra.mxu0 0
          %5914 = vmatprep.subr.bf16.mxu0 0
          %5915 = vmatpush2.bf16.msra.mxu0 0
          %5916 = vmatprep.subr.bf16.mxu0 0
          %5917 = vmatpush2.bf16.msra.mxu0 0
          %5918 = vmatprep.subr.bf16.mxu0 0
          %5919 = vmatpush2.bf16.msra.mxu0 0
          %5920 = vmatprep.mubr.bf16.mxu0 0
          %5921 = vmatmul.mubr.bf16.gmra.mxu0 %v5660
          %v5922 = vpop.f32.mrf.mxu0
          %v5923 = vadd.f32 0.0, %v5922
          %v5924 = vpop.f32.mrf.mxu0
          %v5925 = vpop.f32.mrf.mxu0
          %v5926 = vpop.f32.mrf.mxu0
          %5927 = vdwg.mxu0
          %v5936 = vunpack.c.l.b16 %v5848
          %v5937 = vunpack.c.l.b16 %v5849
          %v5938 = vunpack.c.l.b16 %v5850
          %v5939 = vunpack.c.l.b16 %v5851
          %v5940 = vunpack.c.l.b16 %v5852
          %v5941 = vunpack.c.l.b16 %v5853
          %v5942 = vunpack.c.l.b16 %v5854
          %v5943 = vunpack.c.l.b16 %v5855
          %v5944 = vpack.c.b16 %v5937, %v5936
          %v5945 = vpack.c.b16 %v5939, %v5938
          %v5946 = vpack.c.b16 %v5941, %v5940
          %v5947 = vpack.c.b16 %v5943, %v5942
          %5952 = vmatprep.subr.bf16.mxu0 0
          %5953 = vmatpush1.bf16.msra.mxu0 0
          %5954 = vmatprep.subr.bf16.mxu0 0
          %5955 = vmatpush1.bf16.msra.mxu0 0
          %5956 = vmatprep.subr.bf16.mxu0 0
          %5957 = vmatpush1.bf16.msra.mxu0 0
          %5958 = vmatprep.subr.bf16.mxu0 0
          %5959 = vmatpush1.bf16.msra.mxu0 0
          %5960 = vmatprep.subr.bf16.mxu0 0
          %5961 = vmatpush1.bf16.msra.mxu0 %v5947
          %5962 = vmatprep.subr.bf16.mxu0 0
          %5963 = vmatpush1.bf16.msra.mxu0 %v5946
          %5964 = vmatprep.subr.bf16.mxu0 0
          %5965 = vmatpush1.bf16.msra.mxu0 %v5945
          %5966 = vmatprep.subr.bf16.mxu0 0
          %5967 = vmatpush1.bf16.msra.mxu0 %v5944
          %5968 = vmatprep.subr.bf16.mxu0 0
          %5969 = vmatpush2.bf16.msra.mxu0 0
          %5970 = vmatprep.subr.bf16.mxu0 0
          %5971 = vmatpush2.bf16.msra.mxu0 0
          %5972 = vmatprep.subr.bf16.mxu0 0
          %5973 = vmatpush2.bf16.msra.mxu0 0
          %5974 = vmatprep.subr.bf16.mxu0 0
          %5975 = vmatpush2.bf16.msra.mxu0 0
          %5976 = vmatprep.subr.bf16.mxu0 0
          %5977 = vmatpush2.bf16.msra.mxu0 0
          %5978 = vmatprep.subr.bf16.mxu0 0
          %5979 = vmatpush2.bf16.msra.mxu0 0
          %5980 = vmatprep.subr.bf16.mxu0 0
          %5981 = vmatpush2.bf16.msra.mxu0 0
          %5982 = vmatprep.subr.bf16.mxu0 0
          %5983 = vmatpush2.bf16.msra.mxu0 0
          %5984 = vmatprep.mubr.bf16.mxu0 0
          %5985 = vmatmul.mubr.bf16.gmra.mxu0 %v5730
          %v5986 = vpop.f32.mrf.mxu0
          %v5987 = vadd.f32 %v5923, %v5986
          %v5988 = vpop.f32.mrf.mxu0
          %v5989 = vpop.f32.mrf.mxu0
          %v5990 = vpop.f32.mrf.mxu0
          %5991 = vdwg.mxu0
          %v5992 = vld [vmem:[%s18] sm:$0xf]
          %v5993 = vld [vmem:[%s18 + $0x4] sm:$0xf]
          %v5994 = vld [vmem:[%s18 + $0x8] sm:$0xf]
          %v5995 = vld [vmem:[%s18 + $0xc] sm:$0xf]
          %v5996 = vld [vmem:[%s18 + $0x10] sm:$0xf]
          %v5997 = vld [vmem:[%s18 + $0x14] sm:$0xf]
          %v5998 = vld [vmem:[%s18 + $0x18] sm:$0xf]
          %v5999 = vld [vmem:[%s18 + $0x1c] sm:$0xf]
          %v6008 = vunpack.c.l.b16 %v5992
          %v6009 = vunpack.c.l.b16 %v5993
          %v6010 = vunpack.c.l.b16 %v5994
          %v6011 = vunpack.c.l.b16 %v5995
          %v6012 = vunpack.c.l.b16 %v5996
          %v6013 = vunpack.c.l.b16 %v5997
          %v6014 = vunpack.c.l.b16 %v5998
          %v6015 = vunpack.c.l.b16 %v5999
          %v6016 = vpack.c.b16 %v6009, %v6008
          %v6017 = vpack.c.b16 %v6011, %v6010
          %v6018 = vpack.c.b16 %v6013, %v6012
          %v6019 = vpack.c.b16 %v6015, %v6014
          %6024 = vmatprep.subr.bf16.mxu0 0
          %6025 = vmatpush1.bf16.msra.mxu0 0
          %6026 = vmatprep.subr.bf16.mxu0 0
          %6027 = vmatpush1.bf16.msra.mxu0 0
          %6028 = vmatprep.subr.bf16.mxu0 0
          %6029 = vmatpush1.bf16.msra.mxu0 0
          %6030 = vmatprep.subr.bf16.mxu0 0
          %6031 = vmatpush1.bf16.msra.mxu0 0
          %6032 = vmatprep.subr.bf16.mxu0 0
          %6033 = vmatpush1.bf16.msra.mxu0 %v6019
          %6034 = vmatprep.subr.bf16.mxu0 0
          %6035 = vmatpush1.bf16.msra.mxu0 %v6018
          %6036 = vmatprep.subr.bf16.mxu0 0
          %6037 = vmatpush1.bf16.msra.mxu0 %v6017
          %6038 = vmatprep.subr.bf16.mxu0 0
          %6039 = vmatpush1.bf16.msra.mxu0 %v6016
          %6040 = vmatprep.subr.bf16.mxu0 0
          %6041 = vmatpush2.bf16.msra.mxu0 0
          %6042 = vmatprep.subr.bf16.mxu0 0
          %6043 = vmatpush2.bf16.msra.mxu0 0
          %6044 = vmatprep.subr.bf16.mxu0 0
          %6045 = vmatpush2.bf16.msra.mxu0 0
          %6046 = vmatprep.subr.bf16.mxu0 0
          %6047 = vmatpush2.bf16.msra.mxu0 0
          %6048 = vmatprep.subr.bf16.mxu0 0
          %6049 = vmatpush2.bf16.msra.mxu0 0
          %6050 = vmatprep.subr.bf16.mxu0 0
          %6051 = vmatpush2.bf16.msra.mxu0 0
          %6052 = vmatprep.subr.bf16.mxu0 0
          %6053 = vmatpush2.bf16.msra.mxu0 0
          %6054 = vmatprep.subr.bf16.mxu0 0
          %6055 = vmatpush2.bf16.msra.mxu0 0
          %6056 = vmatprep.mubr.bf16.mxu0 0
          %6057 = vmatmul.mubr.bf16.gmra.mxu0 %v5805
          %v6058 = vpop.f32.mrf.mxu0
          %v6059 = vadd.f32 0.0, %v6058
          %v6060 = vpop.f32.mrf.mxu0
          %v6061 = vpop.f32.mrf.mxu0
          %v6062 = vpop.f32.mrf.mxu0
          %6063 = vdwg.mxu0
          %v6064 = vadd.f32 %v5987, %v6059
          %v6065 = vld [vmem:[%s20] sm:$0xf]
          %v6066 = vld [vmem:[%s20 + $0x4] sm:$0xf]
          %v6067 = vld [vmem:[%s20 + $0x8] sm:$0xf]
          %v6068 = vld [vmem:[%s20 + $0xc] sm:$0xf]
          %v6069 = vld [vmem:[%s20 + $0x10] sm:$0xf]
          %v6070 = vld [vmem:[%s20 + $0x14] sm:$0xf]
          %v6071 = vld [vmem:[%s20 + $0x18] sm:$0xf]
          %v6072 = vld [vmem:[%s20 + $0x1c] sm:$0xf]
          %v6073 = vld [vmem:[%s21] sm:$0xf]
          %v6074 = vld [vmem:[%s21 + $0x4] sm:$0xf]
          %v6075 = vld [vmem:[%s21 + $0x8] sm:$0xf]
          %v6076 = vld [vmem:[%s21 + $0xc] sm:$0xf]
          %v6077 = vld [vmem:[%s21 + $0x10] sm:$0xf]
          %v6078 = vld [vmem:[%s21 + $0x14] sm:$0xf]
          %v6079 = vld [vmem:[%s21 + $0x18] sm:$0xf]
          %v6080 = vld [vmem:[%s21 + $0x1c] sm:$0xf]
          %v6089 = vunpack.c.l.b16 %v6073
          %v6090 = vunpack.c.l.b16 %v6074
          %v6091 = vunpack.c.l.b16 %v6075
          %v6092 = vunpack.c.l.b16 %v6076
          %v6093 = vunpack.c.l.b16 %v6077
          %v6094 = vunpack.c.l.b16 %v6078
          %v6095 = vunpack.c.l.b16 %v6079
          %v6096 = vunpack.c.l.b16 %v6080
          %v6097 = vpack.c.b16 %v6090, %v6089
          %v6098 = vpack.c.b16 %v6092, %v6091
          %v6099 = vpack.c.b16 %v6094, %v6093
          %v6100 = vpack.c.b16 %v6096, %v6095
          %6105 = vmatprep.subr.bf16.mxu0 0
          %6106 = vmatpush1.bf16.msra.mxu0 0
          %6107 = vmatprep.subr.bf16.mxu0 0
          %6108 = vmatpush1.bf16.msra.mxu0 0
          %6109 = vmatprep.subr.bf16.mxu0 0
          %6110 = vmatpush1.bf16.msra.mxu0 0
          %6111 = vmatprep.subr.bf16.mxu0 0
          %6112 = vmatpush1.bf16.msra.mxu0 0
          %6113 = vmatprep.subr.bf16.mxu0 0
          %6114 = vmatpush1.bf16.msra.mxu0 %v6100
          %6115 = vmatprep.subr.bf16.mxu0 0
          %6116 = vmatpush1.bf16.msra.mxu0 %v6099
          %6117 = vmatprep.subr.bf16.mxu0 0
          %6118 = vmatpush1.bf16.msra.mxu0 %v6098
          %6119 = vmatprep.subr.bf16.mxu0 0
          %6120 = vmatpush1.bf16.msra.mxu0 %v6097
          %6121 = vmatprep.subr.bf16.mxu0 0
          %6122 = vmatpush2.bf16.msra.mxu0 0
          %6123 = vmatprep.subr.bf16.mxu0 0
          %6124 = vmatpush2.bf16.msra.mxu0 0
          %6125 = vmatprep.subr.bf16.mxu0 0
          %6126 = vmatpush2.bf16.msra.mxu0 0
          %6127 = vmatprep.subr.bf16.mxu0 0
          %6128 = vmatpush2.bf16.msra.mxu0 0
          %6129 = vmatprep.subr.bf16.mxu0 0
          %6130 = vmatpush2.bf16.msra.mxu0 0
          %6131 = vmatprep.subr.bf16.mxu0 0
          %6132 = vmatpush2.bf16.msra.mxu0 0
          %6133 = vmatprep.subr.bf16.mxu0 0
          %6134 = vmatpush2.bf16.msra.mxu0 0
          %6135 = vmatprep.subr.bf16.mxu0 0
          %6136 = vmatpush2.bf16.msra.mxu0 0
          %6137 = vmatprep.mubr.bf16.mxu0 0
          %6138 = vmatmul.mubr.bf16.gmra.mxu0 %v5660
          %v6139 = vpop.f32.mrf.mxu0
          %v6140 = vadd.f32 0.0, %v6139
          %v6141 = vpop.f32.mrf.mxu0
          %v6142 = vpop.f32.mrf.mxu0
          %v6143 = vpop.f32.mrf.mxu0
          %6144 = vdwg.mxu0
          %v6153 = vunpack.c.l.b16 %v6065
          %v6154 = vunpack.c.l.b16 %v6066
          %v6155 = vunpack.c.l.b16 %v6067
          %v6156 = vunpack.c.l.b16 %v6068
          %v6157 = vunpack.c.l.b16 %v6069
          %v6158 = vunpack.c.l.b16 %v6070
          %v6159 = vunpack.c.l.b16 %v6071
          %v6160 = vunpack.c.l.b16 %v6072
          %v6161 = vpack.c.b16 %v6154, %v6153
          %v6162 = vpack.c.b16 %v6156, %v6155
          %v6163 = vpack.c.b16 %v6158, %v6157
          %v6164 = vpack.c.b16 %v6160, %v6159
          %6169 = vmatprep.subr.bf16.mxu0 0
          %6170 = vmatpush1.bf16.msra.mxu0 0
          %6171 = vmatprep.subr.bf16.mxu0 0
          %6172 = vmatpush1.bf16.msra.mxu0 0
          %6173 = vmatprep.subr.bf16.mxu0 0
          %6174 = vmatpush1.bf16.msra.mxu0 0
          %6175 = vmatprep.subr.bf16.mxu0 0
          %6176 = vmatpush1.bf16.msra.mxu0 0
          %6177 = vmatprep.subr.bf16.mxu0 0
          %6178 = vmatpush1.bf16.msra.mxu0 %v6164
          %6179 = vmatprep.subr.bf16.mxu0 0
          %6180 = vmatpush1.bf16.msra.mxu0 %v6163
          %6181 = vmatprep.subr.bf16.mxu0 0
          %6182 = vmatpush1.bf16.msra.mxu0 %v6162
          %6183 = vmatprep.subr.bf16.mxu0 0
          %6184 = vmatpush1.bf16.msra.mxu0 %v6161
          %6185 = vmatprep.subr.bf16.mxu0 0
          %6186 = vmatpush2.bf16.msra.mxu0 0
          %6187 = vmatprep.subr.bf16.mxu0 0
          %6188 = vmatpush2.bf16.msra.mxu0 0
          %6189 = vmatprep.subr.bf16.mxu0 0
          %6190 = vmatpush2.bf16.msra.mxu0 0
          %6191 = vmatprep.subr.bf16.mxu0 0
          %6192 = vmatpush2.bf16.msra.mxu0 0
          %6193 = vmatprep.subr.bf16.mxu0 0
          %6194 = vmatpush2.bf16.msra.mxu0 0
          %6195 = vmatprep.subr.bf16.mxu0 0
          %6196 = vmatpush2.bf16.msra.mxu0 0
          %6197 = vmatprep.subr.bf16.mxu0 0
          %6198 = vmatpush2.bf16.msra.mxu0 0
          %6199 = vmatprep.subr.bf16.mxu0 0
          %6200 = vmatpush2.bf16.msra.mxu0 0
          %6201 = vmatprep.mubr.bf16.mxu0 0
          %6202 = vmatmul.mubr.bf16.gmra.mxu0 %v5730
          %v6203 = vpop.f32.mrf.mxu0
          %v6204 = vadd.f32 %v6140, %v6203
          %v6205 = vpop.f32.mrf.mxu0
          %v6206 = vpop.f32.mrf.mxu0
          %v6207 = vpop.f32.mrf.mxu0
          %6208 = vdwg.mxu0
          %v6209 = vld [vmem:[%s22] sm:$0xf]
          %v6210 = vld [vmem:[%s22 + $0x4] sm:$0xf]
          %v6211 = vld [vmem:[%s22 + $0x8] sm:$0xf]
          %v6212 = vld [vmem:[%s22 + $0xc] sm:$0xf]
          %v6213 = vld [vmem:[%s22 + $0x10] sm:$0xf]
          %v6214 = vld [vmem:[%s22 + $0x14] sm:$0xf]
          %v6215 = vld [vmem:[%s22 + $0x18] sm:$0xf]
          %v6216 = vld [vmem:[%s22 + $0x1c] sm:$0xf]
          %v6225 = vunpack.c.l.b16 %v6209
          %v6226 = vunpack.c.l.b16 %v6210
          %v6227 = vunpack.c.l.b16 %v6211
          %v6228 = vunpack.c.l.b16 %v6212
          %v6229 = vunpack.c.l.b16 %v6213
          %v6230 = vunpack.c.l.b16 %v6214
          %v6231 = vunpack.c.l.b16 %v6215
          %v6232 = vunpack.c.l.b16 %v6216
          %v6233 = vpack.c.b16 %v6226, %v6225
          %v6234 = vpack.c.b16 %v6228, %v6227
          %v6235 = vpack.c.b16 %v6230, %v6229
          %v6236 = vpack.c.b16 %v6232, %v6231
          %6241 = vmatprep.subr.bf16.mxu0 0
          %6242 = vmatpush1.bf16.msra.mxu0 0
          %6243 = vmatprep.subr.bf16.mxu0 0
          %6244 = vmatpush1.bf16.msra.mxu0 0
          %6245 = vmatprep.subr.bf16.mxu0 0
          %6246 = vmatpush1.bf16.msra.mxu0 0
          %6247 = vmatprep.subr.bf16.mxu0 0
          %6248 = vmatpush1.bf16.msra.mxu0 0
          %6249 = vmatprep.subr.bf16.mxu0 0
          %6250 = vmatpush1.bf16.msra.mxu0 %v6236
          %6251 = vmatprep.subr.bf16.mxu0 0
          %6252 = vmatpush1.bf16.msra.mxu0 %v6235
          %6253 = vmatprep.subr.bf16.mxu0 0
          %6254 = vmatpush1.bf16.msra.mxu0 %v6234
          %6255 = vmatprep.subr.bf16.mxu0 0
          %6256 = vmatpush1.bf16.msra.mxu0 %v6233
          %6257 = vmatprep.subr.bf16.mxu0 0
          %6258 = vmatpush2.bf16.msra.mxu0 0
          %6259 = vmatprep.subr.bf16.mxu0 0
          %6260 = vmatpush2.bf16.msra.mxu0 0
          %6261 = vmatprep.subr.bf16.mxu0 0
          %6262 = vmatpush2.bf16.msra.mxu0 0
          %6263 = vmatprep.subr.bf16.mxu0 0
          %6264 = vmatpush2.bf16.msra.mxu0 0
          %6265 = vmatprep.subr.bf16.mxu0 0
          %6266 = vmatpush2.bf16.msra.mxu0 0
          %6267 = vmatprep.subr.bf16.mxu0 0
          %6268 = vmatpush2.bf16.msra.mxu0 0
          %6269 = vmatprep.subr.bf16.mxu0 0
          %6270 = vmatpush2.bf16.msra.mxu0 0
          %6271 = vmatprep.subr.bf16.mxu0 0
          %6272 = vmatpush2.bf16.msra.mxu0 0
          %6273 = vmatprep.mubr.bf16.mxu0 0
          %6274 = vmatmul.mubr.bf16.gmra.mxu0 %v5805
          %v6275 = vpop.f32.mrf.mxu0
          %v6276 = vadd.f32 0.0, %v6275
          %v6277 = vpop.f32.mrf.mxu0
          %v6278 = vpop.f32.mrf.mxu0
          %v6279 = vpop.f32.mrf.mxu0
          %6280 = vdwg.mxu0
          %v6281 = vadd.f32 %v6204, %v6276
          %v6282 = vpack.c.bf16 %v6064, %v6064
          %v6283 = vld [vmem:[%s19] sm:$0xf]
          %v6284 = vld [vmem:[%s19 + $0x4] sm:$0xf]
          %v6285 = vld [vmem:[%s19 + $0x8] sm:$0xf]
          %v6286 = vld [vmem:[%s19 + $0xc] sm:$0xf]
          %v6287 = vld [vmem:[%s19 + $0x10] sm:$0xf]
          %v6288 = vld [vmem:[%s19 + $0x14] sm:$0xf]
          %v6295 = vunpack.c.l.b16 %v6283
          %v6296 = vunpack.c.l.b16 %v6284
          %v6297 = vunpack.c.l.b16 %v6285
          %v6298 = vunpack.c.l.b16 %v6286
          %v6299 = vunpack.c.l.b16 %v6287
          %v6300 = vunpack.c.l.b16 %v6288
          %v6301 = vpack.c.b16 %v6296, %v6295
          %v6302 = vpack.c.b16 %v6298, %v6297
          %v6303 = vpack.c.b16 %v6300, %v6299
          %vm6307 = vcmask 392192
          %v6309 = vsel %vm6307, %v6282, 0
          %6311 = vmatprep.subr.bf16.mxu0 0
          %6312 = vmatpush1.bf16.msra.mxu0 0
          %6313 = vmatprep.subr.bf16.mxu0 0
          %6314 = vmatpush1.bf16.msra.mxu0 0
          %6315 = vmatprep.subr.bf16.mxu0 0
          %6316 = vmatpush1.bf16.msra.mxu0 0
          %6317 = vmatprep.subr.bf16.mxu0 0
          %6318 = vmatpush1.bf16.msra.mxu0 0
          %6319 = vmatprep.subr.bf16.mxu0 0
          %6320 = vmatpush1.bf16.msra.mxu0 0
          %6321 = vmatprep.subr.bf16.mxu0 0
          %6322 = vmatpush1.bf16.msra.mxu0 %v6303
          %6323 = vmatprep.subr.bf16.mxu0 0
          %6324 = vmatpush1.bf16.msra.mxu0 %v6302
          %6325 = vmatprep.subr.bf16.mxu0 0
          %6326 = vmatpush1.bf16.msra.mxu0 %v6301
          %6327 = vmatprep.subr.bf16.mxu0 0
          %6328 = vmatpush2.bf16.msra.mxu0 0
          %6329 = vmatprep.subr.bf16.mxu0 0
          %6330 = vmatpush2.bf16.msra.mxu0 0
          %6331 = vmatprep.subr.bf16.mxu0 0
          %6332 = vmatpush2.bf16.msra.mxu0 0
          %6333 = vmatprep.subr.bf16.mxu0 0
          %6334 = vmatpush2.bf16.msra.mxu0 0
          %6335 = vmatprep.subr.bf16.mxu0 0
          %6336 = vmatpush2.bf16.msra.mxu0 0
          %6337 = vmatprep.subr.bf16.mxu0 0
          %6338 = vmatpush2.bf16.msra.mxu0 0
          %6339 = vmatprep.subr.bf16.mxu0 0
          %6340 = vmatpush2.bf16.msra.mxu0 0
          %6341 = vmatprep.subr.bf16.mxu0 0
          %6342 = vmatpush2.bf16.msra.mxu0 0
          %6343 = vmatprep.mubr.bf16.mxu0 0
          %6344 = vmatmul.mubr.bf16.gmra.mxu0 %v6309
          %v6345 = vpop.f32.mrf.mxu0
          %v6346 = vadd.f32 0.0, %v6345
          %v6347 = vpop.f32.mrf.mxu0
          %v6348 = vpop.f32.mrf.mxu0
          %v6349 = vpop.f32.mrf.mxu0
          %6350 = vdwg.mxu0
          %v6351 = vpack.c.bf16 %v6281, %v6281
          %v6352 = vld [vmem:[%s23] sm:$0xff]
          %v6353 = vld [vmem:[%s23 + $0x8] sm:$0xf]
          %v6354 = vld [vmem:[%s23 + $0xc] sm:$0x33]
          %v6355 = vld [vmem:[%s23 + $0x14] sm:$0x3]
          %v6360 = vunpack.c.l.b16 %v6352
          %v6361 = vunpack.c.h.b16 %v6352
          %v6362 = vunpack.c.l.b16 %v6353
          %v6363 = vunpack.c.l.b16 %v6354
          %v6364 = vunpack.c.h.b16 %v6354
          %v6365 = vunpack.c.l.b16 %v6355
          %v6366 = vpack.c.b16 %v6363, %v6360
          %v6367 = vpack.c.b16 %v6364, %v6361
          %v6368 = vpack.c.b16 %v6365, %v6362
          %vm6369 = vcmask 97280
          %v6371 = vsel %vm6369, %v6351, 0
          %vm6373 = vcmask 1045504
          %v6375 = vsel %vm6373, %v6366, 0
          %v6378 = vsel %vm6373, %v6367, 0
          %v6381 = vsel %vm6373, %v6368, 0
          %6383 = vmatprep.subr.bf16.mxu0 0
          %6384 = vmatpush1.bf16.msra.mxu0 0
          %6385 = vmatprep.subr.bf16.mxu0 0
          %6386 = vmatpush1.bf16.msra.mxu0 0
          %6387 = vmatprep.subr.bf16.mxu0 0
          %6388 = vmatpush1.bf16.msra.mxu0 0
          %6389 = vmatprep.subr.bf16.mxu0 0
          %6390 = vmatpush1.bf16.msra.mxu0 0
          %6391 = vmatprep.subr.bf16.mxu0 0
          %6392 = vmatpush1.bf16.msra.mxu0 0
          %6393 = vmatprep.subr.bf16.mxu0 0
          %6394 = vmatpush1.bf16.msra.mxu0 0
          %6395 = vmatprep.subr.bf16.mxu0 0
          %6396 = vmatpush1.bf16.msra.mxu0 0
          %6397 = vmatprep.subr.bf16.mxu0 %v6378
          %6398 = vmatpush1.bf16.msra.mxu0 %v6375
          %6399 = vmatprep.subr.bf16.mxu0 0
          %6400 = vmatpush2.bf16.msra.mxu0 0
          %6401 = vmatprep.subr.bf16.mxu0 0
          %6402 = vmatpush2.bf16.msra.mxu0 0
          %6403 = vmatprep.subr.bf16.mxu0 0
          %6404 = vmatpush2.bf16.msra.mxu0 0
          %6405 = vmatprep.subr.bf16.mxu0 0
          %6406 = vmatpush2.bf16.msra.mxu0 0
          %6407 = vmatprep.subr.bf16.mxu0 0
          %6408 = vmatpush2.bf16.msra.mxu0 0
          %6409 = vmatprep.subr.bf16.mxu0 0
          %6410 = vmatpush2.bf16.msra.mxu0 0
          %6411 = vmatprep.subr.bf16.mxu0 0
          %6412 = vmatpush2.bf16.msra.mxu0 0
          %6413 = vmatprep.subr.bf16.mxu0 0
          %6414 = vmatpush2.bf16.msra.mxu0 0
          %6415 = vmatprep.mubr.bf16.mxu0 0
          %6416 = vmatmul.mubr.bf16.gmra.mxu0 %v6371
          %v6417 = vpop.f32.mrf.mxu0
          %v6418 = vadd.f32 0.0, %v6417
          %v6419 = vpop.f32.mrf.mxu0
          %v6420 = vadd.f32 0.0, %v6419
          %v6421 = vpop.f32.mrf.mxu0
          %v6422 = vpop.f32.mrf.mxu0
          %6423 = vdwg.mxu0
          %6424 = vmatprep.subr.bf16.mxu0 0
          %6425 = vmatpush1.bf16.msra.mxu0 0
          %6426 = vmatprep.subr.bf16.mxu0 0
          %6427 = vmatpush1.bf16.msra.mxu0 0
          %6428 = vmatprep.subr.bf16.mxu0 0
          %6429 = vmatpush1.bf16.msra.mxu0 0
          %6430 = vmatprep.subr.bf16.mxu0 0
          %6431 = vmatpush1.bf16.msra.mxu0 0
          %6432 = vmatprep.subr.bf16.mxu0 0
          %6433 = vmatpush1.bf16.msra.mxu0 0
          %6434 = vmatprep.subr.bf16.mxu0 0
          %6435 = vmatpush1.bf16.msra.mxu0 0
          %6436 = vmatprep.subr.bf16.mxu0 0
          %6437 = vmatpush1.bf16.msra.mxu0 0
          %6438 = vmatprep.subr.bf16.mxu0 0
          %6439 = vmatpush1.bf16.msra.mxu0 %v6381
          %6440 = vmatprep.subr.bf16.mxu0 0
          %6441 = vmatpush2.bf16.msra.mxu0 0
          %6442 = vmatprep.subr.bf16.mxu0 0
          %6443 = vmatpush2.bf16.msra.mxu0 0
          %6444 = vmatprep.subr.bf16.mxu0 0
          %6445 = vmatpush2.bf16.msra.mxu0 0
          %6446 = vmatprep.subr.bf16.mxu0 0
          %6447 = vmatpush2.bf16.msra.mxu0 0
          %6448 = vmatprep.subr.bf16.mxu0 0
          %6449 = vmatpush2.bf16.msra.mxu0 0
          %6450 = vmatprep.subr.bf16.mxu0 0
          %6451 = vmatpush2.bf16.msra.mxu0 0
          %6452 = vmatprep.subr.bf16.mxu0 0
          %6453 = vmatpush2.bf16.msra.mxu0 0
          %6454 = vmatprep.subr.bf16.mxu0 0
          %6455 = vmatpush2.bf16.msra.mxu0 0
          %6456 = vmatprep.mubr.bf16.mxu0 0
          %6457 = vmatmul.mubr.bf16.gmra.mxu0 %v6371
          %v6458 = vpop.f32.mrf.mxu0
          %v6459 = vadd.f32 0.0, %v6458
          %v6460 = vpop.f32.mrf.mxu0
          %v6461 = vpop.f32.mrf.mxu0
          %v6462 = vpop.f32.mrf.mxu0
          %6463 = vdwg.mxu0
          %vm6464 = vcmask 277504
          %v6465 = vsel %vm6464, %v5847, -inf
          %6466 = vmax.xlane.f32.xlu0 %v6465
          %v6467 = vpop.xlane.xlu0 %6466
          %v6468 = vsub.f32 %v5847, %v6467
          %v6469 = vmul.f32 %v6468, 1.442695
          %v6470 = vpow.pop %v6469
          %v6471 = vsel %vm6464, %v6470, 0.0
          %6472 = vadd.xlane.f32.xlu0 %v6471
          %v6473 = vpop.xlane.xlu0 %6472
          %v6474 = vlog2.pop %v6473
          %v6475 = vmul.f32 %v6474, 0.6931472
          %v6476 = vsub.f32 %v6468, %v6475
          %v6477 = vsel %vm2863, %v6346, -inf
          %6478 = vmax.xlane.f32.xlu0 %v6477
          %v6479 = vpop.xlane.xlu0 %6478
          %v6480 = vsub.f32 %v6346, %v6479
          %v6481 = vmul.f32 %v6480, 1.442695
          %v6482 = vpow.pop %v6481
          %v6483 = vsel %vm2863, %v6482, 0.0
          %6484 = vadd.xlane.f32.xlu0 %v6483
          %v6485 = vpop.xlane.xlu0 %6484
          %v6486 = vlog2.pop %v6485
          %v6487 = vmul.f32 %v6486, 0.6931472
          %v6488 = vsub.f32 %v6480, %v6487
          %6490 = vset.pattern.permute.xlu0 32
          %6491 = vperm.xlu0 %6490, %v6476
          %v6492 = vpop.permute.xlu0 %6491
          %v6494 = vadd.f32 %v6488, %v6492
          %vm6495 = vcmask 261120
          %v6496 = vsel %vm6495, %v6459, -inf
          %v6497 = vmax.f32 %v6418, %v6420
          %v6498 = vmax.f32 %v6497, %v6496
          %6499 = vmax.xlane.f32.xlu0 %v6498
          %v6500 = vpop.xlane.xlu0 %6499
          %v6501 = vsub.f32 %v6418, %v6500
          %v6502 = vsub.f32 %v6420, %v6500
          %v6503 = vsub.f32 %v6459, %v6500
          %v6504 = vmul.f32 %v6501, 1.442695
          %v6505 = vpow.pop %v6504
          %v6506 = vmul.f32 %v6502, 1.442695
          %v6507 = vpow.pop %v6506
          %v6508 = vmul.f32 %v6503, 1.442695
          %v6509 = vpow.pop %v6508
          %v6510 = vadd.f32 %v6505, %v6507
          %v6511 = vsel %vm6495, %v6509, 0.0
          %v6512 = vadd.f32 %v6510, %v6511
          %6513 = vadd.xlane.f32.xlu0 %v6512
          %v6514 = vpop.xlane.xlu0 %6513
          %v6515 = vlog2.pop %v6514
          %v6516 = vmul.f32 %v6515, 0.6931472
          %v6517 = vsub.f32 %v6501, %v6516
          %v6518 = vsub.f32 %v6502, %v6516
          %v6519 = vsub.f32 %v6503, %v6516
          %6520 = vset.pattern.permute.xlu0 33
          %6521 = vperm.xlu0 %6520, %v6476
          %v6522 = vpop.permute.xlu0 %6521
          %v6524 = vadd.f32 %v6517, %v6522
          %v6525 = vadd.f32 %v6518, %v6522
          %v6526 = vadd.f32 %v6519, %v6522
          %6528 = vrot.lane.b32.xlu0 %v6494, 32
          %v6529 = vpop.permute.xlu0 %6528
          %6534 = vrot.lane.b32.xlu0 %v6524, 96
          %v6535 = vpop.permute.xlu0 %6534
          %6536 = vrot.lane.b32.xlu0 %v6525, 96
          %v6537 = vpop.permute.xlu0 %6536
          %6538 = vrot.lane.b32.xlu0 %v6526, 96
          %v6539 = vpop.permute.xlu0 %6538
          %vm6540 = vcmask 785408
          %v6541 = vsel %vm6540, %v6535, %v6537
          %v6542 = vsel %vm6540, %v6537, %v6539
          %v6546 = vsel %vm6495, %v6476, %v6529
          %v6547 = vsel %vm6540, %v6546, %v6535
          %v6548 = vmul.f32 %v6547, 1.442695
          %v6549 = vpow.pop %v6548
          %v6550 = vmul.f32 %v6541, 1.442695
          %v6551 = vpow.pop %v6550
          %v6552 = vmul.f32 %v6542, 1.442695
          %v6553 = vpow.pop %v6552
          %6554 = vst [vmem:[#allocation14] sm:$0xff] %v6549
          %6555 = vst [vmem:[#allocation14 + $0x8] sm:$0xff] %v6551
          %6556 = vst [vmem:[#allocation14 + $0x10] sm:$0xff] %v6553
        $region214: #{tpu_custom_call.1} parent=189 // pred_fallthru
          _
        // Predicated region
        $region215: #{tpu_custom_call.1} parent=189 // pred_check
          %p6557 = pneg %p576
        $region216: #{tpu_custom_call.1} parent=189 // pred_check_branch
          %6559 = sbr.rel (%p6557) target = $region218
        $region217: #{tpu_custom_call.1} parent=189 // pred_region
          %s6561 = ssub.s32 384, 384
          %6562 = vsyncadd [#allocation11], %s6561
          %s6564 = sshll.u32 [#allocation14], 4
          %s6565 = int_to_ptr.vmem [resolvable:$true] %s6564
          %6567 = dma.vmem_to_hbm [thread:$0]  %s6565, 384, %s24, [#allocation11]
        $region218: #{tpu_custom_call.1} parent=189 // pred_fallthru
          _
        // Predicated region
        $region219: #{tpu_custom_call.1} parent=189 // pred_check
          %p6568 = pneg %p597
        $region220: #{tpu_custom_call.1} parent=189 // pred_check_branch
          %6570 = sbr.rel (%p6568) target = $region222
        $region221: #{tpu_custom_call.1} parent=189 // pred_region
          %s6572 = ssub.s32 256, 256
          %6573 = vsyncadd [#allocation16], %s6572
          %s6575 = sshll.u32 [#allocation15], 4
          %s6576 = int_to_ptr.vmem [resolvable:$true] %s6575
          %6578 = dma.vmem_to_hbm [thread:$0]  %s6576, 256, %s25, [#allocation16]
        $region222: #{tpu_custom_call.1} parent=189 // pred_fallthru
          _
        // Predicated region
        $region223: #{tpu_custom_call.1} parent=189 // pred_check
          %p6579 = pneg %p618
        $region224: #{tpu_custom_call.1} parent=189 // pred_check_branch
          %6581 = sbr.rel (%p6579) target = $region226
        $region225: #{tpu_custom_call.1} parent=189 // pred_region
          %s6583 = ssub.s32 128, 128
          %6584 = vsyncadd [#allocation16], %s6583
          %s6586 = sshll.u32 [#allocation17], 4
          %s6587 = int_to_ptr.vmem [resolvable:$true] %s6586
          %6589 = dma.vmem_to_hbm [thread:$0]  %s6587, 128, %s26, [#allocation16]
        $region226: #{tpu_custom_call.1} parent=189 // pred_fallthru
          _
        // Predicated region
        $region227: #{tpu_custom_call.1} parent=189 // pred_check
          %p6590 = pneg %p639
        $region228: #{tpu_custom_call.1} parent=189 // pred_check_branch
          %6592 = sbr.rel (%p6590) target = $region230
        $region229: #{tpu_custom_call.1} parent=189 // pred_region
          %s6594 = ssub.s32 128, 128
          %6595 = vsyncadd [#allocation19], %s6594
          %s6597 = sshll.u32 [#allocation18], 4
          %s6598 = int_to_ptr.vmem [resolvable:$true] %s6597
          %6600 = dma.vmem_to_hbm [thread:$0]  %s6598, 128, %s27, [#allocation19]
        $region230: #{tpu_custom_call.1} parent=189 // pred_fallthru
          _
        // Predicated region
        $region231: #{tpu_custom_call.1} parent=189 // pred_check
          %p6601 = pneg %p576
        $region232: #{tpu_custom_call.1} parent=189 // pred_check_branch
          %6603 = sbr.rel (%p6601) target = $region234
        $region233: #{tpu_custom_call.1} parent=189 // pred_region
          %6604 = dma.done [#allocation11], 384
        $region234: #{tpu_custom_call.1} parent=189 // pred_fallthru
          _
        // Predicated region
        $region235: #{tpu_custom_call.1} parent=189 // pred_check
          %p6605 = pneg %p597
        $region236: #{tpu_custom_call.1} parent=189 // pred_check_branch
          %6607 = sbr.rel (%p6605) target = $region238
        $region237: #{tpu_custom_call.1} parent=189 // pred_region
          %6608 = dma.done [#allocation16], 256
        $region238: #{tpu_custom_call.1} parent=189 // pred_fallthru
          _
        // Predicated region
        $region239: #{tpu_custom_call.1} parent=189 // pred_check
          %p6609 = pneg %p618
        $region240: #{tpu_custom_call.1} parent=189 // pred_check_branch
          %6611 = sbr.rel (%p6609) target = $region242
        $region241: #{tpu_custom_call.1} parent=189 // pred_region
          %6612 = dma.done [#allocation16], 128
        $region242: #{tpu_custom_call.1} parent=189 // pred_fallthru
          _
        // Predicated region
        $region243: #{tpu_custom_call.1} parent=189 // pred_check
          %p6613 = pneg %p639
        $region244: #{tpu_custom_call.1} parent=189 // pred_check_branch
          %6615 = sbr.rel (%p6613) target = $region246
        $region245: #{tpu_custom_call.1} parent=189 // pred_region
          %6616 = dma.done [#allocation19], 128
        $region246: #{tpu_custom_call.1} parent=189 // pred_fallthru
          _
      $region190: #{tpu_custom_call.1} parent=5 // pred_fallthru
        _
      %p6617 = scmp.le.s32.totalorder 2, %s39
      // Predicated region
      $region247: #{tpu_custom_call.1} parent=5 // pred_check
        %p6618 = pneg %p6617
      $region248: #{tpu_custom_call.1} parent=5 // pred_check_branch
        %6620 = sbr.rel (%p6618) target = $region250
      $region249: #{tpu_custom_call.1} parent=5 // pred_region
        %s6621 = ssub.s32 %s39, 2
      $region250: #{tpu_custom_call.1} parent=5 // pred_fallthru
        _
    $region6: #{tpu_custom_call.1} parent=1 // loop_footer
      %s43 = sadd.s32 1, %s39
    $region7: #{tpu_custom_call.1} parent=1 // loop_footer_branch
      %38 = sbr.rel target = $region3
    $region8: #{tpu_custom_call.1} parent=1 // loop_exit
      _
    %6622 = vsyncpa [#allocation10], 1
    %s6623 = scalar_lea.sflag [#allocation10], 1
    %6624 = vsyncpa %s6623, 1
    %6625 = vsyncpa [#allocation13], 1
    %6626 = vsyncpa [#allocation11], 1
    %s6627 = scalar_lea.sflag [#allocation11], 1
    %6628 = vsyncpa %s6627, 1
    %6629 = vsyncpa [#allocation16], 1
    %6630 = vsyncpa [#allocation19], 1

</llo_original>
